<compile_context>
chip_gen: v5e
topology: v5e:2x2
jax: 0.10.0
libtpu: 0.0.40
codegen_flags: <defaults>
</compile_context>

<pallas_src>
import functools

import jax
import jax.numpy as jnp
from jax.experimental import pallas as pl
from jax.experimental.pallas import tpu as pltpu

_LPAD = 8  # sublane-aligned left pad of the padded activation scratch


# ----------------------------------------------------------------------------
# Fused kernel: [3x3 conv + folded-BN + ReLU] x num_convs  +  Haar DWT epilogue
# ----------------------------------------------------------------------------
def _make_fused_kernel(num_convs, H, W, c_in, c_out):
    Hh, Wh = H // 2, W // 2
    HW = H * W
    nsub = Hh * Wh
    Wp = _LPAD + W + 8            # left pad 8, >=1 zero col on the right, aligned

    def zero_halo(pad_ref, c):
        # Zero ONLY the halo strips (interior is fully overwritten each step).
        z = jnp.bfloat16
        pad_ref[0:1, :, :] = jnp.zeros((1, Wp, c), z)                 # top row
        pad_ref[H + 1:H + 2, :, :] = jnp.zeros((1, Wp, c), z)         # bottom row
        pad_ref[:, 0:_LPAD, :] = jnp.zeros((H + 2, _LPAD, c), z)      # left strip
        pad_ref[:, _LPAD + W:Wp, :] = jnp.zeros((H + 2, 8, c), z)     # right strip

    def conv3x3_bn_relu(xp_ref, w_ref, s_ref, b_ref, cin):
        # xp_ref: (H+2, Wp, cin) bf16 zero-halo activation (VMEM scratch)
        # w_ref : (3, 3*cin, c_out) bf16 weights, per-dy row index = dx*cin + ci
        # s_ref, b_ref: (1, c_out) f32 folded BN scale / bias
        # returns: (H*W, c_out) f32 post-ReLU activation
        acc = None
        for dy in range(3):                          # unrolled at trace time
            cols = []
            for dx in range(3):
                c0 = _LPAD - 1 + dx                  # window starts at col w-1+dx
                win = xp_ref[dy:dy + H, c0:c0 + W, :]          # (H, W, cin) bf16
                cols.append(win.reshape(HW, cin))
            patch = jnp.concatenate(cols, axis=1)              # (HW, 3*cin) bf16
            part = jnp.dot(patch, w_ref[dy],
                           preferred_element_type=jnp.float32)  # MXU, f32 acc
            acc = part if acc is None else acc + part
        y = acc * s_ref[...] + b_ref[...]                       # folded BN (f32)
        return jnp.maximum(y, 0.0)                               # ReLU

    def kernel(*refs):
        x_ref = refs[0]                                          # (1,H,W,c_in) bf16
        conv_refs = refs[1:1 + 3 * num_convs]                    # (w, s, b) per conv
        out_ref = refs[1 + 3 * num_convs]                        # (1,Hh,Wh,4*c_out)
        pad_in, pad_mid, rs_ref, rd_ref = refs[2 + 3 * num_convs:]

        # Halo strips zeroed (cheap, border only); interiors written below.
        zero_halo(pad_in, c_in)
        zero_halo(pad_mid, c_out)
        pad_in[1:H + 1, _LPAD:_LPAD + W, :] = x_ref[0]           # aligned store

        act = None
        for layer in range(num_convs):
            w_ref, s_ref, b_ref = conv_refs[3 * layer:3 * layer + 3]
            src = pad_in if layer == 0 else pad_mid
            cin = c_in if layer == 0 else c_out
            act = conv3x3_bn_relu(src, w_ref, s_ref, b_ref, cin)  # (HW, c_out) f32
            if layer + 1 < num_convs:
                # Inter-layer activation stays in VMEM; single bf16 cast.
                pad_mid[1:H + 1, _LPAD:_LPAD + W, :] = (
                    act.astype(jnp.bfloat16).reshape(H, W, c_out))

        # ---- Haar level-1 DWT epilogue (pure VPU add/sub, fused) -----------
        # (detach=True in wavelet_fn only affects autodiff; forward unchanged.)
        y4 = act.reshape(Hh, 2, W, c_out)                    # split even/odd rows
        rs_ref[...] = (y4[:, 0] + y4[:, 1]).reshape(Hh * W, c_out)   # row sums
        rd_ref[...] = (y4[:, 0] - y4[:, 1]).reshape(Hh * W, c_out)   # row diffs
        # Even/odd column decimation via strided sublane reads.
        rs_e = rs_ref[pl.ds(0, nsub, stride=2), :]
        rs_o = rs_ref[pl.ds(1, nsub, stride=2), :]
        rd_e = rd_ref[pl.ds(0, nsub, stride=2), :]
        rd_o = rd_ref[pl.ds(1, nsub, stride=2), :]
        ll = ((rs_e + rs_o) * 0.5).reshape(Hh, Wh, c_out)
        lh = ((rs_e - rs_o) * 0.5).reshape(Hh, Wh, c_out)
        hl = ((rd_e + rd_o) * 0.5).reshape(Hh, Wh, c_out)
        hh = ((rd_e - rd_o) * 0.5).reshape(Hh, Wh, c_out)
        # Single (..., 4*c_out) store instead of four lane-sparse outputs.
        out_ref[0] = jnp.concatenate([ll, lh, hl, hh], axis=-1)

    return kernel


def fused_conv_block_dwt(x_nhwc, conv_params):
    """Fused conv stack + Haar DWT.  Returns (N, H/2, W/2, 4*Cout) NHWC,
    channels ordered [LL | LH | HL | HH]."""
    N, H, W, Cin = x_nhwc.shape
    assert H % 2 == 0 and W % 2 == 0, "Haar DWT requires even H and W"
    num_convs = len(conv_params)
    Cout = conv_params[0][0].shape[-1]
    Hh, Wh = H // 2, W // 2
    Wp = _LPAD + W + 8

    flat_args = [x_nhwc.astype(jnp.bfloat16)]                 # bf16 at the boundary
    in_specs = [pl.BlockSpec((1, H, W, Cin), lambda n: (n, 0, 0, 0))]
    for idx, (w, scale, bias) in enumerate(conv_params):
        cin_l, cout_l = w.shape[2], w.shape[3]
        assert cin_l == (Cin if idx == 0 else Cout) and cout_l == Cout
        # Weights per dy-slab: (3, 3*cin, cout), row index = dx*cin + ci.
        flat_args.append(w.reshape(3, 3 * cin_l, cout_l).astype(jnp.bfloat16))
        flat_args.append(scale.reshape(1, cout_l).astype(jnp.float32))
        flat_args.append(bias.reshape(1, cout_l).astype(jnp.float32))
        in_specs.append(pl.BlockSpec((3, 3 * cin_l, cout_l), lambda n: (0, 0, 0)))
        in_specs.append(pl.BlockSpec((1, cout_l), lambda n: (0, 0)))
        in_specs.append(pl.BlockSpec((1, cout_l), lambda n: (0, 0)))

    # Scoped-VMEM limit sized from the per-step footprint (defaults of
    # 16/32 MiB are too small once feature maps grow).
    per_step = (
        2 * H * W * Cin * 2                         # input block, double-buffered
        + 2 * Hh * Wh * 4 * Cout * 4                # output block, double-buffered
        + (H + 2) * Wp * (Cin + Cout) * 2           # bf16 padded scratch
        + 2 * Hh * W * Cout * 4                     # DWT rs/rd scratch
        + 4 * H * W * max(Cin, Cout) * 2            # im2col dy-chunk temporaries
        + 2 * H * W * Cout * 4                      # f32 matmul accumulators
        + sum(2 * (w.size * 2 + 2 * w.shape[-1] * 4) for (w, _, _) in conv_params)
    )
    vmem_limit = int(min(64 << 20, max(2 * per_step, 32 << 20)))

    kernel = _make_fused_kernel(num_convs, H, W, Cin, Cout)
    return pl.pallas_call(
        kernel,
        out_shape=jax.ShapeDtypeStruct((N, Hh, Wh, 4 * Cout), jnp.float32),
        grid=(N,),
        in_specs=in_specs,
        out_specs=pl.BlockSpec((1, Hh, Wh, 4 * Cout), lambda n: (n, 0, 0, 0)),
        scratch_shapes=[
            pltpu.VMEM((H + 2, Wp, Cin), jnp.bfloat16),   # padded input (halo)
            pltpu.VMEM((H + 2, Wp, Cout), jnp.bfloat16),  # padded mid activation
            pltpu.VMEM((Hh * W, Cout), jnp.float32),      # DWT row sums
            pltpu.VMEM((Hh * W, Cout), jnp.float32),      # DWT row diffs
        ],
        compiler_params=pltpu.CompilerParams(
            dimension_semantics=("parallel",),            # 2 TCs on v7x
            vmem_limit_bytes=vmem_limit),
    )(*flat_args)


# ----------------------------------------------------------------------------
# Parameter setup (deterministic, synthetic) + module forward
# ----------------------------------------------------------------------------
def init_conv_bn_params(key, cin, cout, eps=1e-5):
    kw, kb, kg, kbe, km, kv = jax.random.split(key, 6)
    w = jax.random.normal(kw, (3, 3, cin, cout), jnp.float32)
    w = w * (1.0 / jnp.sqrt(9.0 * cin))
    conv_b = 0.1 * jax.random.normal(kb, (cout,), jnp.float32)
    gamma = 1.0 + 0.1 * jax.random.normal(kg, (cout,), jnp.float32)
    beta = 0.1 * jax.random.normal(kbe, (cout,), jnp.float32)
    running_mean = 0.1 * jax.random.normal(km, (cout,), jnp.float32)
    running_var = 1.0 + jnp.abs(jax.random.normal(kv, (cout,), jnp.float32))
    scale = gamma / jnp.sqrt(running_var + eps)
    bias = (conv_b - running_mean) * scale + beta
    return w, scale, bias


def vgg_wavelet_block2(x_nchw, params, conv_more=False):
    x = jnp.transpose(x_nchw, (0, 2, 3, 1))                # NCHW -> NHWC
    names = ["conv1", "conv2"] + (["conv3"] if conv_more else [])
    conv_params = [params[n] for n in names]
    C = conv_params[-1][0].shape[-1]
    out = fused_conv_block_dwt(x, conv_params)             # (N, Hh, Wh, 4C)
    out = jax.lax.stop_gradient(out)                       # wavelet_fn(..., detach=True)
    out = jnp.transpose(out, (0, 3, 1, 2))                 # (N, 4C, Hh, Wh)
    ll = out[:, 0 * C:1 * C]
    lh = out[:, 1 * C:2 * C]
    hl = out[:, 2 * C:3 * C]
    hh = out[:, 3 * C:4 * C]
    return ll, lh, hl, hh


# ----------------------------------------------------------------------------
# Pure-JAX reference (bf16 conv operands to match the kernel's precision)
# ----------------------------------------------------------------------------
def _ref_forward(x_nchw, params, conv_more=False):
    x = jnp.transpose(x_nchw, (0, 2, 3, 1))

    def cbr(x, w, scale, bias):
        y = jax.lax.conv_general_dilated(
            x.astype(jnp.bfloat16), w.astype(jnp.bfloat16),
            window_strides=(1, 1), padding="SAME",
            dimension_numbers=("NHWC", "HWIO", "NHWC"),
            preferred_element_type=jnp.float32)
        return jnp.maximum(y * scale + bias, 0.0)

    out = cbr(x, *params["conv1"])
    out = cbr(out, *params["conv2"])
    if conv_more:
        out = cbr(out, *params["conv3"])
    a = out[:, 0::2, 0::2, :]; b = out[:, 0::2, 1::2, :]
    c = out[:, 1::2, 0::2, :]; d = out[:, 1::2, 1::2, :]
    ll = (a + b + c + d) * 0.5; lh = (a - b + c - d) * 0.5
    hl = (a + b - c - d) * 0.5; hh = (a - b - c + d) * 0.5
    t = lambda z: jnp.transpose(z, (0, 3, 1, 2))
    return t(ll), t(lh), t(hl), t(hh)


if __name__ == "__main__":
    key = jax.random.PRNGKey(0)
    kx, k1, k2 = jax.random.split(key, 3)

    N, Cin, H, W = 2, 4, 16, 16
    Cout = 8
    x = jax.random.normal(kx, (N, Cin, H, W), jnp.float32)

    params = {
        "conv1": init_conv_bn_params(k1, Cin, Cout),
        "conv2": init_conv_bn_params(k2, Cout, Cout),
    }

    fwd = jax.jit(functools.partial(vgg_wavelet_block2, conv_more=False))
    ll, lh, hl, hh = fwd(x, params)
    jax.block_until_ready((ll, lh, hl, hh))

    assert ll.shape == (N, Cout, H // 2, W // 2), ll.shape
    assert lh.shape == hl.shape == hh.shape == ll.shape

    # Reference also uses bf16 conv operands (f32 accumulation) and rounds the
    # inter-layer activation to bf16 at the next conv, matching the kernel, so
    # only summation-order differences remain -> moderately tight tolerance.
    rll, rlh, rhl, rhh = _ref_forward(x, params, conv_more=False)
    for name, got, ref in (("LL", ll, rll), ("LH", lh, rlh),
                           ("HL", hl, rhl), ("HH", hh, rhh)):
        err = float(jnp.max(jnp.abs(got - ref)))
        assert jnp.allclose(got, ref, rtol=1e-2, atol=1e-2), (name, err)

    print("KERNEL_OK")
</pallas_src>

<mosaic_0001>
module attributes {stable_mosaic.version = 11 : i64} {
  func.func @kernel(%arg0: i32, %arg1: memref<1x16x16x4xbf16, #tpu.memory_space<vmem>>, %arg2: memref<3x12x8xbf16, #tpu.memory_space<vmem>>, %arg3: memref<1x8xf32, #tpu.memory_space<vmem>>, %arg4: memref<1x8xf32, #tpu.memory_space<vmem>>, %arg5: memref<3x24x8xbf16, #tpu.memory_space<vmem>>, %arg6: memref<1x8xf32, #tpu.memory_space<vmem>>, %arg7: memref<1x8xf32, #tpu.memory_space<vmem>>, %arg8: memref<1x8x8x32xf32, #tpu.memory_space<vmem>>, %arg9: memref<18x32x4xbf16, #tpu.memory_space<vmem>>, %arg10: memref<18x32x8xbf16, #tpu.memory_space<vmem>>, %arg11: memref<128x8xf32, #tpu.memory_space<vmem>>, %arg12: memref<128x8xf32, #tpu.memory_space<vmem>>) attributes {dimension_semantics = [#tpu.dimension_semantics<parallel>], iteration_bounds = array<i64: 2>, scalar_prefetch = 0 : i64, scratch_operands = 4 : i64, tpu.core_type = #tpu.core_type<tc>, window_params = [{transform_indices = @transform_0, window_bounds = array<i64: 1, 16, 16, 4>}, {pipeline_mode = #tpu.pipeline_mode<synchronous>, transform_indices = @transform_1, window_bounds = array<i64: 3, 12, 8>}, {pipeline_mode = #tpu.pipeline_mode<synchronous>, transform_indices = @transform_2, window_bounds = array<i64: 1, 8>}, {pipeline_mode = #tpu.pipeline_mode<synchronous>, transform_indices = @transform_3, window_bounds = array<i64: 1, 8>}, {pipeline_mode = #tpu.pipeline_mode<synchronous>, transform_indices = @transform_4, window_bounds = array<i64: 3, 24, 8>}, {pipeline_mode = #tpu.pipeline_mode<synchronous>, transform_indices = @transform_5, window_bounds = array<i64: 1, 8>}, {pipeline_mode = #tpu.pipeline_mode<synchronous>, transform_indices = @transform_6, window_bounds = array<i64: 1, 8>}, {transform_indices = @transform_7, window_bounds = array<i64: 1, 8, 8, 32>}]} {
    %cst = arith.constant 0.000000e+00 : bf16
    %0 = vector.broadcast %cst : bf16 to vector<1x32x4xbf16>
    %c0 = arith.constant 0 : index
    %c0_0 = arith.constant 0 : index
    %c0_1 = arith.constant 0 : index
    %1 = vector.load %arg9[%c0, %c0_0, %c0_1] : memref<18x32x4xbf16, #tpu.memory_space<vmem>>, vector<1x32x4xbf16>
    tpu.vector_store %arg9[%c0, %c0_0, %c0_1], %0 {strides = array<i32>} : memref<18x32x4xbf16, #tpu.memory_space<vmem>>, vector<1x32x4xbf16>,
    %cst_2 = arith.constant 0.000000e+00 : bf16
    %2 = vector.broadcast %cst_2 : bf16 to vector<1x32x4xbf16>
    %c17 = arith.constant 17 : index
    %c0_3 = arith.constant 0 : index
    %c0_4 = arith.constant 0 : index
    %3 = vector.load %arg9[%c17, %c0_3, %c0_4] : memref<18x32x4xbf16, #tpu.memory_space<vmem>>, vector<1x32x4xbf16>
    tpu.vector_store %arg9[%c17, %c0_3, %c0_4], %2 {strides = array<i32>} : memref<18x32x4xbf16, #tpu.memory_space<vmem>>, vector<1x32x4xbf16>,
    %cst_5 = arith.constant 0.000000e+00 : bf16
    %4 = vector.broadcast %cst_5 : bf16 to vector<18x8x4xbf16>
    %c0_6 = arith.constant 0 : index
    %c0_7 = arith.constant 0 : index
    %c0_8 = arith.constant 0 : index
    %5 = vector.load %arg9[%c0_6, %c0_7, %c0_8] : memref<18x32x4xbf16, #tpu.memory_space<vmem>>, vector<18x8x4xbf16>
    tpu.vector_store %arg9[%c0_6, %c0_7, %c0_8], %4 {strides = array<i32>} : memref<18x32x4xbf16, #tpu.memory_space<vmem>>, vector<18x8x4xbf16>,
    %cst_9 = arith.constant 0.000000e+00 : bf16
    %6 = vector.broadcast %cst_9 : bf16 to vector<18x8x4xbf16>
    %c0_10 = arith.constant 0 : index
    %c24 = arith.constant 24 : index
    %c0_11 = arith.constant 0 : index
    %7 = vector.load %arg9[%c0_10, %c24, %c0_11] : memref<18x32x4xbf16, #tpu.memory_space<vmem>>, vector<18x8x4xbf16>
    tpu.vector_store %arg9[%c0_10, %c24, %c0_11], %6 {strides = array<i32>} : memref<18x32x4xbf16, #tpu.memory_space<vmem>>, vector<18x8x4xbf16>,
    %cst_12 = arith.constant 0.000000e+00 : bf16
    %8 = vector.broadcast %cst_12 : bf16 to vector<1x32x8xbf16>
    %c0_13 = arith.constant 0 : index
    %c0_14 = arith.constant 0 : index
    %c0_15 = arith.constant 0 : index
    %9 = vector.load %arg10[%c0_13, %c0_14, %c0_15] : memref<18x32x8xbf16, #tpu.memory_space<vmem>>, vector<1x32x8xbf16>
    tpu.vector_store %arg10[%c0_13, %c0_14, %c0_15], %8 {strides = array<i32>} : memref<18x32x8xbf16, #tpu.memory_space<vmem>>, vector<1x32x8xbf16>,
    %cst_16 = arith.constant 0.000000e+00 : bf16
    %10 = vector.broadcast %cst_16 : bf16 to vector<1x32x8xbf16>
    %c17_17 = arith.constant 17 : index
    %c0_18 = arith.constant 0 : index
    %c0_19 = arith.constant 0 : index
    %11 = vector.load %arg10[%c17_17, %c0_18, %c0_19] : memref<18x32x8xbf16, #tpu.memory_space<vmem>>, vector<1x32x8xbf16>
    tpu.vector_store %arg10[%c17_17, %c0_18, %c0_19], %10 {strides = array<i32>} : memref<18x32x8xbf16, #tpu.memory_space<vmem>>, vector<1x32x8xbf16>,
    %cst_20 = arith.constant 0.000000e+00 : bf16
    %12 = vector.broadcast %cst_20 : bf16 to vector<18x8x8xbf16>
    %c0_21 = arith.constant 0 : index
    %c0_22 = arith.constant 0 : index
    %c0_23 = arith.constant 0 : index
    %13 = vector.load %arg10[%c0_21, %c0_22, %c0_23] : memref<18x32x8xbf16, #tpu.memory_space<vmem>>, vector<18x8x8xbf16>
    tpu.vector_store %arg10[%c0_21, %c0_22, %c0_23], %12 {strides = array<i32>} : memref<18x32x8xbf16, #tpu.memory_space<vmem>>, vector<18x8x8xbf16>,
    %cst_24 = arith.constant 0.000000e+00 : bf16
    %14 = vector.broadcast %cst_24 : bf16 to vector<18x8x8xbf16>
    %c0_25 = arith.constant 0 : index
    %c24_26 = arith.constant 24 : index
    %c0_27 = arith.constant 0 : index
    %15 = vector.load %arg10[%c0_25, %c24_26, %c0_27] : memref<18x32x8xbf16, #tpu.memory_space<vmem>>, vector<18x8x8xbf16>
    tpu.vector_store %arg10[%c0_25, %c24_26, %c0_27], %14 {strides = array<i32>} : memref<18x32x8xbf16, #tpu.memory_space<vmem>>, vector<18x8x8xbf16>,
    %c0_28 = arith.constant 0 : index
    %c0_29 = arith.constant 0 : index
    %c0_30 = arith.constant 0 : index
    %c0_31 = arith.constant 0 : index
    %16 = vector.load %arg1[%c0_28, %c0_29, %c0_30, %c0_31] : memref<1x16x16x4xbf16, #tpu.memory_space<vmem>>, vector<1x16x16x4xbf16>
    %17 = vector.shape_cast %16 : vector<1x16x16x4xbf16> to vector<16x16x4xbf16>
    %c1 = arith.constant 1 : index
    %c8 = arith.constant 8 : index
    %c0_32 = arith.constant 0 : index
    %18 = vector.load %arg9[%c1, %c8, %c0_32] : memref<18x32x4xbf16, #tpu.memory_space<vmem>>, vector<16x16x4xbf16>
    tpu.vector_store %arg9[%c1, %c8, %c0_32], %17 {strides = array<i32>} : memref<18x32x4xbf16, #tpu.memory_space<vmem>>, vector<16x16x4xbf16>,
    %c0_33 = arith.constant 0 : index
    %c7 = arith.constant 7 : index
    %c0_34 = arith.constant 0 : index
    %19 = vector.load %arg9[%c0_33, %c7, %c0_34] : memref<18x32x4xbf16, #tpu.memory_space<vmem>>, vector<16x16x4xbf16>
    %20 = vector.shape_cast %19 : vector<16x16x4xbf16> to vector<256x4xbf16>
    %c0_35 = arith.constant 0 : index
    %c8_36 = arith.constant 8 : index
    %c0_37 = arith.constant 0 : index
    %21 = vector.load %arg9[%c0_35, %c8_36, %c0_37] : memref<18x32x4xbf16, #tpu.memory_space<vmem>>, vector<16x16x4xbf16>
    %22 = vector.shape_cast %21 : vector<16x16x4xbf16> to vector<256x4xbf16>
    %c0_38 = arith.constant 0 : index
    %c9 = arith.constant 9 : index
    %c0_39 = arith.constant 0 : index
    %23 = vector.load %arg9[%c0_38, %c9, %c0_39] : memref<18x32x4xbf16, #tpu.memory_space<vmem>>, vector<16x16x4xbf16>
    %24 = vector.shape_cast %23 : vector<16x16x4xbf16> to vector<256x4xbf16>
    %25 = tpu.concatenate %20, %22, %24 in 1 : vector<256x4xbf16>, vector<256x4xbf16>, vector<256x4xbf16> -> vector<256x12xbf16>
    %c0_40 = arith.constant 0 : index
    %c0_41 = arith.constant 0 : index
    %c0_42 = arith.constant 0 : index
    %26 = vector.load %arg2[%c0_40, %c0_41, %c0_42] : memref<3x12x8xbf16, #tpu.memory_space<vmem>>, vector<1x12x8xbf16>
    %27 = vector.shape_cast %26 : vector<1x12x8xbf16> to vector<12x8xbf16>
    %cst_43 = arith.constant dense<0.000000e+00> : vector<256x8xf32>
    %28 = tpu.matmul %25, %27, %cst_43 {dimension_numbers = #tpu.dot_dimension_numbers<[1], [0], [0], [1], [0, 0, 1, 1], [], []>} : vector<256x12xbf16>, vector<12x8xbf16>, vector<256x8xf32> -> vector<256x8xf32>
    %c1_44 = arith.constant 1 : index
    %c7_45 = arith.constant 7 : index
    %c0_46 = arith.constant 0 : index
    %29 = vector.load %arg9[%c1_44, %c7_45, %c0_46] : memref<18x32x4xbf16, #tpu.memory_space<vmem>>, vector<16x16x4xbf16>
    %30 = vector.shape_cast %29 : vector<16x16x4xbf16> to vector<256x4xbf16>
    %c1_47 = arith.constant 1 : index
    %c8_48 = arith.constant 8 : index
    %c0_49 = arith.constant 0 : index
    %31 = vector.load %arg9[%c1_47, %c8_48, %c0_49] : memref<18x32x4xbf16, #tpu.memory_space<vmem>>, vector<16x16x4xbf16>
    %32 = vector.shape_cast %31 : vector<16x16x4xbf16> to vector<256x4xbf16>
    %c1_50 = arith.constant 1 : index
    %c9_51 = arith.constant 9 : index
    %c0_52 = arith.constant 0 : index
    %33 = vector.load %arg9[%c1_50, %c9_51, %c0_52] : memref<18x32x4xbf16, #tpu.memory_space<vmem>>, vector<16x16x4xbf16>
    %34 = vector.shape_cast %33 : vector<16x16x4xbf16> to vector<256x4xbf16>
    %35 = tpu.concatenate %30, %32, %34 in 1 : vector<256x4xbf16>, vector<256x4xbf16>, vector<256x4xbf16> -> vector<256x12xbf16>
    %c1_53 = arith.constant 1 : index
    %c0_54 = arith.constant 0 : index
    %c0_55 = arith.constant 0 : index
    %36 = vector.load %arg2[%c1_53, %c0_54, %c0_55] : memref<3x12x8xbf16, #tpu.memory_space<vmem>>, vector<1x12x8xbf16>
    %37 = vector.shape_cast %36 : vector<1x12x8xbf16> to vector<12x8xbf16>
    %cst_56 = arith.constant dense<0.000000e+00> : vector<256x8xf32>
    %38 = tpu.matmul %35, %37, %cst_56 {dimension_numbers = #tpu.dot_dimension_numbers<[1], [0], [0], [1], [0, 0, 1, 1], [], []>} : vector<256x12xbf16>, vector<12x8xbf16>, vector<256x8xf32> -> vector<256x8xf32>
    %39 = arith.addf %28, %38 : vector<256x8xf32>
    %c2 = arith.constant 2 : index
    %c7_57 = arith.constant 7 : index
    %c0_58 = arith.constant 0 : index
    %40 = vector.load %arg9[%c2, %c7_57, %c0_58] : memref<18x32x4xbf16, #tpu.memory_space<vmem>>, vector<16x16x4xbf16>
    %41 = vector.shape_cast %40 : vector<16x16x4xbf16> to vector<256x4xbf16>
    %c2_59 = arith.constant 2 : index
    %c8_60 = arith.constant 8 : index
    %c0_61 = arith.constant 0 : index
    %42 = vector.load %arg9[%c2_59, %c8_60, %c0_61] : memref<18x32x4xbf16, #tpu.memory_space<vmem>>, vector<16x16x4xbf16>
    %43 = vector.shape_cast %42 : vector<16x16x4xbf16> to vector<256x4xbf16>
    %c2_62 = arith.constant 2 : index
    %c9_63 = arith.constant 9 : index
    %c0_64 = arith.constant 0 : index
    %44 = vector.load %arg9[%c2_62, %c9_63, %c0_64] : memref<18x32x4xbf16, #tpu.memory_space<vmem>>, vector<16x16x4xbf16>
    %45 = vector.shape_cast %44 : vector<16x16x4xbf16> to vector<256x4xbf16>
    %46 = tpu.concatenate %41, %43, %45 in 1 : vector<256x4xbf16>, vector<256x4xbf16>, vector<256x4xbf16> -> vector<256x12xbf16>
    %c2_65 = arith.constant 2 : index
    %c0_66 = arith.constant 0 : index
    %c0_67 = arith.constant 0 : index
    %47 = vector.load %arg2[%c2_65, %c0_66, %c0_67] : memref<3x12x8xbf16, #tpu.memory_space<vmem>>, vector<1x12x8xbf16>
    %48 = vector.shape_cast %47 : vector<1x12x8xbf16> to vector<12x8xbf16>
    %cst_68 = arith.constant dense<0.000000e+00> : vector<256x8xf32>
    %49 = tpu.matmul %46, %48, %cst_68 {dimension_numbers = #tpu.dot_dimension_numbers<[1], [0], [0], [1], [0, 0, 1, 1], [], []>} : vector<256x12xbf16>, vector<12x8xbf16>, vector<256x8xf32> -> vector<256x8xf32>
    %50 = arith.addf %39, %49 : vector<256x8xf32>
    %c0_69 = arith.constant 0 : index
    %c0_70 = arith.constant 0 : index
    %51 = vector.load %arg3[%c0_69, %c0_70] : memref<1x8xf32, #tpu.memory_space<vmem>>, vector<1x8xf32>
    %52 = vector.broadcast %51 : vector<1x8xf32> to vector<256x8xf32>
    %53 = arith.mulf %50, %52 : vector<256x8xf32>
    %c0_71 = arith.constant 0 : index
    %c0_72 = arith.constant 0 : index
    %54 = vector.load %arg4[%c0_71, %c0_72] : memref<1x8xf32, #tpu.memory_space<vmem>>, vector<1x8xf32>
    %55 = vector.broadcast %54 : vector<1x8xf32> to vector<256x8xf32>
    %56 = arith.addf %53, %55 : vector<256x8xf32>
    %cst_73 = arith.constant 0.000000e+00 : f32
    %57 = vector.broadcast %cst_73 : f32 to vector<256x8xf32>
    %58 = arith.maximumf %56, %57 : vector<256x8xf32>
    %59 = arith.truncf %58 : vector<256x8xf32> to vector<256x8xbf16>
    %60 = vector.shape_cast %59 : vector<256x8xbf16> to vector<16x16x8xbf16>
    %c1_74 = arith.constant 1 : index
    %c8_75 = arith.constant 8 : index
    %c0_76 = arith.constant 0 : index
    %61 = vector.load %arg10[%c1_74, %c8_75, %c0_76] : memref<18x32x8xbf16, #tpu.memory_space<vmem>>, vector<16x16x8xbf16>
    tpu.vector_store %arg10[%c1_74, %c8_75, %c0_76], %60 {strides = array<i32>} : memref<18x32x8xbf16, #tpu.memory_space<vmem>>, vector<16x16x8xbf16>,
    %c0_77 = arith.constant 0 : index
    %c7_78 = arith.constant 7 : index
    %c0_79 = arith.constant 0 : index
    %62 = vector.load %arg10[%c0_77, %c7_78, %c0_79] : memref<18x32x8xbf16, #tpu.memory_space<vmem>>, vector<16x16x8xbf16>
    %63 = vector.shape_cast %62 : vector<16x16x8xbf16> to vector<256x8xbf16>
    %c0_80 = arith.constant 0 : index
    %c8_81 = arith.constant 8 : index
    %c0_82 = arith.constant 0 : index
    %64 = vector.load %arg10[%c0_80, %c8_81, %c0_82] : memref<18x32x8xbf16, #tpu.memory_space<vmem>>, vector<16x16x8xbf16>
    %65 = vector.shape_cast %64 : vector<16x16x8xbf16> to vector<256x8xbf16>
    %c0_83 = arith.constant 0 : index
    %c9_84 = arith.constant 9 : index
    %c0_85 = arith.constant 0 : index
    %66 = vector.load %arg10[%c0_83, %c9_84, %c0_85] : memref<18x32x8xbf16, #tpu.memory_space<vmem>>, vector<16x16x8xbf16>
    %67 = vector.shape_cast %66 : vector<16x16x8xbf16> to vector<256x8xbf16>
    %68 = tpu.concatenate %63, %65, %67 in 1 : vector<256x8xbf16>, vector<256x8xbf16>, vector<256x8xbf16> -> vector<256x24xbf16>
    %c0_86 = arith.constant 0 : index
    %c0_87 = arith.constant 0 : index
    %c0_88 = arith.constant 0 : index
    %69 = vector.load %arg5[%c0_86, %c0_87, %c0_88] : memref<3x24x8xbf16, #tpu.memory_space<vmem>>, vector<1x24x8xbf16>
    %70 = vector.shape_cast %69 : vector<1x24x8xbf16> to vector<24x8xbf16>
    %cst_89 = arith.constant dense<0.000000e+00> : vector<256x8xf32>
    %71 = tpu.matmul %68, %70, %cst_89 {dimension_numbers = #tpu.dot_dimension_numbers<[1], [0], [0], [1], [0, 0, 1, 1], [], []>} : vector<256x24xbf16>, vector<24x8xbf16>, vector<256x8xf32> -> vector<256x8xf32>
    %c1_90 = arith.constant 1 : index
    %c7_91 = arith.constant 7 : index
    %c0_92 = arith.constant 0 : index
    %72 = vector.load %arg10[%c1_90, %c7_91, %c0_92] : memref<18x32x8xbf16, #tpu.memory_space<vmem>>, vector<16x16x8xbf16>
    %73 = vector.shape_cast %72 : vector<16x16x8xbf16> to vector<256x8xbf16>
    %c1_93 = arith.constant 1 : index
    %c8_94 = arith.constant 8 : index
    %c0_95 = arith.constant 0 : index
    %74 = vector.load %arg10[%c1_93, %c8_94, %c0_95] : memref<18x32x8xbf16, #tpu.memory_space<vmem>>, vector<16x16x8xbf16>
    %75 = vector.shape_cast %74 : vector<16x16x8xbf16> to vector<256x8xbf16>
    %c1_96 = arith.constant 1 : index
    %c9_97 = arith.constant 9 : index
    %c0_98 = arith.constant 0 : index
    %76 = vector.load %arg10[%c1_96, %c9_97, %c0_98] : memref<18x32x8xbf16, #tpu.memory_space<vmem>>, vector<16x16x8xbf16>
    %77 = vector.shape_cast %76 : vector<16x16x8xbf16> to vector<256x8xbf16>
    %78 = tpu.concatenate %73, %75, %77 in 1 : vector<256x8xbf16>, vector<256x8xbf16>, vector<256x8xbf16> -> vector<256x24xbf16>
    %c1_99 = arith.constant 1 : index
    %c0_100 = arith.constant 0 : index
    %c0_101 = arith.constant 0 : index
    %79 = vector.load %arg5[%c1_99, %c0_100, %c0_101] : memref<3x24x8xbf16, #tpu.memory_space<vmem>>, vector<1x24x8xbf16>
    %80 = vector.shape_cast %79 : vector<1x24x8xbf16> to vector<24x8xbf16>
    %cst_102 = arith.constant dense<0.000000e+00> : vector<256x8xf32>
    %81 = tpu.matmul %78, %80, %cst_102 {dimension_numbers = #tpu.dot_dimension_numbers<[1], [0], [0], [1], [0, 0, 1, 1], [], []>} : vector<256x24xbf16>, vector<24x8xbf16>, vector<256x8xf32> -> vector<256x8xf32>
    %82 = arith.addf %71, %81 : vector<256x8xf32>
    %c2_103 = arith.constant 2 : index
    %c7_104 = arith.constant 7 : index
    %c0_105 = arith.constant 0 : index
    %83 = vector.load %arg10[%c2_103, %c7_104, %c0_105] : memref<18x32x8xbf16, #tpu.memory_space<vmem>>, vector<16x16x8xbf16>
    %84 = vector.shape_cast %83 : vector<16x16x8xbf16> to vector<256x8xbf16>
    %c2_106 = arith.constant 2 : index
    %c8_107 = arith.constant 8 : index
    %c0_108 = arith.constant 0 : index
    %85 = vector.load %arg10[%c2_106, %c8_107, %c0_108] : memref<18x32x8xbf16, #tpu.memory_space<vmem>>, vector<16x16x8xbf16>
    %86 = vector.shape_cast %85 : vector<16x16x8xbf16> to vector<256x8xbf16>
    %c2_109 = arith.constant 2 : index
    %c9_110 = arith.constant 9 : index
    %c0_111 = arith.constant 0 : index
    %87 = vector.load %arg10[%c2_109, %c9_110, %c0_111] : memref<18x32x8xbf16, #tpu.memory_space<vmem>>, vector<16x16x8xbf16>
    %88 = vector.shape_cast %87 : vector<16x16x8xbf16> to vector<256x8xbf16>
    %89 = tpu.concatenate %84, %86, %88 in 1 : vector<256x8xbf16>, vector<256x8xbf16>, vector<256x8xbf16> -> vector<256x24xbf16>
    %c2_112 = arith.constant 2 : index
    %c0_113 = arith.constant 0 : index
    %c0_114 = arith.constant 0 : index
    %90 = vector.load %arg5[%c2_112, %c0_113, %c0_114] : memref<3x24x8xbf16, #tpu.memory_space<vmem>>, vector<1x24x8xbf16>
    %91 = vector.shape_cast %90 : vector<1x24x8xbf16> to vector<24x8xbf16>
    %cst_115 = arith.constant dense<0.000000e+00> : vector<256x8xf32>
    %92 = tpu.matmul %89, %91, %cst_115 {dimension_numbers = #tpu.dot_dimension_numbers<[1], [0], [0], [1], [0, 0, 1, 1], [], []>} : vector<256x24xbf16>, vector<24x8xbf16>, vector<256x8xf32> -> vector<256x8xf32>
    %93 = arith.addf %82, %92 : vector<256x8xf32>
    %c0_116 = arith.constant 0 : index
    %c0_117 = arith.constant 0 : index
    %94 = vector.load %arg6[%c0_116, %c0_117] : memref<1x8xf32, #tpu.memory_space<vmem>>, vector<1x8xf32>
    %95 = vector.broadcast %94 : vector<1x8xf32> to vector<256x8xf32>
    %96 = arith.mulf %93, %95 : vector<256x8xf32>
    %c0_118 = arith.constant 0 : index
    %c0_119 = arith.constant 0 : index
    %97 = vector.load %arg7[%c0_118, %c0_119] : memref<1x8xf32, #tpu.memory_space<vmem>>, vector<1x8xf32>
    %98 = vector.broadcast %97 : vector<1x8xf32> to vector<256x8xf32>
    %99 = arith.addf %96, %98 : vector<256x8xf32>
    %cst_120 = arith.constant 0.000000e+00 : f32
    %100 = vector.broadcast %cst_120 : f32 to vector<256x8xf32>
    %101 = arith.maximumf %99, %100 : vector<256x8xf32>
    %102 = vector.shape_cast %101 : vector<256x8xf32> to vector<8x2x16x8xf32>
    %103 = vector.extract_strided_slice %102 {offsets = [0, 0, 0, 0], sizes = [8, 1, 16, 8], strides = [1, 1, 1, 1]} : vector<8x2x16x8xf32> to vector<8x1x16x8xf32>
    %104 = vector.shape_cast %103 : vector<8x1x16x8xf32> to vector<8x16x8xf32>
    %105 = vector.extract_strided_slice %102 {offsets = [0, 1, 0, 0], sizes = [8, 1, 16, 8], strides = [1, 1, 1, 1]} : vector<8x2x16x8xf32> to vector<8x1x16x8xf32>
    %106 = vector.shape_cast %105 : vector<8x1x16x8xf32> to vector<8x16x8xf32>
    %107 = arith.addf %104, %106 : vector<8x16x8xf32>
    %108 = vector.shape_cast %107 : vector<8x16x8xf32> to vector<128x8xf32>
    %c0_121 = arith.constant 0 : index
    %c0_122 = arith.constant 0 : index
    %109 = vector.load %arg11[%c0_121, %c0_122] : memref<128x8xf32, #tpu.memory_space<vmem>>, vector<128x8xf32>
    tpu.vector_store %arg11[%c0_121, %c0_122], %108 {strides = array<i32>} : memref<128x8xf32, #tpu.memory_space<vmem>>, vector<128x8xf32>,
    %110 = vector.extract_strided_slice %102 {offsets = [0, 0, 0, 0], sizes = [8, 1, 16, 8], strides = [1, 1, 1, 1]} : vector<8x2x16x8xf32> to vector<8x1x16x8xf32>
    %111 = vector.shape_cast %110 : vector<8x1x16x8xf32> to vector<8x16x8xf32>
    %112 = vector.extract_strided_slice %102 {offsets = [0, 1, 0, 0], sizes = [8, 1, 16, 8], strides = [1, 1, 1, 1]} : vector<8x2x16x8xf32> to vector<8x1x16x8xf32>
    %113 = vector.shape_cast %112 : vector<8x1x16x8xf32> to vector<8x16x8xf32>
    %114 = arith.subf %111, %113 : vector<8x16x8xf32>
    %115 = vector.shape_cast %114 : vector<8x16x8xf32> to vector<128x8xf32>
    %c0_123 = arith.constant 0 : index
    %c0_124 = arith.constant 0 : index
    %116 = vector.load %arg12[%c0_123, %c0_124] : memref<128x8xf32, #tpu.memory_space<vmem>>, vector<128x8xf32>
    tpu.vector_store %arg12[%c0_123, %c0_124], %115 {strides = array<i32>} : memref<128x8xf32, #tpu.memory_space<vmem>>, vector<128x8xf32>,
    %c0_125 = arith.constant 0 : index
    %c0_126 = arith.constant 0 : index
    %117 = tpu.strided_load %arg11[%c0_125, %c0_126] {strides = array<i32: 2, 1>} : memref<128x8xf32, #tpu.memory_space<vmem>>, vector<64x8xf32>
    %c1_127 = arith.constant 1 : index
    %c0_128 = arith.constant 0 : index
    %118 = tpu.strided_load %arg11[%c1_127, %c0_128] {strides = array<i32: 2, 1>} : memref<128x8xf32, #tpu.memory_space<vmem>>, vector<64x8xf32>
    %c0_129 = arith.constant 0 : index
    %c0_130 = arith.constant 0 : index
    %119 = tpu.strided_load %arg12[%c0_129, %c0_130] {strides = array<i32: 2, 1>} : memref<128x8xf32, #tpu.memory_space<vmem>>, vector<64x8xf32>
    %c1_131 = arith.constant 1 : index
    %c0_132 = arith.constant 0 : index
    %120 = tpu.strided_load %arg12[%c1_131, %c0_132] {strides = array<i32: 2, 1>} : memref<128x8xf32, #tpu.memory_space<vmem>>, vector<64x8xf32>
    %121 = arith.addf %117, %118 : vector<64x8xf32>
    %cst_133 = arith.constant 5.000000e-01 : f32
    %122 = vector.broadcast %cst_133 : f32 to vector<64x8xf32>
    %123 = arith.mulf %121, %122 : vector<64x8xf32>
    %124 = vector.shape_cast %123 : vector<64x8xf32> to vector<8x8x8xf32>
    %125 = arith.subf %117, %118 : vector<64x8xf32>
    %cst_134 = arith.constant 5.000000e-01 : f32
    %126 = vector.broadcast %cst_134 : f32 to vector<64x8xf32>
    %127 = arith.mulf %125, %126 : vector<64x8xf32>
    %128 = vector.shape_cast %127 : vector<64x8xf32> to vector<8x8x8xf32>
    %129 = arith.addf %119, %120 : vector<64x8xf32>
    %cst_135 = arith.constant 5.000000e-01 : f32
    %130 = vector.broadcast %cst_135 : f32 to vector<64x8xf32>
    %131 = arith.mulf %129, %130 : vector<64x8xf32>
    %132 = vector.shape_cast %131 : vector<64x8xf32> to vector<8x8x8xf32>
    %133 = arith.subf %119, %120 : vector<64x8xf32>
    %cst_136 = arith.constant 5.000000e-01 : f32
    %134 = vector.broadcast %cst_136 : f32 to vector<64x8xf32>
    %135 = arith.mulf %133, %134 : vector<64x8xf32>
    %136 = vector.shape_cast %135 : vector<64x8xf32> to vector<8x8x8xf32>
    %137 = tpu.concatenate %124, %128, %132, %136 in 2 : vector<8x8x8xf32>, vector<8x8x8xf32>, vector<8x8x8xf32>, vector<8x8x8xf32> -> vector<8x8x32xf32>
    %c0_137 = arith.constant 0 : index
    %c0_138 = arith.constant 0 : index
    %c0_139 = arith.constant 0 : index
    %c0_140 = arith.constant 0 : index
    %138 = vector.load %arg8[%c0_137, %c0_138, %c0_139, %c0_140] : memref<1x8x8x32xf32, #tpu.memory_space<vmem>>, vector<1x8x8x32xf32>
    %139 = vector.shape_cast %138 : vector<1x8x8x32xf32> to vector<8x8x32xf32>
    %140 = vector.shape_cast %137 : vector<8x8x32xf32> to vector<1x8x8x32xf32>
    tpu.vector_store %arg8[%c0_137, %c0_138, %c0_139, %c0_140], %140 {strides = array<i32>} : memref<1x8x8x32xf32, #tpu.memory_space<vmem>>, vector<1x8x8x32xf32>,
    return
  }
  func.func @transform_0(%arg0: i32) -> (i32, i32, i32, i32) {
    %c0_i32 = arith.constant 0 : i32
    %c0_i32_0 = arith.constant 0 : i32
    %c0_i32_1 = arith.constant 0 : i32
    %c0_i32_2 = arith.constant 0 : i32
    return %arg0, %c0_i32, %c0_i32_0, %c0_i32_1 : i32, i32, i32, i32
  }
  func.func @transform_1(%arg0: i32) -> (i32, i32, i32) {
    %c0_i32 = arith.constant 0 : i32
    %c0_i32_0 = arith.constant 0 : i32
    %c0_i32_1 = arith.constant 0 : i32
    %c0_i32_2 = arith.constant 0 : i32
    return %c0_i32, %c0_i32_0, %c0_i32_1 : i32, i32, i32
  }
  func.func @transform_2(%arg0: i32) -> (i32, i32) {
    %c0_i32 = arith.constant 0 : i32
    %c0_i32_0 = arith.constant 0 : i32
    %c0_i32_1 = arith.constant 0 : i32
    return %c0_i32, %c0_i32_0 : i32, i32
  }
  func.func @transform_3(%arg0: i32) -> (i32, i32) {
    %c0_i32 = arith.constant 0 : i32
    %c0_i32_0 = arith.constant 0 : i32
    %c0_i32_1 = arith.constant 0 : i32
    return %c0_i32, %c0_i32_0 : i32, i32
  }
  func.func @transform_4(%arg0: i32) -> (i32, i32, i32) {
    %c0_i32 = arith.constant 0 : i32
    %c0_i32_0 = arith.constant 0 : i32
    %c0_i32_1 = arith.constant 0 : i32
    %c0_i32_2 = arith.constant 0 : i32
    return %c0_i32, %c0_i32_0, %c0_i32_1 : i32, i32, i32
  }
  func.func @transform_5(%arg0: i32) -> (i32, i32) {
    %c0_i32 = arith.constant 0 : i32
    %c0_i32_0 = arith.constant 0 : i32
    %c0_i32_1 = arith.constant 0 : i32
    return %c0_i32, %c0_i32_0 : i32, i32
  }
  func.func @transform_6(%arg0: i32) -> (i32, i32) {
    %c0_i32 = arith.constant 0 : i32
    %c0_i32_0 = arith.constant 0 : i32
    %c0_i32_1 = arith.constant 0 : i32
    return %c0_i32, %c0_i32_0 : i32, i32
  }
  func.func @transform_7(%arg0: i32) -> (i32, i32, i32, i32) {
    %c0_i32 = arith.constant 0 : i32
    %c0_i32_0 = arith.constant 0 : i32
    %c0_i32_1 = arith.constant 0 : i32
    %c0_i32_2 = arith.constant 0 : i32
    return %arg0, %c0_i32, %c0_i32_0, %c0_i32_1 : i32, i32, i32, i32
  }
}

</mosaic_0001>

<llo_original>
// kernel: vgg_wavelet_block2.1
$region0: #{vgg_wavelet_block2.1}
  #allocation0 [shape = 'u32[]', space=smem, size = 0x4, offset = 0x4, fixed_abs, tag = 'smem constant byte address 0x4 - core index']
  #allocation1 [shape = 'u32[72,128]{1,0:T(1,128)}', space=vmem, size = 0x9000, scoped, tag = 'internal scratch']
  #allocation2 [shape = 'bf16[18,32,4]{2,1,0:T(8,128)(2,1)}', space=vmem, size = 0x24000, scoped, tag = 'scratch operand']
  #allocation3 [shape = 'bf16[18,32,8]{2,1,0:T(8,128)(2,1)}', space=vmem, size = 0x24000, scoped, tag = 'scratch operand']
  #allocation4 [shape = 'f32[128,8]{1,0:T(8,128)}', space=vmem, size = 0x10000, scoped, tag = 'scratch operand']
  #allocation5 [shape = 'f32[128,8]{1,0:T(8,128)}', space=vmem, size = 0x10000, scoped, tag = 'scratch operand']
  %s0 = inlined_call_operand.vmem [shape: bf16[2,16,16,4], index: 0, kind: input, shape index: {}]
  %s1 = inlined_call_operand.vmem [shape: bf16[3,12,8], index: 1, kind: input, shape index: {}]
  %s2 = inlined_call_operand.vmem [shape: f32[1,8], index: 2, kind: input, shape index: {}]
  %s3 = inlined_call_operand.vmem [shape: f32[1,8], index: 3, kind: input, shape index: {}]
  %s4 = inlined_call_operand.vmem [shape: bf16[3,24,8], index: 4, kind: input, shape index: {}]
  %s5 = inlined_call_operand.vmem [shape: f32[1,8], index: 5, kind: input, shape index: {}]
  %s6 = inlined_call_operand.vmem [shape: f32[1,8], index: 6, kind: input, shape index: {}]
  %s7 = inlined_call_operand.vmem [shape: f32[2,8,8,32], index: 7, kind: output, shape index: {}]
  %s8 = sld [smem:[#allocation0]]
  $region61: #{vgg_wavelet_block2.1} parent=0
    _
  %s10 = ssub.s32 1, %s8
  %s11 = scalar_select 0, %s10, %s8
  loop: start=0, step=1, limit=4
  $region2: #{vgg_wavelet_block2.1} parent=0 // loop_pre_header
    _
  $region3: #{vgg_wavelet_block2.1} parent=0 // loop_header
    %s13 = sphi 0, %s17
    %p14 = scmp.ge.s32.totalorder %s13, 4
    %s23 = sphi 0, %s25
    %s26 = sphi 0, %s23
    %s27 = sphi 0, %s26
    %s43 = sphi 0, %s27
    %s47 = sphi 0, %s47
    %s49 = sphi 0, %s47
    %s50 = sphi 0, %s49
    %s64 = sphi 0, %s50
    %s68 = sphi 0, %s68
    %s70 = sphi 0, %s68
    %s71 = sphi 0, %s70
    %s85 = sphi 0, %s71
    %s89 = sphi 0, %s89
    %s91 = sphi 0, %s89
    %s92 = sphi 0, %s91
    %s106 = sphi 0, %s92
    %s110 = sphi 0, %s110
    %s112 = sphi 0, %s110
    %s113 = sphi 0, %s112
    %s127 = sphi 0, %s113
    %s131 = sphi 0, %s131
    %s133 = sphi 0, %s131
    %s134 = sphi 0, %s133
    %s148 = sphi 0, %s134
    %s152 = sphi 0, %s152
    %s154 = sphi 0, %s152
    %s155 = sphi 0, %s154
    %s169 = sphi 0, %s155
    %s175 = sphi 0, %s177
    %s178 = sphi 0, %s175
    %s179 = sphi 0, %s178
    %s195 = sphi 0, %s179
  $region4: #{vgg_wavelet_block2.1} parent=0 // loop_header_branch
    %16 = sbr.rel (%p14) target = $region8
  $region5: #{vgg_wavelet_block2.1} parent=0 // loop_body
    %s18 = ssub.s32 %s13, 1
    %s19 = ssub.s32 %s13, 2
    %s20 = sadd.s32 %s13, 1
    %s21 = ssub.s32 %s13, %s20
    %p22 = scmp.eq.s32.totalorder %s21, 0
    %s24 = sadd.s32 %s23, 1
    %s25 = scalar_select %p22, %s23, %s24
    %p28 = pneg %p22
    %p29 = scmp.eq.s32.totalorder %s13, 1
    %p30 = por %p28, %p29
    %p31 = scmp.ne.s32.totalorder %s23, %s26
    %p32 = scmp.eq.s32.totalorder %s13, 0
    %p33 = por %p31, %p32
    %p34 = scmp.ne.s32.totalorder %s23, %s26
    %p35 = scmp.eq.s32.totalorder %s18, 1
    %p36 = por %p34, %p35
    %p37 = scmp.ne.s32.totalorder %s26, %s27
    %p38 = scmp.eq.s32.totalorder %s18, 0
    %p39 = por %p37, %p38
    %p40 = scmp.ne.s32.totalorder %s26, %s27
    %p41 = scmp.eq.s32.totalorder %s19, 1
    %p42 = por %p40, %p41
    %p44 = scmp.ne.s32.totalorder %s27, %s43
    %p45 = scmp.eq.s32.totalorder %s19, 0
    %p46 = por %p44, %p45
    %s48 = sadd.s32 %s47, 1
    %p51 = scmp.eq.s32.totalorder %s13, 1
    %p52 = scmp.ne.s32.totalorder %s47, %s49
    %p53 = scmp.eq.s32.totalorder %s13, 0
    %p54 = por %p52, %p53
    %p55 = scmp.ne.s32.totalorder %s47, %s49
    %p56 = scmp.eq.s32.totalorder %s18, 1
    %p57 = por %p55, %p56
    %p58 = scmp.ne.s32.totalorder %s49, %s50
    %p59 = scmp.eq.s32.totalorder %s18, 0
    %p60 = por %p58, %p59
    %p61 = scmp.ne.s32.totalorder %s49, %s50
    %p62 = scmp.eq.s32.totalorder %s19, 1
    %p63 = por %p61, %p62
    %p65 = scmp.ne.s32.totalorder %s50, %s64
    %p66 = scmp.eq.s32.totalorder %s19, 0
    %p67 = por %p65, %p66
    %s69 = sadd.s32 %s68, 1
    %p72 = scmp.eq.s32.totalorder %s13, 1
    %p73 = scmp.ne.s32.totalorder %s68, %s70
    %p74 = scmp.eq.s32.totalorder %s13, 0
    %p75 = por %p73, %p74
    %p76 = scmp.ne.s32.totalorder %s68, %s70
    %p77 = scmp.eq.s32.totalorder %s18, 1
    %p78 = por %p76, %p77
    %p79 = scmp.ne.s32.totalorder %s70, %s71
    %p80 = scmp.eq.s32.totalorder %s18, 0
    %p81 = por %p79, %p80
    %p82 = scmp.ne.s32.totalorder %s70, %s71
    %p83 = scmp.eq.s32.totalorder %s19, 1
    %p84 = por %p82, %p83
    %p86 = scmp.ne.s32.totalorder %s71, %s85
    %p87 = scmp.eq.s32.totalorder %s19, 0
    %p88 = por %p86, %p87
    %s90 = sadd.s32 %s89, 1
    %p93 = scmp.eq.s32.totalorder %s13, 1
    %p94 = scmp.ne.s32.totalorder %s89, %s91
    %p95 = scmp.eq.s32.totalorder %s13, 0
    %p96 = por %p94, %p95
    %p97 = scmp.ne.s32.totalorder %s89, %s91
    %p98 = scmp.eq.s32.totalorder %s18, 1
    %p99 = por %p97, %p98
    %p100 = scmp.ne.s32.totalorder %s91, %s92
    %p101 = scmp.eq.s32.totalorder %s18, 0
    %p102 = por %p100, %p101
    %p103 = scmp.ne.s32.totalorder %s91, %s92
    %p104 = scmp.eq.s32.totalorder %s19, 1
    %p105 = por %p103, %p104
    %p107 = scmp.ne.s32.totalorder %s92, %s106
    %p108 = scmp.eq.s32.totalorder %s19, 0
    %p109 = por %p107, %p108
    %s111 = sadd.s32 %s110, 1
    %p114 = scmp.eq.s32.totalorder %s13, 1
    %p115 = scmp.ne.s32.totalorder %s110, %s112
    %p116 = scmp.eq.s32.totalorder %s13, 0
    %p117 = por %p115, %p116
    %p118 = scmp.ne.s32.totalorder %s110, %s112
    %p119 = scmp.eq.s32.totalorder %s18, 1
    %p120 = por %p118, %p119
    %p121 = scmp.ne.s32.totalorder %s112, %s113
    %p122 = scmp.eq.s32.totalorder %s18, 0
    %p123 = por %p121, %p122
    %p124 = scmp.ne.s32.totalorder %s112, %s113
    %p125 = scmp.eq.s32.totalorder %s19, 1
    %p126 = por %p124, %p125
    %p128 = scmp.ne.s32.totalorder %s113, %s127
    %p129 = scmp.eq.s32.totalorder %s19, 0
    %p130 = por %p128, %p129
    %s132 = sadd.s32 %s131, 1
    %p135 = scmp.eq.s32.totalorder %s13, 1
    %p136 = scmp.ne.s32.totalorder %s131, %s133
    %p137 = scmp.eq.s32.totalorder %s13, 0
    %p138 = por %p136, %p137
    %p139 = scmp.ne.s32.totalorder %s131, %s133
    %p140 = scmp.eq.s32.totalorder %s18, 1
    %p141 = por %p139, %p140
    %p142 = scmp.ne.s32.totalorder %s133, %s134
    %p143 = scmp.eq.s32.totalorder %s18, 0
    %p144 = por %p142, %p143
    %p145 = scmp.ne.s32.totalorder %s133, %s134
    %p146 = scmp.eq.s32.totalorder %s19, 1
    %p147 = por %p145, %p146
    %p149 = scmp.ne.s32.totalorder %s134, %s148
    %p150 = scmp.eq.s32.totalorder %s19, 0
    %p151 = por %p149, %p150
    %s153 = sadd.s32 %s152, 1
    %p156 = scmp.eq.s32.totalorder %s13, 1
    %p157 = scmp.ne.s32.totalorder %s152, %s154
    %p158 = scmp.eq.s32.totalorder %s13, 0
    %p159 = por %p157, %p158
    %p160 = scmp.ne.s32.totalorder %s152, %s154
    %p161 = scmp.eq.s32.totalorder %s18, 1
    %p162 = por %p160, %p161
    %p163 = scmp.ne.s32.totalorder %s154, %s155
    %p164 = scmp.eq.s32.totalorder %s18, 0
    %p165 = por %p163, %p164
    %p166 = scmp.ne.s32.totalorder %s154, %s155
    %p167 = scmp.eq.s32.totalorder %s19, 1
    %p168 = por %p166, %p167
    %p170 = scmp.ne.s32.totalorder %s155, %s169
    %p171 = scmp.eq.s32.totalorder %s19, 0
    %p172 = por %p170, %p171
    %s173 = ssub.s32 %s13, %s20
    %p174 = scmp.eq.s32.totalorder %s173, 0
    %s176 = sadd.s32 %s175, 1
    %s177 = scalar_select %p174, %s175, %s176
    %p180 = pneg %p174
    %p181 = scmp.eq.s32.totalorder %s13, 1
    %p182 = por %p180, %p181
    %p183 = scmp.ne.s32.totalorder %s175, %s178
    %p184 = scmp.eq.s32.totalorder %s13, 0
    %p185 = por %p183, %p184
    %p186 = scmp.ne.s32.totalorder %s175, %s178
    %p187 = scmp.eq.s32.totalorder %s18, 1
    %p188 = por %p186, %p187
    %p189 = scmp.ne.s32.totalorder %s178, %s179
    %p190 = scmp.eq.s32.totalorder %s18, 0
    %p191 = por %p189, %p190
    %p192 = scmp.ne.s32.totalorder %s178, %s179
    %p193 = scmp.eq.s32.totalorder %s19, 1
    %p194 = por %p192, %p193
    %p196 = scmp.ne.s32.totalorder %s179, %s195
    %p197 = scmp.eq.s32.totalorder %s19, 0
    %p198 = por %p196, %p197
    %p199 = scmp.le.s32.totalorder 1, %s13
    %p200 = scmp.lt.s32.totalorder %s13, 3
    %p201 = pnand %p199, %p200
    %p202 = pneg %p201
    // Predicated region
    $region9: #{vgg_wavelet_block2.1} parent=5 // pred_check
      _
    $region10: #{vgg_wavelet_block2.1} parent=5 // pred_check_branch
      %204 = sbr.rel (%p201) target = $region12
    $region11: #{vgg_wavelet_block2.1} parent=5 // pred_region
      %s205 = ssub.s32 %s13, 1
      // Predicated region
      $region13: #{vgg_wavelet_block2.1} parent=11 // pred_check
        %p206 = pneg %p60
      $region14: #{vgg_wavelet_block2.1} parent=11 // pred_check_branch
        %208 = sbr.rel (%p206) target = $region16
      $region15: #{vgg_wavelet_block2.1} parent=11 // pred_region
        _
      $region16: #{vgg_wavelet_block2.1} parent=11 // pred_fallthru
        _
      // Predicated region
      $region17: #{vgg_wavelet_block2.1} parent=11 // pred_check
        %p209 = pneg %p81
      $region18: #{vgg_wavelet_block2.1} parent=11 // pred_check_branch
        %211 = sbr.rel (%p209) target = $region20
      $region19: #{vgg_wavelet_block2.1} parent=11 // pred_region
        _
      $region20: #{vgg_wavelet_block2.1} parent=11 // pred_fallthru
        _
      // Predicated region
      $region21: #{vgg_wavelet_block2.1} parent=11 // pred_check
        %p212 = pneg %p102
      $region22: #{vgg_wavelet_block2.1} parent=11 // pred_check_branch
        %214 = sbr.rel (%p212) target = $region24
      $region23: #{vgg_wavelet_block2.1} parent=11 // pred_region
        _
      $region24: #{vgg_wavelet_block2.1} parent=11 // pred_fallthru
        _
      // Predicated region
      $region25: #{vgg_wavelet_block2.1} parent=11 // pred_check
        %p215 = pneg %p123
      $region26: #{vgg_wavelet_block2.1} parent=11 // pred_check_branch
        %217 = sbr.rel (%p215) target = $region28
      $region27: #{vgg_wavelet_block2.1} parent=11 // pred_region
        _
      $region28: #{vgg_wavelet_block2.1} parent=11 // pred_fallthru
        _
      // Predicated region
      $region29: #{vgg_wavelet_block2.1} parent=11 // pred_check
        %p218 = pneg %p144
      $region30: #{vgg_wavelet_block2.1} parent=11 // pred_check_branch
        %220 = sbr.rel (%p218) target = $region32
      $region31: #{vgg_wavelet_block2.1} parent=11 // pred_region
        _
      $region32: #{vgg_wavelet_block2.1} parent=11 // pred_fallthru
        _
      // Predicated region
      $region33: #{vgg_wavelet_block2.1} parent=11 // pred_check
        %p221 = pneg %p165
      $region34: #{vgg_wavelet_block2.1} parent=11 // pred_check_branch
        %223 = sbr.rel (%p221) target = $region36
      $region35: #{vgg_wavelet_block2.1} parent=11 // pred_region
        _
      $region36: #{vgg_wavelet_block2.1} parent=11 // pred_fallthru
        _
    $region12: #{vgg_wavelet_block2.1} parent=5 // pred_fallthru
      _
    %p224 = scmp.lt.s32.totalorder %s13, 2
    // Predicated region
    $region37: #{vgg_wavelet_block2.1} parent=5 // pred_check
      %p225 = pneg %p224
    $region38: #{vgg_wavelet_block2.1} parent=5 // pred_check_branch
      %227 = sbr.rel (%p225) target = $region40
    $region39: #{vgg_wavelet_block2.1} parent=5 // pred_region
      // Predicated region
      $region41: #{vgg_wavelet_block2.1} parent=39 // pred_check
        %p228 = pneg %p33
      $region42: #{vgg_wavelet_block2.1} parent=39 // pred_check_branch
        %230 = sbr.rel (%p228) target = $region44
      $region43: #{vgg_wavelet_block2.1} parent=39 // pred_region
        %p231 = scmp.lt.s32.totalorder %s13, 1
        %s232 = scalar_select %p231, %s13, 1
        %s233 = smul.addr %s232, 32
        %s234 = smul.addr %s233, 4
        %s235 = scalar_lea.vmem %s0, %s234
      $region44: #{vgg_wavelet_block2.1} parent=39 // pred_fallthru
        _
    $region40: #{vgg_wavelet_block2.1} parent=5 // pred_fallthru
      _
    %p236 = scmp.le.s32.totalorder 1, %s13
    %p237 = scmp.lt.s32.totalorder %s13, 3
    %p238 = pnand %p236, %p237
    %p239 = pneg %p238
    // Predicated region
    $region45: #{vgg_wavelet_block2.1} parent=5 // pred_check
      _
    $region46: #{vgg_wavelet_block2.1} parent=5 // pred_check_branch
      %241 = sbr.rel (%p238) target = $region48
    $region47: #{vgg_wavelet_block2.1} parent=5 // pred_region
      %s242 = ssub.s32 %s13, 1
      %p243 = scmp.lt.s32.totalorder %s18, 1
      %s244 = scalar_select %p243, %s18, 1
      %s245 = smul.addr %s244, 32
      %s246 = smul.addr %s245, 4
      %s247 = scalar_lea.vmem %s0, %s246
      %p248 = pneg %p39
      %p249 = pneg %p36
      %p250 = pneg %p60
      %p251 = pneg %p57
      %p252 = pneg %p81
      %p253 = pneg %p78
      %p254 = pneg %p102
      %p255 = pneg %p99
      %p256 = pneg %p123
      %p257 = pneg %p120
      %p258 = pneg %p144
      %p259 = pneg %p141
      %p260 = pneg %p165
      %p261 = pneg %p162
      %p262 = pneg %p191
      %p263 = pneg %p188
      %p264 = scmp.lt.s32.totalorder %s18, 1
      %s265 = scalar_select %p264, %s18, 1
      %s266 = smul.addr %s265, 8
      %s267 = smul.addr %s266, 8
      %s268 = scalar_lea.vmem %s7, %s267
      %p269 = scmp.lt.s32.totalorder %s18, 1
      %s270 = scalar_select %p269, %s18, 1
      %s271 = smul.addr %s270, 32
      %s272 = smul.addr %s271, 4
      %s273 = scalar_lea.vmem %s0, %s272
      %p274 = scmp.lt.s32.totalorder %s18, 1
      %s275 = scalar_select %p274, %s18, 1
      %s276 = smul.addr %s275, 8
      %s277 = smul.addr %s276, 8
      %s278 = scalar_lea.vmem %s7, %s277
      %vm280 = vcmask 27648
      %281 = vst.msk [vmem:[#allocation2] sm:$0xf] %vm280, 0
      %282 = vst.msk [vmem:[#allocation2 + $0x4] sm:$0xf] %vm280, 0
      %283 = vst.msk [vmem:[#allocation2 + $0x8] sm:$0xf] %vm280, 0
      %284 = vst.msk [vmem:[#allocation2 + $0xc] sm:$0xf] %vm280, 0
      %s285 = scalar_lea.vmem [#allocation2], 272
      %286 = vst.msk [vmem:[%s285] sm:$0xf] %vm280, 0
      %287 = vst.msk [vmem:[%s285 + $0x4] sm:$0xf] %vm280, 0
      %288 = vst.msk [vmem:[%s285 + $0x8] sm:$0xf] %vm280, 0
      %289 = vst.msk [vmem:[%s285 + $0xc] sm:$0xf] %vm280, 0
      %290 = vst.msk [vmem:[#allocation2] sm:$0xf] %vm280, 0
      %291 = vst.msk [vmem:[#allocation2 + $0x10] sm:$0xf] %vm280, 0
      %292 = vst.msk [vmem:[#allocation2 + $0x20] sm:$0xf] %vm280, 0
      %293 = vst.msk [vmem:[#allocation2 + $0x30] sm:$0xf] %vm280, 0
      %294 = vst.msk [vmem:[#allocation2 + $0x40] sm:$0xf] %vm280, 0
      %295 = vst.msk [vmem:[#allocation2 + $0x50] sm:$0xf] %vm280, 0
      %296 = vst.msk [vmem:[#allocation2 + $0x60] sm:$0xf] %vm280, 0
      %297 = vst.msk [vmem:[#allocation2 + $0x70] sm:$0xf] %vm280, 0
      %298 = vst.msk [vmem:[#allocation2 + $0x80] sm:$0xf] %vm280, 0
      %299 = vst.msk [vmem:[#allocation2 + $0x90] sm:$0xf] %vm280, 0
      %300 = vst.msk [vmem:[#allocation2 + $0xa0] sm:$0xf] %vm280, 0
      %301 = vst.msk [vmem:[#allocation2 + $0xb0] sm:$0xf] %vm280, 0
      %302 = vst.msk [vmem:[#allocation2 + $0xc0] sm:$0xf] %vm280, 0
      %303 = vst.msk [vmem:[#allocation2 + $0xd0] sm:$0xf] %vm280, 0
      %304 = vst.msk [vmem:[#allocation2 + $0xe0] sm:$0xf] %vm280, 0
      %305 = vst.msk [vmem:[#allocation2 + $0xf0] sm:$0xf] %vm280, 0
      %306 = vst.msk [vmem:[#allocation2 + $0x100] sm:$0xf] %vm280, 0
      %307 = vst.msk [vmem:[#allocation2 + $0x110] sm:$0xf] %vm280, 0
      %308 = vst.msk [vmem:[#allocation2 + $0xc] sm:$0xf] %vm280, 0
      %309 = vst.msk [vmem:[#allocation2 + $0x1c] sm:$0xf] %vm280, 0
      %310 = vst.msk [vmem:[#allocation2 + $0x2c] sm:$0xf] %vm280, 0
      %311 = vst.msk [vmem:[#allocation2 + $0x3c] sm:$0xf] %vm280, 0
      %312 = vst.msk [vmem:[#allocation2 + $0x4c] sm:$0xf] %vm280, 0
      %313 = vst.msk [vmem:[#allocation2 + $0x5c] sm:$0xf] %vm280, 0
      %314 = vst.msk [vmem:[#allocation2 + $0x6c] sm:$0xf] %vm280, 0
      %315 = vst.msk [vmem:[#allocation2 + $0x7c] sm:$0xf] %vm280, 0
      %316 = vst.msk [vmem:[#allocation2 + $0x8c] sm:$0xf] %vm280, 0
      %317 = vst.msk [vmem:[#allocation2 + $0x9c] sm:$0xf] %vm280, 0
      %318 = vst.msk [vmem:[#allocation2 + $0xac] sm:$0xf] %vm280, 0
      %319 = vst.msk [vmem:[#allocation2 + $0xbc] sm:$0xf] %vm280, 0
      %320 = vst.msk [vmem:[#allocation2 + $0xcc] sm:$0xf] %vm280, 0
      %321 = vst.msk [vmem:[#allocation2 + $0xdc] sm:$0xf] %vm280, 0
      %322 = vst.msk [vmem:[#allocation2 + $0xec] sm:$0xf] %vm280, 0
      %323 = vst.msk [vmem:[#allocation2 + $0xfc] sm:$0xf] %vm280, 0
      %324 = vst.msk [vmem:[#allocation2 + $0x10c] sm:$0xf] %vm280, 0
      %325 = vst.msk [vmem:[#allocation2 + $0x11c] sm:$0xf] %vm280, 0
      %vm326 = vcmask 60416
      %327 = vst.msk [vmem:[#allocation3] sm:$0xf] %vm326, 0
      %328 = vst.msk [vmem:[#allocation3 + $0x4] sm:$0xf] %vm326, 0
      %329 = vst.msk [vmem:[#allocation3 + $0x8] sm:$0xf] %vm326, 0
      %330 = vst.msk [vmem:[#allocation3 + $0xc] sm:$0xf] %vm326, 0
      %s331 = scalar_lea.vmem [#allocation3], 272
      %332 = vst.msk [vmem:[%s331] sm:$0xf] %vm326, 0
      %333 = vst.msk [vmem:[%s331 + $0x4] sm:$0xf] %vm326, 0
      %334 = vst.msk [vmem:[%s331 + $0x8] sm:$0xf] %vm326, 0
      %335 = vst.msk [vmem:[%s331 + $0xc] sm:$0xf] %vm326, 0
      %336 = vst.msk [vmem:[#allocation3] sm:$0xf] %vm326, 0
      %337 = vst.msk [vmem:[#allocation3 + $0x10] sm:$0xf] %vm326, 0
      %338 = vst.msk [vmem:[#allocation3 + $0x20] sm:$0xf] %vm326, 0
      %339 = vst.msk [vmem:[#allocation3 + $0x30] sm:$0xf] %vm326, 0
      %340 = vst.msk [vmem:[#allocation3 + $0x40] sm:$0xf] %vm326, 0
      %341 = vst.msk [vmem:[#allocation3 + $0x50] sm:$0xf] %vm326, 0
      %342 = vst.msk [vmem:[#allocation3 + $0x60] sm:$0xf] %vm326, 0
      %343 = vst.msk [vmem:[#allocation3 + $0x70] sm:$0xf] %vm326, 0
      %344 = vst.msk [vmem:[#allocation3 + $0x80] sm:$0xf] %vm326, 0
      %345 = vst.msk [vmem:[#allocation3 + $0x90] sm:$0xf] %vm326, 0
      %346 = vst.msk [vmem:[#allocation3 + $0xa0] sm:$0xf] %vm326, 0
      %347 = vst.msk [vmem:[#allocation3 + $0xb0] sm:$0xf] %vm326, 0
      %348 = vst.msk [vmem:[#allocation3 + $0xc0] sm:$0xf] %vm326, 0
      %349 = vst.msk [vmem:[#allocation3 + $0xd0] sm:$0xf] %vm326, 0
      %350 = vst.msk [vmem:[#allocation3 + $0xe0] sm:$0xf] %vm326, 0
      %351 = vst.msk [vmem:[#allocation3 + $0xf0] sm:$0xf] %vm326, 0
      %352 = vst.msk [vmem:[#allocation3 + $0x100] sm:$0xf] %vm326, 0
      %353 = vst.msk [vmem:[#allocation3 + $0x110] sm:$0xf] %vm326, 0
      %354 = vst.msk [vmem:[#allocation3 + $0xc] sm:$0xf] %vm326, 0
      %355 = vst.msk [vmem:[#allocation3 + $0x1c] sm:$0xf] %vm326, 0
      %356 = vst.msk [vmem:[#allocation3 + $0x2c] sm:$0xf] %vm326, 0
      %357 = vst.msk [vmem:[#allocation3 + $0x3c] sm:$0xf] %vm326, 0
      %358 = vst.msk [vmem:[#allocation3 + $0x4c] sm:$0xf] %vm326, 0
      %359 = vst.msk [vmem:[#allocation3 + $0x5c] sm:$0xf] %vm326, 0
      %360 = vst.msk [vmem:[#allocation3 + $0x6c] sm:$0xf] %vm326, 0
      %361 = vst.msk [vmem:[#allocation3 + $0x7c] sm:$0xf] %vm326, 0
      %362 = vst.msk [vmem:[#allocation3 + $0x8c] sm:$0xf] %vm326, 0
      %363 = vst.msk [vmem:[#allocation3 + $0x9c] sm:$0xf] %vm326, 0
      %364 = vst.msk [vmem:[#allocation3 + $0xac] sm:$0xf] %vm326, 0
      %365 = vst.msk [vmem:[#allocation3 + $0xbc] sm:$0xf] %vm326, 0
      %366 = vst.msk [vmem:[#allocation3 + $0xcc] sm:$0xf] %vm326, 0
      %367 = vst.msk [vmem:[#allocation3 + $0xdc] sm:$0xf] %vm326, 0
      %368 = vst.msk [vmem:[#allocation3 + $0xec] sm:$0xf] %vm326, 0
      %369 = vst.msk [vmem:[#allocation3 + $0xfc] sm:$0xf] %vm326, 0
      %370 = vst.msk [vmem:[#allocation3 + $0x10c] sm:$0xf] %vm326, 0
      %371 = vst.msk [vmem:[#allocation3 + $0x11c] sm:$0xf] %vm326, 0
      %v372 = vld [vmem:[%s273] sm:$0xf]
      %v373 = vld [vmem:[%s273 + $0x4] sm:$0xf]
      %v374 = vld [vmem:[%s273 + $0x8] sm:$0xf]
      %v375 = vld [vmem:[%s273 + $0xc] sm:$0xf]
      %v376 = vld [vmem:[%s273 + $0x10] sm:$0xf]
      %v377 = vld [vmem:[%s273 + $0x14] sm:$0xf]
      %v378 = vld [vmem:[%s273 + $0x18] sm:$0xf]
      %v379 = vld [vmem:[%s273 + $0x1c] sm:$0xf]
      %v380 = vld [vmem:[%s273 + $0x20] sm:$0xf]
      %v381 = vld [vmem:[%s273 + $0x24] sm:$0xf]
      %v382 = vld [vmem:[%s273 + $0x28] sm:$0xf]
      %v383 = vld [vmem:[%s273 + $0x2c] sm:$0xf]
      %v384 = vld [vmem:[%s273 + $0x30] sm:$0xf]
      %v385 = vld [vmem:[%s273 + $0x34] sm:$0xf]
      %v386 = vld [vmem:[%s273 + $0x38] sm:$0xf]
      %v387 = vld [vmem:[%s273 + $0x3c] sm:$0xf]
      %v388 = vld [vmem:[%s273 + $0x40] sm:$0xf]
      %v389 = vld [vmem:[%s273 + $0x44] sm:$0xf]
      %v390 = vld [vmem:[%s273 + $0x48] sm:$0xf]
      %v391 = vld [vmem:[%s273 + $0x4c] sm:$0xf]
      %v392 = vld [vmem:[%s273 + $0x50] sm:$0xf]
      %v393 = vld [vmem:[%s273 + $0x54] sm:$0xf]
      %v394 = vld [vmem:[%s273 + $0x58] sm:$0xf]
      %v395 = vld [vmem:[%s273 + $0x5c] sm:$0xf]
      %v396 = vld [vmem:[%s273 + $0x60] sm:$0xf]
      %v397 = vld [vmem:[%s273 + $0x64] sm:$0xf]
      %v398 = vld [vmem:[%s273 + $0x68] sm:$0xf]
      %v399 = vld [vmem:[%s273 + $0x6c] sm:$0xf]
      %v400 = vld [vmem:[%s273 + $0x70] sm:$0xf]
      %v401 = vld [vmem:[%s273 + $0x74] sm:$0xf]
      %v402 = vld [vmem:[%s273 + $0x78] sm:$0xf]
      %v403 = vld [vmem:[%s273 + $0x7c] sm:$0xf]
      %s404 = scalar_lea.vmem [#allocation2], 16
      %405 = vst.msk [vmem:[%s404 + $0x4] sm:$0xf] %vm280, %v372
      %406 = vst.msk [vmem:[%s404 + $0x8] sm:$0xf] %vm280, %v373
      %407 = vst.msk [vmem:[%s404 + $0x14] sm:$0xf] %vm280, %v374
      %408 = vst.msk [vmem:[%s404 + $0x18] sm:$0xf] %vm280, %v375
      %409 = vst.msk [vmem:[%s404 + $0x24] sm:$0xf] %vm280, %v376
      %410 = vst.msk [vmem:[%s404 + $0x28] sm:$0xf] %vm280, %v377
      %411 = vst.msk [vmem:[%s404 + $0x34] sm:$0xf] %vm280, %v378
      %412 = vst.msk [vmem:[%s404 + $0x38] sm:$0xf] %vm280, %v379
      %413 = vst.msk [vmem:[%s404 + $0x44] sm:$0xf] %vm280, %v380
      %414 = vst.msk [vmem:[%s404 + $0x48] sm:$0xf] %vm280, %v381
      %415 = vst.msk [vmem:[%s404 + $0x54] sm:$0xf] %vm280, %v382
      %416 = vst.msk [vmem:[%s404 + $0x58] sm:$0xf] %vm280, %v383
      %417 = vst.msk [vmem:[%s404 + $0x64] sm:$0xf] %vm280, %v384
      %418 = vst.msk [vmem:[%s404 + $0x68] sm:$0xf] %vm280, %v385
      %419 = vst.msk [vmem:[%s404 + $0x74] sm:$0xf] %vm280, %v386
      %420 = vst.msk [vmem:[%s404 + $0x78] sm:$0xf] %vm280, %v387
      %421 = vst.msk [vmem:[%s404 + $0x84] sm:$0xf] %vm280, %v388
      %422 = vst.msk [vmem:[%s404 + $0x88] sm:$0xf] %vm280, %v389
      %423 = vst.msk [vmem:[%s404 + $0x94] sm:$0xf] %vm280, %v390
      %424 = vst.msk [vmem:[%s404 + $0x98] sm:$0xf] %vm280, %v391
      %425 = vst.msk [vmem:[%s404 + $0xa4] sm:$0xf] %vm280, %v392
      %426 = vst.msk [vmem:[%s404 + $0xa8] sm:$0xf] %vm280, %v393
      %427 = vst.msk [vmem:[%s404 + $0xb4] sm:$0xf] %vm280, %v394
      %428 = vst.msk [vmem:[%s404 + $0xb8] sm:$0xf] %vm280, %v395
      %429 = vst.msk [vmem:[%s404 + $0xc4] sm:$0xf] %vm280, %v396
      %430 = vst.msk [vmem:[%s404 + $0xc8] sm:$0xf] %vm280, %v397
      %431 = vst.msk [vmem:[%s404 + $0xd4] sm:$0xf] %vm280, %v398
      %432 = vst.msk [vmem:[%s404 + $0xd8] sm:$0xf] %vm280, %v399
      %433 = vst.msk [vmem:[%s404 + $0xe4] sm:$0xf] %vm280, %v400
      %434 = vst.msk [vmem:[%s404 + $0xe8] sm:$0xf] %vm280, %v401
      %435 = vst.msk [vmem:[%s404 + $0xf4] sm:$0xf] %vm280, %v402
      %436 = vst.msk [vmem:[%s404 + $0xf8] sm:$0xf] %vm280, %v403
      %v437 = vld [vmem:[#allocation2] sm:$0x8]
      %v438 = vld [vmem:[#allocation2 + $0x4] sm:$0xf]
      %v439 = vld [vmem:[#allocation2 + $0x8] sm:$0xf]
      %v440 = vld [vmem:[#allocation2 + $0x10] sm:$0x8]
      %v441 = vld [vmem:[#allocation2 + $0x14] sm:$0xf]
      %v442 = vld [vmem:[#allocation2 + $0x18] sm:$0xf]
      %v443 = vld [vmem:[#allocation2 + $0x20] sm:$0x8]
      %v444 = vld [vmem:[#allocation2 + $0x24] sm:$0xf]
      %v445 = vld [vmem:[#allocation2 + $0x28] sm:$0xf]
      %v446 = vld [vmem:[#allocation2 + $0x30] sm:$0x8]
      %v447 = vld [vmem:[#allocation2 + $0x34] sm:$0xf]
      %v448 = vld [vmem:[#allocation2 + $0x38] sm:$0xf]
      %v449 = vld [vmem:[#allocation2 + $0x40] sm:$0x8]
      %v450 = vld [vmem:[#allocation2 + $0x44] sm:$0xf]
      %v451 = vld [vmem:[#allocation2 + $0x48] sm:$0xf]
      %v452 = vld [vmem:[#allocation2 + $0x50] sm:$0x8]
      %v453 = vld [vmem:[#allocation2 + $0x54] sm:$0xf]
      %v454 = vld [vmem:[#allocation2 + $0x58] sm:$0xf]
      %v455 = vld [vmem:[#allocation2 + $0x60] sm:$0x8]
      %v456 = vld [vmem:[#allocation2 + $0x64] sm:$0xf]
      %v457 = vld [vmem:[#allocation2 + $0x68] sm:$0xf]
      %v458 = vld [vmem:[#allocation2 + $0x70] sm:$0x8]
      %v459 = vld [vmem:[#allocation2 + $0x74] sm:$0xf]
      %v460 = vld [vmem:[#allocation2 + $0x78] sm:$0xf]
      %v461 = vld [vmem:[#allocation2 + $0x80] sm:$0x8]
      %v462 = vld [vmem:[#allocation2 + $0x84] sm:$0xf]
      %v463 = vld [vmem:[#allocation2 + $0x88] sm:$0xf]
      %v464 = vld [vmem:[#allocation2 + $0x90] sm:$0x8]
      %v465 = vld [vmem:[#allocation2 + $0x94] sm:$0xf]
      %v466 = vld [vmem:[#allocation2 + $0x98] sm:$0xf]
      %v467 = vld [vmem:[#allocation2 + $0xa0] sm:$0x8]
      %v468 = vld [vmem:[#allocation2 + $0xa4] sm:$0xf]
      %v469 = vld [vmem:[#allocation2 + $0xa8] sm:$0xf]
      %v470 = vld [vmem:[#allocation2 + $0xb0] sm:$0x8]
      %v471 = vld [vmem:[#allocation2 + $0xb4] sm:$0xf]
      %v472 = vld [vmem:[#allocation2 + $0xb8] sm:$0xf]
      %v473 = vld [vmem:[#allocation2 + $0xc0] sm:$0x8]
      %v474 = vld [vmem:[#allocation2 + $0xc4] sm:$0xf]
      %v475 = vld [vmem:[#allocation2 + $0xc8] sm:$0xf]
      %v476 = vld [vmem:[#allocation2 + $0xd0] sm:$0x8]
      %v477 = vld [vmem:[#allocation2 + $0xd4] sm:$0xf]
      %v478 = vld [vmem:[#allocation2 + $0xd8] sm:$0xf]
      %v479 = vld [vmem:[#allocation2 + $0xe0] sm:$0x8]
      %v480 = vld [vmem:[#allocation2 + $0xe4] sm:$0xf]
      %v481 = vld [vmem:[#allocation2 + $0xe8] sm:$0xf]
      %v482 = vld [vmem:[#allocation2 + $0xf0] sm:$0x8]
      %v483 = vld [vmem:[#allocation2 + $0xf4] sm:$0xf]
      %v484 = vld [vmem:[#allocation2 + $0xf8] sm:$0xf]
      %vm485 = vsmask.f32 256
      %vm486 = vsmask.f32 4368
      %vm487 = vmor %vm485, %vm486
      %v489 = vshrl.u32 %v437, 16
      %v491 = vrot.slane %v489, 7
      %v492 = vrot.slane %v491, 4
      %v494 = vshrl.u32 %v438, 16
      %v496 = vrot.slane %v494, 7
      %v497 = vshll.u32 %v438, 16
      %v499 = vor.u32 %v496, %v497
      %v500 = vsel %vm487, %v492, %v499
      %v501 = vrot.slane %v496, 4
      %v503 = vshrl.u32 %v439, 16
      %v505 = vrot.slane %v503, 7
      %v506 = vshll.u32 %v439, 16
      %v508 = vor.u32 %v505, %v506
      %v509 = vsel %vm487, %v501, %v508
      %v511 = vshrl.u32 %v440, 16
      %v513 = vrot.slane %v511, 7
      %v514 = vrot.slane %v513, 4
      %v516 = vshrl.u32 %v441, 16
      %v518 = vrot.slane %v516, 7
      %v519 = vshll.u32 %v441, 16
      %v521 = vor.u32 %v518, %v519
      %v522 = vsel %vm487, %v514, %v521
      %v523 = vrot.slane %v518, 4
      %v525 = vshrl.u32 %v442, 16
      %v527 = vrot.slane %v525, 7
      %v528 = vshll.u32 %v442, 16
      %v530 = vor.u32 %v527, %v528
      %v531 = vsel %vm487, %v523, %v530
      %v533 = vshrl.u32 %v443, 16
      %v535 = vrot.slane %v533, 7
      %v536 = vrot.slane %v535, 4
      %v538 = vshrl.u32 %v444, 16
      %v540 = vrot.slane %v538, 7
      %v541 = vshll.u32 %v444, 16
      %v543 = vor.u32 %v540, %v541
      %v544 = vsel %vm487, %v536, %v543
      %v545 = vrot.slane %v540, 4
      %v547 = vshrl.u32 %v445, 16
      %v549 = vrot.slane %v547, 7
      %v550 = vshll.u32 %v445, 16
      %v552 = vor.u32 %v549, %v550
      %v553 = vsel %vm487, %v545, %v552
      %v555 = vshrl.u32 %v446, 16
      %v557 = vrot.slane %v555, 7
      %v558 = vrot.slane %v557, 4
      %v560 = vshrl.u32 %v447, 16
      %v562 = vrot.slane %v560, 7
      %v563 = vshll.u32 %v447, 16
      %v565 = vor.u32 %v562, %v563
      %v566 = vsel %vm487, %v558, %v565
      %v567 = vrot.slane %v562, 4
      %v569 = vshrl.u32 %v448, 16
      %v571 = vrot.slane %v569, 7
      %v572 = vshll.u32 %v448, 16
      %v574 = vor.u32 %v571, %v572
      %v575 = vsel %vm487, %v567, %v574
      %v577 = vshrl.u32 %v449, 16
      %v579 = vrot.slane %v577, 7
      %v580 = vrot.slane %v579, 4
      %v582 = vshrl.u32 %v450, 16
      %v584 = vrot.slane %v582, 7
      %v585 = vshll.u32 %v450, 16
      %v587 = vor.u32 %v584, %v585
      %v588 = vsel %vm487, %v580, %v587
      %v589 = vrot.slane %v584, 4
      %v591 = vshrl.u32 %v451, 16
      %v593 = vrot.slane %v591, 7
      %v594 = vshll.u32 %v451, 16
      %v596 = vor.u32 %v593, %v594
      %v597 = vsel %vm487, %v589, %v596
      %v599 = vshrl.u32 %v452, 16
      %v601 = vrot.slane %v599, 7
      %v602 = vrot.slane %v601, 4
      %v604 = vshrl.u32 %v453, 16
      %v606 = vrot.slane %v604, 7
      %v607 = vshll.u32 %v453, 16
      %v609 = vor.u32 %v606, %v607
      %v610 = vsel %vm487, %v602, %v609
      %v611 = vrot.slane %v606, 4
      %v613 = vshrl.u32 %v454, 16
      %v615 = vrot.slane %v613, 7
      %v616 = vshll.u32 %v454, 16
      %v618 = vor.u32 %v615, %v616
      %v619 = vsel %vm487, %v611, %v618
      %v621 = vshrl.u32 %v455, 16
      %v623 = vrot.slane %v621, 7
      %v624 = vrot.slane %v623, 4
      %v626 = vshrl.u32 %v456, 16
      %v628 = vrot.slane %v626, 7
      %v629 = vshll.u32 %v456, 16
      %v631 = vor.u32 %v628, %v629
      %v632 = vsel %vm487, %v624, %v631
      %v633 = vrot.slane %v628, 4
      %v635 = vshrl.u32 %v457, 16
      %v637 = vrot.slane %v635, 7
      %v638 = vshll.u32 %v457, 16
      %v640 = vor.u32 %v637, %v638
      %v641 = vsel %vm487, %v633, %v640
      %v643 = vshrl.u32 %v458, 16
      %v645 = vrot.slane %v643, 7
      %v646 = vrot.slane %v645, 4
      %v648 = vshrl.u32 %v459, 16
      %v650 = vrot.slane %v648, 7
      %v651 = vshll.u32 %v459, 16
      %v653 = vor.u32 %v650, %v651
      %v654 = vsel %vm487, %v646, %v653
      %v655 = vrot.slane %v650, 4
      %v657 = vshrl.u32 %v460, 16
      %v659 = vrot.slane %v657, 7
      %v660 = vshll.u32 %v460, 16
      %v662 = vor.u32 %v659, %v660
      %v663 = vsel %vm487, %v655, %v662
      %v665 = vshrl.u32 %v461, 16
      %v667 = vrot.slane %v665, 7
      %v668 = vrot.slane %v667, 4
      %v670 = vshrl.u32 %v462, 16
      %v672 = vrot.slane %v670, 7
      %v673 = vshll.u32 %v462, 16
      %v675 = vor.u32 %v672, %v673
      %v676 = vsel %vm487, %v668, %v675
      %v677 = vrot.slane %v672, 4
      %v679 = vshrl.u32 %v463, 16
      %v681 = vrot.slane %v679, 7
      %v682 = vshll.u32 %v463, 16
      %v684 = vor.u32 %v681, %v682
      %v685 = vsel %vm487, %v677, %v684
      %v687 = vshrl.u32 %v464, 16
      %v689 = vrot.slane %v687, 7
      %v690 = vrot.slane %v689, 4
      %v692 = vshrl.u32 %v465, 16
      %v694 = vrot.slane %v692, 7
      %v695 = vshll.u32 %v465, 16
      %v697 = vor.u32 %v694, %v695
      %v698 = vsel %vm487, %v690, %v697
      %v699 = vrot.slane %v694, 4
      %v701 = vshrl.u32 %v466, 16
      %v703 = vrot.slane %v701, 7
      %v704 = vshll.u32 %v466, 16
      %v706 = vor.u32 %v703, %v704
      %v707 = vsel %vm487, %v699, %v706
      %v709 = vshrl.u32 %v467, 16
      %v711 = vrot.slane %v709, 7
      %v712 = vrot.slane %v711, 4
      %v714 = vshrl.u32 %v468, 16
      %v716 = vrot.slane %v714, 7
      %v717 = vshll.u32 %v468, 16
      %v719 = vor.u32 %v716, %v717
      %v720 = vsel %vm487, %v712, %v719
      %v721 = vrot.slane %v716, 4
      %v723 = vshrl.u32 %v469, 16
      %v725 = vrot.slane %v723, 7
      %v726 = vshll.u32 %v469, 16
      %v728 = vor.u32 %v725, %v726
      %v729 = vsel %vm487, %v721, %v728
      %v731 = vshrl.u32 %v470, 16
      %v733 = vrot.slane %v731, 7
      %v734 = vrot.slane %v733, 4
      %v736 = vshrl.u32 %v471, 16
      %v738 = vrot.slane %v736, 7
      %v739 = vshll.u32 %v471, 16
      %v741 = vor.u32 %v738, %v739
      %v742 = vsel %vm487, %v734, %v741
      %v743 = vrot.slane %v738, 4
      %v745 = vshrl.u32 %v472, 16
      %v747 = vrot.slane %v745, 7
      %v748 = vshll.u32 %v472, 16
      %v750 = vor.u32 %v747, %v748
      %v751 = vsel %vm487, %v743, %v750
      %v753 = vshrl.u32 %v473, 16
      %v755 = vrot.slane %v753, 7
      %v756 = vrot.slane %v755, 4
      %v758 = vshrl.u32 %v474, 16
      %v760 = vrot.slane %v758, 7
      %v761 = vshll.u32 %v474, 16
      %v763 = vor.u32 %v760, %v761
      %v764 = vsel %vm487, %v756, %v763
      %v765 = vrot.slane %v760, 4
      %v767 = vshrl.u32 %v475, 16
      %v769 = vrot.slane %v767, 7
      %v770 = vshll.u32 %v475, 16
      %v772 = vor.u32 %v769, %v770
      %v773 = vsel %vm487, %v765, %v772
      %v775 = vshrl.u32 %v476, 16
      %v777 = vrot.slane %v775, 7
      %v778 = vrot.slane %v777, 4
      %v780 = vshrl.u32 %v477, 16
      %v782 = vrot.slane %v780, 7
      %v783 = vshll.u32 %v477, 16
      %v785 = vor.u32 %v782, %v783
      %v786 = vsel %vm487, %v778, %v785
      %v787 = vrot.slane %v782, 4
      %v789 = vshrl.u32 %v478, 16
      %v791 = vrot.slane %v789, 7
      %v792 = vshll.u32 %v478, 16
      %v794 = vor.u32 %v791, %v792
      %v795 = vsel %vm487, %v787, %v794
      %v797 = vshrl.u32 %v479, 16
      %v799 = vrot.slane %v797, 7
      %v800 = vrot.slane %v799, 4
      %v802 = vshrl.u32 %v480, 16
      %v804 = vrot.slane %v802, 7
      %v805 = vshll.u32 %v480, 16
      %v807 = vor.u32 %v804, %v805
      %v808 = vsel %vm487, %v800, %v807
      %v809 = vrot.slane %v804, 4
      %v811 = vshrl.u32 %v481, 16
      %v813 = vrot.slane %v811, 7
      %v814 = vshll.u32 %v481, 16
      %v816 = vor.u32 %v813, %v814
      %v817 = vsel %vm487, %v809, %v816
      %v819 = vshrl.u32 %v482, 16
      %v821 = vrot.slane %v819, 7
      %v822 = vrot.slane %v821, 4
      %v824 = vshrl.u32 %v483, 16
      %v826 = vrot.slane %v824, 7
      %v827 = vshll.u32 %v483, 16
      %v829 = vor.u32 %v826, %v827
      %v830 = vsel %vm487, %v822, %v829
      %v831 = vrot.slane %v826, 4
      %v833 = vshrl.u32 %v484, 16
      %v835 = vrot.slane %v833, 7
      %v836 = vshll.u32 %v484, 16
      %v838 = vor.u32 %v835, %v836
      %v839 = vsel %vm487, %v831, %v838
      %v840 = vld [vmem:[#allocation2 + $0xc] sm:$0x1]
      %v841 = vld [vmem:[#allocation2 + $0x1c] sm:$0x1]
      %v842 = vld [vmem:[#allocation2 + $0x2c] sm:$0x1]
      %v843 = vld [vmem:[#allocation2 + $0x3c] sm:$0x1]
      %v844 = vld [vmem:[#allocation2 + $0x4c] sm:$0x1]
      %v845 = vld [vmem:[#allocation2 + $0x5c] sm:$0x1]
      %v846 = vld [vmem:[#allocation2 + $0x6c] sm:$0x1]
      %v847 = vld [vmem:[#allocation2 + $0x7c] sm:$0x1]
      %v848 = vld [vmem:[#allocation2 + $0x8c] sm:$0x1]
      %v849 = vld [vmem:[#allocation2 + $0x9c] sm:$0x1]
      %v850 = vld [vmem:[#allocation2 + $0xac] sm:$0x1]
      %v851 = vld [vmem:[#allocation2 + $0xbc] sm:$0x1]
      %v852 = vld [vmem:[#allocation2 + $0xcc] sm:$0x1]
      %v853 = vld [vmem:[#allocation2 + $0xdc] sm:$0x1]
      %v854 = vld [vmem:[#allocation2 + $0xec] sm:$0x1]
      %v855 = vld [vmem:[#allocation2 + $0xfc] sm:$0x1]
      %vm856 = vsmask.f32 3328
      %vm857 = vsmask.f32 7440
      %vm858 = vmor %vm856, %vm857
      %v859 = vrot.slane %v494, 4
      %v860 = vrot.slane %v497, 5
      %v861 = vor.u32 %v859, %v860
      %v862 = vrot.slane %v861, 4
      %v863 = vrot.slane %v506, 5
      %v864 = vsel %vm858, %v862, %v863
      %v865 = vrot.slane %v503, 4
      %v866 = vor.u32 %v865, %v863
      %v867 = vrot.slane %v866, 4
      %v869 = vshll.u32 %v840, 16
      %v871 = vrot.slane %v869, 5
      %v872 = vsel %vm858, %v867, %v871
      %v873 = vrot.slane %v516, 4
      %v874 = vrot.slane %v519, 5
      %v875 = vor.u32 %v873, %v874
      %v876 = vrot.slane %v875, 4
      %v877 = vrot.slane %v528, 5
      %v878 = vsel %vm858, %v876, %v877
      %v879 = vrot.slane %v525, 4
      %v880 = vor.u32 %v879, %v877
      %v881 = vrot.slane %v880, 4
      %v883 = vshll.u32 %v841, 16
      %v885 = vrot.slane %v883, 5
      %v886 = vsel %vm858, %v881, %v885
      %v887 = vrot.slane %v538, 4
      %v888 = vrot.slane %v541, 5
      %v889 = vor.u32 %v887, %v888
      %v890 = vrot.slane %v889, 4
      %v891 = vrot.slane %v550, 5
      %v892 = vsel %vm858, %v890, %v891
      %v893 = vrot.slane %v547, 4
      %v894 = vor.u32 %v893, %v891
      %v895 = vrot.slane %v894, 4
      %v897 = vshll.u32 %v842, 16
      %v899 = vrot.slane %v897, 5
      %v900 = vsel %vm858, %v895, %v899
      %v901 = vrot.slane %v560, 4
      %v902 = vrot.slane %v563, 5
      %v903 = vor.u32 %v901, %v902
      %v904 = vrot.slane %v903, 4
      %v905 = vrot.slane %v572, 5
      %v906 = vsel %vm858, %v904, %v905
      %v907 = vrot.slane %v569, 4
      %v908 = vor.u32 %v907, %v905
      %v909 = vrot.slane %v908, 4
      %v911 = vshll.u32 %v843, 16
      %v913 = vrot.slane %v911, 5
      %v914 = vsel %vm858, %v909, %v913
      %v915 = vrot.slane %v582, 4
      %v916 = vrot.slane %v585, 5
      %v917 = vor.u32 %v915, %v916
      %v918 = vrot.slane %v917, 4
      %v919 = vrot.slane %v594, 5
      %v920 = vsel %vm858, %v918, %v919
      %v921 = vrot.slane %v591, 4
      %v922 = vor.u32 %v921, %v919
      %v923 = vrot.slane %v922, 4
      %v925 = vshll.u32 %v844, 16
      %v927 = vrot.slane %v925, 5
      %v928 = vsel %vm858, %v923, %v927
      %v929 = vrot.slane %v604, 4
      %v930 = vrot.slane %v607, 5
      %v931 = vor.u32 %v929, %v930
      %v932 = vrot.slane %v931, 4
      %v933 = vrot.slane %v616, 5
      %v934 = vsel %vm858, %v932, %v933
      %v935 = vrot.slane %v613, 4
      %v936 = vor.u32 %v935, %v933
      %v937 = vrot.slane %v936, 4
      %v939 = vshll.u32 %v845, 16
      %v941 = vrot.slane %v939, 5
      %v942 = vsel %vm858, %v937, %v941
      %v943 = vrot.slane %v626, 4
      %v944 = vrot.slane %v629, 5
      %v945 = vor.u32 %v943, %v944
      %v946 = vrot.slane %v945, 4
      %v947 = vrot.slane %v638, 5
      %v948 = vsel %vm858, %v946, %v947
      %v949 = vrot.slane %v635, 4
      %v950 = vor.u32 %v949, %v947
      %v951 = vrot.slane %v950, 4
      %v953 = vshll.u32 %v846, 16
      %v955 = vrot.slane %v953, 5
      %v956 = vsel %vm858, %v951, %v955
      %v957 = vrot.slane %v648, 4
      %v958 = vrot.slane %v651, 5
      %v959 = vor.u32 %v957, %v958
      %v960 = vrot.slane %v959, 4
      %v961 = vrot.slane %v660, 5
      %v962 = vsel %vm858, %v960, %v961
      %v963 = vrot.slane %v657, 4
      %v964 = vor.u32 %v963, %v961
      %v965 = vrot.slane %v964, 4
      %v967 = vshll.u32 %v847, 16
      %v969 = vrot.slane %v967, 5
      %v970 = vsel %vm858, %v965, %v969
      %v971 = vrot.slane %v670, 4
      %v972 = vrot.slane %v673, 5
      %v973 = vor.u32 %v971, %v972
      %v974 = vrot.slane %v973, 4
      %v975 = vrot.slane %v682, 5
      %v976 = vsel %vm858, %v974, %v975
      %v977 = vrot.slane %v679, 4
      %v978 = vor.u32 %v977, %v975
      %v979 = vrot.slane %v978, 4
      %v981 = vshll.u32 %v848, 16
      %v983 = vrot.slane %v981, 5
      %v984 = vsel %vm858, %v979, %v983
      %v985 = vrot.slane %v692, 4
      %v986 = vrot.slane %v695, 5
      %v987 = vor.u32 %v985, %v986
      %v988 = vrot.slane %v987, 4
      %v989 = vrot.slane %v704, 5
      %v990 = vsel %vm858, %v988, %v989
      %v991 = vrot.slane %v701, 4
      %v992 = vor.u32 %v991, %v989
      %v993 = vrot.slane %v992, 4
      %v995 = vshll.u32 %v849, 16
      %v997 = vrot.slane %v995, 5
      %v998 = vsel %vm858, %v993, %v997
      %v999 = vrot.slane %v714, 4
      %v1000 = vrot.slane %v717, 5
      %v1001 = vor.u32 %v999, %v1000
      %v1002 = vrot.slane %v1001, 4
      %v1003 = vrot.slane %v726, 5
      %v1004 = vsel %vm858, %v1002, %v1003
      %v1005 = vrot.slane %v723, 4
      %v1006 = vor.u32 %v1005, %v1003
      %v1007 = vrot.slane %v1006, 4
      %v1009 = vshll.u32 %v850, 16
      %v1011 = vrot.slane %v1009, 5
      %v1012 = vsel %vm858, %v1007, %v1011
      %v1013 = vrot.slane %v736, 4
      %v1014 = vrot.slane %v739, 5
      %v1015 = vor.u32 %v1013, %v1014
      %v1016 = vrot.slane %v1015, 4
      %v1017 = vrot.slane %v748, 5
      %v1018 = vsel %vm858, %v1016, %v1017
      %v1019 = vrot.slane %v745, 4
      %v1020 = vor.u32 %v1019, %v1017
      %v1021 = vrot.slane %v1020, 4
      %v1023 = vshll.u32 %v851, 16
      %v1025 = vrot.slane %v1023, 5
      %v1026 = vsel %vm858, %v1021, %v1025
      %v1027 = vrot.slane %v758, 4
      %v1028 = vrot.slane %v761, 5
      %v1029 = vor.u32 %v1027, %v1028
      %v1030 = vrot.slane %v1029, 4
      %v1031 = vrot.slane %v770, 5
      %v1032 = vsel %vm858, %v1030, %v1031
      %v1033 = vrot.slane %v767, 4
      %v1034 = vor.u32 %v1033, %v1031
      %v1035 = vrot.slane %v1034, 4
      %v1037 = vshll.u32 %v852, 16
      %v1039 = vrot.slane %v1037, 5
      %v1040 = vsel %vm858, %v1035, %v1039
      %v1041 = vrot.slane %v780, 4
      %v1042 = vrot.slane %v783, 5
      %v1043 = vor.u32 %v1041, %v1042
      %v1044 = vrot.slane %v1043, 4
      %v1045 = vrot.slane %v792, 5
      %v1046 = vsel %vm858, %v1044, %v1045
      %v1047 = vrot.slane %v789, 4
      %v1048 = vor.u32 %v1047, %v1045
      %v1049 = vrot.slane %v1048, 4
      %v1051 = vshll.u32 %v853, 16
      %v1053 = vrot.slane %v1051, 5
      %v1054 = vsel %vm858, %v1049, %v1053
      %v1055 = vrot.slane %v802, 4
      %v1056 = vrot.slane %v805, 5
      %v1057 = vor.u32 %v1055, %v1056
      %v1058 = vrot.slane %v1057, 4
      %v1059 = vrot.slane %v814, 5
      %v1060 = vsel %vm858, %v1058, %v1059
      %v1061 = vrot.slane %v811, 4
      %v1062 = vor.u32 %v1061, %v1059
      %v1063 = vrot.slane %v1062, 4
      %v1065 = vshll.u32 %v854, 16
      %v1067 = vrot.slane %v1065, 5
      %v1068 = vsel %vm858, %v1063, %v1067
      %v1069 = vrot.slane %v824, 4
      %v1070 = vrot.slane %v827, 5
      %v1071 = vor.u32 %v1069, %v1070
      %v1072 = vrot.slane %v1071, 4
      %v1073 = vrot.slane %v836, 5
      %v1074 = vsel %vm858, %v1072, %v1073
      %v1075 = vrot.slane %v833, 4
      %v1076 = vor.u32 %v1075, %v1073
      %v1077 = vrot.slane %v1076, 4
      %v1079 = vshll.u32 %v855, 16
      %v1081 = vrot.slane %v1079, 5
      %v1082 = vsel %vm858, %v1077, %v1081
      %v1083 = vunpack.c.l.b16 %v500
      %v1084 = vunpack.c.l.b16 %v509
      %v1085 = vunpack.c.l.b16 %v522
      %v1086 = vunpack.c.l.b16 %v531
      %v1087 = vunpack.c.l.b16 %v544
      %v1088 = vunpack.c.l.b16 %v553
      %v1089 = vunpack.c.l.b16 %v566
      %v1090 = vunpack.c.l.b16 %v575
      %v1091 = vunpack.c.l.b16 %v588
      %v1092 = vunpack.c.l.b16 %v597
      %v1093 = vunpack.c.l.b16 %v610
      %v1094 = vunpack.c.l.b16 %v619
      %v1095 = vunpack.c.l.b16 %v632
      %v1096 = vunpack.c.l.b16 %v641
      %v1097 = vunpack.c.l.b16 %v654
      %v1098 = vunpack.c.l.b16 %v663
      %v1099 = vunpack.c.l.b16 %v676
      %v1100 = vunpack.c.l.b16 %v685
      %v1101 = vunpack.c.l.b16 %v698
      %v1102 = vunpack.c.l.b16 %v707
      %v1103 = vunpack.c.l.b16 %v720
      %v1104 = vunpack.c.l.b16 %v729
      %v1105 = vunpack.c.l.b16 %v742
      %v1106 = vunpack.c.l.b16 %v751
      %v1107 = vunpack.c.l.b16 %v764
      %v1108 = vunpack.c.l.b16 %v773
      %v1109 = vunpack.c.l.b16 %v786
      %v1110 = vunpack.c.l.b16 %v795
      %v1111 = vunpack.c.l.b16 %v808
      %v1112 = vunpack.c.l.b16 %v817
      %v1113 = vunpack.c.l.b16 %v830
      %v1114 = vunpack.c.l.b16 %v839
      %v1115 = vpack.c.b16 %v1084, %v1083
      %v1116 = vpack.c.b16 %v1086, %v1085
      %v1117 = vpack.c.b16 %v1088, %v1087
      %v1118 = vpack.c.b16 %v1090, %v1089
      %v1119 = vpack.c.b16 %v1092, %v1091
      %v1120 = vpack.c.b16 %v1094, %v1093
      %v1121 = vpack.c.b16 %v1096, %v1095
      %v1122 = vpack.c.b16 %v1098, %v1097
      %v1123 = vpack.c.b16 %v1100, %v1099
      %v1124 = vpack.c.b16 %v1102, %v1101
      %v1125 = vpack.c.b16 %v1104, %v1103
      %v1126 = vpack.c.b16 %v1106, %v1105
      %v1127 = vpack.c.b16 %v1108, %v1107
      %v1128 = vpack.c.b16 %v1110, %v1109
      %v1129 = vpack.c.b16 %v1112, %v1111
      %v1130 = vpack.c.b16 %v1114, %v1113
      %v1163 = vunpack.c.l.b16 %v438
      %v1164 = vunpack.c.l.b16 %v439
      %v1165 = vunpack.c.l.b16 %v441
      %v1166 = vunpack.c.l.b16 %v442
      %v1167 = vunpack.c.l.b16 %v444
      %v1168 = vunpack.c.l.b16 %v445
      %v1169 = vunpack.c.l.b16 %v447
      %v1170 = vunpack.c.l.b16 %v448
      %v1171 = vunpack.c.l.b16 %v450
      %v1172 = vunpack.c.l.b16 %v451
      %v1173 = vunpack.c.l.b16 %v453
      %v1174 = vunpack.c.l.b16 %v454
      %v1175 = vunpack.c.l.b16 %v456
      %v1176 = vunpack.c.l.b16 %v457
      %v1177 = vunpack.c.l.b16 %v459
      %v1178 = vunpack.c.l.b16 %v460
      %v1179 = vunpack.c.l.b16 %v462
      %v1180 = vunpack.c.l.b16 %v463
      %v1181 = vunpack.c.l.b16 %v465
      %v1182 = vunpack.c.l.b16 %v466
      %v1183 = vunpack.c.l.b16 %v468
      %v1184 = vunpack.c.l.b16 %v469
      %v1185 = vunpack.c.l.b16 %v471
      %v1186 = vunpack.c.l.b16 %v472
      %v1187 = vunpack.c.l.b16 %v474
      %v1188 = vunpack.c.l.b16 %v475
      %v1189 = vunpack.c.l.b16 %v477
      %v1190 = vunpack.c.l.b16 %v478
      %v1191 = vunpack.c.l.b16 %v480
      %v1192 = vunpack.c.l.b16 %v481
      %v1193 = vunpack.c.l.b16 %v483
      %v1194 = vunpack.c.l.b16 %v484
      %v1195 = vpack.c.b16 %v1164, %v1163
      %v1196 = vpack.c.b16 %v1166, %v1165
      %v1197 = vpack.c.b16 %v1168, %v1167
      %v1198 = vpack.c.b16 %v1170, %v1169
      %v1199 = vpack.c.b16 %v1172, %v1171
      %v1200 = vpack.c.b16 %v1174, %v1173
      %v1201 = vpack.c.b16 %v1176, %v1175
      %v1202 = vpack.c.b16 %v1178, %v1177
      %v1203 = vpack.c.b16 %v1180, %v1179
      %v1204 = vpack.c.b16 %v1182, %v1181
      %v1205 = vpack.c.b16 %v1184, %v1183
      %v1206 = vpack.c.b16 %v1186, %v1185
      %v1207 = vpack.c.b16 %v1188, %v1187
      %v1208 = vpack.c.b16 %v1190, %v1189
      %v1209 = vpack.c.b16 %v1192, %v1191
      %v1210 = vpack.c.b16 %v1194, %v1193
      %1211 = vrot.lane.b32.xlu0 %v1195, 4
      %v1212 = vpop.permute.xlu0 %1211
      %1213 = vrot.lane.b32.xlu0 %v1196, 4
      %v1214 = vpop.permute.xlu0 %1213
      %1215 = vrot.lane.b32.xlu0 %v1197, 4
      %v1216 = vpop.permute.xlu0 %1215
      %1217 = vrot.lane.b32.xlu0 %v1198, 4
      %v1218 = vpop.permute.xlu0 %1217
      %1219 = vrot.lane.b32.xlu0 %v1199, 4
      %v1220 = vpop.permute.xlu0 %1219
      %1221 = vrot.lane.b32.xlu0 %v1200, 4
      %v1222 = vpop.permute.xlu0 %1221
      %1223 = vrot.lane.b32.xlu0 %v1201, 4
      %v1224 = vpop.permute.xlu0 %1223
      %1225 = vrot.lane.b32.xlu0 %v1202, 4
      %v1226 = vpop.permute.xlu0 %1225
      %1227 = vrot.lane.b32.xlu0 %v1203, 4
      %v1228 = vpop.permute.xlu0 %1227
      %1229 = vrot.lane.b32.xlu0 %v1204, 4
      %v1230 = vpop.permute.xlu0 %1229
      %1231 = vrot.lane.b32.xlu0 %v1205, 4
      %v1232 = vpop.permute.xlu0 %1231
      %1233 = vrot.lane.b32.xlu0 %v1206, 4
      %v1234 = vpop.permute.xlu0 %1233
      %1235 = vrot.lane.b32.xlu0 %v1207, 4
      %v1236 = vpop.permute.xlu0 %1235
      %1237 = vrot.lane.b32.xlu0 %v1208, 4
      %v1238 = vpop.permute.xlu0 %1237
      %1239 = vrot.lane.b32.xlu0 %v1209, 4
      %v1240 = vpop.permute.xlu0 %1239
      %1241 = vrot.lane.b32.xlu0 %v1210, 4
      %v1242 = vpop.permute.xlu0 %1241
      %v1243 = vunpack.c.l.b16 %v864
      %v1244 = vunpack.c.l.b16 %v872
      %v1245 = vunpack.c.l.b16 %v878
      %v1246 = vunpack.c.l.b16 %v886
      %v1247 = vunpack.c.l.b16 %v892
      %v1248 = vunpack.c.l.b16 %v900
      %v1249 = vunpack.c.l.b16 %v906
      %v1250 = vunpack.c.l.b16 %v914
      %v1251 = vunpack.c.l.b16 %v920
      %v1252 = vunpack.c.l.b16 %v928
      %v1253 = vunpack.c.l.b16 %v934
      %v1254 = vunpack.c.l.b16 %v942
      %v1255 = vunpack.c.l.b16 %v948
      %v1256 = vunpack.c.l.b16 %v956
      %v1257 = vunpack.c.l.b16 %v962
      %v1258 = vunpack.c.l.b16 %v970
      %v1259 = vunpack.c.l.b16 %v976
      %v1260 = vunpack.c.l.b16 %v984
      %v1261 = vunpack.c.l.b16 %v990
      %v1262 = vunpack.c.l.b16 %v998
      %v1263 = vunpack.c.l.b16 %v1004
      %v1264 = vunpack.c.l.b16 %v1012
      %v1265 = vunpack.c.l.b16 %v1018
      %v1266 = vunpack.c.l.b16 %v1026
      %v1267 = vunpack.c.l.b16 %v1032
      %v1268 = vunpack.c.l.b16 %v1040
      %v1269 = vunpack.c.l.b16 %v1046
      %v1270 = vunpack.c.l.b16 %v1054
      %v1271 = vunpack.c.l.b16 %v1060
      %v1272 = vunpack.c.l.b16 %v1068
      %v1273 = vunpack.c.l.b16 %v1074
      %v1274 = vunpack.c.l.b16 %v1082
      %v1275 = vpack.c.b16 %v1244, %v1243
      %v1276 = vpack.c.b16 %v1246, %v1245
      %v1277 = vpack.c.b16 %v1248, %v1247
      %v1278 = vpack.c.b16 %v1250, %v1249
      %v1279 = vpack.c.b16 %v1252, %v1251
      %v1280 = vpack.c.b16 %v1254, %v1253
      %v1281 = vpack.c.b16 %v1256, %v1255
      %v1282 = vpack.c.b16 %v1258, %v1257
      %v1283 = vpack.c.b16 %v1260, %v1259
      %v1284 = vpack.c.b16 %v1262, %v1261
      %v1285 = vpack.c.b16 %v1264, %v1263
      %v1286 = vpack.c.b16 %v1266, %v1265
      %v1287 = vpack.c.b16 %v1268, %v1267
      %v1288 = vpack.c.b16 %v1270, %v1269
      %v1289 = vpack.c.b16 %v1272, %v1271
      %v1290 = vpack.c.b16 %v1274, %v1273
      %1291 = vrot.lane.b32.xlu0 %v1275, 8
      %v1292 = vpop.permute.xlu0 %1291
      %1293 = vrot.lane.b32.xlu0 %v1276, 8
      %v1294 = vpop.permute.xlu0 %1293
      %1295 = vrot.lane.b32.xlu0 %v1277, 8
      %v1296 = vpop.permute.xlu0 %1295
      %1297 = vrot.lane.b32.xlu0 %v1278, 8
      %v1298 = vpop.permute.xlu0 %1297
      %1299 = vrot.lane.b32.xlu0 %v1279, 8
      %v1300 = vpop.permute.xlu0 %1299
      %1301 = vrot.lane.b32.xlu0 %v1280, 8
      %v1302 = vpop.permute.xlu0 %1301
      %1303 = vrot.lane.b32.xlu0 %v1281, 8
      %v1304 = vpop.permute.xlu0 %1303
      %1305 = vrot.lane.b32.xlu0 %v1282, 8
      %v1306 = vpop.permute.xlu0 %1305
      %1307 = vrot.lane.b32.xlu0 %v1283, 8
      %v1308 = vpop.permute.xlu0 %1307
      %1309 = vrot.lane.b32.xlu0 %v1284, 8
      %v1310 = vpop.permute.xlu0 %1309
      %1311 = vrot.lane.b32.xlu0 %v1285, 8
      %v1312 = vpop.permute.xlu0 %1311
      %1313 = vrot.lane.b32.xlu0 %v1286, 8
      %v1314 = vpop.permute.xlu0 %1313
      %1315 = vrot.lane.b32.xlu0 %v1287, 8
      %v1316 = vpop.permute.xlu0 %1315
      %1317 = vrot.lane.b32.xlu0 %v1288, 8
      %v1318 = vpop.permute.xlu0 %1317
      %1319 = vrot.lane.b32.xlu0 %v1289, 8
      %v1320 = vpop.permute.xlu0 %1319
      %1321 = vrot.lane.b32.xlu0 %v1290, 8
      %v1322 = vpop.permute.xlu0 %1321
      %vm1323 = vcmask 31744
      %v1326 = vsel %vm1323, %v1115, %v1212
      %v1329 = vsel %vm1323, %v1116, %v1214
      %v1332 = vsel %vm1323, %v1117, %v1216
      %v1335 = vsel %vm1323, %v1118, %v1218
      %v1338 = vsel %vm1323, %v1119, %v1220
      %v1341 = vsel %vm1323, %v1120, %v1222
      %v1344 = vsel %vm1323, %v1121, %v1224
      %v1347 = vsel %vm1323, %v1122, %v1226
      %v1350 = vsel %vm1323, %v1123, %v1228
      %v1353 = vsel %vm1323, %v1124, %v1230
      %v1356 = vsel %vm1323, %v1125, %v1232
      %v1359 = vsel %vm1323, %v1126, %v1234
      %v1362 = vsel %vm1323, %v1127, %v1236
      %v1365 = vsel %vm1323, %v1128, %v1238
      %v1368 = vsel %vm1323, %v1129, %v1240
      %v1371 = vsel %vm1323, %v1130, %v1242
      %vm1372 = vcmask 64512
      %v1374 = vsel %vm1372, %v1326, %v1292
      %v1376 = vsel %vm1372, %v1329, %v1294
      %v1378 = vsel %vm1372, %v1332, %v1296
      %v1380 = vsel %vm1372, %v1335, %v1298
      %v1382 = vsel %vm1372, %v1338, %v1300
      %v1384 = vsel %vm1372, %v1341, %v1302
      %v1386 = vsel %vm1372, %v1344, %v1304
      %v1388 = vsel %vm1372, %v1347, %v1306
      %v1390 = vsel %vm1372, %v1350, %v1308
      %v1392 = vsel %vm1372, %v1353, %v1310
      %v1394 = vsel %vm1372, %v1356, %v1312
      %v1396 = vsel %vm1372, %v1359, %v1314
      %v1398 = vsel %vm1372, %v1362, %v1316
      %v1400 = vsel %vm1372, %v1365, %v1318
      %v1402 = vsel %vm1372, %v1368, %v1320
      %v1404 = vsel %vm1372, %v1371, %v1322
      %v1405 = vld [vmem:[%s1] sm:$0xf]
      %v1406 = vld [vmem:[%s1 + $0x4] sm:$0x3]
      %v1407 = vld [vmem:[%s404] sm:$0x8]
      %v1408 = vld [vmem:[%s404 + $0x4] sm:$0xf]
      %v1409 = vld [vmem:[%s404 + $0x8] sm:$0xf]
      %v1410 = vld [vmem:[%s404 + $0x10] sm:$0x8]
      %v1411 = vld [vmem:[%s404 + $0x14] sm:$0xf]
      %v1412 = vld [vmem:[%s404 + $0x18] sm:$0xf]
      %v1413 = vld [vmem:[%s404 + $0x20] sm:$0x8]
      %v1414 = vld [vmem:[%s404 + $0x24] sm:$0xf]
      %v1415 = vld [vmem:[%s404 + $0x28] sm:$0xf]
      %v1416 = vld [vmem:[%s404 + $0x30] sm:$0x8]
      %v1417 = vld [vmem:[%s404 + $0x34] sm:$0xf]
      %v1418 = vld [vmem:[%s404 + $0x38] sm:$0xf]
      %v1419 = vld [vmem:[%s404 + $0x40] sm:$0x8]
      %v1420 = vld [vmem:[%s404 + $0x44] sm:$0xf]
      %v1421 = vld [vmem:[%s404 + $0x48] sm:$0xf]
      %v1422 = vld [vmem:[%s404 + $0x50] sm:$0x8]
      %v1423 = vld [vmem:[%s404 + $0x54] sm:$0xf]
      %v1424 = vld [vmem:[%s404 + $0x58] sm:$0xf]
      %v1425 = vld [vmem:[%s404 + $0x60] sm:$0x8]
      %v1426 = vld [vmem:[%s404 + $0x64] sm:$0xf]
      %v1427 = vld [vmem:[%s404 + $0x68] sm:$0xf]
      %v1428 = vld [vmem:[%s404 + $0x70] sm:$0x8]
      %v1429 = vld [vmem:[%s404 + $0x74] sm:$0xf]
      %v1430 = vld [vmem:[%s404 + $0x78] sm:$0xf]
      %v1431 = vld [vmem:[%s404 + $0x80] sm:$0x8]
      %v1432 = vld [vmem:[%s404 + $0x84] sm:$0xf]
      %v1433 = vld [vmem:[%s404 + $0x88] sm:$0xf]
      %v1434 = vld [vmem:[%s404 + $0x90] sm:$0x8]
      %v1435 = vld [vmem:[%s404 + $0x94] sm:$0xf]
      %v1436 = vld [vmem:[%s404 + $0x98] sm:$0xf]
      %v1437 = vld [vmem:[%s404 + $0xa0] sm:$0x8]
      %v1438 = vld [vmem:[%s404 + $0xa4] sm:$0xf]
      %v1439 = vld [vmem:[%s404 + $0xa8] sm:$0xf]
      %v1440 = vld [vmem:[%s404 + $0xb0] sm:$0x8]
      %v1441 = vld [vmem:[%s404 + $0xb4] sm:$0xf]
      %v1442 = vld [vmem:[%s404 + $0xb8] sm:$0xf]
      %v1443 = vld [vmem:[%s404 + $0xc0] sm:$0x8]
      %v1444 = vld [vmem:[%s404 + $0xc4] sm:$0xf]
      %v1445 = vld [vmem:[%s404 + $0xc8] sm:$0xf]
      %v1446 = vld [vmem:[%s404 + $0xd0] sm:$0x8]
      %v1447 = vld [vmem:[%s404 + $0xd4] sm:$0xf]
      %v1448 = vld [vmem:[%s404 + $0xd8] sm:$0xf]
      %v1449 = vld [vmem:[%s404 + $0xe0] sm:$0x8]
      %v1450 = vld [vmem:[%s404 + $0xe4] sm:$0xf]
      %v1451 = vld [vmem:[%s404 + $0xe8] sm:$0xf]
      %v1452 = vld [vmem:[%s404 + $0xf0] sm:$0x8]
      %v1453 = vld [vmem:[%s404 + $0xf4] sm:$0xf]
      %v1454 = vld [vmem:[%s404 + $0xf8] sm:$0xf]
      %v1456 = vshrl.u32 %v1407, 16
      %v1458 = vrot.slane %v1456, 7
      %v1459 = vrot.slane %v1458, 4
      %v1461 = vshrl.u32 %v1408, 16
      %v1463 = vrot.slane %v1461, 7
      %v1464 = vshll.u32 %v1408, 16
      %v1466 = vor.u32 %v1463, %v1464
      %v1467 = vsel %vm487, %v1459, %v1466
      %v1468 = vrot.slane %v1463, 4
      %v1470 = vshrl.u32 %v1409, 16
      %v1472 = vrot.slane %v1470, 7
      %v1473 = vshll.u32 %v1409, 16
      %v1475 = vor.u32 %v1472, %v1473
      %v1476 = vsel %vm487, %v1468, %v1475
      %v1478 = vshrl.u32 %v1410, 16
      %v1480 = vrot.slane %v1478, 7
      %v1481 = vrot.slane %v1480, 4
      %v1483 = vshrl.u32 %v1411, 16
      %v1485 = vrot.slane %v1483, 7
      %v1486 = vshll.u32 %v1411, 16
      %v1488 = vor.u32 %v1485, %v1486
      %v1489 = vsel %vm487, %v1481, %v1488
      %v1490 = vrot.slane %v1485, 4
      %v1492 = vshrl.u32 %v1412, 16
      %v1494 = vrot.slane %v1492, 7
      %v1495 = vshll.u32 %v1412, 16
      %v1497 = vor.u32 %v1494, %v1495
      %v1498 = vsel %vm487, %v1490, %v1497
      %v1500 = vshrl.u32 %v1413, 16
      %v1502 = vrot.slane %v1500, 7
      %v1503 = vrot.slane %v1502, 4
      %v1505 = vshrl.u32 %v1414, 16
      %v1507 = vrot.slane %v1505, 7
      %v1508 = vshll.u32 %v1414, 16
      %v1510 = vor.u32 %v1507, %v1508
      %v1511 = vsel %vm487, %v1503, %v1510
      %v1512 = vrot.slane %v1507, 4
      %v1514 = vshrl.u32 %v1415, 16
      %v1516 = vrot.slane %v1514, 7
      %v1517 = vshll.u32 %v1415, 16
      %v1519 = vor.u32 %v1516, %v1517
      %v1520 = vsel %vm487, %v1512, %v1519
      %v1522 = vshrl.u32 %v1416, 16
      %v1524 = vrot.slane %v1522, 7
      %v1525 = vrot.slane %v1524, 4
      %v1527 = vshrl.u32 %v1417, 16
      %v1529 = vrot.slane %v1527, 7
      %v1530 = vshll.u32 %v1417, 16
      %v1532 = vor.u32 %v1529, %v1530
      %v1533 = vsel %vm487, %v1525, %v1532
      %v1534 = vrot.slane %v1529, 4
      %v1536 = vshrl.u32 %v1418, 16
      %v1538 = vrot.slane %v1536, 7
      %v1539 = vshll.u32 %v1418, 16
      %v1541 = vor.u32 %v1538, %v1539
      %v1542 = vsel %vm487, %v1534, %v1541
      %v1544 = vshrl.u32 %v1419, 16
      %v1546 = vrot.slane %v1544, 7
      %v1547 = vrot.slane %v1546, 4
      %v1549 = vshrl.u32 %v1420, 16
      %v1551 = vrot.slane %v1549, 7
      %v1552 = vshll.u32 %v1420, 16
      %v1554 = vor.u32 %v1551, %v1552
      %v1555 = vsel %vm487, %v1547, %v1554
      %v1556 = vrot.slane %v1551, 4
      %v1558 = vshrl.u32 %v1421, 16
      %v1560 = vrot.slane %v1558, 7
      %v1561 = vshll.u32 %v1421, 16
      %v1563 = vor.u32 %v1560, %v1561
      %v1564 = vsel %vm487, %v1556, %v1563
      %v1566 = vshrl.u32 %v1422, 16
      %v1568 = vrot.slane %v1566, 7
      %v1569 = vrot.slane %v1568, 4
      %v1571 = vshrl.u32 %v1423, 16
      %v1573 = vrot.slane %v1571, 7
      %v1574 = vshll.u32 %v1423, 16
      %v1576 = vor.u32 %v1573, %v1574
      %v1577 = vsel %vm487, %v1569, %v1576
      %v1578 = vrot.slane %v1573, 4
      %v1580 = vshrl.u32 %v1424, 16
      %v1582 = vrot.slane %v1580, 7
      %v1583 = vshll.u32 %v1424, 16
      %v1585 = vor.u32 %v1582, %v1583
      %v1586 = vsel %vm487, %v1578, %v1585
      %v1588 = vshrl.u32 %v1425, 16
      %v1590 = vrot.slane %v1588, 7
      %v1591 = vrot.slane %v1590, 4
      %v1593 = vshrl.u32 %v1426, 16
      %v1595 = vrot.slane %v1593, 7
      %v1596 = vshll.u32 %v1426, 16
      %v1598 = vor.u32 %v1595, %v1596
      %v1599 = vsel %vm487, %v1591, %v1598
      %v1600 = vrot.slane %v1595, 4
      %v1602 = vshrl.u32 %v1427, 16
      %v1604 = vrot.slane %v1602, 7
      %v1605 = vshll.u32 %v1427, 16
      %v1607 = vor.u32 %v1604, %v1605
      %v1608 = vsel %vm487, %v1600, %v1607
      %v1610 = vshrl.u32 %v1428, 16
      %v1612 = vrot.slane %v1610, 7
      %v1613 = vrot.slane %v1612, 4
      %v1615 = vshrl.u32 %v1429, 16
      %v1617 = vrot.slane %v1615, 7
      %v1618 = vshll.u32 %v1429, 16
      %v1620 = vor.u32 %v1617, %v1618
      %v1621 = vsel %vm487, %v1613, %v1620
      %v1622 = vrot.slane %v1617, 4
      %v1624 = vshrl.u32 %v1430, 16
      %v1626 = vrot.slane %v1624, 7
      %v1627 = vshll.u32 %v1430, 16
      %v1629 = vor.u32 %v1626, %v1627
      %v1630 = vsel %vm487, %v1622, %v1629
      %v1632 = vshrl.u32 %v1431, 16
      %v1634 = vrot.slane %v1632, 7
      %v1635 = vrot.slane %v1634, 4
      %v1637 = vshrl.u32 %v1432, 16
      %v1639 = vrot.slane %v1637, 7
      %v1640 = vshll.u32 %v1432, 16
      %v1642 = vor.u32 %v1639, %v1640
      %v1643 = vsel %vm487, %v1635, %v1642
      %v1644 = vrot.slane %v1639, 4
      %v1646 = vshrl.u32 %v1433, 16
      %v1648 = vrot.slane %v1646, 7
      %v1649 = vshll.u32 %v1433, 16
      %v1651 = vor.u32 %v1648, %v1649
      %v1652 = vsel %vm487, %v1644, %v1651
      %v1654 = vshrl.u32 %v1434, 16
      %v1656 = vrot.slane %v1654, 7
      %v1657 = vrot.slane %v1656, 4
      %v1659 = vshrl.u32 %v1435, 16
      %v1661 = vrot.slane %v1659, 7
      %v1662 = vshll.u32 %v1435, 16
      %v1664 = vor.u32 %v1661, %v1662
      %v1665 = vsel %vm487, %v1657, %v1664
      %v1666 = vrot.slane %v1661, 4
      %v1668 = vshrl.u32 %v1436, 16
      %v1670 = vrot.slane %v1668, 7
      %v1671 = vshll.u32 %v1436, 16
      %v1673 = vor.u32 %v1670, %v1671
      %v1674 = vsel %vm487, %v1666, %v1673
      %v1676 = vshrl.u32 %v1437, 16
      %v1678 = vrot.slane %v1676, 7
      %v1679 = vrot.slane %v1678, 4
      %v1681 = vshrl.u32 %v1438, 16
      %v1683 = vrot.slane %v1681, 7
      %v1684 = vshll.u32 %v1438, 16
      %v1686 = vor.u32 %v1683, %v1684
      %v1687 = vsel %vm487, %v1679, %v1686
      %v1688 = vrot.slane %v1683, 4
      %v1690 = vshrl.u32 %v1439, 16
      %v1692 = vrot.slane %v1690, 7
      %v1693 = vshll.u32 %v1439, 16
      %v1695 = vor.u32 %v1692, %v1693
      %v1696 = vsel %vm487, %v1688, %v1695
      %v1698 = vshrl.u32 %v1440, 16
      %v1700 = vrot.slane %v1698, 7
      %v1701 = vrot.slane %v1700, 4
      %v1703 = vshrl.u32 %v1441, 16
      %v1705 = vrot.slane %v1703, 7
      %v1706 = vshll.u32 %v1441, 16
      %v1708 = vor.u32 %v1705, %v1706
      %v1709 = vsel %vm487, %v1701, %v1708
      %v1710 = vrot.slane %v1705, 4
      %v1712 = vshrl.u32 %v1442, 16
      %v1714 = vrot.slane %v1712, 7
      %v1715 = vshll.u32 %v1442, 16
      %v1717 = vor.u32 %v1714, %v1715
      %v1718 = vsel %vm487, %v1710, %v1717
      %v1720 = vshrl.u32 %v1443, 16
      %v1722 = vrot.slane %v1720, 7
      %v1723 = vrot.slane %v1722, 4
      %v1725 = vshrl.u32 %v1444, 16
      %v1727 = vrot.slane %v1725, 7
      %v1728 = vshll.u32 %v1444, 16
      %v1730 = vor.u32 %v1727, %v1728
      %v1731 = vsel %vm487, %v1723, %v1730
      %v1732 = vrot.slane %v1727, 4
      %v1734 = vshrl.u32 %v1445, 16
      %v1736 = vrot.slane %v1734, 7
      %v1737 = vshll.u32 %v1445, 16
      %v1739 = vor.u32 %v1736, %v1737
      %v1740 = vsel %vm487, %v1732, %v1739
      %v1742 = vshrl.u32 %v1446, 16
      %v1744 = vrot.slane %v1742, 7
      %v1745 = vrot.slane %v1744, 4
      %v1747 = vshrl.u32 %v1447, 16
      %v1749 = vrot.slane %v1747, 7
      %v1750 = vshll.u32 %v1447, 16
      %v1752 = vor.u32 %v1749, %v1750
      %v1753 = vsel %vm487, %v1745, %v1752
      %v1754 = vrot.slane %v1749, 4
      %v1756 = vshrl.u32 %v1448, 16
      %v1758 = vrot.slane %v1756, 7
      %v1759 = vshll.u32 %v1448, 16
      %v1761 = vor.u32 %v1758, %v1759
      %v1762 = vsel %vm487, %v1754, %v1761
      %v1764 = vshrl.u32 %v1449, 16
      %v1766 = vrot.slane %v1764, 7
      %v1767 = vrot.slane %v1766, 4
      %v1769 = vshrl.u32 %v1450, 16
      %v1771 = vrot.slane %v1769, 7
      %v1772 = vshll.u32 %v1450, 16
      %v1774 = vor.u32 %v1771, %v1772
      %v1775 = vsel %vm487, %v1767, %v1774
      %v1776 = vrot.slane %v1771, 4
      %v1778 = vshrl.u32 %v1451, 16
      %v1780 = vrot.slane %v1778, 7
      %v1781 = vshll.u32 %v1451, 16
      %v1783 = vor.u32 %v1780, %v1781
      %v1784 = vsel %vm487, %v1776, %v1783
      %v1786 = vshrl.u32 %v1452, 16
      %v1788 = vrot.slane %v1786, 7
      %v1789 = vrot.slane %v1788, 4
      %v1791 = vshrl.u32 %v1453, 16
      %v1793 = vrot.slane %v1791, 7
      %v1794 = vshll.u32 %v1453, 16
      %v1796 = vor.u32 %v1793, %v1794
      %v1797 = vsel %vm487, %v1789, %v1796
      %v1798 = vrot.slane %v1793, 4
      %v1800 = vshrl.u32 %v1454, 16
      %v1802 = vrot.slane %v1800, 7
      %v1803 = vshll.u32 %v1454, 16
      %v1805 = vor.u32 %v1802, %v1803
      %v1806 = vsel %vm487, %v1798, %v1805
      %v1807 = vld [vmem:[%s404 + $0xc] sm:$0x1]
      %v1808 = vld [vmem:[%s404 + $0x1c] sm:$0x1]
      %v1809 = vld [vmem:[%s404 + $0x2c] sm:$0x1]
      %v1810 = vld [vmem:[%s404 + $0x3c] sm:$0x1]
      %v1811 = vld [vmem:[%s404 + $0x4c] sm:$0x1]
      %v1812 = vld [vmem:[%s404 + $0x5c] sm:$0x1]
      %v1813 = vld [vmem:[%s404 + $0x6c] sm:$0x1]
      %v1814 = vld [vmem:[%s404 + $0x7c] sm:$0x1]
      %v1815 = vld [vmem:[%s404 + $0x8c] sm:$0x1]
      %v1816 = vld [vmem:[%s404 + $0x9c] sm:$0x1]
      %v1817 = vld [vmem:[%s404 + $0xac] sm:$0x1]
      %v1818 = vld [vmem:[%s404 + $0xbc] sm:$0x1]
      %v1819 = vld [vmem:[%s404 + $0xcc] sm:$0x1]
      %v1820 = vld [vmem:[%s404 + $0xdc] sm:$0x1]
      %v1821 = vld [vmem:[%s404 + $0xec] sm:$0x1]
      %v1822 = vld [vmem:[%s404 + $0xfc] sm:$0x1]
      %v1823 = vrot.slane %v1461, 4
      %v1824 = vrot.slane %v1464, 5
      %v1825 = vor.u32 %v1823, %v1824
      %v1826 = vrot.slane %v1825, 4
      %v1827 = vrot.slane %v1473, 5
      %v1828 = vsel %vm858, %v1826, %v1827
      %v1829 = vrot.slane %v1470, 4
      %v1830 = vor.u32 %v1829, %v1827
      %v1831 = vrot.slane %v1830, 4
      %v1833 = vshll.u32 %v1807, 16
      %v1835 = vrot.slane %v1833, 5
      %v1836 = vsel %vm858, %v1831, %v1835
      %v1837 = vrot.slane %v1483, 4
      %v1838 = vrot.slane %v1486, 5
      %v1839 = vor.u32 %v1837, %v1838
      %v1840 = vrot.slane %v1839, 4
      %v1841 = vrot.slane %v1495, 5
      %v1842 = vsel %vm858, %v1840, %v1841
      %v1843 = vrot.slane %v1492, 4
      %v1844 = vor.u32 %v1843, %v1841
      %v1845 = vrot.slane %v1844, 4
      %v1847 = vshll.u32 %v1808, 16
      %v1849 = vrot.slane %v1847, 5
      %v1850 = vsel %vm858, %v1845, %v1849
      %v1851 = vrot.slane %v1505, 4
      %v1852 = vrot.slane %v1508, 5
      %v1853 = vor.u32 %v1851, %v1852
      %v1854 = vrot.slane %v1853, 4
      %v1855 = vrot.slane %v1517, 5
      %v1856 = vsel %vm858, %v1854, %v1855
      %v1857 = vrot.slane %v1514, 4
      %v1858 = vor.u32 %v1857, %v1855
      %v1859 = vrot.slane %v1858, 4
      %v1861 = vshll.u32 %v1809, 16
      %v1863 = vrot.slane %v1861, 5
      %v1864 = vsel %vm858, %v1859, %v1863
      %v1865 = vrot.slane %v1527, 4
      %v1866 = vrot.slane %v1530, 5
      %v1867 = vor.u32 %v1865, %v1866
      %v1868 = vrot.slane %v1867, 4
      %v1869 = vrot.slane %v1539, 5
      %v1870 = vsel %vm858, %v1868, %v1869
      %v1871 = vrot.slane %v1536, 4
      %v1872 = vor.u32 %v1871, %v1869
      %v1873 = vrot.slane %v1872, 4
      %v1875 = vshll.u32 %v1810, 16
      %v1877 = vrot.slane %v1875, 5
      %v1878 = vsel %vm858, %v1873, %v1877
      %v1879 = vrot.slane %v1549, 4
      %v1880 = vrot.slane %v1552, 5
      %v1881 = vor.u32 %v1879, %v1880
      %v1882 = vrot.slane %v1881, 4
      %v1883 = vrot.slane %v1561, 5
      %v1884 = vsel %vm858, %v1882, %v1883
      %v1885 = vrot.slane %v1558, 4
      %v1886 = vor.u32 %v1885, %v1883
      %v1887 = vrot.slane %v1886, 4
      %v1889 = vshll.u32 %v1811, 16
      %v1891 = vrot.slane %v1889, 5
      %v1892 = vsel %vm858, %v1887, %v1891
      %v1893 = vrot.slane %v1571, 4
      %v1894 = vrot.slane %v1574, 5
      %v1895 = vor.u32 %v1893, %v1894
      %v1896 = vrot.slane %v1895, 4
      %v1897 = vrot.slane %v1583, 5
      %v1898 = vsel %vm858, %v1896, %v1897
      %v1899 = vrot.slane %v1580, 4
      %v1900 = vor.u32 %v1899, %v1897
      %v1901 = vrot.slane %v1900, 4
      %v1903 = vshll.u32 %v1812, 16
      %v1905 = vrot.slane %v1903, 5
      %v1906 = vsel %vm858, %v1901, %v1905
      %v1907 = vrot.slane %v1593, 4
      %v1908 = vrot.slane %v1596, 5
      %v1909 = vor.u32 %v1907, %v1908
      %v1910 = vrot.slane %v1909, 4
      %v1911 = vrot.slane %v1605, 5
      %v1912 = vsel %vm858, %v1910, %v1911
      %v1913 = vrot.slane %v1602, 4
      %v1914 = vor.u32 %v1913, %v1911
      %v1915 = vrot.slane %v1914, 4
      %v1917 = vshll.u32 %v1813, 16
      %v1919 = vrot.slane %v1917, 5
      %v1920 = vsel %vm858, %v1915, %v1919
      %v1921 = vrot.slane %v1615, 4
      %v1922 = vrot.slane %v1618, 5
      %v1923 = vor.u32 %v1921, %v1922
      %v1924 = vrot.slane %v1923, 4
      %v1925 = vrot.slane %v1627, 5
      %v1926 = vsel %vm858, %v1924, %v1925
      %v1927 = vrot.slane %v1624, 4
      %v1928 = vor.u32 %v1927, %v1925
      %v1929 = vrot.slane %v1928, 4
      %v1931 = vshll.u32 %v1814, 16
      %v1933 = vrot.slane %v1931, 5
      %v1934 = vsel %vm858, %v1929, %v1933
      %v1935 = vrot.slane %v1637, 4
      %v1936 = vrot.slane %v1640, 5
      %v1937 = vor.u32 %v1935, %v1936
      %v1938 = vrot.slane %v1937, 4
      %v1939 = vrot.slane %v1649, 5
      %v1940 = vsel %vm858, %v1938, %v1939
      %v1941 = vrot.slane %v1646, 4
      %v1942 = vor.u32 %v1941, %v1939
      %v1943 = vrot.slane %v1942, 4
      %v1945 = vshll.u32 %v1815, 16
      %v1947 = vrot.slane %v1945, 5
      %v1948 = vsel %vm858, %v1943, %v1947
      %v1949 = vrot.slane %v1659, 4
      %v1950 = vrot.slane %v1662, 5
      %v1951 = vor.u32 %v1949, %v1950
      %v1952 = vrot.slane %v1951, 4
      %v1953 = vrot.slane %v1671, 5
      %v1954 = vsel %vm858, %v1952, %v1953
      %v1955 = vrot.slane %v1668, 4
      %v1956 = vor.u32 %v1955, %v1953
      %v1957 = vrot.slane %v1956, 4
      %v1959 = vshll.u32 %v1816, 16
      %v1961 = vrot.slane %v1959, 5
      %v1962 = vsel %vm858, %v1957, %v1961
      %v1963 = vrot.slane %v1681, 4
      %v1964 = vrot.slane %v1684, 5
      %v1965 = vor.u32 %v1963, %v1964
      %v1966 = vrot.slane %v1965, 4
      %v1967 = vrot.slane %v1693, 5
      %v1968 = vsel %vm858, %v1966, %v1967
      %v1969 = vrot.slane %v1690, 4
      %v1970 = vor.u32 %v1969, %v1967
      %v1971 = vrot.slane %v1970, 4
      %v1973 = vshll.u32 %v1817, 16
      %v1975 = vrot.slane %v1973, 5
      %v1976 = vsel %vm858, %v1971, %v1975
      %v1977 = vrot.slane %v1703, 4
      %v1978 = vrot.slane %v1706, 5
      %v1979 = vor.u32 %v1977, %v1978
      %v1980 = vrot.slane %v1979, 4
      %v1981 = vrot.slane %v1715, 5
      %v1982 = vsel %vm858, %v1980, %v1981
      %v1983 = vrot.slane %v1712, 4
      %v1984 = vor.u32 %v1983, %v1981
      %v1985 = vrot.slane %v1984, 4
      %v1987 = vshll.u32 %v1818, 16
      %v1989 = vrot.slane %v1987, 5
      %v1990 = vsel %vm858, %v1985, %v1989
      %v1991 = vrot.slane %v1725, 4
      %v1992 = vrot.slane %v1728, 5
      %v1993 = vor.u32 %v1991, %v1992
      %v1994 = vrot.slane %v1993, 4
      %v1995 = vrot.slane %v1737, 5
      %v1996 = vsel %vm858, %v1994, %v1995
      %v1997 = vrot.slane %v1734, 4
      %v1998 = vor.u32 %v1997, %v1995
      %v1999 = vrot.slane %v1998, 4
      %v2001 = vshll.u32 %v1819, 16
      %v2003 = vrot.slane %v2001, 5
      %v2004 = vsel %vm858, %v1999, %v2003
      %v2005 = vrot.slane %v1747, 4
      %v2006 = vrot.slane %v1750, 5
      %v2007 = vor.u32 %v2005, %v2006
      %v2008 = vrot.slane %v2007, 4
      %v2009 = vrot.slane %v1759, 5
      %v2010 = vsel %vm858, %v2008, %v2009
      %v2011 = vrot.slane %v1756, 4
      %v2012 = vor.u32 %v2011, %v2009
      %v2013 = vrot.slane %v2012, 4
      %v2015 = vshll.u32 %v1820, 16
      %v2017 = vrot.slane %v2015, 5
      %v2018 = vsel %vm858, %v2013, %v2017
      %v2019 = vrot.slane %v1769, 4
      %v2020 = vrot.slane %v1772, 5
      %v2021 = vor.u32 %v2019, %v2020
      %v2022 = vrot.slane %v2021, 4
      %v2023 = vrot.slane %v1781, 5
      %v2024 = vsel %vm858, %v2022, %v2023
      %v2025 = vrot.slane %v1778, 4
      %v2026 = vor.u32 %v2025, %v2023
      %v2027 = vrot.slane %v2026, 4
      %v2029 = vshll.u32 %v1821, 16
      %v2031 = vrot.slane %v2029, 5
      %v2032 = vsel %vm858, %v2027, %v2031
      %v2033 = vrot.slane %v1791, 4
      %v2034 = vrot.slane %v1794, 5
      %v2035 = vor.u32 %v2033, %v2034
      %v2036 = vrot.slane %v2035, 4
      %v2037 = vrot.slane %v1803, 5
      %v2038 = vsel %vm858, %v2036, %v2037
      %v2039 = vrot.slane %v1800, 4
      %v2040 = vor.u32 %v2039, %v2037
      %v2041 = vrot.slane %v2040, 4
      %v2043 = vshll.u32 %v1822, 16
      %v2045 = vrot.slane %v2043, 5
      %v2046 = vsel %vm858, %v2041, %v2045
      %v2047 = vunpack.c.l.b16 %v1467
      %v2048 = vunpack.c.l.b16 %v1476
      %v2049 = vunpack.c.l.b16 %v1489
      %v2050 = vunpack.c.l.b16 %v1498
      %v2051 = vunpack.c.l.b16 %v1511
      %v2052 = vunpack.c.l.b16 %v1520
      %v2053 = vunpack.c.l.b16 %v1533
      %v2054 = vunpack.c.l.b16 %v1542
      %v2055 = vunpack.c.l.b16 %v1555
      %v2056 = vunpack.c.l.b16 %v1564
      %v2057 = vunpack.c.l.b16 %v1577
      %v2058 = vunpack.c.l.b16 %v1586
      %v2059 = vunpack.c.l.b16 %v1599
      %v2060 = vunpack.c.l.b16 %v1608
      %v2061 = vunpack.c.l.b16 %v1621
      %v2062 = vunpack.c.l.b16 %v1630
      %v2063 = vunpack.c.l.b16 %v1643
      %v2064 = vunpack.c.l.b16 %v1652
      %v2065 = vunpack.c.l.b16 %v1665
      %v2066 = vunpack.c.l.b16 %v1674
      %v2067 = vunpack.c.l.b16 %v1687
      %v2068 = vunpack.c.l.b16 %v1696
      %v2069 = vunpack.c.l.b16 %v1709
      %v2070 = vunpack.c.l.b16 %v1718
      %v2071 = vunpack.c.l.b16 %v1731
      %v2072 = vunpack.c.l.b16 %v1740
      %v2073 = vunpack.c.l.b16 %v1753
      %v2074 = vunpack.c.l.b16 %v1762
      %v2075 = vunpack.c.l.b16 %v1775
      %v2076 = vunpack.c.l.b16 %v1784
      %v2077 = vunpack.c.l.b16 %v1797
      %v2078 = vunpack.c.l.b16 %v1806
      %v2079 = vpack.c.b16 %v2048, %v2047
      %v2080 = vpack.c.b16 %v2050, %v2049
      %v2081 = vpack.c.b16 %v2052, %v2051
      %v2082 = vpack.c.b16 %v2054, %v2053
      %v2083 = vpack.c.b16 %v2056, %v2055
      %v2084 = vpack.c.b16 %v2058, %v2057
      %v2085 = vpack.c.b16 %v2060, %v2059
      %v2086 = vpack.c.b16 %v2062, %v2061
      %v2087 = vpack.c.b16 %v2064, %v2063
      %v2088 = vpack.c.b16 %v2066, %v2065
      %v2089 = vpack.c.b16 %v2068, %v2067
      %v2090 = vpack.c.b16 %v2070, %v2069
      %v2091 = vpack.c.b16 %v2072, %v2071
      %v2092 = vpack.c.b16 %v2074, %v2073
      %v2093 = vpack.c.b16 %v2076, %v2075
      %v2094 = vpack.c.b16 %v2078, %v2077
      %v2127 = vunpack.c.l.b16 %v1408
      %v2128 = vunpack.c.l.b16 %v1409
      %v2129 = vunpack.c.l.b16 %v1411
      %v2130 = vunpack.c.l.b16 %v1412
      %v2131 = vunpack.c.l.b16 %v1414
      %v2132 = vunpack.c.l.b16 %v1415
      %v2133 = vunpack.c.l.b16 %v1417
      %v2134 = vunpack.c.l.b16 %v1418
      %v2135 = vunpack.c.l.b16 %v1420
      %v2136 = vunpack.c.l.b16 %v1421
      %v2137 = vunpack.c.l.b16 %v1423
      %v2138 = vunpack.c.l.b16 %v1424
      %v2139 = vunpack.c.l.b16 %v1426
      %v2140 = vunpack.c.l.b16 %v1427
      %v2141 = vunpack.c.l.b16 %v1429
      %v2142 = vunpack.c.l.b16 %v1430
      %v2143 = vunpack.c.l.b16 %v1432
      %v2144 = vunpack.c.l.b16 %v1433
      %v2145 = vunpack.c.l.b16 %v1435
      %v2146 = vunpack.c.l.b16 %v1436
      %v2147 = vunpack.c.l.b16 %v1438
      %v2148 = vunpack.c.l.b16 %v1439
      %v2149 = vunpack.c.l.b16 %v1441
      %v2150 = vunpack.c.l.b16 %v1442
      %v2151 = vunpack.c.l.b16 %v1444
      %v2152 = vunpack.c.l.b16 %v1445
      %v2153 = vunpack.c.l.b16 %v1447
      %v2154 = vunpack.c.l.b16 %v1448
      %v2155 = vunpack.c.l.b16 %v1450
      %v2156 = vunpack.c.l.b16 %v1451
      %v2157 = vunpack.c.l.b16 %v1453
      %v2158 = vunpack.c.l.b16 %v1454
      %v2159 = vpack.c.b16 %v2128, %v2127
      %v2160 = vpack.c.b16 %v2130, %v2129
      %v2161 = vpack.c.b16 %v2132, %v2131
      %v2162 = vpack.c.b16 %v2134, %v2133
      %v2163 = vpack.c.b16 %v2136, %v2135
      %v2164 = vpack.c.b16 %v2138, %v2137
      %v2165 = vpack.c.b16 %v2140, %v2139
      %v2166 = vpack.c.b16 %v2142, %v2141
      %v2167 = vpack.c.b16 %v2144, %v2143
      %v2168 = vpack.c.b16 %v2146, %v2145
      %v2169 = vpack.c.b16 %v2148, %v2147
      %v2170 = vpack.c.b16 %v2150, %v2149
      %v2171 = vpack.c.b16 %v2152, %v2151
      %v2172 = vpack.c.b16 %v2154, %v2153
      %v2173 = vpack.c.b16 %v2156, %v2155
      %v2174 = vpack.c.b16 %v2158, %v2157
      %2175 = vrot.lane.b32.xlu0 %v2159, 4
      %v2176 = vpop.permute.xlu0 %2175
      %2177 = vrot.lane.b32.xlu0 %v2160, 4
      %v2178 = vpop.permute.xlu0 %2177
      %2179 = vrot.lane.b32.xlu0 %v2161, 4
      %v2180 = vpop.permute.xlu0 %2179
      %2181 = vrot.lane.b32.xlu0 %v2162, 4
      %v2182 = vpop.permute.xlu0 %2181
      %2183 = vrot.lane.b32.xlu0 %v2163, 4
      %v2184 = vpop.permute.xlu0 %2183
      %2185 = vrot.lane.b32.xlu0 %v2164, 4
      %v2186 = vpop.permute.xlu0 %2185
      %2187 = vrot.lane.b32.xlu0 %v2165, 4
      %v2188 = vpop.permute.xlu0 %2187
      %2189 = vrot.lane.b32.xlu0 %v2166, 4
      %v2190 = vpop.permute.xlu0 %2189
      %2191 = vrot.lane.b32.xlu0 %v2167, 4
      %v2192 = vpop.permute.xlu0 %2191
      %2193 = vrot.lane.b32.xlu0 %v2168, 4
      %v2194 = vpop.permute.xlu0 %2193
      %2195 = vrot.lane.b32.xlu0 %v2169, 4
      %v2196 = vpop.permute.xlu0 %2195
      %2197 = vrot.lane.b32.xlu0 %v2170, 4
      %v2198 = vpop.permute.xlu0 %2197
      %2199 = vrot.lane.b32.xlu0 %v2171, 4
      %v2200 = vpop.permute.xlu0 %2199
      %2201 = vrot.lane.b32.xlu0 %v2172, 4
      %v2202 = vpop.permute.xlu0 %2201
      %2203 = vrot.lane.b32.xlu0 %v2173, 4
      %v2204 = vpop.permute.xlu0 %2203
      %2205 = vrot.lane.b32.xlu0 %v2174, 4
      %v2206 = vpop.permute.xlu0 %2205
      %v2207 = vunpack.c.l.b16 %v1828
      %v2208 = vunpack.c.l.b16 %v1836
      %v2209 = vunpack.c.l.b16 %v1842
      %v2210 = vunpack.c.l.b16 %v1850
      %v2211 = vunpack.c.l.b16 %v1856
      %v2212 = vunpack.c.l.b16 %v1864
      %v2213 = vunpack.c.l.b16 %v1870
      %v2214 = vunpack.c.l.b16 %v1878
      %v2215 = vunpack.c.l.b16 %v1884
      %v2216 = vunpack.c.l.b16 %v1892
      %v2217 = vunpack.c.l.b16 %v1898
      %v2218 = vunpack.c.l.b16 %v1906
      %v2219 = vunpack.c.l.b16 %v1912
      %v2220 = vunpack.c.l.b16 %v1920
      %v2221 = vunpack.c.l.b16 %v1926
      %v2222 = vunpack.c.l.b16 %v1934
      %v2223 = vunpack.c.l.b16 %v1940
      %v2224 = vunpack.c.l.b16 %v1948
      %v2225 = vunpack.c.l.b16 %v1954
      %v2226 = vunpack.c.l.b16 %v1962
      %v2227 = vunpack.c.l.b16 %v1968
      %v2228 = vunpack.c.l.b16 %v1976
      %v2229 = vunpack.c.l.b16 %v1982
      %v2230 = vunpack.c.l.b16 %v1990
      %v2231 = vunpack.c.l.b16 %v1996
      %v2232 = vunpack.c.l.b16 %v2004
      %v2233 = vunpack.c.l.b16 %v2010
      %v2234 = vunpack.c.l.b16 %v2018
      %v2235 = vunpack.c.l.b16 %v2024
      %v2236 = vunpack.c.l.b16 %v2032
      %v2237 = vunpack.c.l.b16 %v2038
      %v2238 = vunpack.c.l.b16 %v2046
      %v2239 = vpack.c.b16 %v2208, %v2207
      %v2240 = vpack.c.b16 %v2210, %v2209
      %v2241 = vpack.c.b16 %v2212, %v2211
      %v2242 = vpack.c.b16 %v2214, %v2213
      %v2243 = vpack.c.b16 %v2216, %v2215
      %v2244 = vpack.c.b16 %v2218, %v2217
      %v2245 = vpack.c.b16 %v2220, %v2219
      %v2246 = vpack.c.b16 %v2222, %v2221
      %v2247 = vpack.c.b16 %v2224, %v2223
      %v2248 = vpack.c.b16 %v2226, %v2225
      %v2249 = vpack.c.b16 %v2228, %v2227
      %v2250 = vpack.c.b16 %v2230, %v2229
      %v2251 = vpack.c.b16 %v2232, %v2231
      %v2252 = vpack.c.b16 %v2234, %v2233
      %v2253 = vpack.c.b16 %v2236, %v2235
      %v2254 = vpack.c.b16 %v2238, %v2237
      %2255 = vrot.lane.b32.xlu0 %v2239, 8
      %v2256 = vpop.permute.xlu0 %2255
      %2257 = vrot.lane.b32.xlu0 %v2240, 8
      %v2258 = vpop.permute.xlu0 %2257
      %2259 = vrot.lane.b32.xlu0 %v2241, 8
      %v2260 = vpop.permute.xlu0 %2259
      %2261 = vrot.lane.b32.xlu0 %v2242, 8
      %v2262 = vpop.permute.xlu0 %2261
      %2263 = vrot.lane.b32.xlu0 %v2243, 8
      %v2264 = vpop.permute.xlu0 %2263
      %2265 = vrot.lane.b32.xlu0 %v2244, 8
      %v2266 = vpop.permute.xlu0 %2265
      %2267 = vrot.lane.b32.xlu0 %v2245, 8
      %v2268 = vpop.permute.xlu0 %2267
      %2269 = vrot.lane.b32.xlu0 %v2246, 8
      %v2270 = vpop.permute.xlu0 %2269
      %2271 = vrot.lane.b32.xlu0 %v2247, 8
      %v2272 = vpop.permute.xlu0 %2271
      %2273 = vrot.lane.b32.xlu0 %v2248, 8
      %v2274 = vpop.permute.xlu0 %2273
      %2275 = vrot.lane.b32.xlu0 %v2249, 8
      %v2276 = vpop.permute.xlu0 %2275
      %2277 = vrot.lane.b32.xlu0 %v2250, 8
      %v2278 = vpop.permute.xlu0 %2277
      %2279 = vrot.lane.b32.xlu0 %v2251, 8
      %v2280 = vpop.permute.xlu0 %2279
      %2281 = vrot.lane.b32.xlu0 %v2252, 8
      %v2282 = vpop.permute.xlu0 %2281
      %2283 = vrot.lane.b32.xlu0 %v2253, 8
      %v2284 = vpop.permute.xlu0 %2283
      %2285 = vrot.lane.b32.xlu0 %v2254, 8
      %v2286 = vpop.permute.xlu0 %2285
      %v2289 = vsel %vm1323, %v2079, %v2176
      %v2292 = vsel %vm1323, %v2080, %v2178
      %v2295 = vsel %vm1323, %v2081, %v2180
      %v2298 = vsel %vm1323, %v2082, %v2182
      %v2301 = vsel %vm1323, %v2083, %v2184
      %v2304 = vsel %vm1323, %v2084, %v2186
      %v2307 = vsel %vm1323, %v2085, %v2188
      %v2310 = vsel %vm1323, %v2086, %v2190
      %v2313 = vsel %vm1323, %v2087, %v2192
      %v2316 = vsel %vm1323, %v2088, %v2194
      %v2319 = vsel %vm1323, %v2089, %v2196
      %v2322 = vsel %vm1323, %v2090, %v2198
      %v2325 = vsel %vm1323, %v2091, %v2200
      %v2328 = vsel %vm1323, %v2092, %v2202
      %v2331 = vsel %vm1323, %v2093, %v2204
      %v2334 = vsel %vm1323, %v2094, %v2206
      %v2336 = vsel %vm1372, %v2289, %v2256
      %v2338 = vsel %vm1372, %v2292, %v2258
      %v2340 = vsel %vm1372, %v2295, %v2260
      %v2342 = vsel %vm1372, %v2298, %v2262
      %v2344 = vsel %vm1372, %v2301, %v2264
      %v2346 = vsel %vm1372, %v2304, %v2266
      %v2348 = vsel %vm1372, %v2307, %v2268
      %v2350 = vsel %vm1372, %v2310, %v2270
      %v2352 = vsel %vm1372, %v2313, %v2272
      %v2354 = vsel %vm1372, %v2316, %v2274
      %v2356 = vsel %vm1372, %v2319, %v2276
      %v2358 = vsel %vm1372, %v2322, %v2278
      %v2360 = vsel %vm1372, %v2325, %v2280
      %v2362 = vsel %vm1372, %v2328, %v2282
      %v2364 = vsel %vm1372, %v2331, %v2284
      %v2366 = vsel %vm1372, %v2334, %v2286
      %s2367 = scalar_lea.vmem %s1, 8
      %v2368 = vld [vmem:[%s2367] sm:$0xf]
      %v2369 = vld [vmem:[%s2367 + $0x4] sm:$0x3]
      %v2372 = vunpack.c.l.b16 %v2368
      %v2373 = vunpack.c.l.b16 %v2369
      %v2374 = vpack.c.b16 %v2373, %v2372
      %vm2375 = vcmask 97280
      %v2376 = vsel %vm2375, %v2336, 0
      %v2378 = vsel %vm2375, %v2338, 0
      %v2380 = vsel %vm2375, %v2340, 0
      %v2382 = vsel %vm2375, %v2342, 0
      %v2384 = vsel %vm2375, %v2344, 0
      %v2386 = vsel %vm2375, %v2346, 0
      %v2388 = vsel %vm2375, %v2348, 0
      %v2390 = vsel %vm2375, %v2350, 0
      %v2392 = vsel %vm2375, %v2352, 0
      %v2394 = vsel %vm2375, %v2354, 0
      %v2396 = vsel %vm2375, %v2356, 0
      %v2398 = vsel %vm2375, %v2358, 0
      %v2400 = vsel %vm2375, %v2360, 0
      %v2402 = vsel %vm2375, %v2362, 0
      %v2404 = vsel %vm2375, %v2364, 0
      %v2406 = vsel %vm2375, %v2366, 0
      %vm2408 = vcmask 1045504
      %v2410 = vsel %vm2408, %v2374, 0
      %2412 = vmatpush.bf16.msra.mxu0 0
      %2413 = vmatpush.bf16.msra.mxu0 0
      %2414 = vmatpush.bf16.msra.mxu0 0
      %2415 = vmatpush.bf16.msra.mxu0 0
      %2416 = vmatpush.bf16.msra.mxu0 0
      %2417 = vmatpush.bf16.msra.mxu0 0
      %2418 = vmatpush.bf16.msra.mxu0 0
      %2419 = vmatpush.bf16.msra.mxu0 %v2410
      %2420 = vmatmul.bf16.gmra.mxu0 %v2376
      %v2421 = vpop.f32.mrf.mxu0
      %v2422 = vadd.f32 0.0, %v2421
      %v2423 = vpop.f32.mrf.mxu0
      %v2424 = vadd.f32 0.0, %v2423
      %2425 = vmatmul.bf16.gmra.mxu0 %v2378
      %v2426 = vpop.f32.mrf.mxu0
      %v2427 = vadd.f32 0.0, %v2426
      %v2428 = vpop.f32.mrf.mxu0
      %v2429 = vadd.f32 0.0, %v2428
      %2430 = vmatmul.bf16.gmra.mxu0 %v2380
      %v2431 = vpop.f32.mrf.mxu0
      %v2432 = vadd.f32 0.0, %v2431
      %v2433 = vpop.f32.mrf.mxu0
      %v2434 = vadd.f32 0.0, %v2433
      %2435 = vmatmul.bf16.gmra.mxu0 %v2382
      %v2436 = vpop.f32.mrf.mxu0
      %v2437 = vadd.f32 0.0, %v2436
      %v2438 = vpop.f32.mrf.mxu0
      %v2439 = vadd.f32 0.0, %v2438
      %2440 = vmatmul.bf16.gmra.mxu0 %v2384
      %v2441 = vpop.f32.mrf.mxu0
      %v2442 = vadd.f32 0.0, %v2441
      %v2443 = vpop.f32.mrf.mxu0
      %v2444 = vadd.f32 0.0, %v2443
      %2445 = vmatmul.bf16.gmra.mxu0 %v2386
      %v2446 = vpop.f32.mrf.mxu0
      %v2447 = vadd.f32 0.0, %v2446
      %v2448 = vpop.f32.mrf.mxu0
      %v2449 = vadd.f32 0.0, %v2448
      %2450 = vmatmul.bf16.gmra.mxu0 %v2388
      %v2451 = vpop.f32.mrf.mxu0
      %v2452 = vadd.f32 0.0, %v2451
      %v2453 = vpop.f32.mrf.mxu0
      %v2454 = vadd.f32 0.0, %v2453
      %2455 = vmatmul.bf16.gmra.mxu0 %v2390
      %v2456 = vpop.f32.mrf.mxu0
      %v2457 = vadd.f32 0.0, %v2456
      %v2458 = vpop.f32.mrf.mxu0
      %v2459 = vadd.f32 0.0, %v2458
      %2460 = vmatmul.bf16.gmra.mxu0 %v2392
      %v2461 = vpop.f32.mrf.mxu0
      %v2462 = vadd.f32 0.0, %v2461
      %v2463 = vpop.f32.mrf.mxu0
      %v2464 = vadd.f32 0.0, %v2463
      %2465 = vmatmul.bf16.gmra.mxu0 %v2394
      %v2466 = vpop.f32.mrf.mxu0
      %v2467 = vadd.f32 0.0, %v2466
      %v2468 = vpop.f32.mrf.mxu0
      %v2469 = vadd.f32 0.0, %v2468
      %2470 = vmatmul.bf16.gmra.mxu0 %v2396
      %v2471 = vpop.f32.mrf.mxu0
      %v2472 = vadd.f32 0.0, %v2471
      %v2473 = vpop.f32.mrf.mxu0
      %v2474 = vadd.f32 0.0, %v2473
      %2475 = vmatmul.bf16.gmra.mxu0 %v2398
      %v2476 = vpop.f32.mrf.mxu0
      %v2477 = vadd.f32 0.0, %v2476
      %v2478 = vpop.f32.mrf.mxu0
      %v2479 = vadd.f32 0.0, %v2478
      %2480 = vmatmul.bf16.gmra.mxu0 %v2400
      %v2481 = vpop.f32.mrf.mxu0
      %v2482 = vadd.f32 0.0, %v2481
      %v2483 = vpop.f32.mrf.mxu0
      %v2484 = vadd.f32 0.0, %v2483
      %2485 = vmatmul.bf16.gmra.mxu0 %v2402
      %v2486 = vpop.f32.mrf.mxu0
      %v2487 = vadd.f32 0.0, %v2486
      %v2488 = vpop.f32.mrf.mxu0
      %v2489 = vadd.f32 0.0, %v2488
      %2490 = vmatmul.bf16.gmra.mxu0 %v2404
      %v2491 = vpop.f32.mrf.mxu0
      %v2492 = vadd.f32 0.0, %v2491
      %v2493 = vpop.f32.mrf.mxu0
      %v2494 = vadd.f32 0.0, %v2493
      %2495 = vmatmul.bf16.gmra.mxu0 %v2406
      %v2496 = vpop.f32.mrf.mxu0
      %v2497 = vadd.f32 0.0, %v2496
      %v2498 = vpop.f32.mrf.mxu0
      %v2499 = vadd.f32 0.0, %v2498
      %2500 = vdwg.mxu0
      %v2503 = vunpack.c.l.b16 %v1405
      %v2504 = vunpack.c.l.b16 %v1406
      %v2505 = vpack.c.b16 %v2504, %v2503
      %v2506 = vsel %vm2375, %v1374, 0
      %v2508 = vsel %vm2375, %v1376, 0
      %v2510 = vsel %vm2375, %v1378, 0
      %v2512 = vsel %vm2375, %v1380, 0
      %v2514 = vsel %vm2375, %v1382, 0
      %v2516 = vsel %vm2375, %v1384, 0
      %v2518 = vsel %vm2375, %v1386, 0
      %v2520 = vsel %vm2375, %v1388, 0
      %v2522 = vsel %vm2375, %v1390, 0
      %v2524 = vsel %vm2375, %v1392, 0
      %v2526 = vsel %vm2375, %v1394, 0
      %v2528 = vsel %vm2375, %v1396, 0
      %v2530 = vsel %vm2375, %v1398, 0
      %v2532 = vsel %vm2375, %v1400, 0
      %v2534 = vsel %vm2375, %v1402, 0
      %v2536 = vsel %vm2375, %v1404, 0
      %v2539 = vsel %vm2408, %v2505, 0
      %2541 = vmatpush.bf16.msra.mxu0 0
      %2542 = vmatpush.bf16.msra.mxu0 0
      %2543 = vmatpush.bf16.msra.mxu0 0
      %2544 = vmatpush.bf16.msra.mxu0 0
      %2545 = vmatpush.bf16.msra.mxu0 0
      %2546 = vmatpush.bf16.msra.mxu0 0
      %2547 = vmatpush.bf16.msra.mxu0 0
      %2548 = vmatpush.bf16.msra.mxu0 %v2539
      %2549 = vmatmul.bf16.gmra.mxu0 %v2506
      %v2550 = vpop.f32.mrf.mxu0
      %v2551 = vadd.f32 %v2422, %v2550
      %v2552 = vpop.f32.mrf.mxu0
      %v2553 = vadd.f32 %v2424, %v2552
      %2554 = vmatmul.bf16.gmra.mxu0 %v2508
      %v2555 = vpop.f32.mrf.mxu0
      %v2556 = vadd.f32 %v2427, %v2555
      %v2557 = vpop.f32.mrf.mxu0
      %v2558 = vadd.f32 %v2429, %v2557
      %2559 = vmatmul.bf16.gmra.mxu0 %v2510
      %v2560 = vpop.f32.mrf.mxu0
      %v2561 = vadd.f32 %v2432, %v2560
      %v2562 = vpop.f32.mrf.mxu0
      %v2563 = vadd.f32 %v2434, %v2562
      %2564 = vmatmul.bf16.gmra.mxu0 %v2512
      %v2565 = vpop.f32.mrf.mxu0
      %v2566 = vadd.f32 %v2437, %v2565
      %v2567 = vpop.f32.mrf.mxu0
      %v2568 = vadd.f32 %v2439, %v2567
      %2569 = vmatmul.bf16.gmra.mxu0 %v2514
      %v2570 = vpop.f32.mrf.mxu0
      %v2571 = vadd.f32 %v2442, %v2570
      %v2572 = vpop.f32.mrf.mxu0
      %v2573 = vadd.f32 %v2444, %v2572
      %2574 = vmatmul.bf16.gmra.mxu0 %v2516
      %v2575 = vpop.f32.mrf.mxu0
      %v2576 = vadd.f32 %v2447, %v2575
      %v2577 = vpop.f32.mrf.mxu0
      %v2578 = vadd.f32 %v2449, %v2577
      %2579 = vmatmul.bf16.gmra.mxu0 %v2518
      %v2580 = vpop.f32.mrf.mxu0
      %v2581 = vadd.f32 %v2452, %v2580
      %v2582 = vpop.f32.mrf.mxu0
      %v2583 = vadd.f32 %v2454, %v2582
      %2584 = vmatmul.bf16.gmra.mxu0 %v2520
      %v2585 = vpop.f32.mrf.mxu0
      %v2586 = vadd.f32 %v2457, %v2585
      %v2587 = vpop.f32.mrf.mxu0
      %v2588 = vadd.f32 %v2459, %v2587
      %2589 = vmatmul.bf16.gmra.mxu0 %v2522
      %v2590 = vpop.f32.mrf.mxu0
      %v2591 = vadd.f32 %v2462, %v2590
      %v2592 = vpop.f32.mrf.mxu0
      %v2593 = vadd.f32 %v2464, %v2592
      %2594 = vmatmul.bf16.gmra.mxu0 %v2524
      %v2595 = vpop.f32.mrf.mxu0
      %v2596 = vadd.f32 %v2467, %v2595
      %v2597 = vpop.f32.mrf.mxu0
      %v2598 = vadd.f32 %v2469, %v2597
      %2599 = vmatmul.bf16.gmra.mxu0 %v2526
      %v2600 = vpop.f32.mrf.mxu0
      %v2601 = vadd.f32 %v2472, %v2600
      %v2602 = vpop.f32.mrf.mxu0
      %v2603 = vadd.f32 %v2474, %v2602
      %2604 = vmatmul.bf16.gmra.mxu0 %v2528
      %v2605 = vpop.f32.mrf.mxu0
      %v2606 = vadd.f32 %v2477, %v2605
      %v2607 = vpop.f32.mrf.mxu0
      %v2608 = vadd.f32 %v2479, %v2607
      %2609 = vmatmul.bf16.gmra.mxu0 %v2530
      %v2610 = vpop.f32.mrf.mxu0
      %v2611 = vadd.f32 %v2482, %v2610
      %v2612 = vpop.f32.mrf.mxu0
      %v2613 = vadd.f32 %v2484, %v2612
      %2614 = vmatmul.bf16.gmra.mxu0 %v2532
      %v2615 = vpop.f32.mrf.mxu0
      %v2616 = vadd.f32 %v2487, %v2615
      %v2617 = vpop.f32.mrf.mxu0
      %v2618 = vadd.f32 %v2489, %v2617
      %2619 = vmatmul.bf16.gmra.mxu0 %v2534
      %v2620 = vpop.f32.mrf.mxu0
      %v2621 = vadd.f32 %v2492, %v2620
      %v2622 = vpop.f32.mrf.mxu0
      %v2623 = vadd.f32 %v2494, %v2622
      %2624 = vmatmul.bf16.gmra.mxu0 %v2536
      %v2625 = vpop.f32.mrf.mxu0
      %v2626 = vadd.f32 %v2497, %v2625
      %v2627 = vpop.f32.mrf.mxu0
      %v2628 = vadd.f32 %v2499, %v2627
      %2629 = vdwg.mxu0
      %s2630 = scalar_lea.vmem [#allocation2], 32
      %v2631 = vld [vmem:[%s2630] sm:$0x8]
      %v2632 = vld [vmem:[%s2630 + $0x4] sm:$0xf]
      %v2633 = vld [vmem:[%s2630 + $0x8] sm:$0xf]
      %v2634 = vld [vmem:[%s2630 + $0x10] sm:$0x8]
      %v2635 = vld [vmem:[%s2630 + $0x14] sm:$0xf]
      %v2636 = vld [vmem:[%s2630 + $0x18] sm:$0xf]
      %v2637 = vld [vmem:[%s2630 + $0x20] sm:$0x8]
      %v2638 = vld [vmem:[%s2630 + $0x24] sm:$0xf]
      %v2639 = vld [vmem:[%s2630 + $0x28] sm:$0xf]
      %v2640 = vld [vmem:[%s2630 + $0x30] sm:$0x8]
      %v2641 = vld [vmem:[%s2630 + $0x34] sm:$0xf]
      %v2642 = vld [vmem:[%s2630 + $0x38] sm:$0xf]
      %v2643 = vld [vmem:[%s2630 + $0x40] sm:$0x8]
      %v2644 = vld [vmem:[%s2630 + $0x44] sm:$0xf]
      %v2645 = vld [vmem:[%s2630 + $0x48] sm:$0xf]
      %v2646 = vld [vmem:[%s2630 + $0x50] sm:$0x8]
      %v2647 = vld [vmem:[%s2630 + $0x54] sm:$0xf]
      %v2648 = vld [vmem:[%s2630 + $0x58] sm:$0xf]
      %v2649 = vld [vmem:[%s2630 + $0x60] sm:$0x8]
      %v2650 = vld [vmem:[%s2630 + $0x64] sm:$0xf]
      %v2651 = vld [vmem:[%s2630 + $0x68] sm:$0xf]
      %v2652 = vld [vmem:[%s2630 + $0x70] sm:$0x8]
      %v2653 = vld [vmem:[%s2630 + $0x74] sm:$0xf]
      %v2654 = vld [vmem:[%s2630 + $0x78] sm:$0xf]
      %v2655 = vld [vmem:[%s2630 + $0x80] sm:$0x8]
      %v2656 = vld [vmem:[%s2630 + $0x84] sm:$0xf]
      %v2657 = vld [vmem:[%s2630 + $0x88] sm:$0xf]
      %v2658 = vld [vmem:[%s2630 + $0x90] sm:$0x8]
      %v2659 = vld [vmem:[%s2630 + $0x94] sm:$0xf]
      %v2660 = vld [vmem:[%s2630 + $0x98] sm:$0xf]
      %v2661 = vld [vmem:[%s2630 + $0xa0] sm:$0x8]
      %v2662 = vld [vmem:[%s2630 + $0xa4] sm:$0xf]
      %v2663 = vld [vmem:[%s2630 + $0xa8] sm:$0xf]
      %v2664 = vld [vmem:[%s2630 + $0xb0] sm:$0x8]
      %v2665 = vld [vmem:[%s2630 + $0xb4] sm:$0xf]
      %v2666 = vld [vmem:[%s2630 + $0xb8] sm:$0xf]
      %v2667 = vld [vmem:[%s2630 + $0xc0] sm:$0x8]
      %v2668 = vld [vmem:[%s2630 + $0xc4] sm:$0xf]
      %v2669 = vld [vmem:[%s2630 + $0xc8] sm:$0xf]
      %v2670 = vld [vmem:[%s2630 + $0xd0] sm:$0x8]
      %v2671 = vld [vmem:[%s2630 + $0xd4] sm:$0xf]
      %v2672 = vld [vmem:[%s2630 + $0xd8] sm:$0xf]
      %v2673 = vld [vmem:[%s2630 + $0xe0] sm:$0x8]
      %v2674 = vld [vmem:[%s2630 + $0xe4] sm:$0xf]
      %v2675 = vld [vmem:[%s2630 + $0xe8] sm:$0xf]
      %v2676 = vld [vmem:[%s2630 + $0xf0] sm:$0x8]
      %v2677 = vld [vmem:[%s2630 + $0xf4] sm:$0xf]
      %v2678 = vld [vmem:[%s2630 + $0xf8] sm:$0xf]
      %v2680 = vshrl.u32 %v2631, 16
      %v2682 = vrot.slane %v2680, 7
      %v2683 = vrot.slane %v2682, 4
      %v2685 = vshrl.u32 %v2632, 16
      %v2687 = vrot.slane %v2685, 7
      %v2688 = vshll.u32 %v2632, 16
      %v2690 = vor.u32 %v2687, %v2688
      %v2691 = vsel %vm487, %v2683, %v2690
      %v2692 = vrot.slane %v2687, 4
      %v2694 = vshrl.u32 %v2633, 16
      %v2696 = vrot.slane %v2694, 7
      %v2697 = vshll.u32 %v2633, 16
      %v2699 = vor.u32 %v2696, %v2697
      %v2700 = vsel %vm487, %v2692, %v2699
      %v2702 = vshrl.u32 %v2634, 16
      %v2704 = vrot.slane %v2702, 7
      %v2705 = vrot.slane %v2704, 4
      %v2707 = vshrl.u32 %v2635, 16
      %v2709 = vrot.slane %v2707, 7
      %v2710 = vshll.u32 %v2635, 16
      %v2712 = vor.u32 %v2709, %v2710
      %v2713 = vsel %vm487, %v2705, %v2712
      %v2714 = vrot.slane %v2709, 4
      %v2716 = vshrl.u32 %v2636, 16
      %v2718 = vrot.slane %v2716, 7
      %v2719 = vshll.u32 %v2636, 16
      %v2721 = vor.u32 %v2718, %v2719
      %v2722 = vsel %vm487, %v2714, %v2721
      %v2724 = vshrl.u32 %v2637, 16
      %v2726 = vrot.slane %v2724, 7
      %v2727 = vrot.slane %v2726, 4
      %v2729 = vshrl.u32 %v2638, 16
      %v2731 = vrot.slane %v2729, 7
      %v2732 = vshll.u32 %v2638, 16
      %v2734 = vor.u32 %v2731, %v2732
      %v2735 = vsel %vm487, %v2727, %v2734
      %v2736 = vrot.slane %v2731, 4
      %v2738 = vshrl.u32 %v2639, 16
      %v2740 = vrot.slane %v2738, 7
      %v2741 = vshll.u32 %v2639, 16
      %v2743 = vor.u32 %v2740, %v2741
      %v2744 = vsel %vm487, %v2736, %v2743
      %v2746 = vshrl.u32 %v2640, 16
      %v2748 = vrot.slane %v2746, 7
      %v2749 = vrot.slane %v2748, 4
      %v2751 = vshrl.u32 %v2641, 16
      %v2753 = vrot.slane %v2751, 7
      %v2754 = vshll.u32 %v2641, 16
      %v2756 = vor.u32 %v2753, %v2754
      %v2757 = vsel %vm487, %v2749, %v2756
      %v2758 = vrot.slane %v2753, 4
      %v2760 = vshrl.u32 %v2642, 16
      %v2762 = vrot.slane %v2760, 7
      %v2763 = vshll.u32 %v2642, 16
      %v2765 = vor.u32 %v2762, %v2763
      %v2766 = vsel %vm487, %v2758, %v2765
      %v2768 = vshrl.u32 %v2643, 16
      %v2770 = vrot.slane %v2768, 7
      %v2771 = vrot.slane %v2770, 4
      %v2773 = vshrl.u32 %v2644, 16
      %v2775 = vrot.slane %v2773, 7
      %v2776 = vshll.u32 %v2644, 16
      %v2778 = vor.u32 %v2775, %v2776
      %v2779 = vsel %vm487, %v2771, %v2778
      %v2780 = vrot.slane %v2775, 4
      %v2782 = vshrl.u32 %v2645, 16
      %v2784 = vrot.slane %v2782, 7
      %v2785 = vshll.u32 %v2645, 16
      %v2787 = vor.u32 %v2784, %v2785
      %v2788 = vsel %vm487, %v2780, %v2787
      %v2790 = vshrl.u32 %v2646, 16
      %v2792 = vrot.slane %v2790, 7
      %v2793 = vrot.slane %v2792, 4
      %v2795 = vshrl.u32 %v2647, 16
      %v2797 = vrot.slane %v2795, 7
      %v2798 = vshll.u32 %v2647, 16
      %v2800 = vor.u32 %v2797, %v2798
      %v2801 = vsel %vm487, %v2793, %v2800
      %v2802 = vrot.slane %v2797, 4
      %v2804 = vshrl.u32 %v2648, 16
      %v2806 = vrot.slane %v2804, 7
      %v2807 = vshll.u32 %v2648, 16
      %v2809 = vor.u32 %v2806, %v2807
      %v2810 = vsel %vm487, %v2802, %v2809
      %v2812 = vshrl.u32 %v2649, 16
      %v2814 = vrot.slane %v2812, 7
      %v2815 = vrot.slane %v2814, 4
      %v2817 = vshrl.u32 %v2650, 16
      %v2819 = vrot.slane %v2817, 7
      %v2820 = vshll.u32 %v2650, 16
      %v2822 = vor.u32 %v2819, %v2820
      %v2823 = vsel %vm487, %v2815, %v2822
      %v2824 = vrot.slane %v2819, 4
      %v2826 = vshrl.u32 %v2651, 16
      %v2828 = vrot.slane %v2826, 7
      %v2829 = vshll.u32 %v2651, 16
      %v2831 = vor.u32 %v2828, %v2829
      %v2832 = vsel %vm487, %v2824, %v2831
      %v2834 = vshrl.u32 %v2652, 16
      %v2836 = vrot.slane %v2834, 7
      %v2837 = vrot.slane %v2836, 4
      %v2839 = vshrl.u32 %v2653, 16
      %v2841 = vrot.slane %v2839, 7
      %v2842 = vshll.u32 %v2653, 16
      %v2844 = vor.u32 %v2841, %v2842
      %v2845 = vsel %vm487, %v2837, %v2844
      %v2846 = vrot.slane %v2841, 4
      %v2848 = vshrl.u32 %v2654, 16
      %v2850 = vrot.slane %v2848, 7
      %v2851 = vshll.u32 %v2654, 16
      %v2853 = vor.u32 %v2850, %v2851
      %v2854 = vsel %vm487, %v2846, %v2853
      %v2856 = vshrl.u32 %v2655, 16
      %v2858 = vrot.slane %v2856, 7
      %v2859 = vrot.slane %v2858, 4
      %v2861 = vshrl.u32 %v2656, 16
      %v2863 = vrot.slane %v2861, 7
      %v2864 = vshll.u32 %v2656, 16
      %v2866 = vor.u32 %v2863, %v2864
      %v2867 = vsel %vm487, %v2859, %v2866
      %v2868 = vrot.slane %v2863, 4
      %v2870 = vshrl.u32 %v2657, 16
      %v2872 = vrot.slane %v2870, 7
      %v2873 = vshll.u32 %v2657, 16
      %v2875 = vor.u32 %v2872, %v2873
      %v2876 = vsel %vm487, %v2868, %v2875
      %v2878 = vshrl.u32 %v2658, 16
      %v2880 = vrot.slane %v2878, 7
      %v2881 = vrot.slane %v2880, 4
      %v2883 = vshrl.u32 %v2659, 16
      %v2885 = vrot.slane %v2883, 7
      %v2886 = vshll.u32 %v2659, 16
      %v2888 = vor.u32 %v2885, %v2886
      %v2889 = vsel %vm487, %v2881, %v2888
      %v2890 = vrot.slane %v2885, 4
      %v2892 = vshrl.u32 %v2660, 16
      %v2894 = vrot.slane %v2892, 7
      %v2895 = vshll.u32 %v2660, 16
      %v2897 = vor.u32 %v2894, %v2895
      %v2898 = vsel %vm487, %v2890, %v2897
      %v2900 = vshrl.u32 %v2661, 16
      %v2902 = vrot.slane %v2900, 7
      %v2903 = vrot.slane %v2902, 4
      %v2905 = vshrl.u32 %v2662, 16
      %v2907 = vrot.slane %v2905, 7
      %v2908 = vshll.u32 %v2662, 16
      %v2910 = vor.u32 %v2907, %v2908
      %v2911 = vsel %vm487, %v2903, %v2910
      %v2912 = vrot.slane %v2907, 4
      %v2914 = vshrl.u32 %v2663, 16
      %v2916 = vrot.slane %v2914, 7
      %v2917 = vshll.u32 %v2663, 16
      %v2919 = vor.u32 %v2916, %v2917
      %v2920 = vsel %vm487, %v2912, %v2919
      %v2922 = vshrl.u32 %v2664, 16
      %v2924 = vrot.slane %v2922, 7
      %v2925 = vrot.slane %v2924, 4
      %v2927 = vshrl.u32 %v2665, 16
      %v2929 = vrot.slane %v2927, 7
      %v2930 = vshll.u32 %v2665, 16
      %v2932 = vor.u32 %v2929, %v2930
      %v2933 = vsel %vm487, %v2925, %v2932
      %v2934 = vrot.slane %v2929, 4
      %v2936 = vshrl.u32 %v2666, 16
      %v2938 = vrot.slane %v2936, 7
      %v2939 = vshll.u32 %v2666, 16
      %v2941 = vor.u32 %v2938, %v2939
      %v2942 = vsel %vm487, %v2934, %v2941
      %v2944 = vshrl.u32 %v2667, 16
      %v2946 = vrot.slane %v2944, 7
      %v2947 = vrot.slane %v2946, 4
      %v2949 = vshrl.u32 %v2668, 16
      %v2951 = vrot.slane %v2949, 7
      %v2952 = vshll.u32 %v2668, 16
      %v2954 = vor.u32 %v2951, %v2952
      %v2955 = vsel %vm487, %v2947, %v2954
      %v2956 = vrot.slane %v2951, 4
      %v2958 = vshrl.u32 %v2669, 16
      %v2960 = vrot.slane %v2958, 7
      %v2961 = vshll.u32 %v2669, 16
      %v2963 = vor.u32 %v2960, %v2961
      %v2964 = vsel %vm487, %v2956, %v2963
      %v2966 = vshrl.u32 %v2670, 16
      %v2968 = vrot.slane %v2966, 7
      %v2969 = vrot.slane %v2968, 4
      %v2971 = vshrl.u32 %v2671, 16
      %v2973 = vrot.slane %v2971, 7
      %v2974 = vshll.u32 %v2671, 16
      %v2976 = vor.u32 %v2973, %v2974
      %v2977 = vsel %vm487, %v2969, %v2976
      %v2978 = vrot.slane %v2973, 4
      %v2980 = vshrl.u32 %v2672, 16
      %v2982 = vrot.slane %v2980, 7
      %v2983 = vshll.u32 %v2672, 16
      %v2985 = vor.u32 %v2982, %v2983
      %v2986 = vsel %vm487, %v2978, %v2985
      %v2988 = vshrl.u32 %v2673, 16
      %v2990 = vrot.slane %v2988, 7
      %v2991 = vrot.slane %v2990, 4
      %v2993 = vshrl.u32 %v2674, 16
      %v2995 = vrot.slane %v2993, 7
      %v2996 = vshll.u32 %v2674, 16
      %v2998 = vor.u32 %v2995, %v2996
      %v2999 = vsel %vm487, %v2991, %v2998
      %v3000 = vrot.slane %v2995, 4
      %v3002 = vshrl.u32 %v2675, 16
      %v3004 = vrot.slane %v3002, 7
      %v3005 = vshll.u32 %v2675, 16
      %v3007 = vor.u32 %v3004, %v3005
      %v3008 = vsel %vm487, %v3000, %v3007
      %v3010 = vshrl.u32 %v2676, 16
      %v3012 = vrot.slane %v3010, 7
      %v3013 = vrot.slane %v3012, 4
      %v3015 = vshrl.u32 %v2677, 16
      %v3017 = vrot.slane %v3015, 7
      %v3018 = vshll.u32 %v2677, 16
      %v3020 = vor.u32 %v3017, %v3018
      %v3021 = vsel %vm487, %v3013, %v3020
      %v3022 = vrot.slane %v3017, 4
      %v3024 = vshrl.u32 %v2678, 16
      %v3026 = vrot.slane %v3024, 7
      %v3027 = vshll.u32 %v2678, 16
      %v3029 = vor.u32 %v3026, %v3027
      %v3030 = vsel %vm487, %v3022, %v3029
      %v3031 = vld [vmem:[%s2630 + $0xc] sm:$0x1]
      %v3032 = vld [vmem:[%s2630 + $0x1c] sm:$0x1]
      %v3033 = vld [vmem:[%s2630 + $0x2c] sm:$0x1]
      %v3034 = vld [vmem:[%s2630 + $0x3c] sm:$0x1]
      %v3035 = vld [vmem:[%s2630 + $0x4c] sm:$0x1]
      %v3036 = vld [vmem:[%s2630 + $0x5c] sm:$0x1]
      %v3037 = vld [vmem:[%s2630 + $0x6c] sm:$0x1]
      %v3038 = vld [vmem:[%s2630 + $0x7c] sm:$0x1]
      %v3039 = vld [vmem:[%s2630 + $0x8c] sm:$0x1]
      %v3040 = vld [vmem:[%s2630 + $0x9c] sm:$0x1]
      %v3041 = vld [vmem:[%s2630 + $0xac] sm:$0x1]
      %v3042 = vld [vmem:[%s2630 + $0xbc] sm:$0x1]
      %v3043 = vld [vmem:[%s2630 + $0xcc] sm:$0x1]
      %v3044 = vld [vmem:[%s2630 + $0xdc] sm:$0x1]
      %v3045 = vld [vmem:[%s2630 + $0xec] sm:$0x1]
      %v3046 = vld [vmem:[%s2630 + $0xfc] sm:$0x1]
      %v3047 = vrot.slane %v2685, 4
      %v3048 = vrot.slane %v2688, 5
      %v3049 = vor.u32 %v3047, %v3048
      %v3050 = vrot.slane %v3049, 4
      %v3051 = vrot.slane %v2697, 5
      %v3052 = vsel %vm858, %v3050, %v3051
      %v3053 = vrot.slane %v2694, 4
      %v3054 = vor.u32 %v3053, %v3051
      %v3055 = vrot.slane %v3054, 4
      %v3057 = vshll.u32 %v3031, 16
      %v3059 = vrot.slane %v3057, 5
      %v3060 = vsel %vm858, %v3055, %v3059
      %v3061 = vrot.slane %v2707, 4
      %v3062 = vrot.slane %v2710, 5
      %v3063 = vor.u32 %v3061, %v3062
      %v3064 = vrot.slane %v3063, 4
      %v3065 = vrot.slane %v2719, 5
      %v3066 = vsel %vm858, %v3064, %v3065
      %v3067 = vrot.slane %v2716, 4
      %v3068 = vor.u32 %v3067, %v3065
      %v3069 = vrot.slane %v3068, 4
      %v3071 = vshll.u32 %v3032, 16
      %v3073 = vrot.slane %v3071, 5
      %v3074 = vsel %vm858, %v3069, %v3073
      %v3075 = vrot.slane %v2729, 4
      %v3076 = vrot.slane %v2732, 5
      %v3077 = vor.u32 %v3075, %v3076
      %v3078 = vrot.slane %v3077, 4
      %v3079 = vrot.slane %v2741, 5
      %v3080 = vsel %vm858, %v3078, %v3079
      %v3081 = vrot.slane %v2738, 4
      %v3082 = vor.u32 %v3081, %v3079
      %v3083 = vrot.slane %v3082, 4
      %v3085 = vshll.u32 %v3033, 16
      %v3087 = vrot.slane %v3085, 5
      %v3088 = vsel %vm858, %v3083, %v3087
      %v3089 = vrot.slane %v2751, 4
      %v3090 = vrot.slane %v2754, 5
      %v3091 = vor.u32 %v3089, %v3090
      %v3092 = vrot.slane %v3091, 4
      %v3093 = vrot.slane %v2763, 5
      %v3094 = vsel %vm858, %v3092, %v3093
      %v3095 = vrot.slane %v2760, 4
      %v3096 = vor.u32 %v3095, %v3093
      %v3097 = vrot.slane %v3096, 4
      %v3099 = vshll.u32 %v3034, 16
      %v3101 = vrot.slane %v3099, 5
      %v3102 = vsel %vm858, %v3097, %v3101
      %v3103 = vrot.slane %v2773, 4
      %v3104 = vrot.slane %v2776, 5
      %v3105 = vor.u32 %v3103, %v3104
      %v3106 = vrot.slane %v3105, 4
      %v3107 = vrot.slane %v2785, 5
      %v3108 = vsel %vm858, %v3106, %v3107
      %v3109 = vrot.slane %v2782, 4
      %v3110 = vor.u32 %v3109, %v3107
      %v3111 = vrot.slane %v3110, 4
      %v3113 = vshll.u32 %v3035, 16
      %v3115 = vrot.slane %v3113, 5
      %v3116 = vsel %vm858, %v3111, %v3115
      %v3117 = vrot.slane %v2795, 4
      %v3118 = vrot.slane %v2798, 5
      %v3119 = vor.u32 %v3117, %v3118
      %v3120 = vrot.slane %v3119, 4
      %v3121 = vrot.slane %v2807, 5
      %v3122 = vsel %vm858, %v3120, %v3121
      %v3123 = vrot.slane %v2804, 4
      %v3124 = vor.u32 %v3123, %v3121
      %v3125 = vrot.slane %v3124, 4
      %v3127 = vshll.u32 %v3036, 16
      %v3129 = vrot.slane %v3127, 5
      %v3130 = vsel %vm858, %v3125, %v3129
      %v3131 = vrot.slane %v2817, 4
      %v3132 = vrot.slane %v2820, 5
      %v3133 = vor.u32 %v3131, %v3132
      %v3134 = vrot.slane %v3133, 4
      %v3135 = vrot.slane %v2829, 5
      %v3136 = vsel %vm858, %v3134, %v3135
      %v3137 = vrot.slane %v2826, 4
      %v3138 = vor.u32 %v3137, %v3135
      %v3139 = vrot.slane %v3138, 4
      %v3141 = vshll.u32 %v3037, 16
      %v3143 = vrot.slane %v3141, 5
      %v3144 = vsel %vm858, %v3139, %v3143
      %v3145 = vrot.slane %v2839, 4
      %v3146 = vrot.slane %v2842, 5
      %v3147 = vor.u32 %v3145, %v3146
      %v3148 = vrot.slane %v3147, 4
      %v3149 = vrot.slane %v2851, 5
      %v3150 = vsel %vm858, %v3148, %v3149
      %v3151 = vrot.slane %v2848, 4
      %v3152 = vor.u32 %v3151, %v3149
      %v3153 = vrot.slane %v3152, 4
      %v3155 = vshll.u32 %v3038, 16
      %v3157 = vrot.slane %v3155, 5
      %v3158 = vsel %vm858, %v3153, %v3157
      %v3159 = vrot.slane %v2861, 4
      %v3160 = vrot.slane %v2864, 5
      %v3161 = vor.u32 %v3159, %v3160
      %v3162 = vrot.slane %v3161, 4
      %v3163 = vrot.slane %v2873, 5
      %v3164 = vsel %vm858, %v3162, %v3163
      %v3165 = vrot.slane %v2870, 4
      %v3166 = vor.u32 %v3165, %v3163
      %v3167 = vrot.slane %v3166, 4
      %v3169 = vshll.u32 %v3039, 16
      %v3171 = vrot.slane %v3169, 5
      %v3172 = vsel %vm858, %v3167, %v3171
      %v3173 = vrot.slane %v2883, 4
      %v3174 = vrot.slane %v2886, 5
      %v3175 = vor.u32 %v3173, %v3174
      %v3176 = vrot.slane %v3175, 4
      %v3177 = vrot.slane %v2895, 5
      %v3178 = vsel %vm858, %v3176, %v3177
      %v3179 = vrot.slane %v2892, 4
      %v3180 = vor.u32 %v3179, %v3177
      %v3181 = vrot.slane %v3180, 4
      %v3183 = vshll.u32 %v3040, 16
      %v3185 = vrot.slane %v3183, 5
      %v3186 = vsel %vm858, %v3181, %v3185
      %v3187 = vrot.slane %v2905, 4
      %v3188 = vrot.slane %v2908, 5
      %v3189 = vor.u32 %v3187, %v3188
      %v3190 = vrot.slane %v3189, 4
      %v3191 = vrot.slane %v2917, 5
      %v3192 = vsel %vm858, %v3190, %v3191
      %v3193 = vrot.slane %v2914, 4
      %v3194 = vor.u32 %v3193, %v3191
      %v3195 = vrot.slane %v3194, 4
      %v3197 = vshll.u32 %v3041, 16
      %v3199 = vrot.slane %v3197, 5
      %v3200 = vsel %vm858, %v3195, %v3199
      %v3201 = vrot.slane %v2927, 4
      %v3202 = vrot.slane %v2930, 5
      %v3203 = vor.u32 %v3201, %v3202
      %v3204 = vrot.slane %v3203, 4
      %v3205 = vrot.slane %v2939, 5
      %v3206 = vsel %vm858, %v3204, %v3205
      %v3207 = vrot.slane %v2936, 4
      %v3208 = vor.u32 %v3207, %v3205
      %v3209 = vrot.slane %v3208, 4
      %v3211 = vshll.u32 %v3042, 16
      %v3213 = vrot.slane %v3211, 5
      %v3214 = vsel %vm858, %v3209, %v3213
      %v3215 = vrot.slane %v2949, 4
      %v3216 = vrot.slane %v2952, 5
      %v3217 = vor.u32 %v3215, %v3216
      %v3218 = vrot.slane %v3217, 4
      %v3219 = vrot.slane %v2961, 5
      %v3220 = vsel %vm858, %v3218, %v3219
      %v3221 = vrot.slane %v2958, 4
      %v3222 = vor.u32 %v3221, %v3219
      %v3223 = vrot.slane %v3222, 4
      %v3225 = vshll.u32 %v3043, 16
      %v3227 = vrot.slane %v3225, 5
      %v3228 = vsel %vm858, %v3223, %v3227
      %v3229 = vrot.slane %v2971, 4
      %v3230 = vrot.slane %v2974, 5
      %v3231 = vor.u32 %v3229, %v3230
      %v3232 = vrot.slane %v3231, 4
      %v3233 = vrot.slane %v2983, 5
      %v3234 = vsel %vm858, %v3232, %v3233
      %v3235 = vrot.slane %v2980, 4
      %v3236 = vor.u32 %v3235, %v3233
      %v3237 = vrot.slane %v3236, 4
      %v3239 = vshll.u32 %v3044, 16
      %v3241 = vrot.slane %v3239, 5
      %v3242 = vsel %vm858, %v3237, %v3241
      %v3243 = vrot.slane %v2993, 4
      %v3244 = vrot.slane %v2996, 5
      %v3245 = vor.u32 %v3243, %v3244
      %v3246 = vrot.slane %v3245, 4
      %v3247 = vrot.slane %v3005, 5
      %v3248 = vsel %vm858, %v3246, %v3247
      %v3249 = vrot.slane %v3002, 4
      %v3250 = vor.u32 %v3249, %v3247
      %v3251 = vrot.slane %v3250, 4
      %v3253 = vshll.u32 %v3045, 16
      %v3255 = vrot.slane %v3253, 5
      %v3256 = vsel %vm858, %v3251, %v3255
      %v3257 = vrot.slane %v3015, 4
      %v3258 = vrot.slane %v3018, 5
      %v3259 = vor.u32 %v3257, %v3258
      %v3260 = vrot.slane %v3259, 4
      %v3261 = vrot.slane %v3027, 5
      %v3262 = vsel %vm858, %v3260, %v3261
      %v3263 = vrot.slane %v3024, 4
      %v3264 = vor.u32 %v3263, %v3261
      %v3265 = vrot.slane %v3264, 4
      %v3267 = vshll.u32 %v3046, 16
      %v3269 = vrot.slane %v3267, 5
      %v3270 = vsel %vm858, %v3265, %v3269
      %v3271 = vunpack.c.l.b16 %v2691
      %v3272 = vunpack.c.l.b16 %v2700
      %v3273 = vunpack.c.l.b16 %v2713
      %v3274 = vunpack.c.l.b16 %v2722
      %v3275 = vunpack.c.l.b16 %v2735
      %v3276 = vunpack.c.l.b16 %v2744
      %v3277 = vunpack.c.l.b16 %v2757
      %v3278 = vunpack.c.l.b16 %v2766
      %v3279 = vunpack.c.l.b16 %v2779
      %v3280 = vunpack.c.l.b16 %v2788
      %v3281 = vunpack.c.l.b16 %v2801
      %v3282 = vunpack.c.l.b16 %v2810
      %v3283 = vunpack.c.l.b16 %v2823
      %v3284 = vunpack.c.l.b16 %v2832
      %v3285 = vunpack.c.l.b16 %v2845
      %v3286 = vunpack.c.l.b16 %v2854
      %v3287 = vunpack.c.l.b16 %v2867
      %v3288 = vunpack.c.l.b16 %v2876
      %v3289 = vunpack.c.l.b16 %v2889
      %v3290 = vunpack.c.l.b16 %v2898
      %v3291 = vunpack.c.l.b16 %v2911
      %v3292 = vunpack.c.l.b16 %v2920
      %v3293 = vunpack.c.l.b16 %v2933
      %v3294 = vunpack.c.l.b16 %v2942
      %v3295 = vunpack.c.l.b16 %v2955
      %v3296 = vunpack.c.l.b16 %v2964
      %v3297 = vunpack.c.l.b16 %v2977
      %v3298 = vunpack.c.l.b16 %v2986
      %v3299 = vunpack.c.l.b16 %v2999
      %v3300 = vunpack.c.l.b16 %v3008
      %v3301 = vunpack.c.l.b16 %v3021
      %v3302 = vunpack.c.l.b16 %v3030
      %v3303 = vpack.c.b16 %v3272, %v3271
      %v3304 = vpack.c.b16 %v3274, %v3273
      %v3305 = vpack.c.b16 %v3276, %v3275
      %v3306 = vpack.c.b16 %v3278, %v3277
      %v3307 = vpack.c.b16 %v3280, %v3279
      %v3308 = vpack.c.b16 %v3282, %v3281
      %v3309 = vpack.c.b16 %v3284, %v3283
      %v3310 = vpack.c.b16 %v3286, %v3285
      %v3311 = vpack.c.b16 %v3288, %v3287
      %v3312 = vpack.c.b16 %v3290, %v3289
      %v3313 = vpack.c.b16 %v3292, %v3291
      %v3314 = vpack.c.b16 %v3294, %v3293
      %v3315 = vpack.c.b16 %v3296, %v3295
      %v3316 = vpack.c.b16 %v3298, %v3297
      %v3317 = vpack.c.b16 %v3300, %v3299
      %v3318 = vpack.c.b16 %v3302, %v3301
      %v3351 = vunpack.c.l.b16 %v2632
      %v3352 = vunpack.c.l.b16 %v2633
      %v3353 = vunpack.c.l.b16 %v2635
      %v3354 = vunpack.c.l.b16 %v2636
      %v3355 = vunpack.c.l.b16 %v2638
      %v3356 = vunpack.c.l.b16 %v2639
      %v3357 = vunpack.c.l.b16 %v2641
      %v3358 = vunpack.c.l.b16 %v2642
      %v3359 = vunpack.c.l.b16 %v2644
      %v3360 = vunpack.c.l.b16 %v2645
      %v3361 = vunpack.c.l.b16 %v2647
      %v3362 = vunpack.c.l.b16 %v2648
      %v3363 = vunpack.c.l.b16 %v2650
      %v3364 = vunpack.c.l.b16 %v2651
      %v3365 = vunpack.c.l.b16 %v2653
      %v3366 = vunpack.c.l.b16 %v2654
      %v3367 = vunpack.c.l.b16 %v2656
      %v3368 = vunpack.c.l.b16 %v2657
      %v3369 = vunpack.c.l.b16 %v2659
      %v3370 = vunpack.c.l.b16 %v2660
      %v3371 = vunpack.c.l.b16 %v2662
      %v3372 = vunpack.c.l.b16 %v2663
      %v3373 = vunpack.c.l.b16 %v2665
      %v3374 = vunpack.c.l.b16 %v2666
      %v3375 = vunpack.c.l.b16 %v2668
      %v3376 = vunpack.c.l.b16 %v2669
      %v3377 = vunpack.c.l.b16 %v2671
      %v3378 = vunpack.c.l.b16 %v2672
      %v3379 = vunpack.c.l.b16 %v2674
      %v3380 = vunpack.c.l.b16 %v2675
      %v3381 = vunpack.c.l.b16 %v2677
      %v3382 = vunpack.c.l.b16 %v2678
      %v3383 = vpack.c.b16 %v3352, %v3351
      %v3384 = vpack.c.b16 %v3354, %v3353
      %v3385 = vpack.c.b16 %v3356, %v3355
      %v3386 = vpack.c.b16 %v3358, %v3357
      %v3387 = vpack.c.b16 %v3360, %v3359
      %v3388 = vpack.c.b16 %v3362, %v3361
      %v3389 = vpack.c.b16 %v3364, %v3363
      %v3390 = vpack.c.b16 %v3366, %v3365
      %v3391 = vpack.c.b16 %v3368, %v3367
      %v3392 = vpack.c.b16 %v3370, %v3369
      %v3393 = vpack.c.b16 %v3372, %v3371
      %v3394 = vpack.c.b16 %v3374, %v3373
      %v3395 = vpack.c.b16 %v3376, %v3375
      %v3396 = vpack.c.b16 %v3378, %v3377
      %v3397 = vpack.c.b16 %v3380, %v3379
      %v3398 = vpack.c.b16 %v3382, %v3381
      %3399 = vrot.lane.b32.xlu0 %v3383, 4
      %v3400 = vpop.permute.xlu0 %3399
      %3401 = vrot.lane.b32.xlu0 %v3384, 4
      %v3402 = vpop.permute.xlu0 %3401
      %3403 = vrot.lane.b32.xlu0 %v3385, 4
      %v3404 = vpop.permute.xlu0 %3403
      %3405 = vrot.lane.b32.xlu0 %v3386, 4
      %v3406 = vpop.permute.xlu0 %3405
      %3407 = vrot.lane.b32.xlu0 %v3387, 4
      %v3408 = vpop.permute.xlu0 %3407
      %3409 = vrot.lane.b32.xlu0 %v3388, 4
      %v3410 = vpop.permute.xlu0 %3409
      %3411 = vrot.lane.b32.xlu0 %v3389, 4
      %v3412 = vpop.permute.xlu0 %3411
      %3413 = vrot.lane.b32.xlu0 %v3390, 4
      %v3414 = vpop.permute.xlu0 %3413
      %3415 = vrot.lane.b32.xlu0 %v3391, 4
      %v3416 = vpop.permute.xlu0 %3415
      %3417 = vrot.lane.b32.xlu0 %v3392, 4
      %v3418 = vpop.permute.xlu0 %3417
      %3419 = vrot.lane.b32.xlu0 %v3393, 4
      %v3420 = vpop.permute.xlu0 %3419
      %3421 = vrot.lane.b32.xlu0 %v3394, 4
      %v3422 = vpop.permute.xlu0 %3421
      %3423 = vrot.lane.b32.xlu0 %v3395, 4
      %v3424 = vpop.permute.xlu0 %3423
      %3425 = vrot.lane.b32.xlu0 %v3396, 4
      %v3426 = vpop.permute.xlu0 %3425
      %3427 = vrot.lane.b32.xlu0 %v3397, 4
      %v3428 = vpop.permute.xlu0 %3427
      %3429 = vrot.lane.b32.xlu0 %v3398, 4
      %v3430 = vpop.permute.xlu0 %3429
      %v3431 = vunpack.c.l.b16 %v3052
      %v3432 = vunpack.c.l.b16 %v3060
      %v3433 = vunpack.c.l.b16 %v3066
      %v3434 = vunpack.c.l.b16 %v3074
      %v3435 = vunpack.c.l.b16 %v3080
      %v3436 = vunpack.c.l.b16 %v3088
      %v3437 = vunpack.c.l.b16 %v3094
      %v3438 = vunpack.c.l.b16 %v3102
      %v3439 = vunpack.c.l.b16 %v3108
      %v3440 = vunpack.c.l.b16 %v3116
      %v3441 = vunpack.c.l.b16 %v3122
      %v3442 = vunpack.c.l.b16 %v3130
      %v3443 = vunpack.c.l.b16 %v3136
      %v3444 = vunpack.c.l.b16 %v3144
      %v3445 = vunpack.c.l.b16 %v3150
      %v3446 = vunpack.c.l.b16 %v3158
      %v3447 = vunpack.c.l.b16 %v3164
      %v3448 = vunpack.c.l.b16 %v3172
      %v3449 = vunpack.c.l.b16 %v3178
      %v3450 = vunpack.c.l.b16 %v3186
      %v3451 = vunpack.c.l.b16 %v3192
      %v3452 = vunpack.c.l.b16 %v3200
      %v3453 = vunpack.c.l.b16 %v3206
      %v3454 = vunpack.c.l.b16 %v3214
      %v3455 = vunpack.c.l.b16 %v3220
      %v3456 = vunpack.c.l.b16 %v3228
      %v3457 = vunpack.c.l.b16 %v3234
      %v3458 = vunpack.c.l.b16 %v3242
      %v3459 = vunpack.c.l.b16 %v3248
      %v3460 = vunpack.c.l.b16 %v3256
      %v3461 = vunpack.c.l.b16 %v3262
      %v3462 = vunpack.c.l.b16 %v3270
      %v3463 = vpack.c.b16 %v3432, %v3431
      %v3464 = vpack.c.b16 %v3434, %v3433
      %v3465 = vpack.c.b16 %v3436, %v3435
      %v3466 = vpack.c.b16 %v3438, %v3437
      %v3467 = vpack.c.b16 %v3440, %v3439
      %v3468 = vpack.c.b16 %v3442, %v3441
      %v3469 = vpack.c.b16 %v3444, %v3443
      %v3470 = vpack.c.b16 %v3446, %v3445
      %v3471 = vpack.c.b16 %v3448, %v3447
      %v3472 = vpack.c.b16 %v3450, %v3449
      %v3473 = vpack.c.b16 %v3452, %v3451
      %v3474 = vpack.c.b16 %v3454, %v3453
      %v3475 = vpack.c.b16 %v3456, %v3455
      %v3476 = vpack.c.b16 %v3458, %v3457
      %v3477 = vpack.c.b16 %v3460, %v3459
      %v3478 = vpack.c.b16 %v3462, %v3461
      %3479 = vrot.lane.b32.xlu0 %v3463, 8
      %v3480 = vpop.permute.xlu0 %3479
      %3481 = vrot.lane.b32.xlu0 %v3464, 8
      %v3482 = vpop.permute.xlu0 %3481
      %3483 = vrot.lane.b32.xlu0 %v3465, 8
      %v3484 = vpop.permute.xlu0 %3483
      %3485 = vrot.lane.b32.xlu0 %v3466, 8
      %v3486 = vpop.permute.xlu0 %3485
      %3487 = vrot.lane.b32.xlu0 %v3467, 8
      %v3488 = vpop.permute.xlu0 %3487
      %3489 = vrot.lane.b32.xlu0 %v3468, 8
      %v3490 = vpop.permute.xlu0 %3489
      %3491 = vrot.lane.b32.xlu0 %v3469, 8
      %v3492 = vpop.permute.xlu0 %3491
      %3493 = vrot.lane.b32.xlu0 %v3470, 8
      %v3494 = vpop.permute.xlu0 %3493
      %3495 = vrot.lane.b32.xlu0 %v3471, 8
      %v3496 = vpop.permute.xlu0 %3495
      %3497 = vrot.lane.b32.xlu0 %v3472, 8
      %v3498 = vpop.permute.xlu0 %3497
      %3499 = vrot.lane.b32.xlu0 %v3473, 8
      %v3500 = vpop.permute.xlu0 %3499
      %3501 = vrot.lane.b32.xlu0 %v3474, 8
      %v3502 = vpop.permute.xlu0 %3501
      %3503 = vrot.lane.b32.xlu0 %v3475, 8
      %v3504 = vpop.permute.xlu0 %3503
      %3505 = vrot.lane.b32.xlu0 %v3476, 8
      %v3506 = vpop.permute.xlu0 %3505
      %3507 = vrot.lane.b32.xlu0 %v3477, 8
      %v3508 = vpop.permute.xlu0 %3507
      %3509 = vrot.lane.b32.xlu0 %v3478, 8
      %v3510 = vpop.permute.xlu0 %3509
      %v3513 = vsel %vm1323, %v3303, %v3400
      %v3516 = vsel %vm1323, %v3304, %v3402
      %v3519 = vsel %vm1323, %v3305, %v3404
      %v3522 = vsel %vm1323, %v3306, %v3406
      %v3525 = vsel %vm1323, %v3307, %v3408
      %v3528 = vsel %vm1323, %v3308, %v3410
      %v3531 = vsel %vm1323, %v3309, %v3412
      %v3534 = vsel %vm1323, %v3310, %v3414
      %v3537 = vsel %vm1323, %v3311, %v3416
      %v3540 = vsel %vm1323, %v3312, %v3418
      %v3543 = vsel %vm1323, %v3313, %v3420
      %v3546 = vsel %vm1323, %v3314, %v3422
      %v3549 = vsel %vm1323, %v3315, %v3424
      %v3552 = vsel %vm1323, %v3316, %v3426
      %v3555 = vsel %vm1323, %v3317, %v3428
      %v3558 = vsel %vm1323, %v3318, %v3430
      %v3560 = vsel %vm1372, %v3513, %v3480
      %v3562 = vsel %vm1372, %v3516, %v3482
      %v3564 = vsel %vm1372, %v3519, %v3484
      %v3566 = vsel %vm1372, %v3522, %v3486
      %v3568 = vsel %vm1372, %v3525, %v3488
      %v3570 = vsel %vm1372, %v3528, %v3490
      %v3572 = vsel %vm1372, %v3531, %v3492
      %v3574 = vsel %vm1372, %v3534, %v3494
      %v3576 = vsel %vm1372, %v3537, %v3496
      %v3578 = vsel %vm1372, %v3540, %v3498
      %v3580 = vsel %vm1372, %v3543, %v3500
      %v3582 = vsel %vm1372, %v3546, %v3502
      %v3584 = vsel %vm1372, %v3549, %v3504
      %v3586 = vsel %vm1372, %v3552, %v3506
      %v3588 = vsel %vm1372, %v3555, %v3508
      %v3590 = vsel %vm1372, %v3558, %v3510
      %s3591 = scalar_lea.vmem %s1, 16
      %v3592 = vld [vmem:[%s3591] sm:$0xf]
      %v3593 = vld [vmem:[%s3591 + $0x4] sm:$0x3]
      %v3596 = vunpack.c.l.b16 %v3592
      %v3597 = vunpack.c.l.b16 %v3593
      %v3598 = vpack.c.b16 %v3597, %v3596
      %v3599 = vsel %vm2375, %v3560, 0
      %v3601 = vsel %vm2375, %v3562, 0
      %v3603 = vsel %vm2375, %v3564, 0
      %v3605 = vsel %vm2375, %v3566, 0
      %v3607 = vsel %vm2375, %v3568, 0
      %v3609 = vsel %vm2375, %v3570, 0
      %v3611 = vsel %vm2375, %v3572, 0
      %v3613 = vsel %vm2375, %v3574, 0
      %v3615 = vsel %vm2375, %v3576, 0
      %v3617 = vsel %vm2375, %v3578, 0
      %v3619 = vsel %vm2375, %v3580, 0
      %v3621 = vsel %vm2375, %v3582, 0
      %v3623 = vsel %vm2375, %v3584, 0
      %v3625 = vsel %vm2375, %v3586, 0
      %v3627 = vsel %vm2375, %v3588, 0
      %v3629 = vsel %vm2375, %v3590, 0
      %v3632 = vsel %vm2408, %v3598, 0
      %3634 = vmatpush.bf16.msra.mxu0 0
      %3635 = vmatpush.bf16.msra.mxu0 0
      %3636 = vmatpush.bf16.msra.mxu0 0
      %3637 = vmatpush.bf16.msra.mxu0 0
      %3638 = vmatpush.bf16.msra.mxu0 0
      %3639 = vmatpush.bf16.msra.mxu0 0
      %3640 = vmatpush.bf16.msra.mxu0 0
      %3641 = vmatpush.bf16.msra.mxu0 %v3632
      %3642 = vmatmul.bf16.gmra.mxu0 %v3599
      %v3643 = vpop.f32.mrf.mxu0
      %v3644 = vadd.f32 0.0, %v3643
      %v3645 = vpop.f32.mrf.mxu0
      %v3646 = vadd.f32 0.0, %v3645
      %3647 = vmatmul.bf16.gmra.mxu0 %v3601
      %v3648 = vpop.f32.mrf.mxu0
      %v3649 = vadd.f32 0.0, %v3648
      %v3650 = vpop.f32.mrf.mxu0
      %v3651 = vadd.f32 0.0, %v3650
      %3652 = vmatmul.bf16.gmra.mxu0 %v3603
      %v3653 = vpop.f32.mrf.mxu0
      %v3654 = vadd.f32 0.0, %v3653
      %v3655 = vpop.f32.mrf.mxu0
      %v3656 = vadd.f32 0.0, %v3655
      %3657 = vmatmul.bf16.gmra.mxu0 %v3605
      %v3658 = vpop.f32.mrf.mxu0
      %v3659 = vadd.f32 0.0, %v3658
      %v3660 = vpop.f32.mrf.mxu0
      %v3661 = vadd.f32 0.0, %v3660
      %3662 = vmatmul.bf16.gmra.mxu0 %v3607
      %v3663 = vpop.f32.mrf.mxu0
      %v3664 = vadd.f32 0.0, %v3663
      %v3665 = vpop.f32.mrf.mxu0
      %v3666 = vadd.f32 0.0, %v3665
      %3667 = vmatmul.bf16.gmra.mxu0 %v3609
      %v3668 = vpop.f32.mrf.mxu0
      %v3669 = vadd.f32 0.0, %v3668
      %v3670 = vpop.f32.mrf.mxu0
      %v3671 = vadd.f32 0.0, %v3670
      %3672 = vmatmul.bf16.gmra.mxu0 %v3611
      %v3673 = vpop.f32.mrf.mxu0
      %v3674 = vadd.f32 0.0, %v3673
      %v3675 = vpop.f32.mrf.mxu0
      %v3676 = vadd.f32 0.0, %v3675
      %3677 = vmatmul.bf16.gmra.mxu0 %v3613
      %v3678 = vpop.f32.mrf.mxu0
      %v3679 = vadd.f32 0.0, %v3678
      %v3680 = vpop.f32.mrf.mxu0
      %v3681 = vadd.f32 0.0, %v3680
      %3682 = vmatmul.bf16.gmra.mxu0 %v3615
      %v3683 = vpop.f32.mrf.mxu0
      %v3684 = vadd.f32 0.0, %v3683
      %v3685 = vpop.f32.mrf.mxu0
      %v3686 = vadd.f32 0.0, %v3685
      %3687 = vmatmul.bf16.gmra.mxu0 %v3617
      %v3688 = vpop.f32.mrf.mxu0
      %v3689 = vadd.f32 0.0, %v3688
      %v3690 = vpop.f32.mrf.mxu0
      %v3691 = vadd.f32 0.0, %v3690
      %3692 = vmatmul.bf16.gmra.mxu0 %v3619
      %v3693 = vpop.f32.mrf.mxu0
      %v3694 = vadd.f32 0.0, %v3693
      %v3695 = vpop.f32.mrf.mxu0
      %v3696 = vadd.f32 0.0, %v3695
      %3697 = vmatmul.bf16.gmra.mxu0 %v3621
      %v3698 = vpop.f32.mrf.mxu0
      %v3699 = vadd.f32 0.0, %v3698
      %v3700 = vpop.f32.mrf.mxu0
      %v3701 = vadd.f32 0.0, %v3700
      %3702 = vmatmul.bf16.gmra.mxu0 %v3623
      %v3703 = vpop.f32.mrf.mxu0
      %v3704 = vadd.f32 0.0, %v3703
      %v3705 = vpop.f32.mrf.mxu0
      %v3706 = vadd.f32 0.0, %v3705
      %3707 = vmatmul.bf16.gmra.mxu0 %v3625
      %v3708 = vpop.f32.mrf.mxu0
      %v3709 = vadd.f32 0.0, %v3708
      %v3710 = vpop.f32.mrf.mxu0
      %v3711 = vadd.f32 0.0, %v3710
      %3712 = vmatmul.bf16.gmra.mxu0 %v3627
      %v3713 = vpop.f32.mrf.mxu0
      %v3714 = vadd.f32 0.0, %v3713
      %v3715 = vpop.f32.mrf.mxu0
      %v3716 = vadd.f32 0.0, %v3715
      %3717 = vmatmul.bf16.gmra.mxu0 %v3629
      %v3718 = vpop.f32.mrf.mxu0
      %v3719 = vadd.f32 0.0, %v3718
      %v3720 = vpop.f32.mrf.mxu0
      %v3721 = vadd.f32 0.0, %v3720
      %3722 = vdwg.mxu0
      %v3723 = vadd.f32 %v2551, %v3644
      %v3724 = vadd.f32 %v2553, %v3646
      %v3725 = vadd.f32 %v2556, %v3649
      %v3726 = vadd.f32 %v2558, %v3651
      %v3727 = vadd.f32 %v2561, %v3654
      %v3728 = vadd.f32 %v2563, %v3656
      %v3729 = vadd.f32 %v2566, %v3659
      %v3730 = vadd.f32 %v2568, %v3661
      %v3731 = vadd.f32 %v2571, %v3664
      %v3732 = vadd.f32 %v2573, %v3666
      %v3733 = vadd.f32 %v2576, %v3669
      %v3734 = vadd.f32 %v2578, %v3671
      %v3735 = vadd.f32 %v2581, %v3674
      %v3736 = vadd.f32 %v2583, %v3676
      %v3737 = vadd.f32 %v2586, %v3679
      %v3738 = vadd.f32 %v2588, %v3681
      %v3739 = vadd.f32 %v2591, %v3684
      %v3740 = vadd.f32 %v2593, %v3686
      %v3741 = vadd.f32 %v2596, %v3689
      %v3742 = vadd.f32 %v2598, %v3691
      %v3743 = vadd.f32 %v2601, %v3694
      %v3744 = vadd.f32 %v2603, %v3696
      %v3745 = vadd.f32 %v2606, %v3699
      %v3746 = vadd.f32 %v2608, %v3701
      %v3747 = vadd.f32 %v2611, %v3704
      %v3748 = vadd.f32 %v2613, %v3706
      %v3749 = vadd.f32 %v2616, %v3709
      %v3750 = vadd.f32 %v2618, %v3711
      %v3751 = vadd.f32 %v2621, %v3714
      %v3752 = vadd.f32 %v2623, %v3716
      %v3753 = vadd.f32 %v2626, %v3719
      %v3754 = vadd.f32 %v2628, %v3721
      %v3755 = vld [vmem:[%s2] sm:$0x1]
      %v3757 = vperm.slane %v3755, 0
      %v3759 = vmul.f32 %v3723, %v3757
      %v3760 = vmul.f32 %v3724, %v3757
      %v3761 = vmul.f32 %v3725, %v3757
      %v3762 = vmul.f32 %v3726, %v3757
      %v3763 = vmul.f32 %v3727, %v3757
      %v3764 = vmul.f32 %v3728, %v3757
      %v3765 = vmul.f32 %v3729, %v3757
      %v3766 = vmul.f32 %v3730, %v3757
      %v3767 = vmul.f32 %v3731, %v3757
      %v3768 = vmul.f32 %v3732, %v3757
      %v3769 = vmul.f32 %v3733, %v3757
      %v3770 = vmul.f32 %v3734, %v3757
      %v3771 = vmul.f32 %v3735, %v3757
      %v3772 = vmul.f32 %v3736, %v3757
      %v3773 = vmul.f32 %v3737, %v3757
      %v3774 = vmul.f32 %v3738, %v3757
      %v3775 = vmul.f32 %v3739, %v3757
      %v3776 = vmul.f32 %v3740, %v3757
      %v3777 = vmul.f32 %v3741, %v3757
      %v3778 = vmul.f32 %v3742, %v3757
      %v3779 = vmul.f32 %v3743, %v3757
      %v3780 = vmul.f32 %v3744, %v3757
      %v3781 = vmul.f32 %v3745, %v3757
      %v3782 = vmul.f32 %v3746, %v3757
      %v3783 = vmul.f32 %v3747, %v3757
      %v3784 = vmul.f32 %v3748, %v3757
      %v3785 = vmul.f32 %v3749, %v3757
      %v3786 = vmul.f32 %v3750, %v3757
      %v3787 = vmul.f32 %v3751, %v3757
      %v3788 = vmul.f32 %v3752, %v3757
      %v3789 = vmul.f32 %v3753, %v3757
      %v3790 = vmul.f32 %v3754, %v3757
      %v3791 = vld [vmem:[%s3] sm:$0x1]
      %v3793 = vperm.slane %v3791, 0
      %v3795 = vadd.f32 %v3759, %v3793
      %v3796 = vadd.f32 %v3760, %v3793
      %v3797 = vadd.f32 %v3761, %v3793
      %v3798 = vadd.f32 %v3762, %v3793
      %v3799 = vadd.f32 %v3763, %v3793
      %v3800 = vadd.f32 %v3764, %v3793
      %v3801 = vadd.f32 %v3765, %v3793
      %v3802 = vadd.f32 %v3766, %v3793
      %v3803 = vadd.f32 %v3767, %v3793
      %v3804 = vadd.f32 %v3768, %v3793
      %v3805 = vadd.f32 %v3769, %v3793
      %v3806 = vadd.f32 %v3770, %v3793
      %v3807 = vadd.f32 %v3771, %v3793
      %v3808 = vadd.f32 %v3772, %v3793
      %v3809 = vadd.f32 %v3773, %v3793
      %v3810 = vadd.f32 %v3774, %v3793
      %v3811 = vadd.f32 %v3775, %v3793
      %v3812 = vadd.f32 %v3776, %v3793
      %v3813 = vadd.f32 %v3777, %v3793
      %v3814 = vadd.f32 %v3778, %v3793
      %v3815 = vadd.f32 %v3779, %v3793
      %v3816 = vadd.f32 %v3780, %v3793
      %v3817 = vadd.f32 %v3781, %v3793
      %v3818 = vadd.f32 %v3782, %v3793
      %v3819 = vadd.f32 %v3783, %v3793
      %v3820 = vadd.f32 %v3784, %v3793
      %v3821 = vadd.f32 %v3785, %v3793
      %v3822 = vadd.f32 %v3786, %v3793
      %v3823 = vadd.f32 %v3787, %v3793
      %v3824 = vadd.f32 %v3788, %v3793
      %v3825 = vadd.f32 %v3789, %v3793
      %v3826 = vadd.f32 %v3790, %v3793
      %v3827 = vmax.f32 %v3795, 0.0
      %v3828 = vmax.f32 %v3796, 0.0
      %v3829 = vmax.f32 %v3797, 0.0
      %v3830 = vmax.f32 %v3798, 0.0
      %v3831 = vmax.f32 %v3799, 0.0
      %v3832 = vmax.f32 %v3800, 0.0
      %v3833 = vmax.f32 %v3801, 0.0
      %v3834 = vmax.f32 %v3802, 0.0
      %v3835 = vmax.f32 %v3803, 0.0
      %v3836 = vmax.f32 %v3804, 0.0
      %v3837 = vmax.f32 %v3805, 0.0
      %v3838 = vmax.f32 %v3806, 0.0
      %v3839 = vmax.f32 %v3807, 0.0
      %v3840 = vmax.f32 %v3808, 0.0
      %v3841 = vmax.f32 %v3809, 0.0
      %v3842 = vmax.f32 %v3810, 0.0
      %v3843 = vmax.f32 %v3811, 0.0
      %v3844 = vmax.f32 %v3812, 0.0
      %v3845 = vmax.f32 %v3813, 0.0
      %v3846 = vmax.f32 %v3814, 0.0
      %v3847 = vmax.f32 %v3815, 0.0
      %v3848 = vmax.f32 %v3816, 0.0
      %v3849 = vmax.f32 %v3817, 0.0
      %v3850 = vmax.f32 %v3818, 0.0
      %v3851 = vmax.f32 %v3819, 0.0
      %v3852 = vmax.f32 %v3820, 0.0
      %v3853 = vmax.f32 %v3821, 0.0
      %v3854 = vmax.f32 %v3822, 0.0
      %v3855 = vmax.f32 %v3823, 0.0
      %v3856 = vmax.f32 %v3824, 0.0
      %v3857 = vmax.f32 %v3825, 0.0
      %v3858 = vmax.f32 %v3826, 0.0
      %v3859 = vpack.c.bf16 %v3827, %v3827
      %v3860 = vpack.c.bf16 %v3828, %v3828
      %v3861 = vpack.c.bf16 %v3829, %v3829
      %v3862 = vpack.c.bf16 %v3830, %v3830
      %v3863 = vpack.c.bf16 %v3831, %v3831
      %v3864 = vpack.c.bf16 %v3832, %v3832
      %v3865 = vpack.c.bf16 %v3833, %v3833
      %v3866 = vpack.c.bf16 %v3834, %v3834
      %v3867 = vpack.c.bf16 %v3835, %v3835
      %v3868 = vpack.c.bf16 %v3836, %v3836
      %v3869 = vpack.c.bf16 %v3837, %v3837
      %v3870 = vpack.c.bf16 %v3838, %v3838
      %v3871 = vpack.c.bf16 %v3839, %v3839
      %v3872 = vpack.c.bf16 %v3840, %v3840
      %v3873 = vpack.c.bf16 %v3841, %v3841
      %v3874 = vpack.c.bf16 %v3842, %v3842
      %v3875 = vpack.c.bf16 %v3843, %v3843
      %v3876 = vpack.c.bf16 %v3844, %v3844
      %v3877 = vpack.c.bf16 %v3845, %v3845
      %v3878 = vpack.c.bf16 %v3846, %v3846
      %v3879 = vpack.c.bf16 %v3847, %v3847
      %v3880 = vpack.c.bf16 %v3848, %v3848
      %v3881 = vpack.c.bf16 %v3849, %v3849
      %v3882 = vpack.c.bf16 %v3850, %v3850
      %v3883 = vpack.c.bf16 %v3851, %v3851
      %v3884 = vpack.c.bf16 %v3852, %v3852
      %v3885 = vpack.c.bf16 %v3853, %v3853
      %v3886 = vpack.c.bf16 %v3854, %v3854
      %v3887 = vpack.c.bf16 %v3855, %v3855
      %v3888 = vpack.c.bf16 %v3856, %v3856
      %v3889 = vpack.c.bf16 %v3857, %v3857
      %v3890 = vpack.c.bf16 %v3858, %v3858
      %s3891 = scalar_lea.vmem [#allocation3], 16
      %3892 = vst.msk [vmem:[%s3891 + $0x4] sm:$0xf] %vm326, %v3859
      %3893 = vst.msk [vmem:[%s3891 + $0x8] sm:$0xf] %vm326, %v3860
      %3894 = vst.msk [vmem:[%s3891 + $0x14] sm:$0xf] %vm326, %v3861
      %3895 = vst.msk [vmem:[%s3891 + $0x18] sm:$0xf] %vm326, %v3862
      %3896 = vst.msk [vmem:[%s3891 + $0x24] sm:$0xf] %vm326, %v3863
      %3897 = vst.msk [vmem:[%s3891 + $0x28] sm:$0xf] %vm326, %v3864
      %3898 = vst.msk [vmem:[%s3891 + $0x34] sm:$0xf] %vm326, %v3865
      %3899 = vst.msk [vmem:[%s3891 + $0x38] sm:$0xf] %vm326, %v3866
      %3900 = vst.msk [vmem:[%s3891 + $0x44] sm:$0xf] %vm326, %v3867
      %3901 = vst.msk [vmem:[%s3891 + $0x48] sm:$0xf] %vm326, %v3868
      %3902 = vst.msk [vmem:[%s3891 + $0x54] sm:$0xf] %vm326, %v3869
      %3903 = vst.msk [vmem:[%s3891 + $0x58] sm:$0xf] %vm326, %v3870
      %3904 = vst.msk [vmem:[%s3891 + $0x64] sm:$0xf] %vm326, %v3871
      %3905 = vst.msk [vmem:[%s3891 + $0x68] sm:$0xf] %vm326, %v3872
      %3906 = vst.msk [vmem:[%s3891 + $0x74] sm:$0xf] %vm326, %v3873
      %3907 = vst.msk [vmem:[%s3891 + $0x78] sm:$0xf] %vm326, %v3874
      %3908 = vst.msk [vmem:[%s3891 + $0x84] sm:$0xf] %vm326, %v3875
      %3909 = vst.msk [vmem:[%s3891 + $0x88] sm:$0xf] %vm326, %v3876
      %3910 = vst.msk [vmem:[%s3891 + $0x94] sm:$0xf] %vm326, %v3877
      %3911 = vst.msk [vmem:[%s3891 + $0x98] sm:$0xf] %vm326, %v3878
      %3912 = vst.msk [vmem:[%s3891 + $0xa4] sm:$0xf] %vm326, %v3879
      %3913 = vst.msk [vmem:[%s3891 + $0xa8] sm:$0xf] %vm326, %v3880
      %3914 = vst.msk [vmem:[%s3891 + $0xb4] sm:$0xf] %vm326, %v3881
      %3915 = vst.msk [vmem:[%s3891 + $0xb8] sm:$0xf] %vm326, %v3882
      %3916 = vst.msk [vmem:[%s3891 + $0xc4] sm:$0xf] %vm326, %v3883
      %3917 = vst.msk [vmem:[%s3891 + $0xc8] sm:$0xf] %vm326, %v3884
      %3918 = vst.msk [vmem:[%s3891 + $0xd4] sm:$0xf] %vm326, %v3885
      %3919 = vst.msk [vmem:[%s3891 + $0xd8] sm:$0xf] %vm326, %v3886
      %3920 = vst.msk [vmem:[%s3891 + $0xe4] sm:$0xf] %vm326, %v3887
      %3921 = vst.msk [vmem:[%s3891 + $0xe8] sm:$0xf] %vm326, %v3888
      %3922 = vst.msk [vmem:[%s3891 + $0xf4] sm:$0xf] %vm326, %v3889
      %3923 = vst.msk [vmem:[%s3891 + $0xf8] sm:$0xf] %vm326, %v3890
      %v3924 = vld [vmem:[#allocation3] sm:$0x8]
      %v3925 = vld [vmem:[#allocation3 + $0x4] sm:$0xf]
      %v3926 = vld [vmem:[#allocation3 + $0x8] sm:$0xf]
      %v3927 = vld [vmem:[#allocation3 + $0x10] sm:$0x8]
      %v3928 = vld [vmem:[#allocation3 + $0x14] sm:$0xf]
      %v3929 = vld [vmem:[#allocation3 + $0x18] sm:$0xf]
      %v3930 = vld [vmem:[#allocation3 + $0x20] sm:$0x8]
      %v3931 = vld [vmem:[#allocation3 + $0x24] sm:$0xf]
      %v3932 = vld [vmem:[#allocation3 + $0x28] sm:$0xf]
      %v3933 = vld [vmem:[#allocation3 + $0x30] sm:$0x8]
      %v3934 = vld [vmem:[#allocation3 + $0x34] sm:$0xf]
      %v3935 = vld [vmem:[#allocation3 + $0x38] sm:$0xf]
      %v3936 = vld [vmem:[#allocation3 + $0x40] sm:$0x8]
      %v3937 = vld [vmem:[#allocation3 + $0x44] sm:$0xf]
      %v3938 = vld [vmem:[#allocation3 + $0x48] sm:$0xf]
      %v3939 = vld [vmem:[#allocation3 + $0x50] sm:$0x8]
      %v3940 = vld [vmem:[#allocation3 + $0x54] sm:$0xf]
      %v3941 = vld [vmem:[#allocation3 + $0x58] sm:$0xf]
      %v3942 = vld [vmem:[#allocation3 + $0x60] sm:$0x8]
      %v3943 = vld [vmem:[#allocation3 + $0x64] sm:$0xf]
      %v3944 = vld [vmem:[#allocation3 + $0x68] sm:$0xf]
      %v3945 = vld [vmem:[#allocation3 + $0x70] sm:$0x8]
      %v3946 = vld [vmem:[#allocation3 + $0x74] sm:$0xf]
      %v3947 = vld [vmem:[#allocation3 + $0x78] sm:$0xf]
      %v3948 = vld [vmem:[#allocation3 + $0x80] sm:$0x8]
      %v3949 = vld [vmem:[#allocation3 + $0x84] sm:$0xf]
      %v3950 = vld [vmem:[#allocation3 + $0x88] sm:$0xf]
      %v3951 = vld [vmem:[#allocation3 + $0x90] sm:$0x8]
      %v3952 = vld [vmem:[#allocation3 + $0x94] sm:$0xf]
      %v3953 = vld [vmem:[#allocation3 + $0x98] sm:$0xf]
      %v3954 = vld [vmem:[#allocation3 + $0xa0] sm:$0x8]
      %v3955 = vld [vmem:[#allocation3 + $0xa4] sm:$0xf]
      %v3956 = vld [vmem:[#allocation3 + $0xa8] sm:$0xf]
      %v3957 = vld [vmem:[#allocation3 + $0xb0] sm:$0x8]
      %v3958 = vld [vmem:[#allocation3 + $0xb4] sm:$0xf]
      %v3959 = vld [vmem:[#allocation3 + $0xb8] sm:$0xf]
      %v3960 = vld [vmem:[#allocation3 + $0xc0] sm:$0x8]
      %v3961 = vld [vmem:[#allocation3 + $0xc4] sm:$0xf]
      %v3962 = vld [vmem:[#allocation3 + $0xc8] sm:$0xf]
      %v3963 = vld [vmem:[#allocation3 + $0xd0] sm:$0x8]
      %v3964 = vld [vmem:[#allocation3 + $0xd4] sm:$0xf]
      %v3965 = vld [vmem:[#allocation3 + $0xd8] sm:$0xf]
      %v3966 = vld [vmem:[#allocation3 + $0xe0] sm:$0x8]
      %v3967 = vld [vmem:[#allocation3 + $0xe4] sm:$0xf]
      %v3968 = vld [vmem:[#allocation3 + $0xe8] sm:$0xf]
      %v3969 = vld [vmem:[#allocation3 + $0xf0] sm:$0x8]
      %v3970 = vld [vmem:[#allocation3 + $0xf4] sm:$0xf]
      %v3971 = vld [vmem:[#allocation3 + $0xf8] sm:$0xf]
      %v3973 = vshrl.u32 %v3924, 16
      %v3975 = vrot.slane %v3973, 7
      %v3976 = vrot.slane %v3975, 4
      %v3978 = vshrl.u32 %v3925, 16
      %v3980 = vrot.slane %v3978, 7
      %v3981 = vshll.u32 %v3925, 16
      %v3983 = vor.u32 %v3980, %v3981
      %v3984 = vsel %vm487, %v3976, %v3983
      %v3985 = vrot.slane %v3980, 4
      %v3987 = vshrl.u32 %v3926, 16
      %v3989 = vrot.slane %v3987, 7
      %v3990 = vshll.u32 %v3926, 16
      %v3992 = vor.u32 %v3989, %v3990
      %v3993 = vsel %vm487, %v3985, %v3992
      %v3995 = vshrl.u32 %v3927, 16
      %v3997 = vrot.slane %v3995, 7
      %v3998 = vrot.slane %v3997, 4
      %v4000 = vshrl.u32 %v3928, 16
      %v4002 = vrot.slane %v4000, 7
      %v4003 = vshll.u32 %v3928, 16
      %v4005 = vor.u32 %v4002, %v4003
      %v4006 = vsel %vm487, %v3998, %v4005
      %v4007 = vrot.slane %v4002, 4
      %v4009 = vshrl.u32 %v3929, 16
      %v4011 = vrot.slane %v4009, 7
      %v4012 = vshll.u32 %v3929, 16
      %v4014 = vor.u32 %v4011, %v4012
      %v4015 = vsel %vm487, %v4007, %v4014
      %v4017 = vshrl.u32 %v3930, 16
      %v4019 = vrot.slane %v4017, 7
      %v4020 = vrot.slane %v4019, 4
      %v4022 = vshrl.u32 %v3931, 16
      %v4024 = vrot.slane %v4022, 7
      %v4025 = vshll.u32 %v3931, 16
      %v4027 = vor.u32 %v4024, %v4025
      %v4028 = vsel %vm487, %v4020, %v4027
      %v4029 = vrot.slane %v4024, 4
      %v4031 = vshrl.u32 %v3932, 16
      %v4033 = vrot.slane %v4031, 7
      %v4034 = vshll.u32 %v3932, 16
      %v4036 = vor.u32 %v4033, %v4034
      %v4037 = vsel %vm487, %v4029, %v4036
      %v4039 = vshrl.u32 %v3933, 16
      %v4041 = vrot.slane %v4039, 7
      %v4042 = vrot.slane %v4041, 4
      %v4044 = vshrl.u32 %v3934, 16
      %v4046 = vrot.slane %v4044, 7
      %v4047 = vshll.u32 %v3934, 16
      %v4049 = vor.u32 %v4046, %v4047
      %v4050 = vsel %vm487, %v4042, %v4049
      %v4051 = vrot.slane %v4046, 4
      %v4053 = vshrl.u32 %v3935, 16
      %v4055 = vrot.slane %v4053, 7
      %v4056 = vshll.u32 %v3935, 16
      %v4058 = vor.u32 %v4055, %v4056
      %v4059 = vsel %vm487, %v4051, %v4058
      %v4061 = vshrl.u32 %v3936, 16
      %v4063 = vrot.slane %v4061, 7
      %v4064 = vrot.slane %v4063, 4
      %v4066 = vshrl.u32 %v3937, 16
      %v4068 = vrot.slane %v4066, 7
      %v4069 = vshll.u32 %v3937, 16
      %v4071 = vor.u32 %v4068, %v4069
      %v4072 = vsel %vm487, %v4064, %v4071
      %v4073 = vrot.slane %v4068, 4
      %v4075 = vshrl.u32 %v3938, 16
      %v4077 = vrot.slane %v4075, 7
      %v4078 = vshll.u32 %v3938, 16
      %v4080 = vor.u32 %v4077, %v4078
      %v4081 = vsel %vm487, %v4073, %v4080
      %v4083 = vshrl.u32 %v3939, 16
      %v4085 = vrot.slane %v4083, 7
      %v4086 = vrot.slane %v4085, 4
      %v4088 = vshrl.u32 %v3940, 16
      %v4090 = vrot.slane %v4088, 7
      %v4091 = vshll.u32 %v3940, 16
      %v4093 = vor.u32 %v4090, %v4091
      %v4094 = vsel %vm487, %v4086, %v4093
      %v4095 = vrot.slane %v4090, 4
      %v4097 = vshrl.u32 %v3941, 16
      %v4099 = vrot.slane %v4097, 7
      %v4100 = vshll.u32 %v3941, 16
      %v4102 = vor.u32 %v4099, %v4100
      %v4103 = vsel %vm487, %v4095, %v4102
      %v4105 = vshrl.u32 %v3942, 16
      %v4107 = vrot.slane %v4105, 7
      %v4108 = vrot.slane %v4107, 4
      %v4110 = vshrl.u32 %v3943, 16
      %v4112 = vrot.slane %v4110, 7
      %v4113 = vshll.u32 %v3943, 16
      %v4115 = vor.u32 %v4112, %v4113
      %v4116 = vsel %vm487, %v4108, %v4115
      %v4117 = vrot.slane %v4112, 4
      %v4119 = vshrl.u32 %v3944, 16
      %v4121 = vrot.slane %v4119, 7
      %v4122 = vshll.u32 %v3944, 16
      %v4124 = vor.u32 %v4121, %v4122
      %v4125 = vsel %vm487, %v4117, %v4124
      %v4127 = vshrl.u32 %v3945, 16
      %v4129 = vrot.slane %v4127, 7
      %v4130 = vrot.slane %v4129, 4
      %v4132 = vshrl.u32 %v3946, 16
      %v4134 = vrot.slane %v4132, 7
      %v4135 = vshll.u32 %v3946, 16
      %v4137 = vor.u32 %v4134, %v4135
      %v4138 = vsel %vm487, %v4130, %v4137
      %v4139 = vrot.slane %v4134, 4
      %v4141 = vshrl.u32 %v3947, 16
      %v4143 = vrot.slane %v4141, 7
      %v4144 = vshll.u32 %v3947, 16
      %v4146 = vor.u32 %v4143, %v4144
      %v4147 = vsel %vm487, %v4139, %v4146
      %v4149 = vshrl.u32 %v3948, 16
      %v4151 = vrot.slane %v4149, 7
      %v4152 = vrot.slane %v4151, 4
      %v4154 = vshrl.u32 %v3949, 16
      %v4156 = vrot.slane %v4154, 7
      %v4157 = vshll.u32 %v3949, 16
      %v4159 = vor.u32 %v4156, %v4157
      %v4160 = vsel %vm487, %v4152, %v4159
      %v4161 = vrot.slane %v4156, 4
      %v4163 = vshrl.u32 %v3950, 16
      %v4165 = vrot.slane %v4163, 7
      %v4166 = vshll.u32 %v3950, 16
      %v4168 = vor.u32 %v4165, %v4166
      %v4169 = vsel %vm487, %v4161, %v4168
      %v4171 = vshrl.u32 %v3951, 16
      %v4173 = vrot.slane %v4171, 7
      %v4174 = vrot.slane %v4173, 4
      %v4176 = vshrl.u32 %v3952, 16
      %v4178 = vrot.slane %v4176, 7
      %v4179 = vshll.u32 %v3952, 16
      %v4181 = vor.u32 %v4178, %v4179
      %v4182 = vsel %vm487, %v4174, %v4181
      %v4183 = vrot.slane %v4178, 4
      %v4185 = vshrl.u32 %v3953, 16
      %v4187 = vrot.slane %v4185, 7
      %v4188 = vshll.u32 %v3953, 16
      %v4190 = vor.u32 %v4187, %v4188
      %v4191 = vsel %vm487, %v4183, %v4190
      %v4193 = vshrl.u32 %v3954, 16
      %v4195 = vrot.slane %v4193, 7
      %v4196 = vrot.slane %v4195, 4
      %v4198 = vshrl.u32 %v3955, 16
      %v4200 = vrot.slane %v4198, 7
      %v4201 = vshll.u32 %v3955, 16
      %v4203 = vor.u32 %v4200, %v4201
      %v4204 = vsel %vm487, %v4196, %v4203
      %v4205 = vrot.slane %v4200, 4
      %v4207 = vshrl.u32 %v3956, 16
      %v4209 = vrot.slane %v4207, 7
      %v4210 = vshll.u32 %v3956, 16
      %v4212 = vor.u32 %v4209, %v4210
      %v4213 = vsel %vm487, %v4205, %v4212
      %v4215 = vshrl.u32 %v3957, 16
      %v4217 = vrot.slane %v4215, 7
      %v4218 = vrot.slane %v4217, 4
      %v4220 = vshrl.u32 %v3958, 16
      %v4222 = vrot.slane %v4220, 7
      %v4223 = vshll.u32 %v3958, 16
      %v4225 = vor.u32 %v4222, %v4223
      %v4226 = vsel %vm487, %v4218, %v4225
      %v4227 = vrot.slane %v4222, 4
      %v4229 = vshrl.u32 %v3959, 16
      %v4231 = vrot.slane %v4229, 7
      %v4232 = vshll.u32 %v3959, 16
      %v4234 = vor.u32 %v4231, %v4232
      %v4235 = vsel %vm487, %v4227, %v4234
      %v4237 = vshrl.u32 %v3960, 16
      %v4239 = vrot.slane %v4237, 7
      %v4240 = vrot.slane %v4239, 4
      %v4242 = vshrl.u32 %v3961, 16
      %v4244 = vrot.slane %v4242, 7
      %v4245 = vshll.u32 %v3961, 16
      %v4247 = vor.u32 %v4244, %v4245
      %v4248 = vsel %vm487, %v4240, %v4247
      %v4249 = vrot.slane %v4244, 4
      %v4251 = vshrl.u32 %v3962, 16
      %v4253 = vrot.slane %v4251, 7
      %v4254 = vshll.u32 %v3962, 16
      %v4256 = vor.u32 %v4253, %v4254
      %v4257 = vsel %vm487, %v4249, %v4256
      %v4259 = vshrl.u32 %v3963, 16
      %v4261 = vrot.slane %v4259, 7
      %v4262 = vrot.slane %v4261, 4
      %v4264 = vshrl.u32 %v3964, 16
      %v4266 = vrot.slane %v4264, 7
      %v4267 = vshll.u32 %v3964, 16
      %v4269 = vor.u32 %v4266, %v4267
      %v4270 = vsel %vm487, %v4262, %v4269
      %v4271 = vrot.slane %v4266, 4
      %v4273 = vshrl.u32 %v3965, 16
      %v4275 = vrot.slane %v4273, 7
      %v4276 = vshll.u32 %v3965, 16
      %v4278 = vor.u32 %v4275, %v4276
      %v4279 = vsel %vm487, %v4271, %v4278
      %v4281 = vshrl.u32 %v3966, 16
      %v4283 = vrot.slane %v4281, 7
      %v4284 = vrot.slane %v4283, 4
      %v4286 = vshrl.u32 %v3967, 16
      %v4288 = vrot.slane %v4286, 7
      %v4289 = vshll.u32 %v3967, 16
      %v4291 = vor.u32 %v4288, %v4289
      %v4292 = vsel %vm487, %v4284, %v4291
      %v4293 = vrot.slane %v4288, 4
      %v4295 = vshrl.u32 %v3968, 16
      %v4297 = vrot.slane %v4295, 7
      %v4298 = vshll.u32 %v3968, 16
      %v4300 = vor.u32 %v4297, %v4298
      %v4301 = vsel %vm487, %v4293, %v4300
      %v4303 = vshrl.u32 %v3969, 16
      %v4305 = vrot.slane %v4303, 7
      %v4306 = vrot.slane %v4305, 4
      %v4308 = vshrl.u32 %v3970, 16
      %v4310 = vrot.slane %v4308, 7
      %v4311 = vshll.u32 %v3970, 16
      %v4313 = vor.u32 %v4310, %v4311
      %v4314 = vsel %vm487, %v4306, %v4313
      %v4315 = vrot.slane %v4310, 4
      %v4317 = vshrl.u32 %v3971, 16
      %v4319 = vrot.slane %v4317, 7
      %v4320 = vshll.u32 %v3971, 16
      %v4322 = vor.u32 %v4319, %v4320
      %v4323 = vsel %vm487, %v4315, %v4322
      %v4324 = vld [vmem:[#allocation3 + $0xc] sm:$0x1]
      %v4325 = vld [vmem:[#allocation3 + $0x1c] sm:$0x1]
      %v4326 = vld [vmem:[#allocation3 + $0x2c] sm:$0x1]
      %v4327 = vld [vmem:[#allocation3 + $0x3c] sm:$0x1]
      %v4328 = vld [vmem:[#allocation3 + $0x4c] sm:$0x1]
      %v4329 = vld [vmem:[#allocation3 + $0x5c] sm:$0x1]
      %v4330 = vld [vmem:[#allocation3 + $0x6c] sm:$0x1]
      %v4331 = vld [vmem:[#allocation3 + $0x7c] sm:$0x1]
      %v4332 = vld [vmem:[#allocation3 + $0x8c] sm:$0x1]
      %v4333 = vld [vmem:[#allocation3 + $0x9c] sm:$0x1]
      %v4334 = vld [vmem:[#allocation3 + $0xac] sm:$0x1]
      %v4335 = vld [vmem:[#allocation3 + $0xbc] sm:$0x1]
      %v4336 = vld [vmem:[#allocation3 + $0xcc] sm:$0x1]
      %v4337 = vld [vmem:[#allocation3 + $0xdc] sm:$0x1]
      %v4338 = vld [vmem:[#allocation3 + $0xec] sm:$0x1]
      %v4339 = vld [vmem:[#allocation3 + $0xfc] sm:$0x1]
      %v4340 = vrot.slane %v3978, 4
      %v4341 = vrot.slane %v3981, 5
      %v4342 = vor.u32 %v4340, %v4341
      %v4343 = vrot.slane %v4342, 4
      %v4344 = vrot.slane %v3990, 5
      %v4345 = vsel %vm858, %v4343, %v4344
      %v4346 = vrot.slane %v3987, 4
      %v4347 = vor.u32 %v4346, %v4344
      %v4348 = vrot.slane %v4347, 4
      %v4350 = vshll.u32 %v4324, 16
      %v4352 = vrot.slane %v4350, 5
      %v4353 = vsel %vm858, %v4348, %v4352
      %v4354 = vrot.slane %v4000, 4
      %v4355 = vrot.slane %v4003, 5
      %v4356 = vor.u32 %v4354, %v4355
      %v4357 = vrot.slane %v4356, 4
      %v4358 = vrot.slane %v4012, 5
      %v4359 = vsel %vm858, %v4357, %v4358
      %v4360 = vrot.slane %v4009, 4
      %v4361 = vor.u32 %v4360, %v4358
      %v4362 = vrot.slane %v4361, 4
      %v4364 = vshll.u32 %v4325, 16
      %v4366 = vrot.slane %v4364, 5
      %v4367 = vsel %vm858, %v4362, %v4366
      %v4368 = vrot.slane %v4022, 4
      %v4369 = vrot.slane %v4025, 5
      %v4370 = vor.u32 %v4368, %v4369
      %v4371 = vrot.slane %v4370, 4
      %v4372 = vrot.slane %v4034, 5
      %v4373 = vsel %vm858, %v4371, %v4372
      %v4374 = vrot.slane %v4031, 4
      %v4375 = vor.u32 %v4374, %v4372
      %v4376 = vrot.slane %v4375, 4
      %v4378 = vshll.u32 %v4326, 16
      %v4380 = vrot.slane %v4378, 5
      %v4381 = vsel %vm858, %v4376, %v4380
      %v4382 = vrot.slane %v4044, 4
      %v4383 = vrot.slane %v4047, 5
      %v4384 = vor.u32 %v4382, %v4383
      %v4385 = vrot.slane %v4384, 4
      %v4386 = vrot.slane %v4056, 5
      %v4387 = vsel %vm858, %v4385, %v4386
      %v4388 = vrot.slane %v4053, 4
      %v4389 = vor.u32 %v4388, %v4386
      %v4390 = vrot.slane %v4389, 4
      %v4392 = vshll.u32 %v4327, 16
      %v4394 = vrot.slane %v4392, 5
      %v4395 = vsel %vm858, %v4390, %v4394
      %v4396 = vrot.slane %v4066, 4
      %v4397 = vrot.slane %v4069, 5
      %v4398 = vor.u32 %v4396, %v4397
      %v4399 = vrot.slane %v4398, 4
      %v4400 = vrot.slane %v4078, 5
      %v4401 = vsel %vm858, %v4399, %v4400
      %v4402 = vrot.slane %v4075, 4
      %v4403 = vor.u32 %v4402, %v4400
      %v4404 = vrot.slane %v4403, 4
      %v4406 = vshll.u32 %v4328, 16
      %v4408 = vrot.slane %v4406, 5
      %v4409 = vsel %vm858, %v4404, %v4408
      %v4410 = vrot.slane %v4088, 4
      %v4411 = vrot.slane %v4091, 5
      %v4412 = vor.u32 %v4410, %v4411
      %v4413 = vrot.slane %v4412, 4
      %v4414 = vrot.slane %v4100, 5
      %v4415 = vsel %vm858, %v4413, %v4414
      %v4416 = vrot.slane %v4097, 4
      %v4417 = vor.u32 %v4416, %v4414
      %v4418 = vrot.slane %v4417, 4
      %v4420 = vshll.u32 %v4329, 16
      %v4422 = vrot.slane %v4420, 5
      %v4423 = vsel %vm858, %v4418, %v4422
      %v4424 = vrot.slane %v4110, 4
      %v4425 = vrot.slane %v4113, 5
      %v4426 = vor.u32 %v4424, %v4425
      %v4427 = vrot.slane %v4426, 4
      %v4428 = vrot.slane %v4122, 5
      %v4429 = vsel %vm858, %v4427, %v4428
      %v4430 = vrot.slane %v4119, 4
      %v4431 = vor.u32 %v4430, %v4428
      %v4432 = vrot.slane %v4431, 4
      %v4434 = vshll.u32 %v4330, 16
      %v4436 = vrot.slane %v4434, 5
      %v4437 = vsel %vm858, %v4432, %v4436
      %v4438 = vrot.slane %v4132, 4
      %v4439 = vrot.slane %v4135, 5
      %v4440 = vor.u32 %v4438, %v4439
      %v4441 = vrot.slane %v4440, 4
      %v4442 = vrot.slane %v4144, 5
      %v4443 = vsel %vm858, %v4441, %v4442
      %v4444 = vrot.slane %v4141, 4
      %v4445 = vor.u32 %v4444, %v4442
      %v4446 = vrot.slane %v4445, 4
      %v4448 = vshll.u32 %v4331, 16
      %v4450 = vrot.slane %v4448, 5
      %v4451 = vsel %vm858, %v4446, %v4450
      %v4452 = vrot.slane %v4154, 4
      %v4453 = vrot.slane %v4157, 5
      %v4454 = vor.u32 %v4452, %v4453
      %v4455 = vrot.slane %v4454, 4
      %v4456 = vrot.slane %v4166, 5
      %v4457 = vsel %vm858, %v4455, %v4456
      %v4458 = vrot.slane %v4163, 4
      %v4459 = vor.u32 %v4458, %v4456
      %v4460 = vrot.slane %v4459, 4
      %v4462 = vshll.u32 %v4332, 16
      %v4464 = vrot.slane %v4462, 5
      %v4465 = vsel %vm858, %v4460, %v4464
      %v4466 = vrot.slane %v4176, 4
      %v4467 = vrot.slane %v4179, 5
      %v4468 = vor.u32 %v4466, %v4467
      %v4469 = vrot.slane %v4468, 4
      %v4470 = vrot.slane %v4188, 5
      %v4471 = vsel %vm858, %v4469, %v4470
      %v4472 = vrot.slane %v4185, 4
      %v4473 = vor.u32 %v4472, %v4470
      %v4474 = vrot.slane %v4473, 4
      %v4476 = vshll.u32 %v4333, 16
      %v4478 = vrot.slane %v4476, 5
      %v4479 = vsel %vm858, %v4474, %v4478
      %v4480 = vrot.slane %v4198, 4
      %v4481 = vrot.slane %v4201, 5
      %v4482 = vor.u32 %v4480, %v4481
      %v4483 = vrot.slane %v4482, 4
      %v4484 = vrot.slane %v4210, 5
      %v4485 = vsel %vm858, %v4483, %v4484
      %v4486 = vrot.slane %v4207, 4
      %v4487 = vor.u32 %v4486, %v4484
      %v4488 = vrot.slane %v4487, 4
      %v4490 = vshll.u32 %v4334, 16
      %v4492 = vrot.slane %v4490, 5
      %v4493 = vsel %vm858, %v4488, %v4492
      %v4494 = vrot.slane %v4220, 4
      %v4495 = vrot.slane %v4223, 5
      %v4496 = vor.u32 %v4494, %v4495
      %v4497 = vrot.slane %v4496, 4
      %v4498 = vrot.slane %v4232, 5
      %v4499 = vsel %vm858, %v4497, %v4498
      %v4500 = vrot.slane %v4229, 4
      %v4501 = vor.u32 %v4500, %v4498
      %v4502 = vrot.slane %v4501, 4
      %v4504 = vshll.u32 %v4335, 16
      %v4506 = vrot.slane %v4504, 5
      %v4507 = vsel %vm858, %v4502, %v4506
      %v4508 = vrot.slane %v4242, 4
      %v4509 = vrot.slane %v4245, 5
      %v4510 = vor.u32 %v4508, %v4509
      %v4511 = vrot.slane %v4510, 4
      %v4512 = vrot.slane %v4254, 5
      %v4513 = vsel %vm858, %v4511, %v4512
      %v4514 = vrot.slane %v4251, 4
      %v4515 = vor.u32 %v4514, %v4512
      %v4516 = vrot.slane %v4515, 4
      %v4518 = vshll.u32 %v4336, 16
      %v4520 = vrot.slane %v4518, 5
      %v4521 = vsel %vm858, %v4516, %v4520
      %v4522 = vrot.slane %v4264, 4
      %v4523 = vrot.slane %v4267, 5
      %v4524 = vor.u32 %v4522, %v4523
      %v4525 = vrot.slane %v4524, 4
      %v4526 = vrot.slane %v4276, 5
      %v4527 = vsel %vm858, %v4525, %v4526
      %v4528 = vrot.slane %v4273, 4
      %v4529 = vor.u32 %v4528, %v4526
      %v4530 = vrot.slane %v4529, 4
      %v4532 = vshll.u32 %v4337, 16
      %v4534 = vrot.slane %v4532, 5
      %v4535 = vsel %vm858, %v4530, %v4534
      %v4536 = vrot.slane %v4286, 4
      %v4537 = vrot.slane %v4289, 5
      %v4538 = vor.u32 %v4536, %v4537
      %v4539 = vrot.slane %v4538, 4
      %v4540 = vrot.slane %v4298, 5
      %v4541 = vsel %vm858, %v4539, %v4540
      %v4542 = vrot.slane %v4295, 4
      %v4543 = vor.u32 %v4542, %v4540
      %v4544 = vrot.slane %v4543, 4
      %v4546 = vshll.u32 %v4338, 16
      %v4548 = vrot.slane %v4546, 5
      %v4549 = vsel %vm858, %v4544, %v4548
      %v4550 = vrot.slane %v4308, 4
      %v4551 = vrot.slane %v4311, 5
      %v4552 = vor.u32 %v4550, %v4551
      %v4553 = vrot.slane %v4552, 4
      %v4554 = vrot.slane %v4320, 5
      %v4555 = vsel %vm858, %v4553, %v4554
      %v4556 = vrot.slane %v4317, 4
      %v4557 = vor.u32 %v4556, %v4554
      %v4558 = vrot.slane %v4557, 4
      %v4560 = vshll.u32 %v4339, 16
      %v4562 = vrot.slane %v4560, 5
      %v4563 = vsel %vm858, %v4558, %v4562
      %v4564 = vunpack.c.l.b16 %v3984
      %v4565 = vunpack.c.l.b16 %v3993
      %v4566 = vunpack.c.l.b16 %v4006
      %v4567 = vunpack.c.l.b16 %v4015
      %v4568 = vunpack.c.l.b16 %v4028
      %v4569 = vunpack.c.l.b16 %v4037
      %v4570 = vunpack.c.l.b16 %v4050
      %v4571 = vunpack.c.l.b16 %v4059
      %v4572 = vunpack.c.l.b16 %v4072
      %v4573 = vunpack.c.l.b16 %v4081
      %v4574 = vunpack.c.l.b16 %v4094
      %v4575 = vunpack.c.l.b16 %v4103
      %v4576 = vunpack.c.l.b16 %v4116
      %v4577 = vunpack.c.l.b16 %v4125
      %v4578 = vunpack.c.l.b16 %v4138
      %v4579 = vunpack.c.l.b16 %v4147
      %v4580 = vunpack.c.l.b16 %v4160
      %v4581 = vunpack.c.l.b16 %v4169
      %v4582 = vunpack.c.l.b16 %v4182
      %v4583 = vunpack.c.l.b16 %v4191
      %v4584 = vunpack.c.l.b16 %v4204
      %v4585 = vunpack.c.l.b16 %v4213
      %v4586 = vunpack.c.l.b16 %v4226
      %v4587 = vunpack.c.l.b16 %v4235
      %v4588 = vunpack.c.l.b16 %v4248
      %v4589 = vunpack.c.l.b16 %v4257
      %v4590 = vunpack.c.l.b16 %v4270
      %v4591 = vunpack.c.l.b16 %v4279
      %v4592 = vunpack.c.l.b16 %v4292
      %v4593 = vunpack.c.l.b16 %v4301
      %v4594 = vunpack.c.l.b16 %v4314
      %v4595 = vunpack.c.l.b16 %v4323
      %v4596 = vpack.c.b16 %v4565, %v4564
      %v4597 = vpack.c.b16 %v4567, %v4566
      %v4598 = vpack.c.b16 %v4569, %v4568
      %v4599 = vpack.c.b16 %v4571, %v4570
      %v4600 = vpack.c.b16 %v4573, %v4572
      %v4601 = vpack.c.b16 %v4575, %v4574
      %v4602 = vpack.c.b16 %v4577, %v4576
      %v4603 = vpack.c.b16 %v4579, %v4578
      %v4604 = vpack.c.b16 %v4581, %v4580
      %v4605 = vpack.c.b16 %v4583, %v4582
      %v4606 = vpack.c.b16 %v4585, %v4584
      %v4607 = vpack.c.b16 %v4587, %v4586
      %v4608 = vpack.c.b16 %v4589, %v4588
      %v4609 = vpack.c.b16 %v4591, %v4590
      %v4610 = vpack.c.b16 %v4593, %v4592
      %v4611 = vpack.c.b16 %v4595, %v4594
      %v4644 = vunpack.c.l.b16 %v3925
      %v4645 = vunpack.c.l.b16 %v3926
      %v4646 = vunpack.c.l.b16 %v3928
      %v4647 = vunpack.c.l.b16 %v3929
      %v4648 = vunpack.c.l.b16 %v3931
      %v4649 = vunpack.c.l.b16 %v3932
      %v4650 = vunpack.c.l.b16 %v3934
      %v4651 = vunpack.c.l.b16 %v3935
      %v4652 = vunpack.c.l.b16 %v3937
      %v4653 = vunpack.c.l.b16 %v3938
      %v4654 = vunpack.c.l.b16 %v3940
      %v4655 = vunpack.c.l.b16 %v3941
      %v4656 = vunpack.c.l.b16 %v3943
      %v4657 = vunpack.c.l.b16 %v3944
      %v4658 = vunpack.c.l.b16 %v3946
      %v4659 = vunpack.c.l.b16 %v3947
      %v4660 = vunpack.c.l.b16 %v3949
      %v4661 = vunpack.c.l.b16 %v3950
      %v4662 = vunpack.c.l.b16 %v3952
      %v4663 = vunpack.c.l.b16 %v3953
      %v4664 = vunpack.c.l.b16 %v3955
      %v4665 = vunpack.c.l.b16 %v3956
      %v4666 = vunpack.c.l.b16 %v3958
      %v4667 = vunpack.c.l.b16 %v3959
      %v4668 = vunpack.c.l.b16 %v3961
      %v4669 = vunpack.c.l.b16 %v3962
      %v4670 = vunpack.c.l.b16 %v3964
      %v4671 = vunpack.c.l.b16 %v3965
      %v4672 = vunpack.c.l.b16 %v3967
      %v4673 = vunpack.c.l.b16 %v3968
      %v4674 = vunpack.c.l.b16 %v3970
      %v4675 = vunpack.c.l.b16 %v3971
      %v4676 = vpack.c.b16 %v4645, %v4644
      %v4677 = vpack.c.b16 %v4647, %v4646
      %v4678 = vpack.c.b16 %v4649, %v4648
      %v4679 = vpack.c.b16 %v4651, %v4650
      %v4680 = vpack.c.b16 %v4653, %v4652
      %v4681 = vpack.c.b16 %v4655, %v4654
      %v4682 = vpack.c.b16 %v4657, %v4656
      %v4683 = vpack.c.b16 %v4659, %v4658
      %v4684 = vpack.c.b16 %v4661, %v4660
      %v4685 = vpack.c.b16 %v4663, %v4662
      %v4686 = vpack.c.b16 %v4665, %v4664
      %v4687 = vpack.c.b16 %v4667, %v4666
      %v4688 = vpack.c.b16 %v4669, %v4668
      %v4689 = vpack.c.b16 %v4671, %v4670
      %v4690 = vpack.c.b16 %v4673, %v4672
      %v4691 = vpack.c.b16 %v4675, %v4674
      %4692 = vrot.lane.b32.xlu0 %v4676, 8
      %v4693 = vpop.permute.xlu0 %4692
      %4694 = vrot.lane.b32.xlu0 %v4677, 8
      %v4695 = vpop.permute.xlu0 %4694
      %4696 = vrot.lane.b32.xlu0 %v4678, 8
      %v4697 = vpop.permute.xlu0 %4696
      %4698 = vrot.lane.b32.xlu0 %v4679, 8
      %v4699 = vpop.permute.xlu0 %4698
      %4700 = vrot.lane.b32.xlu0 %v4680, 8
      %v4701 = vpop.permute.xlu0 %4700
      %4702 = vrot.lane.b32.xlu0 %v4681, 8
      %v4703 = vpop.permute.xlu0 %4702
      %4704 = vrot.lane.b32.xlu0 %v4682, 8
      %v4705 = vpop.permute.xlu0 %4704
      %4706 = vrot.lane.b32.xlu0 %v4683, 8
      %v4707 = vpop.permute.xlu0 %4706
      %4708 = vrot.lane.b32.xlu0 %v4684, 8
      %v4709 = vpop.permute.xlu0 %4708
      %4710 = vrot.lane.b32.xlu0 %v4685, 8
      %v4711 = vpop.permute.xlu0 %4710
      %4712 = vrot.lane.b32.xlu0 %v4686, 8
      %v4713 = vpop.permute.xlu0 %4712
      %4714 = vrot.lane.b32.xlu0 %v4687, 8
      %v4715 = vpop.permute.xlu0 %4714
      %4716 = vrot.lane.b32.xlu0 %v4688, 8
      %v4717 = vpop.permute.xlu0 %4716
      %4718 = vrot.lane.b32.xlu0 %v4689, 8
      %v4719 = vpop.permute.xlu0 %4718
      %4720 = vrot.lane.b32.xlu0 %v4690, 8
      %v4721 = vpop.permute.xlu0 %4720
      %4722 = vrot.lane.b32.xlu0 %v4691, 8
      %v4723 = vpop.permute.xlu0 %4722
      %v4724 = vunpack.c.l.b16 %v4345
      %v4725 = vunpack.c.l.b16 %v4353
      %v4726 = vunpack.c.l.b16 %v4359
      %v4727 = vunpack.c.l.b16 %v4367
      %v4728 = vunpack.c.l.b16 %v4373
      %v4729 = vunpack.c.l.b16 %v4381
      %v4730 = vunpack.c.l.b16 %v4387
      %v4731 = vunpack.c.l.b16 %v4395
      %v4732 = vunpack.c.l.b16 %v4401
      %v4733 = vunpack.c.l.b16 %v4409
      %v4734 = vunpack.c.l.b16 %v4415
      %v4735 = vunpack.c.l.b16 %v4423
      %v4736 = vunpack.c.l.b16 %v4429
      %v4737 = vunpack.c.l.b16 %v4437
      %v4738 = vunpack.c.l.b16 %v4443
      %v4739 = vunpack.c.l.b16 %v4451
      %v4740 = vunpack.c.l.b16 %v4457
      %v4741 = vunpack.c.l.b16 %v4465
      %v4742 = vunpack.c.l.b16 %v4471
      %v4743 = vunpack.c.l.b16 %v4479
      %v4744 = vunpack.c.l.b16 %v4485
      %v4745 = vunpack.c.l.b16 %v4493
      %v4746 = vunpack.c.l.b16 %v4499
      %v4747 = vunpack.c.l.b16 %v4507
      %v4748 = vunpack.c.l.b16 %v4513
      %v4749 = vunpack.c.l.b16 %v4521
      %v4750 = vunpack.c.l.b16 %v4527
      %v4751 = vunpack.c.l.b16 %v4535
      %v4752 = vunpack.c.l.b16 %v4541
      %v4753 = vunpack.c.l.b16 %v4549
      %v4754 = vunpack.c.l.b16 %v4555
      %v4755 = vunpack.c.l.b16 %v4563
      %v4756 = vpack.c.b16 %v4725, %v4724
      %v4757 = vpack.c.b16 %v4727, %v4726
      %v4758 = vpack.c.b16 %v4729, %v4728
      %v4759 = vpack.c.b16 %v4731, %v4730
      %v4760 = vpack.c.b16 %v4733, %v4732
      %v4761 = vpack.c.b16 %v4735, %v4734
      %v4762 = vpack.c.b16 %v4737, %v4736
      %v4763 = vpack.c.b16 %v4739, %v4738
      %v4764 = vpack.c.b16 %v4741, %v4740
      %v4765 = vpack.c.b16 %v4743, %v4742
      %v4766 = vpack.c.b16 %v4745, %v4744
      %v4767 = vpack.c.b16 %v4747, %v4746
      %v4768 = vpack.c.b16 %v4749, %v4748
      %v4769 = vpack.c.b16 %v4751, %v4750
      %v4770 = vpack.c.b16 %v4753, %v4752
      %v4771 = vpack.c.b16 %v4755, %v4754
      %4772 = vrot.lane.b32.xlu0 %v4756, 16
      %v4773 = vpop.permute.xlu0 %4772
      %4774 = vrot.lane.b32.xlu0 %v4757, 16
      %v4775 = vpop.permute.xlu0 %4774
      %4776 = vrot.lane.b32.xlu0 %v4758, 16
      %v4777 = vpop.permute.xlu0 %4776
      %4778 = vrot.lane.b32.xlu0 %v4759, 16
      %v4779 = vpop.permute.xlu0 %4778
      %4780 = vrot.lane.b32.xlu0 %v4760, 16
      %v4781 = vpop.permute.xlu0 %4780
      %4782 = vrot.lane.b32.xlu0 %v4761, 16
      %v4783 = vpop.permute.xlu0 %4782
      %4784 = vrot.lane.b32.xlu0 %v4762, 16
      %v4785 = vpop.permute.xlu0 %4784
      %4786 = vrot.lane.b32.xlu0 %v4763, 16
      %v4787 = vpop.permute.xlu0 %4786
      %4788 = vrot.lane.b32.xlu0 %v4764, 16
      %v4789 = vpop.permute.xlu0 %4788
      %4790 = vrot.lane.b32.xlu0 %v4765, 16
      %v4791 = vpop.permute.xlu0 %4790
      %4792 = vrot.lane.b32.xlu0 %v4766, 16
      %v4793 = vpop.permute.xlu0 %4792
      %4794 = vrot.lane.b32.xlu0 %v4767, 16
      %v4795 = vpop.permute.xlu0 %4794
      %4796 = vrot.lane.b32.xlu0 %v4768, 16
      %v4797 = vpop.permute.xlu0 %4796
      %4798 = vrot.lane.b32.xlu0 %v4769, 16
      %v4799 = vpop.permute.xlu0 %4798
      %4800 = vrot.lane.b32.xlu0 %v4770, 16
      %v4801 = vpop.permute.xlu0 %4800
      %4802 = vrot.lane.b32.xlu0 %v4771, 16
      %v4803 = vpop.permute.xlu0 %4802
      %v4806 = vsel %vm1372, %v4596, %v4693
      %v4809 = vsel %vm1372, %v4597, %v4695
      %v4812 = vsel %vm1372, %v4598, %v4697
      %v4815 = vsel %vm1372, %v4599, %v4699
      %v4818 = vsel %vm1372, %v4600, %v4701
      %v4821 = vsel %vm1372, %v4601, %v4703
      %v4824 = vsel %vm1372, %v4602, %v4705
      %v4827 = vsel %vm1372, %v4603, %v4707
      %v4830 = vsel %vm1372, %v4604, %v4709
      %v4833 = vsel %vm1372, %v4605, %v4711
      %v4836 = vsel %vm1372, %v4606, %v4713
      %v4839 = vsel %vm1372, %v4607, %v4715
      %v4842 = vsel %vm1372, %v4608, %v4717
      %v4845 = vsel %vm1372, %v4609, %v4719
      %v4848 = vsel %vm1372, %v4610, %v4721
      %v4851 = vsel %vm1372, %v4611, %v4723
      %vm4852 = vcmask 130048
      %v4854 = vsel %vm4852, %v4806, %v4773
      %v4856 = vsel %vm4852, %v4809, %v4775
      %v4858 = vsel %vm4852, %v4812, %v4777
      %v4860 = vsel %vm4852, %v4815, %v4779
      %v4862 = vsel %vm4852, %v4818, %v4781
      %v4864 = vsel %vm4852, %v4821, %v4783
      %v4866 = vsel %vm4852, %v4824, %v4785
      %v4868 = vsel %vm4852, %v4827, %v4787
      %v4870 = vsel %vm4852, %v4830, %v4789
      %v4872 = vsel %vm4852, %v4833, %v4791
      %v4874 = vsel %vm4852, %v4836, %v4793
      %v4876 = vsel %vm4852, %v4839, %v4795
      %v4878 = vsel %vm4852, %v4842, %v4797
      %v4880 = vsel %vm4852, %v4845, %v4799
      %v4882 = vsel %vm4852, %v4848, %v4801
      %v4884 = vsel %vm4852, %v4851, %v4803
      %v4885 = vld [vmem:[%s4] sm:$0xf]
      %v4886 = vld [vmem:[%s4 + $0x4] sm:$0xf]
      %v4887 = vld [vmem:[%s4 + $0x8] sm:$0xf]
      %v4888 = vld [vmem:[%s3891] sm:$0x8]
      %v4889 = vld [vmem:[%s3891 + $0x4] sm:$0xf]
      %v4890 = vld [vmem:[%s3891 + $0x8] sm:$0xf]
      %v4891 = vld [vmem:[%s3891 + $0x10] sm:$0x8]
      %v4892 = vld [vmem:[%s3891 + $0x14] sm:$0xf]
      %v4893 = vld [vmem:[%s3891 + $0x18] sm:$0xf]
      %v4894 = vld [vmem:[%s3891 + $0x20] sm:$0x8]
      %v4895 = vld [vmem:[%s3891 + $0x24] sm:$0xf]
      %v4896 = vld [vmem:[%s3891 + $0x28] sm:$0xf]
      %v4897 = vld [vmem:[%s3891 + $0x30] sm:$0x8]
      %v4898 = vld [vmem:[%s3891 + $0x34] sm:$0xf]
      %v4899 = vld [vmem:[%s3891 + $0x38] sm:$0xf]
      %v4900 = vld [vmem:[%s3891 + $0x40] sm:$0x8]
      %v4901 = vld [vmem:[%s3891 + $0x44] sm:$0xf]
      %v4902 = vld [vmem:[%s3891 + $0x48] sm:$0xf]
      %v4903 = vld [vmem:[%s3891 + $0x50] sm:$0x8]
      %v4904 = vld [vmem:[%s3891 + $0x54] sm:$0xf]
      %v4905 = vld [vmem:[%s3891 + $0x58] sm:$0xf]
      %v4906 = vld [vmem:[%s3891 + $0x60] sm:$0x8]
      %v4907 = vld [vmem:[%s3891 + $0x64] sm:$0xf]
      %v4908 = vld [vmem:[%s3891 + $0x68] sm:$0xf]
      %v4909 = vld [vmem:[%s3891 + $0x70] sm:$0x8]
      %v4910 = vld [vmem:[%s3891 + $0x74] sm:$0xf]
      %v4911 = vld [vmem:[%s3891 + $0x78] sm:$0xf]
      %v4912 = vld [vmem:[%s3891 + $0x80] sm:$0x8]
      %v4913 = vld [vmem:[%s3891 + $0x84] sm:$0xf]
      %v4914 = vld [vmem:[%s3891 + $0x88] sm:$0xf]
      %v4915 = vld [vmem:[%s3891 + $0x90] sm:$0x8]
      %v4916 = vld [vmem:[%s3891 + $0x94] sm:$0xf]
      %v4917 = vld [vmem:[%s3891 + $0x98] sm:$0xf]
      %v4918 = vld [vmem:[%s3891 + $0xa0] sm:$0x8]
      %v4919 = vld [vmem:[%s3891 + $0xa4] sm:$0xf]
      %v4920 = vld [vmem:[%s3891 + $0xa8] sm:$0xf]
      %v4921 = vld [vmem:[%s3891 + $0xb0] sm:$0x8]
      %v4922 = vld [vmem:[%s3891 + $0xb4] sm:$0xf]
      %v4923 = vld [vmem:[%s3891 + $0xb8] sm:$0xf]
      %v4924 = vld [vmem:[%s3891 + $0xc0] sm:$0x8]
      %v4925 = vld [vmem:[%s3891 + $0xc4] sm:$0xf]
      %v4926 = vld [vmem:[%s3891 + $0xc8] sm:$0xf]
      %v4927 = vld [vmem:[%s3891 + $0xd0] sm:$0x8]
      %v4928 = vld [vmem:[%s3891 + $0xd4] sm:$0xf]
      %v4929 = vld [vmem:[%s3891 + $0xd8] sm:$0xf]
      %v4930 = vld [vmem:[%s3891 + $0xe0] sm:$0x8]
      %v4931 = vld [vmem:[%s3891 + $0xe4] sm:$0xf]
      %v4932 = vld [vmem:[%s3891 + $0xe8] sm:$0xf]
      %v4933 = vld [vmem:[%s3891 + $0xf0] sm:$0x8]
      %v4934 = vld [vmem:[%s3891 + $0xf4] sm:$0xf]
      %v4935 = vld [vmem:[%s3891 + $0xf8] sm:$0xf]
      %v4937 = vshrl.u32 %v4888, 16
      %v4939 = vrot.slane %v4937, 7
      %v4940 = vrot.slane %v4939, 4
      %v4942 = vshrl.u32 %v4889, 16
      %v4944 = vrot.slane %v4942, 7
      %v4945 = vshll.u32 %v4889, 16
      %v4947 = vor.u32 %v4944, %v4945
      %v4948 = vsel %vm487, %v4940, %v4947
      %v4949 = vrot.slane %v4944, 4
      %v4951 = vshrl.u32 %v4890, 16
      %v4953 = vrot.slane %v4951, 7
      %v4954 = vshll.u32 %v4890, 16
      %v4956 = vor.u32 %v4953, %v4954
      %v4957 = vsel %vm487, %v4949, %v4956
      %v4959 = vshrl.u32 %v4891, 16
      %v4961 = vrot.slane %v4959, 7
      %v4962 = vrot.slane %v4961, 4
      %v4964 = vshrl.u32 %v4892, 16
      %v4966 = vrot.slane %v4964, 7
      %v4967 = vshll.u32 %v4892, 16
      %v4969 = vor.u32 %v4966, %v4967
      %v4970 = vsel %vm487, %v4962, %v4969
      %v4971 = vrot.slane %v4966, 4
      %v4973 = vshrl.u32 %v4893, 16
      %v4975 = vrot.slane %v4973, 7
      %v4976 = vshll.u32 %v4893, 16
      %v4978 = vor.u32 %v4975, %v4976
      %v4979 = vsel %vm487, %v4971, %v4978
      %v4981 = vshrl.u32 %v4894, 16
      %v4983 = vrot.slane %v4981, 7
      %v4984 = vrot.slane %v4983, 4
      %v4986 = vshrl.u32 %v4895, 16
      %v4988 = vrot.slane %v4986, 7
      %v4989 = vshll.u32 %v4895, 16
      %v4991 = vor.u32 %v4988, %v4989
      %v4992 = vsel %vm487, %v4984, %v4991
      %v4993 = vrot.slane %v4988, 4
      %v4995 = vshrl.u32 %v4896, 16
      %v4997 = vrot.slane %v4995, 7
      %v4998 = vshll.u32 %v4896, 16
      %v5000 = vor.u32 %v4997, %v4998
      %v5001 = vsel %vm487, %v4993, %v5000
      %v5003 = vshrl.u32 %v4897, 16
      %v5005 = vrot.slane %v5003, 7
      %v5006 = vrot.slane %v5005, 4
      %v5008 = vshrl.u32 %v4898, 16
      %v5010 = vrot.slane %v5008, 7
      %v5011 = vshll.u32 %v4898, 16
      %v5013 = vor.u32 %v5010, %v5011
      %v5014 = vsel %vm487, %v5006, %v5013
      %v5015 = vrot.slane %v5010, 4
      %v5017 = vshrl.u32 %v4899, 16
      %v5019 = vrot.slane %v5017, 7
      %v5020 = vshll.u32 %v4899, 16
      %v5022 = vor.u32 %v5019, %v5020
      %v5023 = vsel %vm487, %v5015, %v5022
      %v5025 = vshrl.u32 %v4900, 16
      %v5027 = vrot.slane %v5025, 7
      %v5028 = vrot.slane %v5027, 4
      %v5030 = vshrl.u32 %v4901, 16
      %v5032 = vrot.slane %v5030, 7
      %v5033 = vshll.u32 %v4901, 16
      %v5035 = vor.u32 %v5032, %v5033
      %v5036 = vsel %vm487, %v5028, %v5035
      %v5037 = vrot.slane %v5032, 4
      %v5039 = vshrl.u32 %v4902, 16
      %v5041 = vrot.slane %v5039, 7
      %v5042 = vshll.u32 %v4902, 16
      %v5044 = vor.u32 %v5041, %v5042
      %v5045 = vsel %vm487, %v5037, %v5044
      %v5047 = vshrl.u32 %v4903, 16
      %v5049 = vrot.slane %v5047, 7
      %v5050 = vrot.slane %v5049, 4
      %v5052 = vshrl.u32 %v4904, 16
      %v5054 = vrot.slane %v5052, 7
      %v5055 = vshll.u32 %v4904, 16
      %v5057 = vor.u32 %v5054, %v5055
      %v5058 = vsel %vm487, %v5050, %v5057
      %v5059 = vrot.slane %v5054, 4
      %v5061 = vshrl.u32 %v4905, 16
      %v5063 = vrot.slane %v5061, 7
      %v5064 = vshll.u32 %v4905, 16
      %v5066 = vor.u32 %v5063, %v5064
      %v5067 = vsel %vm487, %v5059, %v5066
      %v5069 = vshrl.u32 %v4906, 16
      %v5071 = vrot.slane %v5069, 7
      %v5072 = vrot.slane %v5071, 4
      %v5074 = vshrl.u32 %v4907, 16
      %v5076 = vrot.slane %v5074, 7
      %v5077 = vshll.u32 %v4907, 16
      %v5079 = vor.u32 %v5076, %v5077
      %v5080 = vsel %vm487, %v5072, %v5079
      %v5081 = vrot.slane %v5076, 4
      %v5083 = vshrl.u32 %v4908, 16
      %v5085 = vrot.slane %v5083, 7
      %v5086 = vshll.u32 %v4908, 16
      %v5088 = vor.u32 %v5085, %v5086
      %v5089 = vsel %vm487, %v5081, %v5088
      %v5091 = vshrl.u32 %v4909, 16
      %v5093 = vrot.slane %v5091, 7
      %v5094 = vrot.slane %v5093, 4
      %v5096 = vshrl.u32 %v4910, 16
      %v5098 = vrot.slane %v5096, 7
      %v5099 = vshll.u32 %v4910, 16
      %v5101 = vor.u32 %v5098, %v5099
      %v5102 = vsel %vm487, %v5094, %v5101
      %v5103 = vrot.slane %v5098, 4
      %v5105 = vshrl.u32 %v4911, 16
      %v5107 = vrot.slane %v5105, 7
      %v5108 = vshll.u32 %v4911, 16
      %v5110 = vor.u32 %v5107, %v5108
      %v5111 = vsel %vm487, %v5103, %v5110
      %v5113 = vshrl.u32 %v4912, 16
      %v5115 = vrot.slane %v5113, 7
      %v5116 = vrot.slane %v5115, 4
      %v5118 = vshrl.u32 %v4913, 16
      %v5120 = vrot.slane %v5118, 7
      %v5121 = vshll.u32 %v4913, 16
      %v5123 = vor.u32 %v5120, %v5121
      %v5124 = vsel %vm487, %v5116, %v5123
      %v5125 = vrot.slane %v5120, 4
      %v5127 = vshrl.u32 %v4914, 16
      %v5129 = vrot.slane %v5127, 7
      %v5130 = vshll.u32 %v4914, 16
      %v5132 = vor.u32 %v5129, %v5130
      %v5133 = vsel %vm487, %v5125, %v5132
      %v5135 = vshrl.u32 %v4915, 16
      %v5137 = vrot.slane %v5135, 7
      %v5138 = vrot.slane %v5137, 4
      %v5140 = vshrl.u32 %v4916, 16
      %v5142 = vrot.slane %v5140, 7
      %v5143 = vshll.u32 %v4916, 16
      %v5145 = vor.u32 %v5142, %v5143
      %v5146 = vsel %vm487, %v5138, %v5145
      %v5147 = vrot.slane %v5142, 4
      %v5149 = vshrl.u32 %v4917, 16
      %v5151 = vrot.slane %v5149, 7
      %v5152 = vshll.u32 %v4917, 16
      %v5154 = vor.u32 %v5151, %v5152
      %v5155 = vsel %vm487, %v5147, %v5154
      %v5157 = vshrl.u32 %v4918, 16
      %v5159 = vrot.slane %v5157, 7
      %v5160 = vrot.slane %v5159, 4
      %v5162 = vshrl.u32 %v4919, 16
      %v5164 = vrot.slane %v5162, 7
      %v5165 = vshll.u32 %v4919, 16
      %v5167 = vor.u32 %v5164, %v5165
      %v5168 = vsel %vm487, %v5160, %v5167
      %v5169 = vrot.slane %v5164, 4
      %v5171 = vshrl.u32 %v4920, 16
      %v5173 = vrot.slane %v5171, 7
      %v5174 = vshll.u32 %v4920, 16
      %v5176 = vor.u32 %v5173, %v5174
      %v5177 = vsel %vm487, %v5169, %v5176
      %v5179 = vshrl.u32 %v4921, 16
      %v5181 = vrot.slane %v5179, 7
      %v5182 = vrot.slane %v5181, 4
      %v5184 = vshrl.u32 %v4922, 16
      %v5186 = vrot.slane %v5184, 7
      %v5187 = vshll.u32 %v4922, 16
      %v5189 = vor.u32 %v5186, %v5187
      %v5190 = vsel %vm487, %v5182, %v5189
      %v5191 = vrot.slane %v5186, 4
      %v5193 = vshrl.u32 %v4923, 16
      %v5195 = vrot.slane %v5193, 7
      %v5196 = vshll.u32 %v4923, 16
      %v5198 = vor.u32 %v5195, %v5196
      %v5199 = vsel %vm487, %v5191, %v5198
      %v5201 = vshrl.u32 %v4924, 16
      %v5203 = vrot.slane %v5201, 7
      %v5204 = vrot.slane %v5203, 4
      %v5206 = vshrl.u32 %v4925, 16
      %v5208 = vrot.slane %v5206, 7
      %v5209 = vshll.u32 %v4925, 16
      %v5211 = vor.u32 %v5208, %v5209
      %v5212 = vsel %vm487, %v5204, %v5211
      %v5213 = vrot.slane %v5208, 4
      %v5215 = vshrl.u32 %v4926, 16
      %v5217 = vrot.slane %v5215, 7
      %v5218 = vshll.u32 %v4926, 16
      %v5220 = vor.u32 %v5217, %v5218
      %v5221 = vsel %vm487, %v5213, %v5220
      %v5223 = vshrl.u32 %v4927, 16
      %v5225 = vrot.slane %v5223, 7
      %v5226 = vrot.slane %v5225, 4
      %v5228 = vshrl.u32 %v4928, 16
      %v5230 = vrot.slane %v5228, 7
      %v5231 = vshll.u32 %v4928, 16
      %v5233 = vor.u32 %v5230, %v5231
      %v5234 = vsel %vm487, %v5226, %v5233
      %v5235 = vrot.slane %v5230, 4
      %v5237 = vshrl.u32 %v4929, 16
      %v5239 = vrot.slane %v5237, 7
      %v5240 = vshll.u32 %v4929, 16
      %v5242 = vor.u32 %v5239, %v5240
      %v5243 = vsel %vm487, %v5235, %v5242
      %v5245 = vshrl.u32 %v4930, 16
      %v5247 = vrot.slane %v5245, 7
      %v5248 = vrot.slane %v5247, 4
      %v5250 = vshrl.u32 %v4931, 16
      %v5252 = vrot.slane %v5250, 7
      %v5253 = vshll.u32 %v4931, 16
      %v5255 = vor.u32 %v5252, %v5253
      %v5256 = vsel %vm487, %v5248, %v5255
      %v5257 = vrot.slane %v5252, 4
      %v5259 = vshrl.u32 %v4932, 16
      %v5261 = vrot.slane %v5259, 7
      %v5262 = vshll.u32 %v4932, 16
      %v5264 = vor.u32 %v5261, %v5262
      %v5265 = vsel %vm487, %v5257, %v5264
      %v5267 = vshrl.u32 %v4933, 16
      %v5269 = vrot.slane %v5267, 7
      %v5270 = vrot.slane %v5269, 4
      %v5272 = vshrl.u32 %v4934, 16
      %v5274 = vrot.slane %v5272, 7
      %v5275 = vshll.u32 %v4934, 16
      %v5277 = vor.u32 %v5274, %v5275
      %v5278 = vsel %vm487, %v5270, %v5277
      %v5279 = vrot.slane %v5274, 4
      %v5281 = vshrl.u32 %v4935, 16
      %v5283 = vrot.slane %v5281, 7
      %v5284 = vshll.u32 %v4935, 16
      %v5286 = vor.u32 %v5283, %v5284
      %v5287 = vsel %vm487, %v5279, %v5286
      %v5288 = vld [vmem:[%s3891 + $0xc] sm:$0x1]
      %v5289 = vld [vmem:[%s3891 + $0x1c] sm:$0x1]
      %v5290 = vld [vmem:[%s3891 + $0x2c] sm:$0x1]
      %v5291 = vld [vmem:[%s3891 + $0x3c] sm:$0x1]
      %v5292 = vld [vmem:[%s3891 + $0x4c] sm:$0x1]
      %v5293 = vld [vmem:[%s3891 + $0x5c] sm:$0x1]
      %v5294 = vld [vmem:[%s3891 + $0x6c] sm:$0x1]
      %v5295 = vld [vmem:[%s3891 + $0x7c] sm:$0x1]
      %v5296 = vld [vmem:[%s3891 + $0x8c] sm:$0x1]
      %v5297 = vld [vmem:[%s3891 + $0x9c] sm:$0x1]
      %v5298 = vld [vmem:[%s3891 + $0xac] sm:$0x1]
      %v5299 = vld [vmem:[%s3891 + $0xbc] sm:$0x1]
      %v5300 = vld [vmem:[%s3891 + $0xcc] sm:$0x1]
      %v5301 = vld [vmem:[%s3891 + $0xdc] sm:$0x1]
      %v5302 = vld [vmem:[%s3891 + $0xec] sm:$0x1]
      %v5303 = vld [vmem:[%s3891 + $0xfc] sm:$0x1]
      %v5304 = vrot.slane %v4942, 4
      %v5305 = vrot.slane %v4945, 5
      %v5306 = vor.u32 %v5304, %v5305
      %v5307 = vrot.slane %v5306, 4
      %v5308 = vrot.slane %v4954, 5
      %v5309 = vsel %vm858, %v5307, %v5308
      %v5310 = vrot.slane %v4951, 4
      %v5311 = vor.u32 %v5310, %v5308
      %v5312 = vrot.slane %v5311, 4
      %v5314 = vshll.u32 %v5288, 16
      %v5316 = vrot.slane %v5314, 5
      %v5317 = vsel %vm858, %v5312, %v5316
      %v5318 = vrot.slane %v4964, 4
      %v5319 = vrot.slane %v4967, 5
      %v5320 = vor.u32 %v5318, %v5319
      %v5321 = vrot.slane %v5320, 4
      %v5322 = vrot.slane %v4976, 5
      %v5323 = vsel %vm858, %v5321, %v5322
      %v5324 = vrot.slane %v4973, 4
      %v5325 = vor.u32 %v5324, %v5322
      %v5326 = vrot.slane %v5325, 4
      %v5328 = vshll.u32 %v5289, 16
      %v5330 = vrot.slane %v5328, 5
      %v5331 = vsel %vm858, %v5326, %v5330
      %v5332 = vrot.slane %v4986, 4
      %v5333 = vrot.slane %v4989, 5
      %v5334 = vor.u32 %v5332, %v5333
      %v5335 = vrot.slane %v5334, 4
      %v5336 = vrot.slane %v4998, 5
      %v5337 = vsel %vm858, %v5335, %v5336
      %v5338 = vrot.slane %v4995, 4
      %v5339 = vor.u32 %v5338, %v5336
      %v5340 = vrot.slane %v5339, 4
      %v5342 = vshll.u32 %v5290, 16
      %v5344 = vrot.slane %v5342, 5
      %v5345 = vsel %vm858, %v5340, %v5344
      %v5346 = vrot.slane %v5008, 4
      %v5347 = vrot.slane %v5011, 5
      %v5348 = vor.u32 %v5346, %v5347
      %v5349 = vrot.slane %v5348, 4
      %v5350 = vrot.slane %v5020, 5
      %v5351 = vsel %vm858, %v5349, %v5350
      %v5352 = vrot.slane %v5017, 4
      %v5353 = vor.u32 %v5352, %v5350
      %v5354 = vrot.slane %v5353, 4
      %v5356 = vshll.u32 %v5291, 16
      %v5358 = vrot.slane %v5356, 5
      %v5359 = vsel %vm858, %v5354, %v5358
      %v5360 = vrot.slane %v5030, 4
      %v5361 = vrot.slane %v5033, 5
      %v5362 = vor.u32 %v5360, %v5361
      %v5363 = vrot.slane %v5362, 4
      %v5364 = vrot.slane %v5042, 5
      %v5365 = vsel %vm858, %v5363, %v5364
      %v5366 = vrot.slane %v5039, 4
      %v5367 = vor.u32 %v5366, %v5364
      %v5368 = vrot.slane %v5367, 4
      %v5370 = vshll.u32 %v5292, 16
      %v5372 = vrot.slane %v5370, 5
      %v5373 = vsel %vm858, %v5368, %v5372
      %v5374 = vrot.slane %v5052, 4
      %v5375 = vrot.slane %v5055, 5
      %v5376 = vor.u32 %v5374, %v5375
      %v5377 = vrot.slane %v5376, 4
      %v5378 = vrot.slane %v5064, 5
      %v5379 = vsel %vm858, %v5377, %v5378
      %v5380 = vrot.slane %v5061, 4
      %v5381 = vor.u32 %v5380, %v5378
      %v5382 = vrot.slane %v5381, 4
      %v5384 = vshll.u32 %v5293, 16
      %v5386 = vrot.slane %v5384, 5
      %v5387 = vsel %vm858, %v5382, %v5386
      %v5388 = vrot.slane %v5074, 4
      %v5389 = vrot.slane %v5077, 5
      %v5390 = vor.u32 %v5388, %v5389
      %v5391 = vrot.slane %v5390, 4
      %v5392 = vrot.slane %v5086, 5
      %v5393 = vsel %vm858, %v5391, %v5392
      %v5394 = vrot.slane %v5083, 4
      %v5395 = vor.u32 %v5394, %v5392
      %v5396 = vrot.slane %v5395, 4
      %v5398 = vshll.u32 %v5294, 16
      %v5400 = vrot.slane %v5398, 5
      %v5401 = vsel %vm858, %v5396, %v5400
      %v5402 = vrot.slane %v5096, 4
      %v5403 = vrot.slane %v5099, 5
      %v5404 = vor.u32 %v5402, %v5403
      %v5405 = vrot.slane %v5404, 4
      %v5406 = vrot.slane %v5108, 5
      %v5407 = vsel %vm858, %v5405, %v5406
      %v5408 = vrot.slane %v5105, 4
      %v5409 = vor.u32 %v5408, %v5406
      %v5410 = vrot.slane %v5409, 4
      %v5412 = vshll.u32 %v5295, 16
      %v5414 = vrot.slane %v5412, 5
      %v5415 = vsel %vm858, %v5410, %v5414
      %v5416 = vrot.slane %v5118, 4
      %v5417 = vrot.slane %v5121, 5
      %v5418 = vor.u32 %v5416, %v5417
      %v5419 = vrot.slane %v5418, 4
      %v5420 = vrot.slane %v5130, 5
      %v5421 = vsel %vm858, %v5419, %v5420
      %v5422 = vrot.slane %v5127, 4
      %v5423 = vor.u32 %v5422, %v5420
      %v5424 = vrot.slane %v5423, 4
      %v5426 = vshll.u32 %v5296, 16
      %v5428 = vrot.slane %v5426, 5
      %v5429 = vsel %vm858, %v5424, %v5428
      %v5430 = vrot.slane %v5140, 4
      %v5431 = vrot.slane %v5143, 5
      %v5432 = vor.u32 %v5430, %v5431
      %v5433 = vrot.slane %v5432, 4
      %v5434 = vrot.slane %v5152, 5
      %v5435 = vsel %vm858, %v5433, %v5434
      %v5436 = vrot.slane %v5149, 4
      %v5437 = vor.u32 %v5436, %v5434
      %v5438 = vrot.slane %v5437, 4
      %v5440 = vshll.u32 %v5297, 16
      %v5442 = vrot.slane %v5440, 5
      %v5443 = vsel %vm858, %v5438, %v5442
      %v5444 = vrot.slane %v5162, 4
      %v5445 = vrot.slane %v5165, 5
      %v5446 = vor.u32 %v5444, %v5445
      %v5447 = vrot.slane %v5446, 4
      %v5448 = vrot.slane %v5174, 5
      %v5449 = vsel %vm858, %v5447, %v5448
      %v5450 = vrot.slane %v5171, 4
      %v5451 = vor.u32 %v5450, %v5448
      %v5452 = vrot.slane %v5451, 4
      %v5454 = vshll.u32 %v5298, 16
      %v5456 = vrot.slane %v5454, 5
      %v5457 = vsel %vm858, %v5452, %v5456
      %v5458 = vrot.slane %v5184, 4
      %v5459 = vrot.slane %v5187, 5
      %v5460 = vor.u32 %v5458, %v5459
      %v5461 = vrot.slane %v5460, 4
      %v5462 = vrot.slane %v5196, 5
      %v5463 = vsel %vm858, %v5461, %v5462
      %v5464 = vrot.slane %v5193, 4
      %v5465 = vor.u32 %v5464, %v5462
      %v5466 = vrot.slane %v5465, 4
      %v5468 = vshll.u32 %v5299, 16
      %v5470 = vrot.slane %v5468, 5
      %v5471 = vsel %vm858, %v5466, %v5470
      %v5472 = vrot.slane %v5206, 4
      %v5473 = vrot.slane %v5209, 5
      %v5474 = vor.u32 %v5472, %v5473
      %v5475 = vrot.slane %v5474, 4
      %v5476 = vrot.slane %v5218, 5
      %v5477 = vsel %vm858, %v5475, %v5476
      %v5478 = vrot.slane %v5215, 4
      %v5479 = vor.u32 %v5478, %v5476
      %v5480 = vrot.slane %v5479, 4
      %v5482 = vshll.u32 %v5300, 16
      %v5484 = vrot.slane %v5482, 5
      %v5485 = vsel %vm858, %v5480, %v5484
      %v5486 = vrot.slane %v5228, 4
      %v5487 = vrot.slane %v5231, 5
      %v5488 = vor.u32 %v5486, %v5487
      %v5489 = vrot.slane %v5488, 4
      %v5490 = vrot.slane %v5240, 5
      %v5491 = vsel %vm858, %v5489, %v5490
      %v5492 = vrot.slane %v5237, 4
      %v5493 = vor.u32 %v5492, %v5490
      %v5494 = vrot.slane %v5493, 4
      %v5496 = vshll.u32 %v5301, 16
      %v5498 = vrot.slane %v5496, 5
      %v5499 = vsel %vm858, %v5494, %v5498
      %v5500 = vrot.slane %v5250, 4
      %v5501 = vrot.slane %v5253, 5
      %v5502 = vor.u32 %v5500, %v5501
      %v5503 = vrot.slane %v5502, 4
      %v5504 = vrot.slane %v5262, 5
      %v5505 = vsel %vm858, %v5503, %v5504
      %v5506 = vrot.slane %v5259, 4
      %v5507 = vor.u32 %v5506, %v5504
      %v5508 = vrot.slane %v5507, 4
      %v5510 = vshll.u32 %v5302, 16
      %v5512 = vrot.slane %v5510, 5
      %v5513 = vsel %vm858, %v5508, %v5512
      %v5514 = vrot.slane %v5272, 4
      %v5515 = vrot.slane %v5275, 5
      %v5516 = vor.u32 %v5514, %v5515
      %v5517 = vrot.slane %v5516, 4
      %v5518 = vrot.slane %v5284, 5
      %v5519 = vsel %vm858, %v5517, %v5518
      %v5520 = vrot.slane %v5281, 4
      %v5521 = vor.u32 %v5520, %v5518
      %v5522 = vrot.slane %v5521, 4
      %v5524 = vshll.u32 %v5303, 16
      %v5526 = vrot.slane %v5524, 5
      %v5527 = vsel %vm858, %v5522, %v5526
      %v5528 = vunpack.c.l.b16 %v4948
      %v5529 = vunpack.c.l.b16 %v4957
      %v5530 = vunpack.c.l.b16 %v4970
      %v5531 = vunpack.c.l.b16 %v4979
      %v5532 = vunpack.c.l.b16 %v4992
      %v5533 = vunpack.c.l.b16 %v5001
      %v5534 = vunpack.c.l.b16 %v5014
      %v5535 = vunpack.c.l.b16 %v5023
      %v5536 = vunpack.c.l.b16 %v5036
      %v5537 = vunpack.c.l.b16 %v5045
      %v5538 = vunpack.c.l.b16 %v5058
      %v5539 = vunpack.c.l.b16 %v5067
      %v5540 = vunpack.c.l.b16 %v5080
      %v5541 = vunpack.c.l.b16 %v5089
      %v5542 = vunpack.c.l.b16 %v5102
      %v5543 = vunpack.c.l.b16 %v5111
      %v5544 = vunpack.c.l.b16 %v5124
      %v5545 = vunpack.c.l.b16 %v5133
      %v5546 = vunpack.c.l.b16 %v5146
      %v5547 = vunpack.c.l.b16 %v5155
      %v5548 = vunpack.c.l.b16 %v5168
      %v5549 = vunpack.c.l.b16 %v5177
      %v5550 = vunpack.c.l.b16 %v5190
      %v5551 = vunpack.c.l.b16 %v5199
      %v5552 = vunpack.c.l.b16 %v5212
      %v5553 = vunpack.c.l.b16 %v5221
      %v5554 = vunpack.c.l.b16 %v5234
      %v5555 = vunpack.c.l.b16 %v5243
      %v5556 = vunpack.c.l.b16 %v5256
      %v5557 = vunpack.c.l.b16 %v5265
      %v5558 = vunpack.c.l.b16 %v5278
      %v5559 = vunpack.c.l.b16 %v5287
      %v5560 = vpack.c.b16 %v5529, %v5528
      %v5561 = vpack.c.b16 %v5531, %v5530
      %v5562 = vpack.c.b16 %v5533, %v5532
      %v5563 = vpack.c.b16 %v5535, %v5534
      %v5564 = vpack.c.b16 %v5537, %v5536
      %v5565 = vpack.c.b16 %v5539, %v5538
      %v5566 = vpack.c.b16 %v5541, %v5540
      %v5567 = vpack.c.b16 %v5543, %v5542
      %v5568 = vpack.c.b16 %v5545, %v5544
      %v5569 = vpack.c.b16 %v5547, %v5546
      %v5570 = vpack.c.b16 %v5549, %v5548
      %v5571 = vpack.c.b16 %v5551, %v5550
      %v5572 = vpack.c.b16 %v5553, %v5552
      %v5573 = vpack.c.b16 %v5555, %v5554
      %v5574 = vpack.c.b16 %v5557, %v5556
      %v5575 = vpack.c.b16 %v5559, %v5558
      %v5608 = vunpack.c.l.b16 %v4889
      %v5609 = vunpack.c.l.b16 %v4890
      %v5610 = vunpack.c.l.b16 %v4892
      %v5611 = vunpack.c.l.b16 %v4893
      %v5612 = vunpack.c.l.b16 %v4895
      %v5613 = vunpack.c.l.b16 %v4896
      %v5614 = vunpack.c.l.b16 %v4898
      %v5615 = vunpack.c.l.b16 %v4899
      %v5616 = vunpack.c.l.b16 %v4901
      %v5617 = vunpack.c.l.b16 %v4902
      %v5618 = vunpack.c.l.b16 %v4904
      %v5619 = vunpack.c.l.b16 %v4905
      %v5620 = vunpack.c.l.b16 %v4907
      %v5621 = vunpack.c.l.b16 %v4908
      %v5622 = vunpack.c.l.b16 %v4910
      %v5623 = vunpack.c.l.b16 %v4911
      %v5624 = vunpack.c.l.b16 %v4913
      %v5625 = vunpack.c.l.b16 %v4914
      %v5626 = vunpack.c.l.b16 %v4916
      %v5627 = vunpack.c.l.b16 %v4917
      %v5628 = vunpack.c.l.b16 %v4919
      %v5629 = vunpack.c.l.b16 %v4920
      %v5630 = vunpack.c.l.b16 %v4922
      %v5631 = vunpack.c.l.b16 %v4923
      %v5632 = vunpack.c.l.b16 %v4925
      %v5633 = vunpack.c.l.b16 %v4926
      %v5634 = vunpack.c.l.b16 %v4928
      %v5635 = vunpack.c.l.b16 %v4929
      %v5636 = vunpack.c.l.b16 %v4931
      %v5637 = vunpack.c.l.b16 %v4932
      %v5638 = vunpack.c.l.b16 %v4934
      %v5639 = vunpack.c.l.b16 %v4935
      %v5640 = vpack.c.b16 %v5609, %v5608
      %v5641 = vpack.c.b16 %v5611, %v5610
      %v5642 = vpack.c.b16 %v5613, %v5612
      %v5643 = vpack.c.b16 %v5615, %v5614
      %v5644 = vpack.c.b16 %v5617, %v5616
      %v5645 = vpack.c.b16 %v5619, %v5618
      %v5646 = vpack.c.b16 %v5621, %v5620
      %v5647 = vpack.c.b16 %v5623, %v5622
      %v5648 = vpack.c.b16 %v5625, %v5624
      %v5649 = vpack.c.b16 %v5627, %v5626
      %v5650 = vpack.c.b16 %v5629, %v5628
      %v5651 = vpack.c.b16 %v5631, %v5630
      %v5652 = vpack.c.b16 %v5633, %v5632
      %v5653 = vpack.c.b16 %v5635, %v5634
      %v5654 = vpack.c.b16 %v5637, %v5636
      %v5655 = vpack.c.b16 %v5639, %v5638
      %5656 = vrot.lane.b32.xlu0 %v5640, 8
      %v5657 = vpop.permute.xlu0 %5656
      %5658 = vrot.lane.b32.xlu0 %v5641, 8
      %v5659 = vpop.permute.xlu0 %5658
      %5660 = vrot.lane.b32.xlu0 %v5642, 8
      %v5661 = vpop.permute.xlu0 %5660
      %5662 = vrot.lane.b32.xlu0 %v5643, 8
      %v5663 = vpop.permute.xlu0 %5662
      %5664 = vrot.lane.b32.xlu0 %v5644, 8
      %v5665 = vpop.permute.xlu0 %5664
      %5666 = vrot.lane.b32.xlu0 %v5645, 8
      %v5667 = vpop.permute.xlu0 %5666
      %5668 = vrot.lane.b32.xlu0 %v5646, 8
      %v5669 = vpop.permute.xlu0 %5668
      %5670 = vrot.lane.b32.xlu0 %v5647, 8
      %v5671 = vpop.permute.xlu0 %5670
      %5672 = vrot.lane.b32.xlu0 %v5648, 8
      %v5673 = vpop.permute.xlu0 %5672
      %5674 = vrot.lane.b32.xlu0 %v5649, 8
      %v5675 = vpop.permute.xlu0 %5674
      %5676 = vrot.lane.b32.xlu0 %v5650, 8
      %v5677 = vpop.permute.xlu0 %5676
      %5678 = vrot.lane.b32.xlu0 %v5651, 8
      %v5679 = vpop.permute.xlu0 %5678
      %5680 = vrot.lane.b32.xlu0 %v5652, 8
      %v5681 = vpop.permute.xlu0 %5680
      %5682 = vrot.lane.b32.xlu0 %v5653, 8
      %v5683 = vpop.permute.xlu0 %5682
      %5684 = vrot.lane.b32.xlu0 %v5654, 8
      %v5685 = vpop.permute.xlu0 %5684
      %5686 = vrot.lane.b32.xlu0 %v5655, 8
      %v5687 = vpop.permute.xlu0 %5686
      %v5688 = vunpack.c.l.b16 %v5309
      %v5689 = vunpack.c.l.b16 %v5317
      %v5690 = vunpack.c.l.b16 %v5323
      %v5691 = vunpack.c.l.b16 %v5331
      %v5692 = vunpack.c.l.b16 %v5337
      %v5693 = vunpack.c.l.b16 %v5345
      %v5694 = vunpack.c.l.b16 %v5351
      %v5695 = vunpack.c.l.b16 %v5359
      %v5696 = vunpack.c.l.b16 %v5365
      %v5697 = vunpack.c.l.b16 %v5373
      %v5698 = vunpack.c.l.b16 %v5379
      %v5699 = vunpack.c.l.b16 %v5387
      %v5700 = vunpack.c.l.b16 %v5393
      %v5701 = vunpack.c.l.b16 %v5401
      %v5702 = vunpack.c.l.b16 %v5407
      %v5703 = vunpack.c.l.b16 %v5415
      %v5704 = vunpack.c.l.b16 %v5421
      %v5705 = vunpack.c.l.b16 %v5429
      %v5706 = vunpack.c.l.b16 %v5435
      %v5707 = vunpack.c.l.b16 %v5443
      %v5708 = vunpack.c.l.b16 %v5449
      %v5709 = vunpack.c.l.b16 %v5457
      %v5710 = vunpack.c.l.b16 %v5463
      %v5711 = vunpack.c.l.b16 %v5471
      %v5712 = vunpack.c.l.b16 %v5477
      %v5713 = vunpack.c.l.b16 %v5485
      %v5714 = vunpack.c.l.b16 %v5491
      %v5715 = vunpack.c.l.b16 %v5499
      %v5716 = vunpack.c.l.b16 %v5505
      %v5717 = vunpack.c.l.b16 %v5513
      %v5718 = vunpack.c.l.b16 %v5519
      %v5719 = vunpack.c.l.b16 %v5527
      %v5720 = vpack.c.b16 %v5689, %v5688
      %v5721 = vpack.c.b16 %v5691, %v5690
      %v5722 = vpack.c.b16 %v5693, %v5692
      %v5723 = vpack.c.b16 %v5695, %v5694
      %v5724 = vpack.c.b16 %v5697, %v5696
      %v5725 = vpack.c.b16 %v5699, %v5698
      %v5726 = vpack.c.b16 %v5701, %v5700
      %v5727 = vpack.c.b16 %v5703, %v5702
      %v5728 = vpack.c.b16 %v5705, %v5704
      %v5729 = vpack.c.b16 %v5707, %v5706
      %v5730 = vpack.c.b16 %v5709, %v5708
      %v5731 = vpack.c.b16 %v5711, %v5710
      %v5732 = vpack.c.b16 %v5713, %v5712
      %v5733 = vpack.c.b16 %v5715, %v5714
      %v5734 = vpack.c.b16 %v5717, %v5716
      %v5735 = vpack.c.b16 %v5719, %v5718
      %5736 = vrot.lane.b32.xlu0 %v5720, 16
      %v5737 = vpop.permute.xlu0 %5736
      %5738 = vrot.lane.b32.xlu0 %v5721, 16
      %v5739 = vpop.permute.xlu0 %5738
      %5740 = vrot.lane.b32.xlu0 %v5722, 16
      %v5741 = vpop.permute.xlu0 %5740
      %5742 = vrot.lane.b32.xlu0 %v5723, 16
      %v5743 = vpop.permute.xlu0 %5742
      %5744 = vrot.lane.b32.xlu0 %v5724, 16
      %v5745 = vpop.permute.xlu0 %5744
      %5746 = vrot.lane.b32.xlu0 %v5725, 16
      %v5747 = vpop.permute.xlu0 %5746
      %5748 = vrot.lane.b32.xlu0 %v5726, 16
      %v5749 = vpop.permute.xlu0 %5748
      %5750 = vrot.lane.b32.xlu0 %v5727, 16
      %v5751 = vpop.permute.xlu0 %5750
      %5752 = vrot.lane.b32.xlu0 %v5728, 16
      %v5753 = vpop.permute.xlu0 %5752
      %5754 = vrot.lane.b32.xlu0 %v5729, 16
      %v5755 = vpop.permute.xlu0 %5754
      %5756 = vrot.lane.b32.xlu0 %v5730, 16
      %v5757 = vpop.permute.xlu0 %5756
      %5758 = vrot.lane.b32.xlu0 %v5731, 16
      %v5759 = vpop.permute.xlu0 %5758
      %5760 = vrot.lane.b32.xlu0 %v5732, 16
      %v5761 = vpop.permute.xlu0 %5760
      %5762 = vrot.lane.b32.xlu0 %v5733, 16
      %v5763 = vpop.permute.xlu0 %5762
      %5764 = vrot.lane.b32.xlu0 %v5734, 16
      %v5765 = vpop.permute.xlu0 %5764
      %5766 = vrot.lane.b32.xlu0 %v5735, 16
      %v5767 = vpop.permute.xlu0 %5766
      %v5770 = vsel %vm1372, %v5560, %v5657
      %v5773 = vsel %vm1372, %v5561, %v5659
      %v5776 = vsel %vm1372, %v5562, %v5661
      %v5779 = vsel %vm1372, %v5563, %v5663
      %v5782 = vsel %vm1372, %v5564, %v5665
      %v5785 = vsel %vm1372, %v5565, %v5667
      %v5788 = vsel %vm1372, %v5566, %v5669
      %v5791 = vsel %vm1372, %v5567, %v5671
      %v5794 = vsel %vm1372, %v5568, %v5673
      %v5797 = vsel %vm1372, %v5569, %v5675
      %v5800 = vsel %vm1372, %v5570, %v5677
      %v5803 = vsel %vm1372, %v5571, %v5679
      %v5806 = vsel %vm1372, %v5572, %v5681
      %v5809 = vsel %vm1372, %v5573, %v5683
      %v5812 = vsel %vm1372, %v5574, %v5685
      %v5815 = vsel %vm1372, %v5575, %v5687
      %v5817 = vsel %vm4852, %v5770, %v5737
      %v5819 = vsel %vm4852, %v5773, %v5739
      %v5821 = vsel %vm4852, %v5776, %v5741
      %v5823 = vsel %vm4852, %v5779, %v5743
      %v5825 = vsel %vm4852, %v5782, %v5745
      %v5827 = vsel %vm4852, %v5785, %v5747
      %v5829 = vsel %vm4852, %v5788, %v5749
      %v5831 = vsel %vm4852, %v5791, %v5751
      %v5833 = vsel %vm4852, %v5794, %v5753
      %v5835 = vsel %vm4852, %v5797, %v5755
      %v5837 = vsel %vm4852, %v5800, %v5757
      %v5839 = vsel %vm4852, %v5803, %v5759
      %v5841 = vsel %vm4852, %v5806, %v5761
      %v5843 = vsel %vm4852, %v5809, %v5763
      %v5845 = vsel %vm4852, %v5812, %v5765
      %v5847 = vsel %vm4852, %v5815, %v5767
      %s5848 = scalar_lea.vmem %s4, 12
      %v5849 = vld [vmem:[%s5848] sm:$0xf]
      %v5850 = vld [vmem:[%s5848 + $0x4] sm:$0xf]
      %v5851 = vld [vmem:[%s5848 + $0x8] sm:$0xf]
      %v5855 = vunpack.c.l.b16 %v5849
      %v5856 = vunpack.c.l.b16 %v5850
      %v5857 = vunpack.c.l.b16 %v5851
      %v5858 = vpack.c.b16 %v5856, %v5855
      %v5859 = vpack.c.b16 %v5857, %v5857
      %vm5861 = vcmask 195584
      %v5862 = vsel %vm5861, %v5817, 0
      %v5864 = vsel %vm5861, %v5819, 0
      %v5866 = vsel %vm5861, %v5821, 0
      %v5868 = vsel %vm5861, %v5823, 0
      %v5870 = vsel %vm5861, %v5825, 0
      %v5872 = vsel %vm5861, %v5827, 0
      %v5874 = vsel %vm5861, %v5829, 0
      %v5876 = vsel %vm5861, %v5831, 0
      %v5878 = vsel %vm5861, %v5833, 0
      %v5880 = vsel %vm5861, %v5835, 0
      %v5882 = vsel %vm5861, %v5837, 0
      %v5884 = vsel %vm5861, %v5839, 0
      %v5886 = vsel %vm5861, %v5841, 0
      %v5888 = vsel %vm5861, %v5843, 0
      %v5890 = vsel %vm5861, %v5845, 0
      %v5892 = vsel %vm5861, %v5847, 0
      %vm5894 = vcmask 1043456
      %v5896 = vsel %vm5894, %v5859, 0
      %5898 = vmatpush.bf16.msra.mxu0 0
      %5899 = vmatpush.bf16.msra.mxu0 0
      %5900 = vmatpush.bf16.msra.mxu0 0
      %5901 = vmatpush.bf16.msra.mxu0 0
      %5902 = vmatpush.bf16.msra.mxu0 0
      %5903 = vmatpush.bf16.msra.mxu0 0
      %5904 = vmatpush.bf16.msra.mxu0 %v5896
      %5905 = vmatpush.bf16.msra.mxu0 %v5858
      %5906 = vmatmul.bf16.gmra.mxu0 %v5862
      %v5907 = vpop.f32.mrf.mxu0
      %v5908 = vadd.f32 0.0, %v5907
      %v5909 = vpop.f32.mrf.mxu0
      %v5910 = vadd.f32 0.0, %v5909
      %5911 = vmatmul.bf16.gmra.mxu0 %v5864
      %v5912 = vpop.f32.mrf.mxu0
      %v5913 = vadd.f32 0.0, %v5912
      %v5914 = vpop.f32.mrf.mxu0
      %v5915 = vadd.f32 0.0, %v5914
      %5916 = vmatmul.bf16.gmra.mxu0 %v5866
      %v5917 = vpop.f32.mrf.mxu0
      %v5918 = vadd.f32 0.0, %v5917
      %v5919 = vpop.f32.mrf.mxu0
      %v5920 = vadd.f32 0.0, %v5919
      %5921 = vmatmul.bf16.gmra.mxu0 %v5868
      %v5922 = vpop.f32.mrf.mxu0
      %v5923 = vadd.f32 0.0, %v5922
      %v5924 = vpop.f32.mrf.mxu0
      %v5925 = vadd.f32 0.0, %v5924
      %5926 = vmatmul.bf16.gmra.mxu0 %v5870
      %v5927 = vpop.f32.mrf.mxu0
      %v5928 = vadd.f32 0.0, %v5927
      %v5929 = vpop.f32.mrf.mxu0
      %v5930 = vadd.f32 0.0, %v5929
      %5931 = vmatmul.bf16.gmra.mxu0 %v5872
      %v5932 = vpop.f32.mrf.mxu0
      %v5933 = vadd.f32 0.0, %v5932
      %v5934 = vpop.f32.mrf.mxu0
      %v5935 = vadd.f32 0.0, %v5934
      %5936 = vmatmul.bf16.gmra.mxu0 %v5874
      %v5937 = vpop.f32.mrf.mxu0
      %v5938 = vadd.f32 0.0, %v5937
      %v5939 = vpop.f32.mrf.mxu0
      %v5940 = vadd.f32 0.0, %v5939
      %5941 = vmatmul.bf16.gmra.mxu0 %v5876
      %v5942 = vpop.f32.mrf.mxu0
      %v5943 = vadd.f32 0.0, %v5942
      %v5944 = vpop.f32.mrf.mxu0
      %v5945 = vadd.f32 0.0, %v5944
      %5946 = vmatmul.bf16.gmra.mxu0 %v5878
      %v5947 = vpop.f32.mrf.mxu0
      %v5948 = vadd.f32 0.0, %v5947
      %v5949 = vpop.f32.mrf.mxu0
      %v5950 = vadd.f32 0.0, %v5949
      %5951 = vmatmul.bf16.gmra.mxu0 %v5880
      %v5952 = vpop.f32.mrf.mxu0
      %v5953 = vadd.f32 0.0, %v5952
      %v5954 = vpop.f32.mrf.mxu0
      %v5955 = vadd.f32 0.0, %v5954
      %5956 = vmatmul.bf16.gmra.mxu0 %v5882
      %v5957 = vpop.f32.mrf.mxu0
      %v5958 = vadd.f32 0.0, %v5957
      %v5959 = vpop.f32.mrf.mxu0
      %v5960 = vadd.f32 0.0, %v5959
      %5961 = vmatmul.bf16.gmra.mxu0 %v5884
      %v5962 = vpop.f32.mrf.mxu0
      %v5963 = vadd.f32 0.0, %v5962
      %v5964 = vpop.f32.mrf.mxu0
      %v5965 = vadd.f32 0.0, %v5964
      %5966 = vmatmul.bf16.gmra.mxu0 %v5886
      %v5967 = vpop.f32.mrf.mxu0
      %v5968 = vadd.f32 0.0, %v5967
      %v5969 = vpop.f32.mrf.mxu0
      %v5970 = vadd.f32 0.0, %v5969
      %5971 = vmatmul.bf16.gmra.mxu0 %v5888
      %v5972 = vpop.f32.mrf.mxu0
      %v5973 = vadd.f32 0.0, %v5972
      %v5974 = vpop.f32.mrf.mxu0
      %v5975 = vadd.f32 0.0, %v5974
      %5976 = vmatmul.bf16.gmra.mxu0 %v5890
      %v5977 = vpop.f32.mrf.mxu0
      %v5978 = vadd.f32 0.0, %v5977
      %v5979 = vpop.f32.mrf.mxu0
      %v5980 = vadd.f32 0.0, %v5979
      %5981 = vmatmul.bf16.gmra.mxu0 %v5892
      %v5982 = vpop.f32.mrf.mxu0
      %v5983 = vadd.f32 0.0, %v5982
      %v5984 = vpop.f32.mrf.mxu0
      %v5985 = vadd.f32 0.0, %v5984
      %5986 = vdwg.mxu0
      %v5990 = vunpack.c.l.b16 %v4885
      %v5991 = vunpack.c.l.b16 %v4886
      %v5992 = vunpack.c.l.b16 %v4887
      %v5993 = vpack.c.b16 %v5991, %v5990
      %v5994 = vpack.c.b16 %v5992, %v5992
      %v5996 = vsel %vm5861, %v4854, 0
      %v5998 = vsel %vm5861, %v4856, 0
      %v6000 = vsel %vm5861, %v4858, 0
      %v6002 = vsel %vm5861, %v4860, 0
      %v6004 = vsel %vm5861, %v4862, 0
      %v6006 = vsel %vm5861, %v4864, 0
      %v6008 = vsel %vm5861, %v4866, 0
      %v6010 = vsel %vm5861, %v4868, 0
      %v6012 = vsel %vm5861, %v4870, 0
      %v6014 = vsel %vm5861, %v4872, 0
      %v6016 = vsel %vm5861, %v4874, 0
      %v6018 = vsel %vm5861, %v4876, 0
      %v6020 = vsel %vm5861, %v4878, 0
      %v6022 = vsel %vm5861, %v4880, 0
      %v6024 = vsel %vm5861, %v4882, 0
      %v6026 = vsel %vm5861, %v4884, 0
      %v6029 = vsel %vm5894, %v5994, 0
      %6031 = vmatpush.bf16.msra.mxu0 0
      %6032 = vmatpush.bf16.msra.mxu0 0
      %6033 = vmatpush.bf16.msra.mxu0 0
      %6034 = vmatpush.bf16.msra.mxu0 0
      %6035 = vmatpush.bf16.msra.mxu0 0
      %6036 = vmatpush.bf16.msra.mxu0 0
      %6037 = vmatpush.bf16.msra.mxu0 %v6029
      %6038 = vmatpush.bf16.msra.mxu0 %v5993
      %6039 = vmatmul.bf16.gmra.mxu0 %v5996
      %v6040 = vpop.f32.mrf.mxu0
      %v6041 = vadd.f32 %v5908, %v6040
      %v6042 = vpop.f32.mrf.mxu0
      %v6043 = vadd.f32 %v5910, %v6042
      %6044 = vmatmul.bf16.gmra.mxu0 %v5998
      %v6045 = vpop.f32.mrf.mxu0
      %v6046 = vadd.f32 %v5913, %v6045
      %v6047 = vpop.f32.mrf.mxu0
      %v6048 = vadd.f32 %v5915, %v6047
      %6049 = vmatmul.bf16.gmra.mxu0 %v6000
      %v6050 = vpop.f32.mrf.mxu0
      %v6051 = vadd.f32 %v5918, %v6050
      %v6052 = vpop.f32.mrf.mxu0
      %v6053 = vadd.f32 %v5920, %v6052
      %6054 = vmatmul.bf16.gmra.mxu0 %v6002
      %v6055 = vpop.f32.mrf.mxu0
      %v6056 = vadd.f32 %v5923, %v6055
      %v6057 = vpop.f32.mrf.mxu0
      %v6058 = vadd.f32 %v5925, %v6057
      %6059 = vmatmul.bf16.gmra.mxu0 %v6004
      %v6060 = vpop.f32.mrf.mxu0
      %v6061 = vadd.f32 %v5928, %v6060
      %v6062 = vpop.f32.mrf.mxu0
      %v6063 = vadd.f32 %v5930, %v6062
      %6064 = vmatmul.bf16.gmra.mxu0 %v6006
      %v6065 = vpop.f32.mrf.mxu0
      %v6066 = vadd.f32 %v5933, %v6065
      %v6067 = vpop.f32.mrf.mxu0
      %v6068 = vadd.f32 %v5935, %v6067
      %6069 = vmatmul.bf16.gmra.mxu0 %v6008
      %v6070 = vpop.f32.mrf.mxu0
      %v6071 = vadd.f32 %v5938, %v6070
      %v6072 = vpop.f32.mrf.mxu0
      %v6073 = vadd.f32 %v5940, %v6072
      %6074 = vmatmul.bf16.gmra.mxu0 %v6010
      %v6075 = vpop.f32.mrf.mxu0
      %v6076 = vadd.f32 %v5943, %v6075
      %v6077 = vpop.f32.mrf.mxu0
      %v6078 = vadd.f32 %v5945, %v6077
      %6079 = vmatmul.bf16.gmra.mxu0 %v6012
      %v6080 = vpop.f32.mrf.mxu0
      %v6081 = vadd.f32 %v5948, %v6080
      %v6082 = vpop.f32.mrf.mxu0
      %v6083 = vadd.f32 %v5950, %v6082
      %6084 = vmatmul.bf16.gmra.mxu0 %v6014
      %v6085 = vpop.f32.mrf.mxu0
      %v6086 = vadd.f32 %v5953, %v6085
      %v6087 = vpop.f32.mrf.mxu0
      %v6088 = vadd.f32 %v5955, %v6087
      %6089 = vmatmul.bf16.gmra.mxu0 %v6016
      %v6090 = vpop.f32.mrf.mxu0
      %v6091 = vadd.f32 %v5958, %v6090
      %v6092 = vpop.f32.mrf.mxu0
      %v6093 = vadd.f32 %v5960, %v6092
      %6094 = vmatmul.bf16.gmra.mxu0 %v6018
      %v6095 = vpop.f32.mrf.mxu0
      %v6096 = vadd.f32 %v5963, %v6095
      %v6097 = vpop.f32.mrf.mxu0
      %v6098 = vadd.f32 %v5965, %v6097
      %6099 = vmatmul.bf16.gmra.mxu0 %v6020
      %v6100 = vpop.f32.mrf.mxu0
      %v6101 = vadd.f32 %v5968, %v6100
      %v6102 = vpop.f32.mrf.mxu0
      %v6103 = vadd.f32 %v5970, %v6102
      %6104 = vmatmul.bf16.gmra.mxu0 %v6022
      %v6105 = vpop.f32.mrf.mxu0
      %v6106 = vadd.f32 %v5973, %v6105
      %v6107 = vpop.f32.mrf.mxu0
      %v6108 = vadd.f32 %v5975, %v6107
      %6109 = vmatmul.bf16.gmra.mxu0 %v6024
      %v6110 = vpop.f32.mrf.mxu0
      %v6111 = vadd.f32 %v5978, %v6110
      %v6112 = vpop.f32.mrf.mxu0
      %v6113 = vadd.f32 %v5980, %v6112
      %6114 = vmatmul.bf16.gmra.mxu0 %v6026
      %v6115 = vpop.f32.mrf.mxu0
      %v6116 = vadd.f32 %v5983, %v6115
      %v6117 = vpop.f32.mrf.mxu0
      %v6118 = vadd.f32 %v5985, %v6117
      %6119 = vdwg.mxu0
      %s6120 = scalar_lea.vmem [#allocation3], 32
      %v6121 = vld [vmem:[%s6120] sm:$0x8]
      %v6122 = vld [vmem:[%s6120 + $0x4] sm:$0xf]
      %v6123 = vld [vmem:[%s6120 + $0x8] sm:$0xf]
      %v6124 = vld [vmem:[%s6120 + $0x10] sm:$0x8]
      %v6125 = vld [vmem:[%s6120 + $0x14] sm:$0xf]
      %v6126 = vld [vmem:[%s6120 + $0x18] sm:$0xf]
      %v6127 = vld [vmem:[%s6120 + $0x20] sm:$0x8]
      %v6128 = vld [vmem:[%s6120 + $0x24] sm:$0xf]
      %v6129 = vld [vmem:[%s6120 + $0x28] sm:$0xf]
      %v6130 = vld [vmem:[%s6120 + $0x30] sm:$0x8]
      %v6131 = vld [vmem:[%s6120 + $0x34] sm:$0xf]
      %v6132 = vld [vmem:[%s6120 + $0x38] sm:$0xf]
      %v6133 = vld [vmem:[%s6120 + $0x40] sm:$0x8]
      %v6134 = vld [vmem:[%s6120 + $0x44] sm:$0xf]
      %v6135 = vld [vmem:[%s6120 + $0x48] sm:$0xf]
      %v6136 = vld [vmem:[%s6120 + $0x50] sm:$0x8]
      %v6137 = vld [vmem:[%s6120 + $0x54] sm:$0xf]
      %v6138 = vld [vmem:[%s6120 + $0x58] sm:$0xf]
      %v6139 = vld [vmem:[%s6120 + $0x60] sm:$0x8]
      %v6140 = vld [vmem:[%s6120 + $0x64] sm:$0xf]
      %v6141 = vld [vmem:[%s6120 + $0x68] sm:$0xf]
      %v6142 = vld [vmem:[%s6120 + $0x70] sm:$0x8]
      %v6143 = vld [vmem:[%s6120 + $0x74] sm:$0xf]
      %v6144 = vld [vmem:[%s6120 + $0x78] sm:$0xf]
      %v6145 = vld [vmem:[%s6120 + $0x80] sm:$0x8]
      %v6146 = vld [vmem:[%s6120 + $0x84] sm:$0xf]
      %v6147 = vld [vmem:[%s6120 + $0x88] sm:$0xf]
      %v6148 = vld [vmem:[%s6120 + $0x90] sm:$0x8]
      %v6149 = vld [vmem:[%s6120 + $0x94] sm:$0xf]
      %v6150 = vld [vmem:[%s6120 + $0x98] sm:$0xf]
      %v6151 = vld [vmem:[%s6120 + $0xa0] sm:$0x8]
      %v6152 = vld [vmem:[%s6120 + $0xa4] sm:$0xf]
      %v6153 = vld [vmem:[%s6120 + $0xa8] sm:$0xf]
      %v6154 = vld [vmem:[%s6120 + $0xb0] sm:$0x8]
      %v6155 = vld [vmem:[%s6120 + $0xb4] sm:$0xf]
      %v6156 = vld [vmem:[%s6120 + $0xb8] sm:$0xf]
      %v6157 = vld [vmem:[%s6120 + $0xc0] sm:$0x8]
      %v6158 = vld [vmem:[%s6120 + $0xc4] sm:$0xf]
      %v6159 = vld [vmem:[%s6120 + $0xc8] sm:$0xf]
      %v6160 = vld [vmem:[%s6120 + $0xd0] sm:$0x8]
      %v6161 = vld [vmem:[%s6120 + $0xd4] sm:$0xf]
      %v6162 = vld [vmem:[%s6120 + $0xd8] sm:$0xf]
      %v6163 = vld [vmem:[%s6120 + $0xe0] sm:$0x8]
      %v6164 = vld [vmem:[%s6120 + $0xe4] sm:$0xf]
      %v6165 = vld [vmem:[%s6120 + $0xe8] sm:$0xf]
      %v6166 = vld [vmem:[%s6120 + $0xf0] sm:$0x8]
      %v6167 = vld [vmem:[%s6120 + $0xf4] sm:$0xf]
      %v6168 = vld [vmem:[%s6120 + $0xf8] sm:$0xf]
      %v6170 = vshrl.u32 %v6121, 16
      %v6172 = vrot.slane %v6170, 7
      %v6173 = vrot.slane %v6172, 4
      %v6175 = vshrl.u32 %v6122, 16
      %v6177 = vrot.slane %v6175, 7
      %v6178 = vshll.u32 %v6122, 16
      %v6180 = vor.u32 %v6177, %v6178
      %v6181 = vsel %vm487, %v6173, %v6180
      %v6182 = vrot.slane %v6177, 4
      %v6184 = vshrl.u32 %v6123, 16
      %v6186 = vrot.slane %v6184, 7
      %v6187 = vshll.u32 %v6123, 16
      %v6189 = vor.u32 %v6186, %v6187
      %v6190 = vsel %vm487, %v6182, %v6189
      %v6192 = vshrl.u32 %v6124, 16
      %v6194 = vrot.slane %v6192, 7
      %v6195 = vrot.slane %v6194, 4
      %v6197 = vshrl.u32 %v6125, 16
      %v6199 = vrot.slane %v6197, 7
      %v6200 = vshll.u32 %v6125, 16
      %v6202 = vor.u32 %v6199, %v6200
      %v6203 = vsel %vm487, %v6195, %v6202
      %v6204 = vrot.slane %v6199, 4
      %v6206 = vshrl.u32 %v6126, 16
      %v6208 = vrot.slane %v6206, 7
      %v6209 = vshll.u32 %v6126, 16
      %v6211 = vor.u32 %v6208, %v6209
      %v6212 = vsel %vm487, %v6204, %v6211
      %v6214 = vshrl.u32 %v6127, 16
      %v6216 = vrot.slane %v6214, 7
      %v6217 = vrot.slane %v6216, 4
      %v6219 = vshrl.u32 %v6128, 16
      %v6221 = vrot.slane %v6219, 7
      %v6222 = vshll.u32 %v6128, 16
      %v6224 = vor.u32 %v6221, %v6222
      %v6225 = vsel %vm487, %v6217, %v6224
      %v6226 = vrot.slane %v6221, 4
      %v6228 = vshrl.u32 %v6129, 16
      %v6230 = vrot.slane %v6228, 7
      %v6231 = vshll.u32 %v6129, 16
      %v6233 = vor.u32 %v6230, %v6231
      %v6234 = vsel %vm487, %v6226, %v6233
      %v6236 = vshrl.u32 %v6130, 16
      %v6238 = vrot.slane %v6236, 7
      %v6239 = vrot.slane %v6238, 4
      %v6241 = vshrl.u32 %v6131, 16
      %v6243 = vrot.slane %v6241, 7
      %v6244 = vshll.u32 %v6131, 16
      %v6246 = vor.u32 %v6243, %v6244
      %v6247 = vsel %vm487, %v6239, %v6246
      %v6248 = vrot.slane %v6243, 4
      %v6250 = vshrl.u32 %v6132, 16
      %v6252 = vrot.slane %v6250, 7
      %v6253 = vshll.u32 %v6132, 16
      %v6255 = vor.u32 %v6252, %v6253
      %v6256 = vsel %vm487, %v6248, %v6255
      %v6258 = vshrl.u32 %v6133, 16
      %v6260 = vrot.slane %v6258, 7
      %v6261 = vrot.slane %v6260, 4
      %v6263 = vshrl.u32 %v6134, 16
      %v6265 = vrot.slane %v6263, 7
      %v6266 = vshll.u32 %v6134, 16
      %v6268 = vor.u32 %v6265, %v6266
      %v6269 = vsel %vm487, %v6261, %v6268
      %v6270 = vrot.slane %v6265, 4
      %v6272 = vshrl.u32 %v6135, 16
      %v6274 = vrot.slane %v6272, 7
      %v6275 = vshll.u32 %v6135, 16
      %v6277 = vor.u32 %v6274, %v6275
      %v6278 = vsel %vm487, %v6270, %v6277
      %v6280 = vshrl.u32 %v6136, 16
      %v6282 = vrot.slane %v6280, 7
      %v6283 = vrot.slane %v6282, 4
      %v6285 = vshrl.u32 %v6137, 16
      %v6287 = vrot.slane %v6285, 7
      %v6288 = vshll.u32 %v6137, 16
      %v6290 = vor.u32 %v6287, %v6288
      %v6291 = vsel %vm487, %v6283, %v6290
      %v6292 = vrot.slane %v6287, 4
      %v6294 = vshrl.u32 %v6138, 16
      %v6296 = vrot.slane %v6294, 7
      %v6297 = vshll.u32 %v6138, 16
      %v6299 = vor.u32 %v6296, %v6297
      %v6300 = vsel %vm487, %v6292, %v6299
      %v6302 = vshrl.u32 %v6139, 16
      %v6304 = vrot.slane %v6302, 7
      %v6305 = vrot.slane %v6304, 4
      %v6307 = vshrl.u32 %v6140, 16
      %v6309 = vrot.slane %v6307, 7
      %v6310 = vshll.u32 %v6140, 16
      %v6312 = vor.u32 %v6309, %v6310
      %v6313 = vsel %vm487, %v6305, %v6312
      %v6314 = vrot.slane %v6309, 4
      %v6316 = vshrl.u32 %v6141, 16
      %v6318 = vrot.slane %v6316, 7
      %v6319 = vshll.u32 %v6141, 16
      %v6321 = vor.u32 %v6318, %v6319
      %v6322 = vsel %vm487, %v6314, %v6321
      %v6324 = vshrl.u32 %v6142, 16
      %v6326 = vrot.slane %v6324, 7
      %v6327 = vrot.slane %v6326, 4
      %v6329 = vshrl.u32 %v6143, 16
      %v6331 = vrot.slane %v6329, 7
      %v6332 = vshll.u32 %v6143, 16
      %v6334 = vor.u32 %v6331, %v6332
      %v6335 = vsel %vm487, %v6327, %v6334
      %v6336 = vrot.slane %v6331, 4
      %v6338 = vshrl.u32 %v6144, 16
      %v6340 = vrot.slane %v6338, 7
      %v6341 = vshll.u32 %v6144, 16
      %v6343 = vor.u32 %v6340, %v6341
      %v6344 = vsel %vm487, %v6336, %v6343
      %v6346 = vshrl.u32 %v6145, 16
      %v6348 = vrot.slane %v6346, 7
      %v6349 = vrot.slane %v6348, 4
      %v6351 = vshrl.u32 %v6146, 16
      %v6353 = vrot.slane %v6351, 7
      %v6354 = vshll.u32 %v6146, 16
      %v6356 = vor.u32 %v6353, %v6354
      %v6357 = vsel %vm487, %v6349, %v6356
      %v6358 = vrot.slane %v6353, 4
      %v6360 = vshrl.u32 %v6147, 16
      %v6362 = vrot.slane %v6360, 7
      %v6363 = vshll.u32 %v6147, 16
      %v6365 = vor.u32 %v6362, %v6363
      %v6366 = vsel %vm487, %v6358, %v6365
      %v6368 = vshrl.u32 %v6148, 16
      %v6370 = vrot.slane %v6368, 7
      %v6371 = vrot.slane %v6370, 4
      %v6373 = vshrl.u32 %v6149, 16
      %v6375 = vrot.slane %v6373, 7
      %v6376 = vshll.u32 %v6149, 16
      %v6378 = vor.u32 %v6375, %v6376
      %v6379 = vsel %vm487, %v6371, %v6378
      %v6380 = vrot.slane %v6375, 4
      %v6382 = vshrl.u32 %v6150, 16
      %v6384 = vrot.slane %v6382, 7
      %v6385 = vshll.u32 %v6150, 16
      %v6387 = vor.u32 %v6384, %v6385
      %v6388 = vsel %vm487, %v6380, %v6387
      %v6390 = vshrl.u32 %v6151, 16
      %v6392 = vrot.slane %v6390, 7
      %v6393 = vrot.slane %v6392, 4
      %v6395 = vshrl.u32 %v6152, 16
      %v6397 = vrot.slane %v6395, 7
      %v6398 = vshll.u32 %v6152, 16
      %v6400 = vor.u32 %v6397, %v6398
      %v6401 = vsel %vm487, %v6393, %v6400
      %v6402 = vrot.slane %v6397, 4
      %v6404 = vshrl.u32 %v6153, 16
      %v6406 = vrot.slane %v6404, 7
      %v6407 = vshll.u32 %v6153, 16
      %v6409 = vor.u32 %v6406, %v6407
      %v6410 = vsel %vm487, %v6402, %v6409
      %v6412 = vshrl.u32 %v6154, 16
      %v6414 = vrot.slane %v6412, 7
      %v6415 = vrot.slane %v6414, 4
      %v6417 = vshrl.u32 %v6155, 16
      %v6419 = vrot.slane %v6417, 7
      %v6420 = vshll.u32 %v6155, 16
      %v6422 = vor.u32 %v6419, %v6420
      %v6423 = vsel %vm487, %v6415, %v6422
      %v6424 = vrot.slane %v6419, 4
      %v6426 = vshrl.u32 %v6156, 16
      %v6428 = vrot.slane %v6426, 7
      %v6429 = vshll.u32 %v6156, 16
      %v6431 = vor.u32 %v6428, %v6429
      %v6432 = vsel %vm487, %v6424, %v6431
      %v6434 = vshrl.u32 %v6157, 16
      %v6436 = vrot.slane %v6434, 7
      %v6437 = vrot.slane %v6436, 4
      %v6439 = vshrl.u32 %v6158, 16
      %v6441 = vrot.slane %v6439, 7
      %v6442 = vshll.u32 %v6158, 16
      %v6444 = vor.u32 %v6441, %v6442
      %v6445 = vsel %vm487, %v6437, %v6444
      %v6446 = vrot.slane %v6441, 4
      %v6448 = vshrl.u32 %v6159, 16
      %v6450 = vrot.slane %v6448, 7
      %v6451 = vshll.u32 %v6159, 16
      %v6453 = vor.u32 %v6450, %v6451
      %v6454 = vsel %vm487, %v6446, %v6453
      %v6456 = vshrl.u32 %v6160, 16
      %v6458 = vrot.slane %v6456, 7
      %v6459 = vrot.slane %v6458, 4
      %v6461 = vshrl.u32 %v6161, 16
      %v6463 = vrot.slane %v6461, 7
      %v6464 = vshll.u32 %v6161, 16
      %v6466 = vor.u32 %v6463, %v6464
      %v6467 = vsel %vm487, %v6459, %v6466
      %v6468 = vrot.slane %v6463, 4
      %v6470 = vshrl.u32 %v6162, 16
      %v6472 = vrot.slane %v6470, 7
      %v6473 = vshll.u32 %v6162, 16
      %v6475 = vor.u32 %v6472, %v6473
      %v6476 = vsel %vm487, %v6468, %v6475
      %v6478 = vshrl.u32 %v6163, 16
      %v6480 = vrot.slane %v6478, 7
      %v6481 = vrot.slane %v6480, 4
      %v6483 = vshrl.u32 %v6164, 16
      %v6485 = vrot.slane %v6483, 7
      %v6486 = vshll.u32 %v6164, 16
      %v6488 = vor.u32 %v6485, %v6486
      %v6489 = vsel %vm487, %v6481, %v6488
      %v6490 = vrot.slane %v6485, 4
      %v6492 = vshrl.u32 %v6165, 16
      %v6494 = vrot.slane %v6492, 7
      %v6495 = vshll.u32 %v6165, 16
      %v6497 = vor.u32 %v6494, %v6495
      %v6498 = vsel %vm487, %v6490, %v6497
      %v6500 = vshrl.u32 %v6166, 16
      %v6502 = vrot.slane %v6500, 7
      %v6503 = vrot.slane %v6502, 4
      %v6505 = vshrl.u32 %v6167, 16
      %v6507 = vrot.slane %v6505, 7
      %v6508 = vshll.u32 %v6167, 16
      %v6510 = vor.u32 %v6507, %v6508
      %v6511 = vsel %vm487, %v6503, %v6510
      %v6512 = vrot.slane %v6507, 4
      %v6514 = vshrl.u32 %v6168, 16
      %v6516 = vrot.slane %v6514, 7
      %v6517 = vshll.u32 %v6168, 16
      %v6519 = vor.u32 %v6516, %v6517
      %v6520 = vsel %vm487, %v6512, %v6519
      %v6521 = vld [vmem:[%s6120 + $0xc] sm:$0x1]
      %v6522 = vld [vmem:[%s6120 + $0x1c] sm:$0x1]
      %v6523 = vld [vmem:[%s6120 + $0x2c] sm:$0x1]
      %v6524 = vld [vmem:[%s6120 + $0x3c] sm:$0x1]
      %v6525 = vld [vmem:[%s6120 + $0x4c] sm:$0x1]
      %v6526 = vld [vmem:[%s6120 + $0x5c] sm:$0x1]
      %v6527 = vld [vmem:[%s6120 + $0x6c] sm:$0x1]
      %v6528 = vld [vmem:[%s6120 + $0x7c] sm:$0x1]
      %v6529 = vld [vmem:[%s6120 + $0x8c] sm:$0x1]
      %v6530 = vld [vmem:[%s6120 + $0x9c] sm:$0x1]
      %v6531 = vld [vmem:[%s6120 + $0xac] sm:$0x1]
      %v6532 = vld [vmem:[%s6120 + $0xbc] sm:$0x1]
      %v6533 = vld [vmem:[%s6120 + $0xcc] sm:$0x1]
      %v6534 = vld [vmem:[%s6120 + $0xdc] sm:$0x1]
      %v6535 = vld [vmem:[%s6120 + $0xec] sm:$0x1]
      %v6536 = vld [vmem:[%s6120 + $0xfc] sm:$0x1]
      %v6537 = vrot.slane %v6175, 4
      %v6538 = vrot.slane %v6178, 5
      %v6539 = vor.u32 %v6537, %v6538
      %v6540 = vrot.slane %v6539, 4
      %v6541 = vrot.slane %v6187, 5
      %v6542 = vsel %vm858, %v6540, %v6541
      %v6543 = vrot.slane %v6184, 4
      %v6544 = vor.u32 %v6543, %v6541
      %v6545 = vrot.slane %v6544, 4
      %v6547 = vshll.u32 %v6521, 16
      %v6549 = vrot.slane %v6547, 5
      %v6550 = vsel %vm858, %v6545, %v6549
      %v6551 = vrot.slane %v6197, 4
      %v6552 = vrot.slane %v6200, 5
      %v6553 = vor.u32 %v6551, %v6552
      %v6554 = vrot.slane %v6553, 4
      %v6555 = vrot.slane %v6209, 5
      %v6556 = vsel %vm858, %v6554, %v6555
      %v6557 = vrot.slane %v6206, 4
      %v6558 = vor.u32 %v6557, %v6555
      %v6559 = vrot.slane %v6558, 4
      %v6561 = vshll.u32 %v6522, 16
      %v6563 = vrot.slane %v6561, 5
      %v6564 = vsel %vm858, %v6559, %v6563
      %v6565 = vrot.slane %v6219, 4
      %v6566 = vrot.slane %v6222, 5
      %v6567 = vor.u32 %v6565, %v6566
      %v6568 = vrot.slane %v6567, 4
      %v6569 = vrot.slane %v6231, 5
      %v6570 = vsel %vm858, %v6568, %v6569
      %v6571 = vrot.slane %v6228, 4
      %v6572 = vor.u32 %v6571, %v6569
      %v6573 = vrot.slane %v6572, 4
      %v6575 = vshll.u32 %v6523, 16
      %v6577 = vrot.slane %v6575, 5
      %v6578 = vsel %vm858, %v6573, %v6577
      %v6579 = vrot.slane %v6241, 4
      %v6580 = vrot.slane %v6244, 5
      %v6581 = vor.u32 %v6579, %v6580
      %v6582 = vrot.slane %v6581, 4
      %v6583 = vrot.slane %v6253, 5
      %v6584 = vsel %vm858, %v6582, %v6583
      %v6585 = vrot.slane %v6250, 4
      %v6586 = vor.u32 %v6585, %v6583
      %v6587 = vrot.slane %v6586, 4
      %v6589 = vshll.u32 %v6524, 16
      %v6591 = vrot.slane %v6589, 5
      %v6592 = vsel %vm858, %v6587, %v6591
      %v6593 = vrot.slane %v6263, 4
      %v6594 = vrot.slane %v6266, 5
      %v6595 = vor.u32 %v6593, %v6594
      %v6596 = vrot.slane %v6595, 4
      %v6597 = vrot.slane %v6275, 5
      %v6598 = vsel %vm858, %v6596, %v6597
      %v6599 = vrot.slane %v6272, 4
      %v6600 = vor.u32 %v6599, %v6597
      %v6601 = vrot.slane %v6600, 4
      %v6603 = vshll.u32 %v6525, 16
      %v6605 = vrot.slane %v6603, 5
      %v6606 = vsel %vm858, %v6601, %v6605
      %v6607 = vrot.slane %v6285, 4
      %v6608 = vrot.slane %v6288, 5
      %v6609 = vor.u32 %v6607, %v6608
      %v6610 = vrot.slane %v6609, 4
      %v6611 = vrot.slane %v6297, 5
      %v6612 = vsel %vm858, %v6610, %v6611
      %v6613 = vrot.slane %v6294, 4
      %v6614 = vor.u32 %v6613, %v6611
      %v6615 = vrot.slane %v6614, 4
      %v6617 = vshll.u32 %v6526, 16
      %v6619 = vrot.slane %v6617, 5
      %v6620 = vsel %vm858, %v6615, %v6619
      %v6621 = vrot.slane %v6307, 4
      %v6622 = vrot.slane %v6310, 5
      %v6623 = vor.u32 %v6621, %v6622
      %v6624 = vrot.slane %v6623, 4
      %v6625 = vrot.slane %v6319, 5
      %v6626 = vsel %vm858, %v6624, %v6625
      %v6627 = vrot.slane %v6316, 4
      %v6628 = vor.u32 %v6627, %v6625
      %v6629 = vrot.slane %v6628, 4
      %v6631 = vshll.u32 %v6527, 16
      %v6633 = vrot.slane %v6631, 5
      %v6634 = vsel %vm858, %v6629, %v6633
      %v6635 = vrot.slane %v6329, 4
      %v6636 = vrot.slane %v6332, 5
      %v6637 = vor.u32 %v6635, %v6636
      %v6638 = vrot.slane %v6637, 4
      %v6639 = vrot.slane %v6341, 5
      %v6640 = vsel %vm858, %v6638, %v6639
      %v6641 = vrot.slane %v6338, 4
      %v6642 = vor.u32 %v6641, %v6639
      %v6643 = vrot.slane %v6642, 4
      %v6645 = vshll.u32 %v6528, 16
      %v6647 = vrot.slane %v6645, 5
      %v6648 = vsel %vm858, %v6643, %v6647
      %v6649 = vrot.slane %v6351, 4
      %v6650 = vrot.slane %v6354, 5
      %v6651 = vor.u32 %v6649, %v6650
      %v6652 = vrot.slane %v6651, 4
      %v6653 = vrot.slane %v6363, 5
      %v6654 = vsel %vm858, %v6652, %v6653
      %v6655 = vrot.slane %v6360, 4
      %v6656 = vor.u32 %v6655, %v6653
      %v6657 = vrot.slane %v6656, 4
      %v6659 = vshll.u32 %v6529, 16
      %v6661 = vrot.slane %v6659, 5
      %v6662 = vsel %vm858, %v6657, %v6661
      %v6663 = vrot.slane %v6373, 4
      %v6664 = vrot.slane %v6376, 5
      %v6665 = vor.u32 %v6663, %v6664
      %v6666 = vrot.slane %v6665, 4
      %v6667 = vrot.slane %v6385, 5
      %v6668 = vsel %vm858, %v6666, %v6667
      %v6669 = vrot.slane %v6382, 4
      %v6670 = vor.u32 %v6669, %v6667
      %v6671 = vrot.slane %v6670, 4
      %v6673 = vshll.u32 %v6530, 16
      %v6675 = vrot.slane %v6673, 5
      %v6676 = vsel %vm858, %v6671, %v6675
      %v6677 = vrot.slane %v6395, 4
      %v6678 = vrot.slane %v6398, 5
      %v6679 = vor.u32 %v6677, %v6678
      %v6680 = vrot.slane %v6679, 4
      %v6681 = vrot.slane %v6407, 5
      %v6682 = vsel %vm858, %v6680, %v6681
      %v6683 = vrot.slane %v6404, 4
      %v6684 = vor.u32 %v6683, %v6681
      %v6685 = vrot.slane %v6684, 4
      %v6687 = vshll.u32 %v6531, 16
      %v6689 = vrot.slane %v6687, 5
      %v6690 = vsel %vm858, %v6685, %v6689
      %v6691 = vrot.slane %v6417, 4
      %v6692 = vrot.slane %v6420, 5
      %v6693 = vor.u32 %v6691, %v6692
      %v6694 = vrot.slane %v6693, 4
      %v6695 = vrot.slane %v6429, 5
      %v6696 = vsel %vm858, %v6694, %v6695
      %v6697 = vrot.slane %v6426, 4
      %v6698 = vor.u32 %v6697, %v6695
      %v6699 = vrot.slane %v6698, 4
      %v6701 = vshll.u32 %v6532, 16
      %v6703 = vrot.slane %v6701, 5
      %v6704 = vsel %vm858, %v6699, %v6703
      %v6705 = vrot.slane %v6439, 4
      %v6706 = vrot.slane %v6442, 5
      %v6707 = vor.u32 %v6705, %v6706
      %v6708 = vrot.slane %v6707, 4
      %v6709 = vrot.slane %v6451, 5
      %v6710 = vsel %vm858, %v6708, %v6709
      %v6711 = vrot.slane %v6448, 4
      %v6712 = vor.u32 %v6711, %v6709
      %v6713 = vrot.slane %v6712, 4
      %v6715 = vshll.u32 %v6533, 16
      %v6717 = vrot.slane %v6715, 5
      %v6718 = vsel %vm858, %v6713, %v6717
      %v6719 = vrot.slane %v6461, 4
      %v6720 = vrot.slane %v6464, 5
      %v6721 = vor.u32 %v6719, %v6720
      %v6722 = vrot.slane %v6721, 4
      %v6723 = vrot.slane %v6473, 5
      %v6724 = vsel %vm858, %v6722, %v6723
      %v6725 = vrot.slane %v6470, 4
      %v6726 = vor.u32 %v6725, %v6723
      %v6727 = vrot.slane %v6726, 4
      %v6729 = vshll.u32 %v6534, 16
      %v6731 = vrot.slane %v6729, 5
      %v6732 = vsel %vm858, %v6727, %v6731
      %v6733 = vrot.slane %v6483, 4
      %v6734 = vrot.slane %v6486, 5
      %v6735 = vor.u32 %v6733, %v6734
      %v6736 = vrot.slane %v6735, 4
      %v6737 = vrot.slane %v6495, 5
      %v6738 = vsel %vm858, %v6736, %v6737
      %v6739 = vrot.slane %v6492, 4
      %v6740 = vor.u32 %v6739, %v6737
      %v6741 = vrot.slane %v6740, 4
      %v6743 = vshll.u32 %v6535, 16
      %v6745 = vrot.slane %v6743, 5
      %v6746 = vsel %vm858, %v6741, %v6745
      %v6747 = vrot.slane %v6505, 4
      %v6748 = vrot.slane %v6508, 5
      %v6749 = vor.u32 %v6747, %v6748
      %v6750 = vrot.slane %v6749, 4
      %v6751 = vrot.slane %v6517, 5
      %v6752 = vsel %vm858, %v6750, %v6751
      %v6753 = vrot.slane %v6514, 4
      %v6754 = vor.u32 %v6753, %v6751
      %v6755 = vrot.slane %v6754, 4
      %v6757 = vshll.u32 %v6536, 16
      %v6759 = vrot.slane %v6757, 5
      %v6760 = vsel %vm858, %v6755, %v6759
      %v6761 = vunpack.c.l.b16 %v6181
      %v6762 = vunpack.c.l.b16 %v6190
      %v6763 = vunpack.c.l.b16 %v6203
      %v6764 = vunpack.c.l.b16 %v6212
      %v6765 = vunpack.c.l.b16 %v6225
      %v6766 = vunpack.c.l.b16 %v6234
      %v6767 = vunpack.c.l.b16 %v6247
      %v6768 = vunpack.c.l.b16 %v6256
      %v6769 = vunpack.c.l.b16 %v6269
      %v6770 = vunpack.c.l.b16 %v6278
      %v6771 = vunpack.c.l.b16 %v6291
      %v6772 = vunpack.c.l.b16 %v6300
      %v6773 = vunpack.c.l.b16 %v6313
      %v6774 = vunpack.c.l.b16 %v6322
      %v6775 = vunpack.c.l.b16 %v6335
      %v6776 = vunpack.c.l.b16 %v6344
      %v6777 = vunpack.c.l.b16 %v6357
      %v6778 = vunpack.c.l.b16 %v6366
      %v6779 = vunpack.c.l.b16 %v6379
      %v6780 = vunpack.c.l.b16 %v6388
      %v6781 = vunpack.c.l.b16 %v6401
      %v6782 = vunpack.c.l.b16 %v6410
      %v6783 = vunpack.c.l.b16 %v6423
      %v6784 = vunpack.c.l.b16 %v6432
      %v6785 = vunpack.c.l.b16 %v6445
      %v6786 = vunpack.c.l.b16 %v6454
      %v6787 = vunpack.c.l.b16 %v6467
      %v6788 = vunpack.c.l.b16 %v6476
      %v6789 = vunpack.c.l.b16 %v6489
      %v6790 = vunpack.c.l.b16 %v6498
      %v6791 = vunpack.c.l.b16 %v6511
      %v6792 = vunpack.c.l.b16 %v6520
      %v6793 = vpack.c.b16 %v6762, %v6761
      %v6794 = vpack.c.b16 %v6764, %v6763
      %v6795 = vpack.c.b16 %v6766, %v6765
      %v6796 = vpack.c.b16 %v6768, %v6767
      %v6797 = vpack.c.b16 %v6770, %v6769
      %v6798 = vpack.c.b16 %v6772, %v6771
      %v6799 = vpack.c.b16 %v6774, %v6773
      %v6800 = vpack.c.b16 %v6776, %v6775
      %v6801 = vpack.c.b16 %v6778, %v6777
      %v6802 = vpack.c.b16 %v6780, %v6779
      %v6803 = vpack.c.b16 %v6782, %v6781
      %v6804 = vpack.c.b16 %v6784, %v6783
      %v6805 = vpack.c.b16 %v6786, %v6785
      %v6806 = vpack.c.b16 %v6788, %v6787
      %v6807 = vpack.c.b16 %v6790, %v6789
      %v6808 = vpack.c.b16 %v6792, %v6791
      %v6841 = vunpack.c.l.b16 %v6122
      %v6842 = vunpack.c.l.b16 %v6123
      %v6843 = vunpack.c.l.b16 %v6125
      %v6844 = vunpack.c.l.b16 %v6126
      %v6845 = vunpack.c.l.b16 %v6128
      %v6846 = vunpack.c.l.b16 %v6129
      %v6847 = vunpack.c.l.b16 %v6131
      %v6848 = vunpack.c.l.b16 %v6132
      %v6849 = vunpack.c.l.b16 %v6134
      %v6850 = vunpack.c.l.b16 %v6135
      %v6851 = vunpack.c.l.b16 %v6137
      %v6852 = vunpack.c.l.b16 %v6138
      %v6853 = vunpack.c.l.b16 %v6140
      %v6854 = vunpack.c.l.b16 %v6141
      %v6855 = vunpack.c.l.b16 %v6143
      %v6856 = vunpack.c.l.b16 %v6144
      %v6857 = vunpack.c.l.b16 %v6146
      %v6858 = vunpack.c.l.b16 %v6147
      %v6859 = vunpack.c.l.b16 %v6149
      %v6860 = vunpack.c.l.b16 %v6150
      %v6861 = vunpack.c.l.b16 %v6152
      %v6862 = vunpack.c.l.b16 %v6153
      %v6863 = vunpack.c.l.b16 %v6155
      %v6864 = vunpack.c.l.b16 %v6156
      %v6865 = vunpack.c.l.b16 %v6158
      %v6866 = vunpack.c.l.b16 %v6159
      %v6867 = vunpack.c.l.b16 %v6161
      %v6868 = vunpack.c.l.b16 %v6162
      %v6869 = vunpack.c.l.b16 %v6164
      %v6870 = vunpack.c.l.b16 %v6165
      %v6871 = vunpack.c.l.b16 %v6167
      %v6872 = vunpack.c.l.b16 %v6168
      %v6873 = vpack.c.b16 %v6842, %v6841
      %v6874 = vpack.c.b16 %v6844, %v6843
      %v6875 = vpack.c.b16 %v6846, %v6845
      %v6876 = vpack.c.b16 %v6848, %v6847
      %v6877 = vpack.c.b16 %v6850, %v6849
      %v6878 = vpack.c.b16 %v6852, %v6851
      %v6879 = vpack.c.b16 %v6854, %v6853
      %v6880 = vpack.c.b16 %v6856, %v6855
      %v6881 = vpack.c.b16 %v6858, %v6857
      %v6882 = vpack.c.b16 %v6860, %v6859
      %v6883 = vpack.c.b16 %v6862, %v6861
      %v6884 = vpack.c.b16 %v6864, %v6863
      %v6885 = vpack.c.b16 %v6866, %v6865
      %v6886 = vpack.c.b16 %v6868, %v6867
      %v6887 = vpack.c.b16 %v6870, %v6869
      %v6888 = vpack.c.b16 %v6872, %v6871
      %6889 = vrot.lane.b32.xlu0 %v6873, 8
      %v6890 = vpop.permute.xlu0 %6889
      %6891 = vrot.lane.b32.xlu0 %v6874, 8
      %v6892 = vpop.permute.xlu0 %6891
      %6893 = vrot.lane.b32.xlu0 %v6875, 8
      %v6894 = vpop.permute.xlu0 %6893
      %6895 = vrot.lane.b32.xlu0 %v6876, 8
      %v6896 = vpop.permute.xlu0 %6895
      %6897 = vrot.lane.b32.xlu0 %v6877, 8
      %v6898 = vpop.permute.xlu0 %6897
      %6899 = vrot.lane.b32.xlu0 %v6878, 8
      %v6900 = vpop.permute.xlu0 %6899
      %6901 = vrot.lane.b32.xlu0 %v6879, 8
      %v6902 = vpop.permute.xlu0 %6901
      %6903 = vrot.lane.b32.xlu0 %v6880, 8
      %v6904 = vpop.permute.xlu0 %6903
      %6905 = vrot.lane.b32.xlu0 %v6881, 8
      %v6906 = vpop.permute.xlu0 %6905
      %6907 = vrot.lane.b32.xlu0 %v6882, 8
      %v6908 = vpop.permute.xlu0 %6907
      %6909 = vrot.lane.b32.xlu0 %v6883, 8
      %v6910 = vpop.permute.xlu0 %6909
      %6911 = vrot.lane.b32.xlu0 %v6884, 8
      %v6912 = vpop.permute.xlu0 %6911
      %6913 = vrot.lane.b32.xlu0 %v6885, 8
      %v6914 = vpop.permute.xlu0 %6913
      %6915 = vrot.lane.b32.xlu0 %v6886, 8
      %v6916 = vpop.permute.xlu0 %6915
      %6917 = vrot.lane.b32.xlu0 %v6887, 8
      %v6918 = vpop.permute.xlu0 %6917
      %6919 = vrot.lane.b32.xlu0 %v6888, 8
      %v6920 = vpop.permute.xlu0 %6919
      %v6921 = vunpack.c.l.b16 %v6542
      %v6922 = vunpack.c.l.b16 %v6550
      %v6923 = vunpack.c.l.b16 %v6556
      %v6924 = vunpack.c.l.b16 %v6564
      %v6925 = vunpack.c.l.b16 %v6570
      %v6926 = vunpack.c.l.b16 %v6578
      %v6927 = vunpack.c.l.b16 %v6584
      %v6928 = vunpack.c.l.b16 %v6592
      %v6929 = vunpack.c.l.b16 %v6598
      %v6930 = vunpack.c.l.b16 %v6606
      %v6931 = vunpack.c.l.b16 %v6612
      %v6932 = vunpack.c.l.b16 %v6620
      %v6933 = vunpack.c.l.b16 %v6626
      %v6934 = vunpack.c.l.b16 %v6634
      %v6935 = vunpack.c.l.b16 %v6640
      %v6936 = vunpack.c.l.b16 %v6648
      %v6937 = vunpack.c.l.b16 %v6654
      %v6938 = vunpack.c.l.b16 %v6662
      %v6939 = vunpack.c.l.b16 %v6668
      %v6940 = vunpack.c.l.b16 %v6676
      %v6941 = vunpack.c.l.b16 %v6682
      %v6942 = vunpack.c.l.b16 %v6690
      %v6943 = vunpack.c.l.b16 %v6696
      %v6944 = vunpack.c.l.b16 %v6704
      %v6945 = vunpack.c.l.b16 %v6710
      %v6946 = vunpack.c.l.b16 %v6718
      %v6947 = vunpack.c.l.b16 %v6724
      %v6948 = vunpack.c.l.b16 %v6732
      %v6949 = vunpack.c.l.b16 %v6738
      %v6950 = vunpack.c.l.b16 %v6746
      %v6951 = vunpack.c.l.b16 %v6752
      %v6952 = vunpack.c.l.b16 %v6760
      %v6953 = vpack.c.b16 %v6922, %v6921
      %v6954 = vpack.c.b16 %v6924, %v6923
      %v6955 = vpack.c.b16 %v6926, %v6925
      %v6956 = vpack.c.b16 %v6928, %v6927
      %v6957 = vpack.c.b16 %v6930, %v6929
      %v6958 = vpack.c.b16 %v6932, %v6931
      %v6959 = vpack.c.b16 %v6934, %v6933
      %v6960 = vpack.c.b16 %v6936, %v6935
      %v6961 = vpack.c.b16 %v6938, %v6937
      %v6962 = vpack.c.b16 %v6940, %v6939
      %v6963 = vpack.c.b16 %v6942, %v6941
      %v6964 = vpack.c.b16 %v6944, %v6943
      %v6965 = vpack.c.b16 %v6946, %v6945
      %v6966 = vpack.c.b16 %v6948, %v6947
      %v6967 = vpack.c.b16 %v6950, %v6949
      %v6968 = vpack.c.b16 %v6952, %v6951
      %6969 = vrot.lane.b32.xlu0 %v6953, 16
      %v6970 = vpop.permute.xlu0 %6969
      %6971 = vrot.lane.b32.xlu0 %v6954, 16
      %v6972 = vpop.permute.xlu0 %6971
      %6973 = vrot.lane.b32.xlu0 %v6955, 16
      %v6974 = vpop.permute.xlu0 %6973
      %6975 = vrot.lane.b32.xlu0 %v6956, 16
      %v6976 = vpop.permute.xlu0 %6975
      %6977 = vrot.lane.b32.xlu0 %v6957, 16
      %v6978 = vpop.permute.xlu0 %6977
      %6979 = vrot.lane.b32.xlu0 %v6958, 16
      %v6980 = vpop.permute.xlu0 %6979
      %6981 = vrot.lane.b32.xlu0 %v6959, 16
      %v6982 = vpop.permute.xlu0 %6981
      %6983 = vrot.lane.b32.xlu0 %v6960, 16
      %v6984 = vpop.permute.xlu0 %6983
      %6985 = vrot.lane.b32.xlu0 %v6961, 16
      %v6986 = vpop.permute.xlu0 %6985
      %6987 = vrot.lane.b32.xlu0 %v6962, 16
      %v6988 = vpop.permute.xlu0 %6987
      %6989 = vrot.lane.b32.xlu0 %v6963, 16
      %v6990 = vpop.permute.xlu0 %6989
      %6991 = vrot.lane.b32.xlu0 %v6964, 16
      %v6992 = vpop.permute.xlu0 %6991
      %6993 = vrot.lane.b32.xlu0 %v6965, 16
      %v6994 = vpop.permute.xlu0 %6993
      %6995 = vrot.lane.b32.xlu0 %v6966, 16
      %v6996 = vpop.permute.xlu0 %6995
      %6997 = vrot.lane.b32.xlu0 %v6967, 16
      %v6998 = vpop.permute.xlu0 %6997
      %6999 = vrot.lane.b32.xlu0 %v6968, 16
      %v7000 = vpop.permute.xlu0 %6999
      %v7003 = vsel %vm1372, %v6793, %v6890
      %v7006 = vsel %vm1372, %v6794, %v6892
      %v7009 = vsel %vm1372, %v6795, %v6894
      %v7012 = vsel %vm1372, %v6796, %v6896
      %v7015 = vsel %vm1372, %v6797, %v6898
      %v7018 = vsel %vm1372, %v6798, %v6900
      %v7021 = vsel %vm1372, %v6799, %v6902
      %v7024 = vsel %vm1372, %v6800, %v6904
      %v7027 = vsel %vm1372, %v6801, %v6906
      %v7030 = vsel %vm1372, %v6802, %v6908
      %v7033 = vsel %vm1372, %v6803, %v6910
      %v7036 = vsel %vm1372, %v6804, %v6912
      %v7039 = vsel %vm1372, %v6805, %v6914
      %v7042 = vsel %vm1372, %v6806, %v6916
      %v7045 = vsel %vm1372, %v6807, %v6918
      %v7048 = vsel %vm1372, %v6808, %v6920
      %v7050 = vsel %vm4852, %v7003, %v6970
      %v7052 = vsel %vm4852, %v7006, %v6972
      %v7054 = vsel %vm4852, %v7009, %v6974
      %v7056 = vsel %vm4852, %v7012, %v6976
      %v7058 = vsel %vm4852, %v7015, %v6978
      %v7060 = vsel %vm4852, %v7018, %v6980
      %v7062 = vsel %vm4852, %v7021, %v6982
      %v7064 = vsel %vm4852, %v7024, %v6984
      %v7066 = vsel %vm4852, %v7027, %v6986
      %v7068 = vsel %vm4852, %v7030, %v6988
      %v7070 = vsel %vm4852, %v7033, %v6990
      %v7072 = vsel %vm4852, %v7036, %v6992
      %v7074 = vsel %vm4852, %v7039, %v6994
      %v7076 = vsel %vm4852, %v7042, %v6996
      %v7078 = vsel %vm4852, %v7045, %v6998
      %v7080 = vsel %vm4852, %v7048, %v7000
      %s7081 = scalar_lea.vmem %s4, 24
      %v7082 = vld [vmem:[%s7081] sm:$0xf]
      %v7083 = vld [vmem:[%s7081 + $0x4] sm:$0xf]
      %v7084 = vld [vmem:[%s7081 + $0x8] sm:$0xf]
      %v7088 = vunpack.c.l.b16 %v7082
      %v7089 = vunpack.c.l.b16 %v7083
      %v7090 = vunpack.c.l.b16 %v7084
      %v7091 = vpack.c.b16 %v7089, %v7088
      %v7092 = vpack.c.b16 %v7090, %v7090
      %v7094 = vsel %vm5861, %v7050, 0
      %v7096 = vsel %vm5861, %v7052, 0
      %v7098 = vsel %vm5861, %v7054, 0
      %v7100 = vsel %vm5861, %v7056, 0
      %v7102 = vsel %vm5861, %v7058, 0
      %v7104 = vsel %vm5861, %v7060, 0
      %v7106 = vsel %vm5861, %v7062, 0
      %v7108 = vsel %vm5861, %v7064, 0
      %v7110 = vsel %vm5861, %v7066, 0
      %v7112 = vsel %vm5861, %v7068, 0
      %v7114 = vsel %vm5861, %v7070, 0
      %v7116 = vsel %vm5861, %v7072, 0
      %v7118 = vsel %vm5861, %v7074, 0
      %v7120 = vsel %vm5861, %v7076, 0
      %v7122 = vsel %vm5861, %v7078, 0
      %v7124 = vsel %vm5861, %v7080, 0
      %v7127 = vsel %vm5894, %v7092, 0
      %7129 = vmatpush.bf16.msra.mxu0 0
      %7130 = vmatpush.bf16.msra.mxu0 0
      %7131 = vmatpush.bf16.msra.mxu0 0
      %7132 = vmatpush.bf16.msra.mxu0 0
      %7133 = vmatpush.bf16.msra.mxu0 0
      %7134 = vmatpush.bf16.msra.mxu0 0
      %7135 = vmatpush.bf16.msra.mxu0 %v7127
      %7136 = vmatpush.bf16.msra.mxu0 %v7091
      %7137 = vmatmul.bf16.gmra.mxu0 %v7094
      %v7138 = vpop.f32.mrf.mxu0
      %v7139 = vadd.f32 0.0, %v7138
      %v7140 = vpop.f32.mrf.mxu0
      %v7141 = vadd.f32 0.0, %v7140
      %7142 = vmatmul.bf16.gmra.mxu0 %v7096
      %v7143 = vpop.f32.mrf.mxu0
      %v7144 = vadd.f32 0.0, %v7143
      %v7145 = vpop.f32.mrf.mxu0
      %v7146 = vadd.f32 0.0, %v7145
      %7147 = vmatmul.bf16.gmra.mxu0 %v7098
      %v7148 = vpop.f32.mrf.mxu0
      %v7149 = vadd.f32 0.0, %v7148
      %v7150 = vpop.f32.mrf.mxu0
      %v7151 = vadd.f32 0.0, %v7150
      %7152 = vmatmul.bf16.gmra.mxu0 %v7100
      %v7153 = vpop.f32.mrf.mxu0
      %v7154 = vadd.f32 0.0, %v7153
      %v7155 = vpop.f32.mrf.mxu0
      %v7156 = vadd.f32 0.0, %v7155
      %7157 = vmatmul.bf16.gmra.mxu0 %v7102
      %v7158 = vpop.f32.mrf.mxu0
      %v7159 = vadd.f32 0.0, %v7158
      %v7160 = vpop.f32.mrf.mxu0
      %v7161 = vadd.f32 0.0, %v7160
      %7162 = vmatmul.bf16.gmra.mxu0 %v7104
      %v7163 = vpop.f32.mrf.mxu0
      %v7164 = vadd.f32 0.0, %v7163
      %v7165 = vpop.f32.mrf.mxu0
      %v7166 = vadd.f32 0.0, %v7165
      %7167 = vmatmul.bf16.gmra.mxu0 %v7106
      %v7168 = vpop.f32.mrf.mxu0
      %v7169 = vadd.f32 0.0, %v7168
      %v7170 = vpop.f32.mrf.mxu0
      %v7171 = vadd.f32 0.0, %v7170
      %7172 = vmatmul.bf16.gmra.mxu0 %v7108
      %v7173 = vpop.f32.mrf.mxu0
      %v7174 = vadd.f32 0.0, %v7173
      %v7175 = vpop.f32.mrf.mxu0
      %v7176 = vadd.f32 0.0, %v7175
      %7177 = vmatmul.bf16.gmra.mxu0 %v7110
      %v7178 = vpop.f32.mrf.mxu0
      %v7179 = vadd.f32 0.0, %v7178
      %v7180 = vpop.f32.mrf.mxu0
      %v7181 = vadd.f32 0.0, %v7180
      %7182 = vmatmul.bf16.gmra.mxu0 %v7112
      %v7183 = vpop.f32.mrf.mxu0
      %v7184 = vadd.f32 0.0, %v7183
      %v7185 = vpop.f32.mrf.mxu0
      %v7186 = vadd.f32 0.0, %v7185
      %7187 = vmatmul.bf16.gmra.mxu0 %v7114
      %v7188 = vpop.f32.mrf.mxu0
      %v7189 = vadd.f32 0.0, %v7188
      %v7190 = vpop.f32.mrf.mxu0
      %v7191 = vadd.f32 0.0, %v7190
      %7192 = vmatmul.bf16.gmra.mxu0 %v7116
      %v7193 = vpop.f32.mrf.mxu0
      %v7194 = vadd.f32 0.0, %v7193
      %v7195 = vpop.f32.mrf.mxu0
      %v7196 = vadd.f32 0.0, %v7195
      %7197 = vmatmul.bf16.gmra.mxu0 %v7118
      %v7198 = vpop.f32.mrf.mxu0
      %v7199 = vadd.f32 0.0, %v7198
      %v7200 = vpop.f32.mrf.mxu0
      %v7201 = vadd.f32 0.0, %v7200
      %7202 = vmatmul.bf16.gmra.mxu0 %v7120
      %v7203 = vpop.f32.mrf.mxu0
      %v7204 = vadd.f32 0.0, %v7203
      %v7205 = vpop.f32.mrf.mxu0
      %v7206 = vadd.f32 0.0, %v7205
      %7207 = vmatmul.bf16.gmra.mxu0 %v7122
      %v7208 = vpop.f32.mrf.mxu0
      %v7209 = vadd.f32 0.0, %v7208
      %v7210 = vpop.f32.mrf.mxu0
      %v7211 = vadd.f32 0.0, %v7210
      %7212 = vmatmul.bf16.gmra.mxu0 %v7124
      %v7213 = vpop.f32.mrf.mxu0
      %v7214 = vadd.f32 0.0, %v7213
      %v7215 = vpop.f32.mrf.mxu0
      %v7216 = vadd.f32 0.0, %v7215
      %7217 = vdwg.mxu0
      %v7218 = vadd.f32 %v6041, %v7139
      %v7219 = vadd.f32 %v6043, %v7141
      %v7220 = vadd.f32 %v6046, %v7144
      %v7221 = vadd.f32 %v6048, %v7146
      %v7222 = vadd.f32 %v6051, %v7149
      %v7223 = vadd.f32 %v6053, %v7151
      %v7224 = vadd.f32 %v6056, %v7154
      %v7225 = vadd.f32 %v6058, %v7156
      %v7226 = vadd.f32 %v6061, %v7159
      %v7227 = vadd.f32 %v6063, %v7161
      %v7228 = vadd.f32 %v6066, %v7164
      %v7229 = vadd.f32 %v6068, %v7166
      %v7230 = vadd.f32 %v6071, %v7169
      %v7231 = vadd.f32 %v6073, %v7171
      %v7232 = vadd.f32 %v6076, %v7174
      %v7233 = vadd.f32 %v6078, %v7176
      %v7234 = vadd.f32 %v6081, %v7179
      %v7235 = vadd.f32 %v6083, %v7181
      %v7236 = vadd.f32 %v6086, %v7184
      %v7237 = vadd.f32 %v6088, %v7186
      %v7238 = vadd.f32 %v6091, %v7189
      %v7239 = vadd.f32 %v6093, %v7191
      %v7240 = vadd.f32 %v6096, %v7194
      %v7241 = vadd.f32 %v6098, %v7196
      %v7242 = vadd.f32 %v6101, %v7199
      %v7243 = vadd.f32 %v6103, %v7201
      %v7244 = vadd.f32 %v6106, %v7204
      %v7245 = vadd.f32 %v6108, %v7206
      %v7246 = vadd.f32 %v6111, %v7209
      %v7247 = vadd.f32 %v6113, %v7211
      %v7248 = vadd.f32 %v6116, %v7214
      %v7249 = vadd.f32 %v6118, %v7216
      %v7250 = vld [vmem:[%s5] sm:$0x1]
      %v7252 = vperm.slane %v7250, 0
      %v7254 = vmul.f32 %v7218, %v7252
      %v7255 = vmul.f32 %v7219, %v7252
      %v7256 = vmul.f32 %v7220, %v7252
      %v7257 = vmul.f32 %v7221, %v7252
      %v7258 = vmul.f32 %v7222, %v7252
      %v7259 = vmul.f32 %v7223, %v7252
      %v7260 = vmul.f32 %v7224, %v7252
      %v7261 = vmul.f32 %v7225, %v7252
      %v7262 = vmul.f32 %v7226, %v7252
      %v7263 = vmul.f32 %v7227, %v7252
      %v7264 = vmul.f32 %v7228, %v7252
      %v7265 = vmul.f32 %v7229, %v7252
      %v7266 = vmul.f32 %v7230, %v7252
      %v7267 = vmul.f32 %v7231, %v7252
      %v7268 = vmul.f32 %v7232, %v7252
      %v7269 = vmul.f32 %v7233, %v7252
      %v7270 = vmul.f32 %v7234, %v7252
      %v7271 = vmul.f32 %v7235, %v7252
      %v7272 = vmul.f32 %v7236, %v7252
      %v7273 = vmul.f32 %v7237, %v7252
      %v7274 = vmul.f32 %v7238, %v7252
      %v7275 = vmul.f32 %v7239, %v7252
      %v7276 = vmul.f32 %v7240, %v7252
      %v7277 = vmul.f32 %v7241, %v7252
      %v7278 = vmul.f32 %v7242, %v7252
      %v7279 = vmul.f32 %v7243, %v7252
      %v7280 = vmul.f32 %v7244, %v7252
      %v7281 = vmul.f32 %v7245, %v7252
      %v7282 = vmul.f32 %v7246, %v7252
      %v7283 = vmul.f32 %v7247, %v7252
      %v7284 = vmul.f32 %v7248, %v7252
      %v7285 = vmul.f32 %v7249, %v7252
      %v7286 = vld [vmem:[%s6] sm:$0x1]
      %v7288 = vperm.slane %v7286, 0
      %v7290 = vadd.f32 %v7254, %v7288
      %v7291 = vadd.f32 %v7255, %v7288
      %v7292 = vadd.f32 %v7256, %v7288
      %v7293 = vadd.f32 %v7257, %v7288
      %v7294 = vadd.f32 %v7258, %v7288
      %v7295 = vadd.f32 %v7259, %v7288
      %v7296 = vadd.f32 %v7260, %v7288
      %v7297 = vadd.f32 %v7261, %v7288
      %v7298 = vadd.f32 %v7262, %v7288
      %v7299 = vadd.f32 %v7263, %v7288
      %v7300 = vadd.f32 %v7264, %v7288
      %v7301 = vadd.f32 %v7265, %v7288
      %v7302 = vadd.f32 %v7266, %v7288
      %v7303 = vadd.f32 %v7267, %v7288
      %v7304 = vadd.f32 %v7268, %v7288
      %v7305 = vadd.f32 %v7269, %v7288
      %v7306 = vadd.f32 %v7270, %v7288
      %v7307 = vadd.f32 %v7271, %v7288
      %v7308 = vadd.f32 %v7272, %v7288
      %v7309 = vadd.f32 %v7273, %v7288
      %v7310 = vadd.f32 %v7274, %v7288
      %v7311 = vadd.f32 %v7275, %v7288
      %v7312 = vadd.f32 %v7276, %v7288
      %v7313 = vadd.f32 %v7277, %v7288
      %v7314 = vadd.f32 %v7278, %v7288
      %v7315 = vadd.f32 %v7279, %v7288
      %v7316 = vadd.f32 %v7280, %v7288
      %v7317 = vadd.f32 %v7281, %v7288
      %v7318 = vadd.f32 %v7282, %v7288
      %v7319 = vadd.f32 %v7283, %v7288
      %v7320 = vadd.f32 %v7284, %v7288
      %v7321 = vadd.f32 %v7285, %v7288
      %v7322 = vmax.f32 %v7290, 0.0
      %v7323 = vmax.f32 %v7291, 0.0
      %v7324 = vmax.f32 %v7292, 0.0
      %v7325 = vmax.f32 %v7293, 0.0
      %v7326 = vmax.f32 %v7294, 0.0
      %v7327 = vmax.f32 %v7295, 0.0
      %v7328 = vmax.f32 %v7296, 0.0
      %v7329 = vmax.f32 %v7297, 0.0
      %v7330 = vmax.f32 %v7298, 0.0
      %v7331 = vmax.f32 %v7299, 0.0
      %v7332 = vmax.f32 %v7300, 0.0
      %v7333 = vmax.f32 %v7301, 0.0
      %v7334 = vmax.f32 %v7302, 0.0
      %v7335 = vmax.f32 %v7303, 0.0
      %v7336 = vmax.f32 %v7304, 0.0
      %v7337 = vmax.f32 %v7305, 0.0
      %v7338 = vmax.f32 %v7306, 0.0
      %v7339 = vmax.f32 %v7307, 0.0
      %v7340 = vmax.f32 %v7308, 0.0
      %v7341 = vmax.f32 %v7309, 0.0
      %v7342 = vmax.f32 %v7310, 0.0
      %v7343 = vmax.f32 %v7311, 0.0
      %v7344 = vmax.f32 %v7312, 0.0
      %v7345 = vmax.f32 %v7313, 0.0
      %v7346 = vmax.f32 %v7314, 0.0
      %v7347 = vmax.f32 %v7315, 0.0
      %v7348 = vmax.f32 %v7316, 0.0
      %v7349 = vmax.f32 %v7317, 0.0
      %v7350 = vmax.f32 %v7318, 0.0
      %v7351 = vmax.f32 %v7319, 0.0
      %v7352 = vmax.f32 %v7320, 0.0
      %v7353 = vmax.f32 %v7321, 0.0
      %v7354 = vadd.f32 %v7322, %v7324
      %v7355 = vadd.f32 %v7323, %v7325
      %v7356 = vadd.f32 %v7326, %v7328
      %v7357 = vadd.f32 %v7327, %v7329
      %v7358 = vadd.f32 %v7330, %v7332
      %v7359 = vadd.f32 %v7331, %v7333
      %v7360 = vadd.f32 %v7334, %v7336
      %v7361 = vadd.f32 %v7335, %v7337
      %v7362 = vadd.f32 %v7338, %v7340
      %v7363 = vadd.f32 %v7339, %v7341
      %v7364 = vadd.f32 %v7342, %v7344
      %v7365 = vadd.f32 %v7343, %v7345
      %v7366 = vadd.f32 %v7346, %v7348
      %v7367 = vadd.f32 %v7347, %v7349
      %v7368 = vadd.f32 %v7350, %v7352
      %v7369 = vadd.f32 %v7351, %v7353
      %7370 = vst.msk [vmem:[#allocation4] sm:$0xff] %vm1372, %v7354
      %7371 = vst.msk [vmem:[#allocation4 + $0x8] sm:$0xff] %vm1372, %v7355
      %7372 = vst.msk [vmem:[#allocation4 + $0x10] sm:$0xff] %vm1372, %v7356
      %7373 = vst.msk [vmem:[#allocation4 + $0x18] sm:$0xff] %vm1372, %v7357
      %7374 = vst.msk [vmem:[#allocation4 + $0x20] sm:$0xff] %vm1372, %v7358
      %7375 = vst.msk [vmem:[#allocation4 + $0x28] sm:$0xff] %vm1372, %v7359
      %7376 = vst.msk [vmem:[#allocation4 + $0x30] sm:$0xff] %vm1372, %v7360
      %7377 = vst.msk [vmem:[#allocation4 + $0x38] sm:$0xff] %vm1372, %v7361
      %7378 = vst.msk [vmem:[#allocation4 + $0x40] sm:$0xff] %vm1372, %v7362
      %7379 = vst.msk [vmem:[#allocation4 + $0x48] sm:$0xff] %vm1372, %v7363
      %7380 = vst.msk [vmem:[#allocation4 + $0x50] sm:$0xff] %vm1372, %v7364
      %7381 = vst.msk [vmem:[#allocation4 + $0x58] sm:$0xff] %vm1372, %v7365
      %7382 = vst.msk [vmem:[#allocation4 + $0x60] sm:$0xff] %vm1372, %v7366
      %7383 = vst.msk [vmem:[#allocation4 + $0x68] sm:$0xff] %vm1372, %v7367
      %7384 = vst.msk [vmem:[#allocation4 + $0x70] sm:$0xff] %vm1372, %v7368
      %7385 = vst.msk [vmem:[#allocation4 + $0x78] sm:$0xff] %vm1372, %v7369
      %v7386 = vsub.f32 %v7322, %v7324
      %v7387 = vsub.f32 %v7323, %v7325
      %v7388 = vsub.f32 %v7326, %v7328
      %v7389 = vsub.f32 %v7327, %v7329
      %v7390 = vsub.f32 %v7330, %v7332
      %v7391 = vsub.f32 %v7331, %v7333
      %v7392 = vsub.f32 %v7334, %v7336
      %v7393 = vsub.f32 %v7335, %v7337
      %v7394 = vsub.f32 %v7338, %v7340
      %v7395 = vsub.f32 %v7339, %v7341
      %v7396 = vsub.f32 %v7342, %v7344
      %v7397 = vsub.f32 %v7343, %v7345
      %v7398 = vsub.f32 %v7346, %v7348
      %v7399 = vsub.f32 %v7347, %v7349
      %v7400 = vsub.f32 %v7350, %v7352
      %v7401 = vsub.f32 %v7351, %v7353
      %7402 = vst.msk [vmem:[#allocation5] sm:$0xff] %vm1372, %v7386
      %7403 = vst.msk [vmem:[#allocation5 + $0x8] sm:$0xff] %vm1372, %v7387
      %7404 = vst.msk [vmem:[#allocation5 + $0x10] sm:$0xff] %vm1372, %v7388
      %7405 = vst.msk [vmem:[#allocation5 + $0x18] sm:$0xff] %vm1372, %v7389
      %7406 = vst.msk [vmem:[#allocation5 + $0x20] sm:$0xff] %vm1372, %v7390
      %7407 = vst.msk [vmem:[#allocation5 + $0x28] sm:$0xff] %vm1372, %v7391
      %7408 = vst.msk [vmem:[#allocation5 + $0x30] sm:$0xff] %vm1372, %v7392
      %7409 = vst.msk [vmem:[#allocation5 + $0x38] sm:$0xff] %vm1372, %v7393
      %7410 = vst.msk [vmem:[#allocation5 + $0x40] sm:$0xff] %vm1372, %v7394
      %7411 = vst.msk [vmem:[#allocation5 + $0x48] sm:$0xff] %vm1372, %v7395
      %7412 = vst.msk [vmem:[#allocation5 + $0x50] sm:$0xff] %vm1372, %v7396
      %7413 = vst.msk [vmem:[#allocation5 + $0x58] sm:$0xff] %vm1372, %v7397
      %7414 = vst.msk [vmem:[#allocation5 + $0x60] sm:$0xff] %vm1372, %v7398
      %7415 = vst.msk [vmem:[#allocation5 + $0x68] sm:$0xff] %vm1372, %v7399
      %7416 = vst.msk [vmem:[#allocation5 + $0x70] sm:$0xff] %vm1372, %v7400
      %7417 = vst.msk [vmem:[#allocation5 + $0x78] sm:$0xff] %vm1372, %v7401
      %v7418 = vld [vmem:[#allocation4] ss:$2 sm:$0xff]
      %s7419 = scalar_lea.vmem [#allocation4], 16
      %v7420 = vld [vmem:[%s7419] ss:$2 sm:$0xff]
      %s7421 = scalar_lea.vmem [#allocation4], 32
      %v7422 = vld [vmem:[%s7421] ss:$2 sm:$0xff]
      %s7423 = scalar_lea.vmem [#allocation4], 48
      %v7424 = vld [vmem:[%s7423] ss:$2 sm:$0xff]
      %s7425 = scalar_lea.vmem [#allocation4], 64
      %v7426 = vld [vmem:[%s7425] ss:$2 sm:$0xff]
      %s7427 = scalar_lea.vmem [#allocation4], 80
      %v7428 = vld [vmem:[%s7427] ss:$2 sm:$0xff]
      %s7429 = scalar_lea.vmem [#allocation4], 96
      %v7430 = vld [vmem:[%s7429] ss:$2 sm:$0xff]
      %s7431 = scalar_lea.vmem [#allocation4], 112
      %v7432 = vld [vmem:[%s7431] ss:$2 sm:$0xff]
      %s7433 = scalar_lea.vmem [#allocation4], 1
      %v7434 = vld [vmem:[%s7433] ss:$2 sm:$0xff]
      %s7435 = scalar_lea.vmem [#allocation4], 17
      %v7436 = vld [vmem:[%s7435] ss:$2 sm:$0xff]
      %s7437 = scalar_lea.vmem [#allocation4], 33
      %v7438 = vld [vmem:[%s7437] ss:$2 sm:$0xff]
      %s7439 = scalar_lea.vmem [#allocation4], 49
      %v7440 = vld [vmem:[%s7439] ss:$2 sm:$0xff]
      %s7441 = scalar_lea.vmem [#allocation4], 65
      %v7442 = vld [vmem:[%s7441] ss:$2 sm:$0xff]
      %s7443 = scalar_lea.vmem [#allocation4], 81
      %v7444 = vld [vmem:[%s7443] ss:$2 sm:$0xff]
      %s7445 = scalar_lea.vmem [#allocation4], 97
      %v7446 = vld [vmem:[%s7445] ss:$2 sm:$0xff]
      %s7447 = scalar_lea.vmem [#allocation4], 113
      %v7448 = vld [vmem:[%s7447] ss:$2 sm:$0xff]
      %v7449 = vld [vmem:[#allocation5] ss:$2 sm:$0xff]
      %s7450 = scalar_lea.vmem [#allocation5], 16
      %v7451 = vld [vmem:[%s7450] ss:$2 sm:$0xff]
      %s7452 = scalar_lea.vmem [#allocation5], 32
      %v7453 = vld [vmem:[%s7452] ss:$2 sm:$0xff]
      %s7454 = scalar_lea.vmem [#allocation5], 48
      %v7455 = vld [vmem:[%s7454] ss:$2 sm:$0xff]
      %s7456 = scalar_lea.vmem [#allocation5], 64
      %v7457 = vld [vmem:[%s7456] ss:$2 sm:$0xff]
      %s7458 = scalar_lea.vmem [#allocation5], 80
      %v7459 = vld [vmem:[%s7458] ss:$2 sm:$0xff]
      %s7460 = scalar_lea.vmem [#allocation5], 96
      %v7461 = vld [vmem:[%s7460] ss:$2 sm:$0xff]
      %s7462 = scalar_lea.vmem [#allocation5], 112
      %v7463 = vld [vmem:[%s7462] ss:$2 sm:$0xff]
      %s7464 = scalar_lea.vmem [#allocation5], 1
      %v7465 = vld [vmem:[%s7464] ss:$2 sm:$0xff]
      %s7466 = scalar_lea.vmem [#allocation5], 17
      %v7467 = vld [vmem:[%s7466] ss:$2 sm:$0xff]
      %s7468 = scalar_lea.vmem [#allocation5], 33
      %v7469 = vld [vmem:[%s7468] ss:$2 sm:$0xff]
      %s7470 = scalar_lea.vmem [#allocation5], 49
      %v7471 = vld [vmem:[%s7470] ss:$2 sm:$0xff]
      %s7472 = scalar_lea.vmem [#allocation5], 65
      %v7473 = vld [vmem:[%s7472] ss:$2 sm:$0xff]
      %s7474 = scalar_lea.vmem [#allocation5], 81
      %v7475 = vld [vmem:[%s7474] ss:$2 sm:$0xff]
      %s7476 = scalar_lea.vmem [#allocation5], 97
      %v7477 = vld [vmem:[%s7476] ss:$2 sm:$0xff]
      %s7478 = scalar_lea.vmem [#allocation5], 113
      %v7479 = vld [vmem:[%s7478] ss:$2 sm:$0xff]
      %v7480 = vadd.f32 %v7418, %v7434
      %v7481 = vadd.f32 %v7420, %v7436
      %v7482 = vadd.f32 %v7422, %v7438
      %v7483 = vadd.f32 %v7424, %v7440
      %v7484 = vadd.f32 %v7426, %v7442
      %v7485 = vadd.f32 %v7428, %v7444
      %v7486 = vadd.f32 %v7430, %v7446
      %v7487 = vadd.f32 %v7432, %v7448
      %v7488 = vmul.f32 %v7480, 0.5
      %v7489 = vmul.f32 %v7481, 0.5
      %v7490 = vmul.f32 %v7482, 0.5
      %v7491 = vmul.f32 %v7483, 0.5
      %v7492 = vmul.f32 %v7484, 0.5
      %v7493 = vmul.f32 %v7485, 0.5
      %v7494 = vmul.f32 %v7486, 0.5
      %v7495 = vmul.f32 %v7487, 0.5
      %v7496 = vsub.f32 %v7418, %v7434
      %v7497 = vsub.f32 %v7420, %v7436
      %v7498 = vsub.f32 %v7422, %v7438
      %v7499 = vsub.f32 %v7424, %v7440
      %v7500 = vsub.f32 %v7426, %v7442
      %v7501 = vsub.f32 %v7428, %v7444
      %v7502 = vsub.f32 %v7430, %v7446
      %v7503 = vsub.f32 %v7432, %v7448
      %v7504 = vmul.f32 %v7496, 0.5
      %v7505 = vmul.f32 %v7497, 0.5
      %v7506 = vmul.f32 %v7498, 0.5
      %v7507 = vmul.f32 %v7499, 0.5
      %v7508 = vmul.f32 %v7500, 0.5
      %v7509 = vmul.f32 %v7501, 0.5
      %v7510 = vmul.f32 %v7502, 0.5
      %v7511 = vmul.f32 %v7503, 0.5
      %v7512 = vadd.f32 %v7449, %v7465
      %v7513 = vadd.f32 %v7451, %v7467
      %v7514 = vadd.f32 %v7453, %v7469
      %v7515 = vadd.f32 %v7455, %v7471
      %v7516 = vadd.f32 %v7457, %v7473
      %v7517 = vadd.f32 %v7459, %v7475
      %v7518 = vadd.f32 %v7461, %v7477
      %v7519 = vadd.f32 %v7463, %v7479
      %v7520 = vmul.f32 %v7512, 0.5
      %v7521 = vmul.f32 %v7513, 0.5
      %v7522 = vmul.f32 %v7514, 0.5
      %v7523 = vmul.f32 %v7515, 0.5
      %v7524 = vmul.f32 %v7516, 0.5
      %v7525 = vmul.f32 %v7517, 0.5
      %v7526 = vmul.f32 %v7518, 0.5
      %v7527 = vmul.f32 %v7519, 0.5
      %v7528 = vsub.f32 %v7449, %v7465
      %v7529 = vsub.f32 %v7451, %v7467
      %v7530 = vsub.f32 %v7453, %v7469
      %v7531 = vsub.f32 %v7455, %v7471
      %v7532 = vsub.f32 %v7457, %v7473
      %v7533 = vsub.f32 %v7459, %v7475
      %v7534 = vsub.f32 %v7461, %v7477
      %v7535 = vsub.f32 %v7463, %v7479
      %v7536 = vmul.f32 %v7528, 0.5
      %v7537 = vmul.f32 %v7529, 0.5
      %v7538 = vmul.f32 %v7530, 0.5
      %v7539 = vmul.f32 %v7531, 0.5
      %v7540 = vmul.f32 %v7532, 0.5
      %v7541 = vmul.f32 %v7533, 0.5
      %v7542 = vmul.f32 %v7534, 0.5
      %v7543 = vmul.f32 %v7535, 0.5
      %7552 = vrot.lane.b32.xlu0 %v7504, 8
      %v7553 = vpop.permute.xlu0 %7552
      %7554 = vrot.lane.b32.xlu0 %v7505, 8
      %v7555 = vpop.permute.xlu0 %7554
      %7556 = vrot.lane.b32.xlu0 %v7506, 8
      %v7557 = vpop.permute.xlu0 %7556
      %7558 = vrot.lane.b32.xlu0 %v7507, 8
      %v7559 = vpop.permute.xlu0 %7558
      %7560 = vrot.lane.b32.xlu0 %v7508, 8
      %v7561 = vpop.permute.xlu0 %7560
      %7562 = vrot.lane.b32.xlu0 %v7509, 8
      %v7563 = vpop.permute.xlu0 %7562
      %7564 = vrot.lane.b32.xlu0 %v7510, 8
      %v7565 = vpop.permute.xlu0 %7564
      %7566 = vrot.lane.b32.xlu0 %v7511, 8
      %v7567 = vpop.permute.xlu0 %7566
      %7584 = vrot.lane.b32.xlu0 %v7520, 16
      %v7585 = vpop.permute.xlu0 %7584
      %7586 = vrot.lane.b32.xlu0 %v7521, 16
      %v7587 = vpop.permute.xlu0 %7586
      %7588 = vrot.lane.b32.xlu0 %v7522, 16
      %v7589 = vpop.permute.xlu0 %7588
      %7590 = vrot.lane.b32.xlu0 %v7523, 16
      %v7591 = vpop.permute.xlu0 %7590
      %7592 = vrot.lane.b32.xlu0 %v7524, 16
      %v7593 = vpop.permute.xlu0 %7592
      %7594 = vrot.lane.b32.xlu0 %v7525, 16
      %v7595 = vpop.permute.xlu0 %7594
      %7596 = vrot.lane.b32.xlu0 %v7526, 16
      %v7597 = vpop.permute.xlu0 %7596
      %7598 = vrot.lane.b32.xlu0 %v7527, 16
      %v7599 = vpop.permute.xlu0 %7598
      %7616 = vrot.lane.b32.xlu0 %v7536, 24
      %v7617 = vpop.permute.xlu0 %7616
      %7618 = vrot.lane.b32.xlu0 %v7537, 24
      %v7619 = vpop.permute.xlu0 %7618
      %7620 = vrot.lane.b32.xlu0 %v7538, 24
      %v7621 = vpop.permute.xlu0 %7620
      %7622 = vrot.lane.b32.xlu0 %v7539, 24
      %v7623 = vpop.permute.xlu0 %7622
      %7624 = vrot.lane.b32.xlu0 %v7540, 24
      %v7625 = vpop.permute.xlu0 %7624
      %7626 = vrot.lane.b32.xlu0 %v7541, 24
      %v7627 = vpop.permute.xlu0 %7626
      %7628 = vrot.lane.b32.xlu0 %v7542, 24
      %v7629 = vpop.permute.xlu0 %7628
      %7630 = vrot.lane.b32.xlu0 %v7543, 24
      %v7631 = vpop.permute.xlu0 %7630
      %v7640 = vsel %vm1372, %v7488, %v7553
      %v7641 = vsel %vm1372, %v7489, %v7555
      %v7642 = vsel %vm1372, %v7490, %v7557
      %v7643 = vsel %vm1372, %v7491, %v7559
      %v7644 = vsel %vm1372, %v7492, %v7561
      %v7645 = vsel %vm1372, %v7493, %v7563
      %v7646 = vsel %vm1372, %v7494, %v7565
      %v7647 = vsel %vm1372, %v7495, %v7567
      %v7648 = vsel %vm4852, %v7640, %v7585
      %v7649 = vsel %vm4852, %v7641, %v7587
      %v7650 = vsel %vm4852, %v7642, %v7589
      %v7651 = vsel %vm4852, %v7643, %v7591
      %v7652 = vsel %vm4852, %v7644, %v7593
      %v7653 = vsel %vm4852, %v7645, %v7595
      %v7654 = vsel %vm4852, %v7646, %v7597
      %v7655 = vsel %vm4852, %v7647, %v7599
      %v7656 = vsel %vm5861, %v7648, %v7617
      %v7657 = vsel %vm5861, %v7649, %v7619
      %v7658 = vsel %vm5861, %v7650, %v7621
      %v7659 = vsel %vm5861, %v7651, %v7623
      %v7660 = vsel %vm5861, %v7652, %v7625
      %v7661 = vsel %vm5861, %v7653, %v7627
      %v7662 = vsel %vm5861, %v7654, %v7629
      %v7663 = vsel %vm5861, %v7655, %v7631
      %vm7664 = vcmask 261120
      %7665 = vst.msk [vmem:[%s278] sm:$0xff] %vm7664, %v7656
      %7666 = vst.msk [vmem:[%s278 + $0x8] sm:$0xff] %vm7664, %v7657
      %7667 = vst.msk [vmem:[%s278 + $0x10] sm:$0xff] %vm7664, %v7658
      %7668 = vst.msk [vmem:[%s278 + $0x18] sm:$0xff] %vm7664, %v7659
      %7669 = vst.msk [vmem:[%s278 + $0x20] sm:$0xff] %vm7664, %v7660
      %7670 = vst.msk [vmem:[%s278 + $0x28] sm:$0xff] %vm7664, %v7661
      %7671 = vst.msk [vmem:[%s278 + $0x30] sm:$0xff] %vm7664, %v7662
      %7672 = vst.msk [vmem:[%s278 + $0x38] sm:$0xff] %vm7664, %v7663
      %p7673 = scmp.lt.s32.totalorder %s18, 1
      %s7674 = scalar_select %p7673, %s18, 1
      %s7675 = smul.addr %s7674, 8
      %s7676 = smul.addr %s7675, 8
      %s7677 = scalar_lea.vmem %s7, %s7676
      // Predicated region
      $region49: #{vgg_wavelet_block2.1} parent=47 // pred_check
        %p7678 = pneg %p188
      $region50: #{vgg_wavelet_block2.1} parent=47 // pred_check_branch
        %7680 = sbr.rel (%p7678) target = $region52
      $region51: #{vgg_wavelet_block2.1} parent=47 // pred_region
        _
      $region52: #{vgg_wavelet_block2.1} parent=47 // pred_fallthru
        _
    $region48: #{vgg_wavelet_block2.1} parent=5 // pred_fallthru
      _
    %p7681 = scmp.le.s32.totalorder 2, %s13
    // Predicated region
    $region53: #{vgg_wavelet_block2.1} parent=5 // pred_check
      %p7682 = pneg %p7681
    $region54: #{vgg_wavelet_block2.1} parent=5 // pred_check_branch
      %7684 = sbr.rel (%p7682) target = $region56
    $region55: #{vgg_wavelet_block2.1} parent=5 // pred_region
      %s7685 = ssub.s32 %s13, 2
      // Predicated region
      $region57: #{vgg_wavelet_block2.1} parent=55 // pred_check
        %p7686 = pneg %p194
      $region58: #{vgg_wavelet_block2.1} parent=55 // pred_check_branch
        %7688 = sbr.rel (%p7686) target = $region60
      $region59: #{vgg_wavelet_block2.1} parent=55 // pred_region
        %p7689 = scmp.lt.s32.totalorder %s19, 1
        %s7690 = scalar_select %p7689, %s19, 1
        %s7691 = smul.addr %s7690, 8
        %s7692 = smul.addr %s7691, 8
        %s7693 = scalar_lea.vmem %s7, %s7692
      $region60: #{vgg_wavelet_block2.1} parent=55 // pred_fallthru
        _
    $region56: #{vgg_wavelet_block2.1} parent=5 // pred_fallthru
      _
  $region6: #{vgg_wavelet_block2.1} parent=0 // loop_footer
    %s17 = sadd.s32 1, %s13
  $region7: #{vgg_wavelet_block2.1} parent=0 // loop_footer_branch
    %12 = sbr.rel target = $region3
  $region8: #{vgg_wavelet_block2.1} parent=0 // loop_exit
    _

</llo_original>
